<compile_context>
chip_gen: v7x
topology: tpu7x:2x2x1
jax: 0.10.0
libtpu: 0.0.40
codegen_flags: <defaults>
</compile_context>

<pallas_src>
import functools

import jax
import jax.numpy as jnp
from jax.experimental import pallas as pl
from jax.experimental.pallas import tpu as pltpu

EPS = 1e-5            # PyTorch BatchNorm2d default eps
LANE = 128            # TPU lane width
# Rows per grid step.  256 keeps the toy test multi-tile (exercises the
# cross-tile stats accumulation); raise towards 512-1024 on v6e/v7x for real
# ResNet shapes (and bump vmem_limit_bytes accordingly).
TILE_M_TARGET = 256


# ---------------------------------------------------------------------------
# Pallas kernels
# ---------------------------------------------------------------------------
def _matmul_stats_kernel(x_ref, w_ref, y_ref, sum_ref, ssq_ref):
    """y = x @ w (bf16 x bf16 -> f32) + per-channel sum / sum(y^2) accumulation."""
    @pl.when(pl.program_id(0) == 0)
    def _():
        sum_ref[...] = jnp.zeros_like(sum_ref)
        ssq_ref[...] = jnp.zeros_like(ssq_ref)

    y = jnp.dot(x_ref[...], w_ref[...], preferred_element_type=jnp.float32)
    y_ref[...] = y
    sum_ref[...] += jnp.sum(y, axis=0, keepdims=True)
    ssq_ref[...] += jnp.sum(y * y, axis=0, keepdims=True)


def _bn_relu_matmul_stats_kernel(y_ref, s_ref, t_ref, w_ref,
                                 o_ref, sum_ref, ssq_ref):
    """o = relu(y*scale + shift) @ w  (fuses BN2+ReLU into conv3) + stats of o."""
    @pl.when(pl.program_id(0) == 0)
    def _():
        sum_ref[...] = jnp.zeros_like(sum_ref)
        ssq_ref[...] = jnp.zeros_like(ssq_ref)

    a = jnp.maximum(y_ref[...] * s_ref[...] + t_ref[...], 0.0)
    o = jnp.dot(a.astype(jnp.bfloat16), w_ref[...],
                preferred_element_type=jnp.float32)
    o_ref[...] = o
    sum_ref[...] += jnp.sum(o, axis=0, keepdims=True)
    ssq_ref[...] += jnp.sum(o * o, axis=0, keepdims=True)


def _conv3x3_stats_kernel(xf_ref, w_ref, y_ref, sum_ref, ssq_ref, *, H, W, C, P):
    """3x3 / stride-1 conv of one image as 9 shifted matmuls (no im2col).

    xf_ref block: (1, P + H*W + P, C) bf16 -- the image flattened row-major
    with P zero rows of padding on each side (P >= W+1, covers the H halo).
    Width-edge wrap (w = -1 / w = W) is masked per tap.
    """
    @pl.when(pl.program_id(0) == 0)
    def _():
        sum_ref[...] = jnp.zeros_like(sum_ref)
        ssq_ref[...] = jnp.zeros_like(ssq_ref)

    HW = H * W
    wcol = jax.lax.broadcasted_iota(jnp.int32, (HW, 1), 0) % W
    left_edge = wcol == 0          # tap kw=0 would wrap from previous row
    right_edge = wcol == W - 1     # tap kw=2 would wrap into next row

    acc = jnp.zeros((HW, C), jnp.float32)
    for kh in range(3):
        for kw in range(3):
            start = P + (kh - 1) * W + (kw - 1)
            xs = xf_ref[0, start:start + HW, :]
            if kw == 0:
                xs = jnp.where(left_edge, jnp.zeros_like(xs), xs)
            elif kw == 2:
                xs = jnp.where(right_edge, jnp.zeros_like(xs), xs)
            acc = acc + jnp.dot(xs, w_ref[kh * 3 + kw],
                                preferred_element_type=jnp.float32)

    y_ref[0] = acc
    sum_ref[...] += jnp.sum(acc, axis=0, keepdims=True)
    ssq_ref[...] += jnp.sum(acc * acc, axis=0, keepdims=True)


def _bn_relu_kernel(y_ref, s_ref, t_ref, o_ref):
    o_ref[...] = jnp.maximum(y_ref[...] * s_ref[...] + t_ref[...],
                             0.0).astype(o_ref.dtype)


def _bn_add_relu_kernel(y_ref, s_ref, t_ref, r_ref, o_ref):
    o_ref[...] = jnp.maximum(
        y_ref[...] * s_ref[...] + t_ref[...] + r_ref[...], 0.0)


# ---------------------------------------------------------------------------
# pallas_call wrappers
# ---------------------------------------------------------------------------
def _row_spec(tile_m, cols):
    return pl.BlockSpec((tile_m, cols), lambda i: (i, 0))


def _resident_spec(shape):
    nd = len(shape)
    return pl.BlockSpec(shape, lambda i: (0,) * nd)


def _conv_stats_call(x, w, tile_m):
    M, K = x.shape
    C = w.shape[1]
    cost = pl.CostEstimate(
        flops=2 * M * K * C, transcendentals=0,
        bytes_accessed=x.size * 2 + w.size * 2 + M * C * 4 + 2 * C * 4)
    return pl.pallas_call(
        _matmul_stats_kernel,
        out_shape=(jax.ShapeDtypeStruct((M, C), jnp.float32),
                   jax.ShapeDtypeStruct((1, C), jnp.float32),
                   jax.ShapeDtypeStruct((1, C), jnp.float32)),
        grid=(M // tile_m,),
        in_specs=[_row_spec(tile_m, K), _resident_spec((K, C))],
        out_specs=(_row_spec(tile_m, C),
                   _resident_spec((1, C)), _resident_spec((1, C))),
        compiler_params=pltpu.CompilerParams(
            dimension_semantics=("arbitrary",)),      # sequential stats accum
        cost_estimate=cost,
    )(x, w)


def _bn_relu_conv_stats_call(y, scale, shift, w, tile_m):
    M, K = y.shape
    C = w.shape[1]
    cost = pl.CostEstimate(
        flops=2 * M * K * C + 4 * M * K, transcendentals=0,
        bytes_accessed=y.size * 4 + w.size * 2 + M * C * 4 + 4 * K * 4)
    return pl.pallas_call(
        _bn_relu_matmul_stats_kernel,
        out_shape=(jax.ShapeDtypeStruct((M, C), jnp.float32),
                   jax.ShapeDtypeStruct((1, C), jnp.float32),
                   jax.ShapeDtypeStruct((1, C), jnp.float32)),
        grid=(M // tile_m,),
        in_specs=[_row_spec(tile_m, K),
                  _resident_spec((1, K)), _resident_spec((1, K)),
                  _resident_spec((K, C))],
        out_specs=(_row_spec(tile_m, C),
                   _resident_spec((1, C)), _resident_spec((1, C))),
        compiler_params=pltpu.CompilerParams(
            dimension_semantics=("arbitrary",)),
        cost_estimate=cost,
    )(y, scale, shift, w)


def _conv3x3_stats_call(xf, w_taps, N, H, W, C, P):
    T = H * W + 2 * P
    M = N * H * W
    cost = pl.CostEstimate(
        flops=2 * 9 * M * C * C, transcendentals=0,
        bytes_accessed=xf.size * 2 + w_taps.size * 2 + M * C * 4 + 2 * C * 4)
    y, s, q = pl.pallas_call(
        functools.partial(_conv3x3_stats_kernel, H=H, W=W, C=C, P=P),
        out_shape=(jax.ShapeDtypeStruct((N, H * W, C), jnp.float32),
                   jax.ShapeDtypeStruct((1, C), jnp.float32),
                   jax.ShapeDtypeStruct((1, C), jnp.float32)),
        grid=(N,),
        in_specs=[pl.BlockSpec((1, T, C), lambda n: (n, 0, 0)),
                  pl.BlockSpec((9, C, C), lambda n: (0, 0, 0))],
        out_specs=(pl.BlockSpec((1, H * W, C), lambda n: (n, 0, 0)),
                   pl.BlockSpec((1, C), lambda n: (0, 0)),
                   pl.BlockSpec((1, C), lambda n: (0, 0))),
        compiler_params=pltpu.CompilerParams(
            dimension_semantics=("arbitrary",)),
        cost_estimate=cost,
    )(xf, w_taps)
    return y.reshape(M, C), s, q


def _bn_relu_call(y, scale, shift, out_dtype, tile_m):
    M, C = y.shape
    cost = pl.CostEstimate(
        flops=3 * M * C, transcendentals=0,
        bytes_accessed=y.size * 4 + M * C * jnp.dtype(out_dtype).itemsize)
    return pl.pallas_call(
        _bn_relu_kernel,
        out_shape=jax.ShapeDtypeStruct((M, C), out_dtype),
        grid=(M // tile_m,),
        in_specs=[_row_spec(tile_m, C),
                  _resident_spec((1, C)), _resident_spec((1, C))],
        out_specs=_row_spec(tile_m, C),
        compiler_params=pltpu.CompilerParams(
            dimension_semantics=("parallel",)),       # megacore on v7x
        cost_estimate=cost,
    )(y, scale, shift)


def _bn_add_relu_call(y, scale, shift, res, tile_m):
    M, C = y.shape
    cost = pl.CostEstimate(
        flops=4 * M * C, transcendentals=0,
        bytes_accessed=y.size * 4 + res.size * 4 + M * C * 4)
    return pl.pallas_call(
        _bn_add_relu_kernel,
        out_shape=jax.ShapeDtypeStruct((M, C), jnp.float32),
        grid=(M // tile_m,),
        in_specs=[_row_spec(tile_m, C),
                  _resident_spec((1, C)), _resident_spec((1, C)),
                  _row_spec(tile_m, C)],
        out_specs=_row_spec(tile_m, C),
        compiler_params=pltpu.CompilerParams(
            dimension_semantics=("parallel",)),
        cost_estimate=cost,
    )(y, scale, shift, res)


# ---------------------------------------------------------------------------
# JAX glue (layout / padding / BN stat folding)
# ---------------------------------------------------------------------------
def _round_up(v, m):
    return (v + m - 1) // m * m


def _pick_tile_m(m, target=TILE_M_TARGET):
    t = min(target, m)
    t -= t % 8
    while t >= 8:
        if m % t == 0:
            return t
        t -= 8
    return m


def _pad_cols(a, cols):
    return jnp.pad(a, ((0, 0), (0, cols - a.shape[1])))


def _pad2(a, rows, cols):
    return jnp.pad(a, ((0, rows - a.shape[0]), (0, cols - a.shape[1])))


def _bn_affine(s, ssq, count, gamma, beta):
    # Fold training-mode batch stats (biased var, eps=1e-5) + gamma/beta into a
    # per-channel scale/shift pair.  Tiny (1, C) math; f32 throughout.
    mean = s / count
    var = jnp.maximum(ssq / count - mean * mean, 0.0)
    scale = gamma * jax.lax.rsqrt(var + EPS)
    return scale, beta - mean * scale


def bottleneck_forward(x_nchw, params):
    N, Cin, H, W = x_nchw.shape
    C = params["w1"].shape[0]                # bottleneck width
    Cout = 4 * C                             # expansion = 4
    # TODO(synk): stride != 1 and a non-None `downsample` submodule are not
    #             implemented (module defaults: stride=1, identity residual).
    # TODO(synk): BatchNorm running-stat (momentum) buffer updates are not
    #             modelled; training-mode batch statistics are used.
    assert Cin == Cout, "identity residual requires input_channel == 4*channel"

    M = N * H * W
    Kp = _round_up(Cin, LANE)                # padded conv1 input channels
    Cp = _round_up(C, LANE)                  # padded bottleneck width
    Op = _round_up(Cout, LANE)               # padded output channels
    tile_m = _pick_tile_m(M)

    # layout: NCHW -> channels-last (M, C), lane-padded
    x2d = jnp.transpose(x_nchw, (0, 2, 3, 1)).reshape(M, Cin)
    x_res = _pad_cols(x2d, Op)                           # f32 residual
    x_mx = _pad_cols(x2d, Kp).astype(jnp.bfloat16)       # bf16 MXU operand

    w1 = _pad2(params["w1"].reshape(C, Cin).T, Kp, Cp).astype(jnp.bfloat16)
    w2 = params["w2"]
    w2_taps = jnp.stack([_pad2(w2[:, :, kh, kw].T, Cp, Cp)
                         for kh in range(3) for kw in range(3)]
                        ).astype(jnp.bfloat16)           # (9, Cp, Cp)
    w3 = _pad2(params["w3"].reshape(Cout, C).T, Cp, Op).astype(jnp.bfloat16)

    g1, b1 = _pad_cols(params["g1"], Cp), _pad_cols(params["b1"], Cp)
    g2, b2 = _pad_cols(params["g2"], Cp), _pad_cols(params["b2"], Cp)
    g3, b3 = _pad_cols(params["g3"], Op), _pad_cols(params["b3"], Op)

    # ---- conv1 (1x1) + BN1 batch-stats accumulation -------------------------
    y1, s1, q1 = _conv_stats_call(x_mx, w1, tile_m)
    sc1, sh1 = _bn_affine(s1, q1, float(M), g1, b1)
    o1 = _bn_relu_call(y1, sc1, sh1, jnp.bfloat16, tile_m)       # (M, Cp) bf16

    # Row-pad each image for the in-kernel 3x3 halo (~tiny, replaces 9x im2col)
    P = _round_up(W + 1, 8)
    o1f = jnp.pad(o1.reshape(N, H * W, Cp), ((0, 0), (P, P), (0, 0)))

    # ---- conv2 (3x3, 9 shifted matmuls in-kernel) + BN2 batch-stats ---------
    y2, s2, q2 = _conv3x3_stats_call(o1f, w2_taps, N, H, W, Cp, P)
    sc2, sh2 = _bn_affine(s2, q2, float(M), g2, b2)

    # ---- BN2 + ReLU fused with conv3 (1x1) + BN3 batch-stats ----------------
    y3, s3, q3 = _bn_relu_conv_stats_call(y2, sc2, sh2, w3, tile_m)
    sc3, sh3 = _bn_affine(s3, q3, float(M), g3, b3)

    # ---- BN3 + identity residual + ReLU -------------------------------------
    out = _bn_add_relu_call(y3, sc3, sh3, x_res, tile_m)

    out = out[:, :Cout].reshape(N, H, W, Cout)
    return jnp.transpose(out, (0, 3, 1, 2))


# ---------------------------------------------------------------------------
# Pure-JAX references (NCHW, lax.conv) for verification
# ---------------------------------------------------------------------------
def reference_forward(x, params, matmul_dtype=jnp.float32):
    def conv(x, w, pad=0):
        return jax.lax.conv_general_dilated(
            x.astype(matmul_dtype), w.astype(matmul_dtype), (1, 1),
            [(pad, pad), (pad, pad)],
            dimension_numbers=("NCHW", "OIHW", "NCHW"),
            preferred_element_type=jnp.float32)

    def bn(y, g, b):
        mean = jnp.mean(y, axis=(0, 2, 3), keepdims=True)
        var = jnp.mean(jnp.square(y - mean), axis=(0, 2, 3), keepdims=True)
        return ((y - mean) * jax.lax.rsqrt(var + EPS)
                * g.reshape(1, -1, 1, 1) + b.reshape(1, -1, 1, 1))

    out = jax.nn.relu(bn(conv(x, params["w1"]), params["g1"], params["b1"]))
    out = jax.nn.relu(bn(conv(out, params["w2"], pad=1), params["g2"], params["b2"]))
    out = bn(conv(out, params["w3"]), params["g3"], params["b3"]) + x
    return jax.nn.relu(out)


def make_params(key, input_channel, channel):
    ks = jax.random.split(key, 9)
    Cout = 4 * channel
    return {
        "w1": 0.1 * jax.random.normal(ks[0], (channel, input_channel, 1, 1), jnp.float32),
        "w2": 0.1 * jax.random.normal(ks[1], (channel, channel, 3, 3), jnp.float32),
        "w3": 0.1 * jax.random.normal(ks[2], (Cout, channel, 1, 1), jnp.float32),
        "g1": jax.random.uniform(ks[3], (1, channel), jnp.float32, 0.5, 1.5),
        "b1": 0.1 * jax.random.normal(ks[4], (1, channel), jnp.float32),
        "g2": jax.random.uniform(ks[5], (1, channel), jnp.float32, 0.5, 1.5),
        "b2": 0.1 * jax.random.normal(ks[6], (1, channel), jnp.float32),
        "g3": jax.random.uniform(ks[7], (1, Cout), jnp.float32, 0.5, 1.5),
        "b3": 0.1 * jax.random.normal(ks[8], (1, Cout), jnp.float32),
    }


if __name__ == "__main__":
    key = jax.random.PRNGKey(0)
    kx, kp = jax.random.split(key)

    N, channel, H, W = 2, 4, 16, 16
    input_channel = 4 * channel            # 16, required for identity residual

    x = jax.random.normal(kx, (N, input_channel, H, W), jnp.float32)
    params = make_params(kp, input_channel, channel)

    fwd = jax.jit(bottleneck_forward)
    out = jax.block_until_ready(fwd(x, params))

    # Tight check vs a reference that emulates the kernel's bf16 matmuls, and a
    # looser check vs the pure-f32 reference (bf16-level tolerance).
    ref_bf16 = jax.block_until_ready(reference_forward(x, params, jnp.bfloat16))
    ref_f32 = jax.block_until_ready(reference_forward(x, params, jnp.float32))

    assert out.shape == (N, 4 * channel, H, W), out.shape
    assert jnp.allclose(out, ref_bf16, atol=5e-3, rtol=5e-3), (
        float(jnp.max(jnp.abs(out - ref_bf16))))
    assert jnp.allclose(out, ref_f32, atol=5e-2, rtol=5e-2), (
        float(jnp.max(jnp.abs(out - ref_f32))))

    print("KERNEL_OK")
</pallas_src>

<mosaic_0001>
module attributes {stable_mosaic.version = 11 : i64} {
  func.func @_matmul_stats_kernel(%arg0: i32, %arg1: memref<256x128xbf16, #tpu.memory_space<vmem>>, %arg2: memref<128x128xbf16, #tpu.memory_space<vmem>>, %arg3: memref<256x128xf32, #tpu.memory_space<vmem>>, %arg4: memref<1x128xf32, #tpu.memory_space<vmem>>, %arg5: memref<1x128xf32, #tpu.memory_space<vmem>>) attributes {dimension_semantics = [#tpu.dimension_semantics<arbitrary>], iteration_bounds = array<i64: 2>, scalar_prefetch = 0 : i64, scratch_operands = 0 : i64, tpu.core_type = #tpu.core_type<tc>, window_params = [{transform_indices = @transform_0, window_bounds = array<i64: 256, 128>}, {pipeline_mode = #tpu.pipeline_mode<synchronous>, transform_indices = @transform_1, window_bounds = array<i64: 128, 128>}, {transform_indices = @transform_2, window_bounds = array<i64: 256, 128>}, {pipeline_mode = #tpu.pipeline_mode<synchronous>, transform_indices = @transform_3, window_bounds = array<i64: 1, 128>}, {pipeline_mode = #tpu.pipeline_mode<synchronous>, transform_indices = @transform_4, window_bounds = array<i64: 1, 128>}]} {
    %c0_i32 = arith.constant 0 : i32
    %0 = arith.cmpi eq, %arg0, %c0_i32 : i32
    %1 = arith.extui %0 : i1 to i32
    %c0_i32_0 = arith.constant 0 : i32
    %2 = arith.cmpi ne, %1, %c0_i32_0 : i32
    scf.if %2 {
      %cst_16 = arith.constant 0.000000e+00 : f32
      %18 = vector.broadcast %cst_16 : f32 to vector<1x128xf32>
      %c0_17 = arith.constant 0 : index
      %c0_18 = arith.constant 0 : index
      %19 = vector.load %arg4[%c0_17, %c0_18] : memref<1x128xf32, #tpu.memory_space<vmem>>, vector<1x128xf32>
      tpu.vector_store %arg4[%c0_17, %c0_18], %18 {strides = array<i32>} : memref<1x128xf32, #tpu.memory_space<vmem>>, vector<1x128xf32>,
      %cst_19 = arith.constant 0.000000e+00 : f32
      %20 = vector.broadcast %cst_19 : f32 to vector<1x128xf32>
      %c0_20 = arith.constant 0 : index
      %c0_21 = arith.constant 0 : index
      %21 = vector.load %arg5[%c0_20, %c0_21] : memref<1x128xf32, #tpu.memory_space<vmem>>, vector<1x128xf32>
      tpu.vector_store %arg5[%c0_20, %c0_21], %20 {strides = array<i32>} : memref<1x128xf32, #tpu.memory_space<vmem>>, vector<1x128xf32>,
    } else {
    }
    %c0 = arith.constant 0 : index
    %c0_1 = arith.constant 0 : index
    %3 = vector.load %arg1[%c0, %c0_1] : memref<256x128xbf16, #tpu.memory_space<vmem>>, vector<256x128xbf16>
    %c0_2 = arith.constant 0 : index
    %c0_3 = arith.constant 0 : index
    %4 = vector.load %arg2[%c0_2, %c0_3] : memref<128x128xbf16, #tpu.memory_space<vmem>>, vector<128x128xbf16>
    %cst = arith.constant dense<0.000000e+00> : vector<256x128xf32>
    %5 = tpu.matmul %3, %4, %cst {dimension_numbers = #tpu.dot_dimension_numbers<[1], [0], [0], [1], [0, 0, 1, 1], [], []>} : vector<256x128xbf16>, vector<128x128xbf16>, vector<256x128xf32> -> vector<256x128xf32>
    %c0_4 = arith.constant 0 : index
    %c0_5 = arith.constant 0 : index
    %6 = vector.load %arg3[%c0_4, %c0_5] : memref<256x128xf32, #tpu.memory_space<vmem>>, vector<256x128xf32>
    tpu.vector_store %arg3[%c0_4, %c0_5], %5 {strides = array<i32>} : memref<256x128xf32, #tpu.memory_space<vmem>>, vector<256x128xf32>,
    %c0_6 = arith.constant 0 : index
    %c0_7 = arith.constant 0 : index
    %7 = vector.load %arg4[%c0_6, %c0_7] : memref<1x128xf32, #tpu.memory_space<vmem>>, vector<1x128xf32>
    %cst_8 = arith.constant dense<0.000000e+00> : vector<128xf32>
    %8 = vector.multi_reduction <add>, %5, %cst_8 [0] : vector<256x128xf32> to vector<128xf32>
    %9 = vector.shape_cast %8 : vector<128xf32> to vector<1x128xf32>
    %10 = arith.addf %7, %9 : vector<1x128xf32>
    %c0_9 = arith.constant 0 : index
    %c0_10 = arith.constant 0 : index
    %11 = vector.load %arg4[%c0_9, %c0_10] : memref<1x128xf32, #tpu.memory_space<vmem>>, vector<1x128xf32>
    tpu.vector_store %arg4[%c0_9, %c0_10], %10 {strides = array<i32>} : memref<1x128xf32, #tpu.memory_space<vmem>>, vector<1x128xf32>,
    %c0_11 = arith.constant 0 : index
    %c0_12 = arith.constant 0 : index
    %12 = vector.load %arg5[%c0_11, %c0_12] : memref<1x128xf32, #tpu.memory_space<vmem>>, vector<1x128xf32>
    %13 = arith.mulf %5, %5 : vector<256x128xf32>
    %cst_13 = arith.constant dense<0.000000e+00> : vector<128xf32>
    %14 = vector.multi_reduction <add>, %13, %cst_13 [0] : vector<256x128xf32> to vector<128xf32>
    %15 = vector.shape_cast %14 : vector<128xf32> to vector<1x128xf32>
    %16 = arith.addf %12, %15 : vector<1x128xf32>
    %c0_14 = arith.constant 0 : index
    %c0_15 = arith.constant 0 : index
    %17 = vector.load %arg5[%c0_14, %c0_15] : memref<1x128xf32, #tpu.memory_space<vmem>>, vector<1x128xf32>
    tpu.vector_store %arg5[%c0_14, %c0_15], %16 {strides = array<i32>} : memref<1x128xf32, #tpu.memory_space<vmem>>, vector<1x128xf32>,
    return
  }
  func.func @transform_0(%arg0: i32) -> (i32, i32) {
    %c0_i32 = arith.constant 0 : i32
    %c0_i32_0 = arith.constant 0 : i32
    return %arg0, %c0_i32 : i32, i32
  }
  func.func @transform_1(%arg0: i32) -> (i32, i32) {
    %c0_i32 = arith.constant 0 : i32
    %c0_i32_0 = arith.constant 0 : i32
    %c0_i32_1 = arith.constant 0 : i32
    return %c0_i32, %c0_i32_0 : i32, i32
  }
  func.func @transform_2(%arg0: i32) -> (i32, i32) {
    %c0_i32 = arith.constant 0 : i32
    %c0_i32_0 = arith.constant 0 : i32
    return %arg0, %c0_i32 : i32, i32
  }
  func.func @transform_3(%arg0: i32) -> (i32, i32) {
    %c0_i32 = arith.constant 0 : i32
    %c0_i32_0 = arith.constant 0 : i32
    %c0_i32_1 = arith.constant 0 : i32
    return %c0_i32, %c0_i32_0 : i32, i32
  }
  func.func @transform_4(%arg0: i32) -> (i32, i32) {
    %c0_i32 = arith.constant 0 : i32
    %c0_i32_0 = arith.constant 0 : i32
    %c0_i32_1 = arith.constant 0 : i32
    return %c0_i32, %c0_i32_0 : i32, i32
  }
}

module attributes {stable_mosaic.version = 11 : i64} {
  func.func @_bn_relu_kernel(%arg0: i32, %arg1: memref<256x128xf32, #tpu.memory_space<vmem>>, %arg2: memref<1x128xf32, #tpu.memory_space<vmem>>, %arg3: memref<1x128xf32, #tpu.memory_space<vmem>>, %arg4: memref<256x128xbf16, #tpu.memory_space<vmem>>) attributes {dimension_semantics = [#tpu.dimension_semantics<parallel>], iteration_bounds = array<i64: 2>, scalar_prefetch = 0 : i64, scratch_operands = 0 : i64, tpu.core_type = #tpu.core_type<tc>, window_params = [{transform_indices = @transform_0, window_bounds = array<i64: 256, 128>}, {pipeline_mode = #tpu.pipeline_mode<synchronous>, transform_indices = @transform_1, window_bounds = array<i64: 1, 128>}, {pipeline_mode = #tpu.pipeline_mode<synchronous>, transform_indices = @transform_2, window_bounds = array<i64: 1, 128>}, {transform_indices = @transform_3, window_bounds = array<i64: 256, 128>}]} {
    %c0 = arith.constant 0 : index
    %c0_0 = arith.constant 0 : index
    %0 = vector.load %arg1[%c0, %c0_0] : memref<256x128xf32, #tpu.memory_space<vmem>>, vector<256x128xf32>
    %c0_1 = arith.constant 0 : index
    %c0_2 = arith.constant 0 : index
    %1 = vector.load %arg2[%c0_1, %c0_2] : memref<1x128xf32, #tpu.memory_space<vmem>>, vector<1x128xf32>
    %2 = vector.broadcast %1 : vector<1x128xf32> to vector<256x128xf32>
    %3 = arith.mulf %0, %2 : vector<256x128xf32>
    %c0_3 = arith.constant 0 : index
    %c0_4 = arith.constant 0 : index
    %4 = vector.load %arg3[%c0_3, %c0_4] : memref<1x128xf32, #tpu.memory_space<vmem>>, vector<1x128xf32>
    %5 = vector.broadcast %4 : vector<1x128xf32> to vector<256x128xf32>
    %6 = arith.addf %3, %5 : vector<256x128xf32>
    %cst = arith.constant 0.000000e+00 : f32
    %7 = vector.broadcast %cst : f32 to vector<256x128xf32>
    %8 = arith.maximumf %6, %7 : vector<256x128xf32>
    %9 = arith.truncf %8 : vector<256x128xf32> to vector<256x128xbf16>
    %c0_5 = arith.constant 0 : index
    %c0_6 = arith.constant 0 : index
    %10 = vector.load %arg4[%c0_5, %c0_6] : memref<256x128xbf16, #tpu.memory_space<vmem>>, vector<256x128xbf16>
    tpu.vector_store %arg4[%c0_5, %c0_6], %9 {strides = array<i32>} : memref<256x128xbf16, #tpu.memory_space<vmem>>, vector<256x128xbf16>,
    return
  }
  func.func @transform_0(%arg0: i32) -> (i32, i32) {
    %c0_i32 = arith.constant 0 : i32
    %c0_i32_0 = arith.constant 0 : i32
    return %arg0, %c0_i32 : i32, i32
  }
  func.func @transform_1(%arg0: i32) -> (i32, i32) {
    %c0_i32 = arith.constant 0 : i32
    %c0_i32_0 = arith.constant 0 : i32
    %c0_i32_1 = arith.constant 0 : i32
    return %c0_i32, %c0_i32_0 : i32, i32
  }
  func.func @transform_2(%arg0: i32) -> (i32, i32) {
    %c0_i32 = arith.constant 0 : i32
    %c0_i32_0 = arith.constant 0 : i32
    %c0_i32_1 = arith.constant 0 : i32
    return %c0_i32, %c0_i32_0 : i32, i32
  }
  func.func @transform_3(%arg0: i32) -> (i32, i32) {
    %c0_i32 = arith.constant 0 : i32
    %c0_i32_0 = arith.constant 0 : i32
    return %arg0, %c0_i32 : i32, i32
  }
}

module attributes {stable_mosaic.version = 11 : i64} {
  func.func @_conv3x3_stats_kernel(%arg0: i32, %arg1: memref<1x304x128xbf16, #tpu.memory_space<vmem>>, %arg2: memref<9x128x128xbf16, #tpu.memory_space<vmem>>, %arg3: memref<1x256x128xf32, #tpu.memory_space<vmem>>, %arg4: memref<1x128xf32, #tpu.memory_space<vmem>>, %arg5: memref<1x128xf32, #tpu.memory_space<vmem>>) attributes {dimension_semantics = [#tpu.dimension_semantics<arbitrary>], iteration_bounds = array<i64: 2>, scalar_prefetch = 0 : i64, scratch_operands = 0 : i64, tpu.core_type = #tpu.core_type<tc>, window_params = [{transform_indices = @transform_0, window_bounds = array<i64: 1, 304, 128>}, {pipeline_mode = #tpu.pipeline_mode<synchronous>, transform_indices = @transform_1, window_bounds = array<i64: 9, 128, 128>}, {transform_indices = @transform_2, window_bounds = array<i64: 1, 256, 128>}, {pipeline_mode = #tpu.pipeline_mode<synchronous>, transform_indices = @transform_3, window_bounds = array<i64: 1, 128>}, {pipeline_mode = #tpu.pipeline_mode<synchronous>, transform_indices = @transform_4, window_bounds = array<i64: 1, 128>}]} {
    %c0_i32 = arith.constant 0 : i32
    %0 = arith.cmpi eq, %arg0, %c0_i32 : i32
    %1 = arith.extui %0 : i1 to i32
    %c0_i32_0 = arith.constant 0 : i32
    %2 = arith.cmpi ne, %1, %c0_i32_0 : i32
    scf.if %2 {
      %cst_72 = arith.constant 0.000000e+00 : f32
      %117 = vector.broadcast %cst_72 : f32 to vector<1x128xf32>
      %c0_73 = arith.constant 0 : index
      %c0_74 = arith.constant 0 : index
      %118 = vector.load %arg4[%c0_73, %c0_74] : memref<1x128xf32, #tpu.memory_space<vmem>>, vector<1x128xf32>
      tpu.vector_store %arg4[%c0_73, %c0_74], %117 {strides = array<i32>} : memref<1x128xf32, #tpu.memory_space<vmem>>, vector<1x128xf32>,
      %cst_75 = arith.constant 0.000000e+00 : f32
      %119 = vector.broadcast %cst_75 : f32 to vector<1x128xf32>
      %c0_76 = arith.constant 0 : index
      %c0_77 = arith.constant 0 : index
      %120 = vector.load %arg5[%c0_76, %c0_77] : memref<1x128xf32, #tpu.memory_space<vmem>>, vector<1x128xf32>
      tpu.vector_store %arg5[%c0_76, %c0_77], %119 {strides = array<i32>} : memref<1x128xf32, #tpu.memory_space<vmem>>, vector<1x128xf32>,
    } else {
    }
    %3 = tpu.iota {dimensions = array<i32: 0>} : vector<256x1xi32>
    %c16_i32 = arith.constant 16 : i32
    %c0_i32_1 = arith.constant 0 : i32
    %4 = arith.cmpi eq, %c16_i32, %c0_i32_1 : i32
    %c1_i32 = arith.constant 1 : i32
    %5 = arith.select %4, %c1_i32, %c16_i32 : i32
    %6 = vector.broadcast %5 : i32 to vector<256x1xi32>
    %7 = arith.remsi %3, %6 : vector<256x1xi32>
    %c0_i32_2 = arith.constant 0 : i32
    %8 = vector.broadcast %c0_i32_2 : i32 to vector<256x1xi32>
    %9 = arith.cmpi ne, %7, %8 : vector<256x1xi32>
    %c0_i32_3 = arith.constant 0 : i32
    %10 = vector.broadcast %c0_i32_3 : i32 to vector<256x1xi32>
    %11 = arith.cmpi slt, %7, %10 : vector<256x1xi32>
    %c0_i32_4 = arith.constant 0 : i32
    %12 = arith.cmpi slt, %5, %c0_i32_4 : i32
    %13 = vector.broadcast %12 : i1 to vector<256x1xi1>
    %14 = vector.broadcast %13 : vector<256x1xi1> to vector<256x1xi1>
    %15 = arith.xori %11, %14 : vector<256x1xi1>
    %16 = arith.andi %15, %9 : vector<256x1xi1>
    %17 = vector.broadcast %5 : i32 to vector<256x1xi32>
    %18 = arith.addi %7, %17 : vector<256x1xi32>
    %19 = arith.select %16, %18, %7 : vector<256x1xi1>, vector<256x1xi32>
    %c0_i32_5 = arith.constant 0 : i32
    %20 = vector.broadcast %c0_i32_5 : i32 to vector<256x1xi32>
    %21 = arith.cmpi eq, %19, %20 : vector<256x1xi32>
    %c15_i32 = arith.constant 15 : i32
    %22 = vector.broadcast %c15_i32 : i32 to vector<256x1xi32>
    %23 = arith.cmpi eq, %19, %22 : vector<256x1xi32>
    %cst = arith.constant 0.000000e+00 : f32
    %24 = vector.broadcast %cst : f32 to vector<256x128xf32>
    %c0 = arith.constant 0 : index
    %c7 = arith.constant 7 : index
    %c0_6 = arith.constant 0 : index
    %25 = vector.load %arg1[%c0, %c7, %c0_6] : memref<1x304x128xbf16, #tpu.memory_space<vmem>>, vector<1x256x128xbf16>
    %26 = vector.shape_cast %25 : vector<1x256x128xbf16> to vector<256x128xbf16>
    %cst_7 = arith.constant 0.000000e+00 : bf16
    %27 = vector.broadcast %cst_7 : bf16 to vector<256x128xbf16>
    %28 = vector.shape_cast %21 : vector<256x1xi1> to vector<256x1xi1>
    %29 = vector.broadcast %28 : vector<256x1xi1> to vector<256x128xi1>
    %30 = arith.select %29, %27, %26 : vector<256x128xi1>, vector<256x128xbf16>
    %c0_8 = arith.constant 0 : index
    %c0_9 = arith.constant 0 : index
    %c0_10 = arith.constant 0 : index
    %31 = vector.load %arg2[%c0_8, %c0_9, %c0_10] : memref<9x128x128xbf16, #tpu.memory_space<vmem>>, vector<1x128x128xbf16>
    %32 = vector.shape_cast %31 : vector<1x128x128xbf16> to vector<128x128xbf16>
    %cst_11 = arith.constant dense<0.000000e+00> : vector<256x128xf32>
    %33 = tpu.matmul %30, %32, %cst_11 {dimension_numbers = #tpu.dot_dimension_numbers<[1], [0], [0], [1], [0, 0, 1, 1], [], []>} : vector<256x128xbf16>, vector<128x128xbf16>, vector<256x128xf32> -> vector<256x128xf32>
    %34 = arith.addf %24, %33 : vector<256x128xf32>
    %c0_12 = arith.constant 0 : index
    %c8 = arith.constant 8 : index
    %c0_13 = arith.constant 0 : index
    %35 = vector.load %arg1[%c0_12, %c8, %c0_13] : memref<1x304x128xbf16, #tpu.memory_space<vmem>>, vector<1x256x128xbf16>
    %36 = vector.shape_cast %35 : vector<1x256x128xbf16> to vector<256x128xbf16>
    %c1 = arith.constant 1 : index
    %c0_14 = arith.constant 0 : index
    %c0_15 = arith.constant 0 : index
    %37 = vector.load %arg2[%c1, %c0_14, %c0_15] : memref<9x128x128xbf16, #tpu.memory_space<vmem>>, vector<1x128x128xbf16>
    %38 = vector.shape_cast %37 : vector<1x128x128xbf16> to vector<128x128xbf16>
    %cst_16 = arith.constant dense<0.000000e+00> : vector<256x128xf32>
    %39 = tpu.matmul %36, %38, %cst_16 {dimension_numbers = #tpu.dot_dimension_numbers<[1], [0], [0], [1], [0, 0, 1, 1], [], []>} : vector<256x128xbf16>, vector<128x128xbf16>, vector<256x128xf32> -> vector<256x128xf32>
    %40 = arith.addf %34, %39 : vector<256x128xf32>
    %c0_17 = arith.constant 0 : index
    %c9 = arith.constant 9 : index
    %c0_18 = arith.constant 0 : index
    %41 = vector.load %arg1[%c0_17, %c9, %c0_18] : memref<1x304x128xbf16, #tpu.memory_space<vmem>>, vector<1x256x128xbf16>
    %42 = vector.shape_cast %41 : vector<1x256x128xbf16> to vector<256x128xbf16>
    %cst_19 = arith.constant 0.000000e+00 : bf16
    %43 = vector.broadcast %cst_19 : bf16 to vector<256x128xbf16>
    %44 = vector.shape_cast %23 : vector<256x1xi1> to vector<256x1xi1>
    %45 = vector.broadcast %44 : vector<256x1xi1> to vector<256x128xi1>
    %46 = arith.select %45, %43, %42 : vector<256x128xi1>, vector<256x128xbf16>
    %c2 = arith.constant 2 : index
    %c0_20 = arith.constant 0 : index
    %c0_21 = arith.constant 0 : index
    %47 = vector.load %arg2[%c2, %c0_20, %c0_21] : memref<9x128x128xbf16, #tpu.memory_space<vmem>>, vector<1x128x128xbf16>
    %48 = vector.shape_cast %47 : vector<1x128x128xbf16> to vector<128x128xbf16>
    %cst_22 = arith.constant dense<0.000000e+00> : vector<256x128xf32>
    %49 = tpu.matmul %46, %48, %cst_22 {dimension_numbers = #tpu.dot_dimension_numbers<[1], [0], [0], [1], [0, 0, 1, 1], [], []>} : vector<256x128xbf16>, vector<128x128xbf16>, vector<256x128xf32> -> vector<256x128xf32>
    %50 = arith.addf %40, %49 : vector<256x128xf32>
    %c0_23 = arith.constant 0 : index
    %c23 = arith.constant 23 : index
    %c0_24 = arith.constant 0 : index
    %51 = vector.load %arg1[%c0_23, %c23, %c0_24] : memref<1x304x128xbf16, #tpu.memory_space<vmem>>, vector<1x256x128xbf16>
    %52 = vector.shape_cast %51 : vector<1x256x128xbf16> to vector<256x128xbf16>
    %cst_25 = arith.constant 0.000000e+00 : bf16
    %53 = vector.broadcast %cst_25 : bf16 to vector<256x128xbf16>
    %54 = vector.shape_cast %21 : vector<256x1xi1> to vector<256x1xi1>
    %55 = vector.broadcast %54 : vector<256x1xi1> to vector<256x128xi1>
    %56 = arith.select %55, %53, %52 : vector<256x128xi1>, vector<256x128xbf16>
    %c3 = arith.constant 3 : index
    %c0_26 = arith.constant 0 : index
    %c0_27 = arith.constant 0 : index
    %57 = vector.load %arg2[%c3, %c0_26, %c0_27] : memref<9x128x128xbf16, #tpu.memory_space<vmem>>, vector<1x128x128xbf16>
    %58 = vector.shape_cast %57 : vector<1x128x128xbf16> to vector<128x128xbf16>
    %cst_28 = arith.constant dense<0.000000e+00> : vector<256x128xf32>
    %59 = tpu.matmul %56, %58, %cst_28 {dimension_numbers = #tpu.dot_dimension_numbers<[1], [0], [0], [1], [0, 0, 1, 1], [], []>} : vector<256x128xbf16>, vector<128x128xbf16>, vector<256x128xf32> -> vector<256x128xf32>
    %60 = arith.addf %50, %59 : vector<256x128xf32>
    %c0_29 = arith.constant 0 : index
    %c24 = arith.constant 24 : index
    %c0_30 = arith.constant 0 : index
    %61 = vector.load %arg1[%c0_29, %c24, %c0_30] : memref<1x304x128xbf16, #tpu.memory_space<vmem>>, vector<1x256x128xbf16>
    %62 = vector.shape_cast %61 : vector<1x256x128xbf16> to vector<256x128xbf16>
    %c4 = arith.constant 4 : index
    %c0_31 = arith.constant 0 : index
    %c0_32 = arith.constant 0 : index
    %63 = vector.load %arg2[%c4, %c0_31, %c0_32] : memref<9x128x128xbf16, #tpu.memory_space<vmem>>, vector<1x128x128xbf16>
    %64 = vector.shape_cast %63 : vector<1x128x128xbf16> to vector<128x128xbf16>
    %cst_33 = arith.constant dense<0.000000e+00> : vector<256x128xf32>
    %65 = tpu.matmul %62, %64, %cst_33 {dimension_numbers = #tpu.dot_dimension_numbers<[1], [0], [0], [1], [0, 0, 1, 1], [], []>} : vector<256x128xbf16>, vector<128x128xbf16>, vector<256x128xf32> -> vector<256x128xf32>
    %66 = arith.addf %60, %65 : vector<256x128xf32>
    %c0_34 = arith.constant 0 : index
    %c25 = arith.constant 25 : index
    %c0_35 = arith.constant 0 : index
    %67 = vector.load %arg1[%c0_34, %c25, %c0_35] : memref<1x304x128xbf16, #tpu.memory_space<vmem>>, vector<1x256x128xbf16>
    %68 = vector.shape_cast %67 : vector<1x256x128xbf16> to vector<256x128xbf16>
    %cst_36 = arith.constant 0.000000e+00 : bf16
    %69 = vector.broadcast %cst_36 : bf16 to vector<256x128xbf16>
    %70 = vector.shape_cast %23 : vector<256x1xi1> to vector<256x1xi1>
    %71 = vector.broadcast %70 : vector<256x1xi1> to vector<256x128xi1>
    %72 = arith.select %71, %69, %68 : vector<256x128xi1>, vector<256x128xbf16>
    %c5 = arith.constant 5 : index
    %c0_37 = arith.constant 0 : index
    %c0_38 = arith.constant 0 : index
    %73 = vector.load %arg2[%c5, %c0_37, %c0_38] : memref<9x128x128xbf16, #tpu.memory_space<vmem>>, vector<1x128x128xbf16>
    %74 = vector.shape_cast %73 : vector<1x128x128xbf16> to vector<128x128xbf16>
    %cst_39 = arith.constant dense<0.000000e+00> : vector<256x128xf32>
    %75 = tpu.matmul %72, %74, %cst_39 {dimension_numbers = #tpu.dot_dimension_numbers<[1], [0], [0], [1], [0, 0, 1, 1], [], []>} : vector<256x128xbf16>, vector<128x128xbf16>, vector<256x128xf32> -> vector<256x128xf32>
    %76 = arith.addf %66, %75 : vector<256x128xf32>
    %c0_40 = arith.constant 0 : index
    %c39 = arith.constant 39 : index
    %c0_41 = arith.constant 0 : index
    %77 = vector.load %arg1[%c0_40, %c39, %c0_41] : memref<1x304x128xbf16, #tpu.memory_space<vmem>>, vector<1x256x128xbf16>
    %78 = vector.shape_cast %77 : vector<1x256x128xbf16> to vector<256x128xbf16>
    %cst_42 = arith.constant 0.000000e+00 : bf16
    %79 = vector.broadcast %cst_42 : bf16 to vector<256x128xbf16>
    %80 = vector.shape_cast %21 : vector<256x1xi1> to vector<256x1xi1>
    %81 = vector.broadcast %80 : vector<256x1xi1> to vector<256x128xi1>
    %82 = arith.select %81, %79, %78 : vector<256x128xi1>, vector<256x128xbf16>
    %c6 = arith.constant 6 : index
    %c0_43 = arith.constant 0 : index
    %c0_44 = arith.constant 0 : index
    %83 = vector.load %arg2[%c6, %c0_43, %c0_44] : memref<9x128x128xbf16, #tpu.memory_space<vmem>>, vector<1x128x128xbf16>
    %84 = vector.shape_cast %83 : vector<1x128x128xbf16> to vector<128x128xbf16>
    %cst_45 = arith.constant dense<0.000000e+00> : vector<256x128xf32>
    %85 = tpu.matmul %82, %84, %cst_45 {dimension_numbers = #tpu.dot_dimension_numbers<[1], [0], [0], [1], [0, 0, 1, 1], [], []>} : vector<256x128xbf16>, vector<128x128xbf16>, vector<256x128xf32> -> vector<256x128xf32>
    %86 = arith.addf %76, %85 : vector<256x128xf32>
    %c0_46 = arith.constant 0 : index
    %c40 = arith.constant 40 : index
    %c0_47 = arith.constant 0 : index
    %87 = vector.load %arg1[%c0_46, %c40, %c0_47] : memref<1x304x128xbf16, #tpu.memory_space<vmem>>, vector<1x256x128xbf16>
    %88 = vector.shape_cast %87 : vector<1x256x128xbf16> to vector<256x128xbf16>
    %c7_48 = arith.constant 7 : index
    %c0_49 = arith.constant 0 : index
    %c0_50 = arith.constant 0 : index
    %89 = vector.load %arg2[%c7_48, %c0_49, %c0_50] : memref<9x128x128xbf16, #tpu.memory_space<vmem>>, vector<1x128x128xbf16>
    %90 = vector.shape_cast %89 : vector<1x128x128xbf16> to vector<128x128xbf16>
    %cst_51 = arith.constant dense<0.000000e+00> : vector<256x128xf32>
    %91 = tpu.matmul %88, %90, %cst_51 {dimension_numbers = #tpu.dot_dimension_numbers<[1], [0], [0], [1], [0, 0, 1, 1], [], []>} : vector<256x128xbf16>, vector<128x128xbf16>, vector<256x128xf32> -> vector<256x128xf32>
    %92 = arith.addf %86, %91 : vector<256x128xf32>
    %c0_52 = arith.constant 0 : index
    %c41 = arith.constant 41 : index
    %c0_53 = arith.constant 0 : index
    %93 = vector.load %arg1[%c0_52, %c41, %c0_53] : memref<1x304x128xbf16, #tpu.memory_space<vmem>>, vector<1x256x128xbf16>
    %94 = vector.shape_cast %93 : vector<1x256x128xbf16> to vector<256x128xbf16>
    %cst_54 = arith.constant 0.000000e+00 : bf16
    %95 = vector.broadcast %cst_54 : bf16 to vector<256x128xbf16>
    %96 = vector.shape_cast %23 : vector<256x1xi1> to vector<256x1xi1>
    %97 = vector.broadcast %96 : vector<256x1xi1> to vector<256x128xi1>
    %98 = arith.select %97, %95, %94 : vector<256x128xi1>, vector<256x128xbf16>
    %c8_55 = arith.constant 8 : index
    %c0_56 = arith.constant 0 : index
    %c0_57 = arith.constant 0 : index
    %99 = vector.load %arg2[%c8_55, %c0_56, %c0_57] : memref<9x128x128xbf16, #tpu.memory_space<vmem>>, vector<1x128x128xbf16>
    %100 = vector.shape_cast %99 : vector<1x128x128xbf16> to vector<128x128xbf16>
    %cst_58 = arith.constant dense<0.000000e+00> : vector<256x128xf32>
    %101 = tpu.matmul %98, %100, %cst_58 {dimension_numbers = #tpu.dot_dimension_numbers<[1], [0], [0], [1], [0, 0, 1, 1], [], []>} : vector<256x128xbf16>, vector<128x128xbf16>, vector<256x128xf32> -> vector<256x128xf32>
    %102 = arith.addf %92, %101 : vector<256x128xf32>
    %c0_59 = arith.constant 0 : index
    %c0_60 = arith.constant 0 : index
    %c0_61 = arith.constant 0 : index
    %103 = vector.load %arg3[%c0_59, %c0_60, %c0_61] : memref<1x256x128xf32, #tpu.memory_space<vmem>>, vector<1x256x128xf32>
    %104 = vector.shape_cast %103 : vector<1x256x128xf32> to vector<256x128xf32>
    %105 = vector.shape_cast %102 : vector<256x128xf32> to vector<1x256x128xf32>
    tpu.vector_store %arg3[%c0_59, %c0_60, %c0_61], %105 {strides = array<i32>} : memref<1x256x128xf32, #tpu.memory_space<vmem>>, vector<1x256x128xf32>,
    %c0_62 = arith.constant 0 : index
    %c0_63 = arith.constant 0 : index
    %106 = vector.load %arg4[%c0_62, %c0_63] : memref<1x128xf32, #tpu.memory_space<vmem>>, vector<1x128xf32>
    %cst_64 = arith.constant dense<0.000000e+00> : vector<128xf32>
    %107 = vector.multi_reduction <add>, %102, %cst_64 [0] : vector<256x128xf32> to vector<128xf32>
    %108 = vector.shape_cast %107 : vector<128xf32> to vector<1x128xf32>
    %109 = arith.addf %106, %108 : vector<1x128xf32>
    %c0_65 = arith.constant 0 : index
    %c0_66 = arith.constant 0 : index
    %110 = vector.load %arg4[%c0_65, %c0_66] : memref<1x128xf32, #tpu.memory_space<vmem>>, vector<1x128xf32>
    tpu.vector_store %arg4[%c0_65, %c0_66], %109 {strides = array<i32>} : memref<1x128xf32, #tpu.memory_space<vmem>>, vector<1x128xf32>,
    %c0_67 = arith.constant 0 : index
    %c0_68 = arith.constant 0 : index
    %111 = vector.load %arg5[%c0_67, %c0_68] : memref<1x128xf32, #tpu.memory_space<vmem>>, vector<1x128xf32>
    %112 = arith.mulf %102, %102 : vector<256x128xf32>
    %cst_69 = arith.constant dense<0.000000e+00> : vector<128xf32>
    %113 = vector.multi_reduction <add>, %112, %cst_69 [0] : vector<256x128xf32> to vector<128xf32>
    %114 = vector.shape_cast %113 : vector<128xf32> to vector<1x128xf32>
    %115 = arith.addf %111, %114 : vector<1x128xf32>
    %c0_70 = arith.constant 0 : index
    %c0_71 = arith.constant 0 : index
    %116 = vector.load %arg5[%c0_70, %c0_71] : memref<1x128xf32, #tpu.memory_space<vmem>>, vector<1x128xf32>
    tpu.vector_store %arg5[%c0_70, %c0_71], %115 {strides = array<i32>} : memref<1x128xf32, #tpu.memory_space<vmem>>, vector<1x128xf32>,
    return
  }
  func.func @transform_0(%arg0: i32) -> (i32, i32, i32) {
    %c0_i32 = arith.constant 0 : i32
    %c0_i32_0 = arith.constant 0 : i32
    %c0_i32_1 = arith.constant 0 : i32
    return %arg0, %c0_i32, %c0_i32_0 : i32, i32, i32
  }
  func.func @transform_1(%arg0: i32) -> (i32, i32, i32) {
    %c0_i32 = arith.constant 0 : i32
    %c0_i32_0 = arith.constant 0 : i32
    %c0_i32_1 = arith.constant 0 : i32
    %c0_i32_2 = arith.constant 0 : i32
    return %c0_i32, %c0_i32_0, %c0_i32_1 : i32, i32, i32
  }
  func.func @transform_2(%arg0: i32) -> (i32, i32, i32) {
    %c0_i32 = arith.constant 0 : i32
    %c0_i32_0 = arith.constant 0 : i32
    %c0_i32_1 = arith.constant 0 : i32
    return %arg0, %c0_i32, %c0_i32_0 : i32, i32, i32
  }
  func.func @transform_3(%arg0: i32) -> (i32, i32) {
    %c0_i32 = arith.constant 0 : i32
    %c0_i32_0 = arith.constant 0 : i32
    %c0_i32_1 = arith.constant 0 : i32
    return %c0_i32, %c0_i32_0 : i32, i32
  }
  func.func @transform_4(%arg0: i32) -> (i32, i32) {
    %c0_i32 = arith.constant 0 : i32
    %c0_i32_0 = arith.constant 0 : i32
    %c0_i32_1 = arith.constant 0 : i32
    return %c0_i32, %c0_i32_0 : i32, i32
  }
}

module attributes {stable_mosaic.version = 11 : i64} {
  func.func @_bn_relu_matmul_stats_kernel(%arg0: i32, %arg1: memref<256x128xf32, #tpu.memory_space<vmem>>, %arg2: memref<1x128xf32, #tpu.memory_space<vmem>>, %arg3: memref<1x128xf32, #tpu.memory_space<vmem>>, %arg4: memref<128x128xbf16, #tpu.memory_space<vmem>>, %arg5: memref<256x128xf32, #tpu.memory_space<vmem>>, %arg6: memref<1x128xf32, #tpu.memory_space<vmem>>, %arg7: memref<1x128xf32, #tpu.memory_space<vmem>>) attributes {dimension_semantics = [#tpu.dimension_semantics<arbitrary>], iteration_bounds = array<i64: 2>, scalar_prefetch = 0 : i64, scratch_operands = 0 : i64, tpu.core_type = #tpu.core_type<tc>, window_params = [{transform_indices = @transform_0, window_bounds = array<i64: 256, 128>}, {pipeline_mode = #tpu.pipeline_mode<synchronous>, transform_indices = @transform_1, window_bounds = array<i64: 1, 128>}, {pipeline_mode = #tpu.pipeline_mode<synchronous>, transform_indices = @transform_2, window_bounds = array<i64: 1, 128>}, {pipeline_mode = #tpu.pipeline_mode<synchronous>, transform_indices = @transform_3, window_bounds = array<i64: 128, 128>}, {transform_indices = @transform_4, window_bounds = array<i64: 256, 128>}, {pipeline_mode = #tpu.pipeline_mode<synchronous>, transform_indices = @transform_5, window_bounds = array<i64: 1, 128>}, {pipeline_mode = #tpu.pipeline_mode<synchronous>, transform_indices = @transform_6, window_bounds = array<i64: 1, 128>}]} {
    %c0_i32 = arith.constant 0 : i32
    %0 = arith.cmpi eq, %arg0, %c0_i32 : i32
    %1 = arith.extui %0 : i1 to i32
    %c0_i32_0 = arith.constant 0 : i32
    %2 = arith.cmpi ne, %1, %c0_i32_0 : i32
    scf.if %2 {
      %cst_21 = arith.constant 0.000000e+00 : f32
      %27 = vector.broadcast %cst_21 : f32 to vector<1x128xf32>
      %c0_22 = arith.constant 0 : index
      %c0_23 = arith.constant 0 : index
      %28 = vector.load %arg6[%c0_22, %c0_23] : memref<1x128xf32, #tpu.memory_space<vmem>>, vector<1x128xf32>
      tpu.vector_store %arg6[%c0_22, %c0_23], %27 {strides = array<i32>} : memref<1x128xf32, #tpu.memory_space<vmem>>, vector<1x128xf32>,
      %cst_24 = arith.constant 0.000000e+00 : f32
      %29 = vector.broadcast %cst_24 : f32 to vector<1x128xf32>
      %c0_25 = arith.constant 0 : index
      %c0_26 = arith.constant 0 : index
      %30 = vector.load %arg7[%c0_25, %c0_26] : memref<1x128xf32, #tpu.memory_space<vmem>>, vector<1x128xf32>
      tpu.vector_store %arg7[%c0_25, %c0_26], %29 {strides = array<i32>} : memref<1x128xf32, #tpu.memory_space<vmem>>, vector<1x128xf32>,
    } else {
    }
    %c0 = arith.constant 0 : index
    %c0_1 = arith.constant 0 : index
    %3 = vector.load %arg1[%c0, %c0_1] : memref<256x128xf32, #tpu.memory_space<vmem>>, vector<256x128xf32>
    %c0_2 = arith.constant 0 : index
    %c0_3 = arith.constant 0 : index
    %4 = vector.load %arg2[%c0_2, %c0_3] : memref<1x128xf32, #tpu.memory_space<vmem>>, vector<1x128xf32>
    %5 = vector.broadcast %4 : vector<1x128xf32> to vector<256x128xf32>
    %6 = arith.mulf %3, %5 : vector<256x128xf32>
    %c0_4 = arith.constant 0 : index
    %c0_5 = arith.constant 0 : index
    %7 = vector.load %arg3[%c0_4, %c0_5] : memref<1x128xf32, #tpu.memory_space<vmem>>, vector<1x128xf32>
    %8 = vector.broadcast %7 : vector<1x128xf32> to vector<256x128xf32>
    %9 = arith.addf %6, %8 : vector<256x128xf32>
    %cst = arith.constant 0.000000e+00 : f32
    %10 = vector.broadcast %cst : f32 to vector<256x128xf32>
    %11 = arith.maximumf %9, %10 : vector<256x128xf32>
    %12 = arith.truncf %11 : vector<256x128xf32> to vector<256x128xbf16>
    %c0_6 = arith.constant 0 : index
    %c0_7 = arith.constant 0 : index
    %13 = vector.load %arg4[%c0_6, %c0_7] : memref<128x128xbf16, #tpu.memory_space<vmem>>, vector<128x128xbf16>
    %cst_8 = arith.constant dense<0.000000e+00> : vector<256x128xf32>
    %14 = tpu.matmul %12, %13, %cst_8 {dimension_numbers = #tpu.dot_dimension_numbers<[1], [0], [0], [1], [0, 0, 1, 1], [], []>} : vector<256x128xbf16>, vector<128x128xbf16>, vector<256x128xf32> -> vector<256x128xf32>
    %c0_9 = arith.constant 0 : index
    %c0_10 = arith.constant 0 : index
    %15 = vector.load %arg5[%c0_9, %c0_10] : memref<256x128xf32, #tpu.memory_space<vmem>>, vector<256x128xf32>
    tpu.vector_store %arg5[%c0_9, %c0_10], %14 {strides = array<i32>} : memref<256x128xf32, #tpu.memory_space<vmem>>, vector<256x128xf32>,
    %c0_11 = arith.constant 0 : index
    %c0_12 = arith.constant 0 : index
    %16 = vector.load %arg6[%c0_11, %c0_12] : memref<1x128xf32, #tpu.memory_space<vmem>>, vector<1x128xf32>
    %cst_13 = arith.constant dense<0.000000e+00> : vector<128xf32>
    %17 = vector.multi_reduction <add>, %14, %cst_13 [0] : vector<256x128xf32> to vector<128xf32>
    %18 = vector.shape_cast %17 : vector<128xf32> to vector<1x128xf32>
    %19 = arith.addf %16, %18 : vector<1x128xf32>
    %c0_14 = arith.constant 0 : index
    %c0_15 = arith.constant 0 : index
    %20 = vector.load %arg6[%c0_14, %c0_15] : memref<1x128xf32, #tpu.memory_space<vmem>>, vector<1x128xf32>
    tpu.vector_store %arg6[%c0_14, %c0_15], %19 {strides = array<i32>} : memref<1x128xf32, #tpu.memory_space<vmem>>, vector<1x128xf32>,
    %c0_16 = arith.constant 0 : index
    %c0_17 = arith.constant 0 : index
    %21 = vector.load %arg7[%c0_16, %c0_17] : memref<1x128xf32, #tpu.memory_space<vmem>>, vector<1x128xf32>
    %22 = arith.mulf %14, %14 : vector<256x128xf32>
    %cst_18 = arith.constant dense<0.000000e+00> : vector<128xf32>
    %23 = vector.multi_reduction <add>, %22, %cst_18 [0] : vector<256x128xf32> to vector<128xf32>
    %24 = vector.shape_cast %23 : vector<128xf32> to vector<1x128xf32>
    %25 = arith.addf %21, %24 : vector<1x128xf32>
    %c0_19 = arith.constant 0 : index
    %c0_20 = arith.constant 0 : index
    %26 = vector.load %arg7[%c0_19, %c0_20] : memref<1x128xf32, #tpu.memory_space<vmem>>, vector<1x128xf32>
    tpu.vector_store %arg7[%c0_19, %c0_20], %25 {strides = array<i32>} : memref<1x128xf32, #tpu.memory_space<vmem>>, vector<1x128xf32>,
    return
  }
  func.func @transform_0(%arg0: i32) -> (i32, i32) {
    %c0_i32 = arith.constant 0 : i32
    %c0_i32_0 = arith.constant 0 : i32
    return %arg0, %c0_i32 : i32, i32
  }
  func.func @transform_1(%arg0: i32) -> (i32, i32) {
    %c0_i32 = arith.constant 0 : i32
    %c0_i32_0 = arith.constant 0 : i32
    %c0_i32_1 = arith.constant 0 : i32
    return %c0_i32, %c0_i32_0 : i32, i32
  }
  func.func @transform_2(%arg0: i32) -> (i32, i32) {
    %c0_i32 = arith.constant 0 : i32
    %c0_i32_0 = arith.constant 0 : i32
    %c0_i32_1 = arith.constant 0 : i32
    return %c0_i32, %c0_i32_0 : i32, i32
  }
  func.func @transform_3(%arg0: i32) -> (i32, i32) {
    %c0_i32 = arith.constant 0 : i32
    %c0_i32_0 = arith.constant 0 : i32
    %c0_i32_1 = arith.constant 0 : i32
    return %c0_i32, %c0_i32_0 : i32, i32
  }
  func.func @transform_4(%arg0: i32) -> (i32, i32) {
    %c0_i32 = arith.constant 0 : i32
    %c0_i32_0 = arith.constant 0 : i32
    return %arg0, %c0_i32 : i32, i32
  }
  func.func @transform_5(%arg0: i32) -> (i32, i32) {
    %c0_i32 = arith.constant 0 : i32
    %c0_i32_0 = arith.constant 0 : i32
    %c0_i32_1 = arith.constant 0 : i32
    return %c0_i32, %c0_i32_0 : i32, i32
  }
  func.func @transform_6(%arg0: i32) -> (i32, i32) {
    %c0_i32 = arith.constant 0 : i32
    %c0_i32_0 = arith.constant 0 : i32
    %c0_i32_1 = arith.constant 0 : i32
    return %c0_i32, %c0_i32_0 : i32, i32
  }
}

module attributes {stable_mosaic.version = 11 : i64} {
  func.func @_bn_add_relu_kernel(%arg0: i32, %arg1: memref<256x128xf32, #tpu.memory_space<vmem>>, %arg2: memref<1x128xf32, #tpu.memory_space<vmem>>, %arg3: memref<1x128xf32, #tpu.memory_space<vmem>>, %arg4: memref<256x128xf32, #tpu.memory_space<vmem>>, %arg5: memref<256x128xf32, #tpu.memory_space<vmem>>) attributes {dimension_semantics = [#tpu.dimension_semantics<parallel>], iteration_bounds = array<i64: 2>, scalar_prefetch = 0 : i64, scratch_operands = 0 : i64, tpu.core_type = #tpu.core_type<tc>, window_params = [{transform_indices = @transform_0, window_bounds = array<i64: 256, 128>}, {pipeline_mode = #tpu.pipeline_mode<synchronous>, transform_indices = @transform_1, window_bounds = array<i64: 1, 128>}, {pipeline_mode = #tpu.pipeline_mode<synchronous>, transform_indices = @transform_2, window_bounds = array<i64: 1, 128>}, {transform_indices = @transform_3, window_bounds = array<i64: 256, 128>}, {transform_indices = @transform_4, window_bounds = array<i64: 256, 128>}]} {
    %c0 = arith.constant 0 : index
    %c0_0 = arith.constant 0 : index
    %0 = vector.load %arg1[%c0, %c0_0] : memref<256x128xf32, #tpu.memory_space<vmem>>, vector<256x128xf32>
    %c0_1 = arith.constant 0 : index
    %c0_2 = arith.constant 0 : index
    %1 = vector.load %arg2[%c0_1, %c0_2] : memref<1x128xf32, #tpu.memory_space<vmem>>, vector<1x128xf32>
    %2 = vector.broadcast %1 : vector<1x128xf32> to vector<256x128xf32>
    %3 = arith.mulf %0, %2 : vector<256x128xf32>
    %c0_3 = arith.constant 0 : index
    %c0_4 = arith.constant 0 : index
    %4 = vector.load %arg3[%c0_3, %c0_4] : memref<1x128xf32, #tpu.memory_space<vmem>>, vector<1x128xf32>
    %5 = vector.broadcast %4 : vector<1x128xf32> to vector<256x128xf32>
    %6 = arith.addf %3, %5 : vector<256x128xf32>
    %c0_5 = arith.constant 0 : index
    %c0_6 = arith.constant 0 : index
    %7 = vector.load %arg4[%c0_5, %c0_6] : memref<256x128xf32, #tpu.memory_space<vmem>>, vector<256x128xf32>
    %8 = arith.addf %6, %7 : vector<256x128xf32>
    %cst = arith.constant 0.000000e+00 : f32
    %9 = vector.broadcast %cst : f32 to vector<256x128xf32>
    %10 = arith.maximumf %8, %9 : vector<256x128xf32>
    %c0_7 = arith.constant 0 : index
    %c0_8 = arith.constant 0 : index
    %11 = vector.load %arg5[%c0_7, %c0_8] : memref<256x128xf32, #tpu.memory_space<vmem>>, vector<256x128xf32>
    tpu.vector_store %arg5[%c0_7, %c0_8], %10 {strides = array<i32>} : memref<256x128xf32, #tpu.memory_space<vmem>>, vector<256x128xf32>,
    return
  }
  func.func @transform_0(%arg0: i32) -> (i32, i32) {
    %c0_i32 = arith.constant 0 : i32
    %c0_i32_0 = arith.constant 0 : i32
    return %arg0, %c0_i32 : i32, i32
  }
  func.func @transform_1(%arg0: i32) -> (i32, i32) {
    %c0_i32 = arith.constant 0 : i32
    %c0_i32_0 = arith.constant 0 : i32
    %c0_i32_1 = arith.constant 0 : i32
    return %c0_i32, %c0_i32_0 : i32, i32
  }
  func.func @transform_2(%arg0: i32) -> (i32, i32) {
    %c0_i32 = arith.constant 0 : i32
    %c0_i32_0 = arith.constant 0 : i32
    %c0_i32_1 = arith.constant 0 : i32
    return %c0_i32, %c0_i32_0 : i32, i32
  }
  func.func @transform_3(%arg0: i32) -> (i32, i32) {
    %c0_i32 = arith.constant 0 : i32
    %c0_i32_0 = arith.constant 0 : i32
    return %arg0, %c0_i32 : i32, i32
  }
  func.func @transform_4(%arg0: i32) -> (i32, i32) {
    %c0_i32 = arith.constant 0 : i32
    %c0_i32_0 = arith.constant 0 : i32
    return %arg0, %c0_i32 : i32, i32
  }
}

</mosaic_0001>

<llo_original>
// kernel: bottleneck_forward.6
$region0: #{bottleneck_forward.6}
  #allocation0 [shape = 'u32[]', space=smem, size = 0x4, offset = 0x4, fixed_abs, tag = 'smem constant byte address 0x4 - core index']
  #allocation1 [shape = 'u32[144,128]{1,0:T(1,128)}', space=vmem, size = 0x12000, scoped, tag = 'internal scratch']
  %s0 = inlined_call_operand.vmem [shape: f32[512,128], index: 0, kind: input, shape index: {}]
  %s1 = inlined_call_operand.vmem [shape: f32[1,128], index: 1, kind: input, shape index: {}]
  %s2 = inlined_call_operand.vmem [shape: f32[1,128], index: 2, kind: input, shape index: {}]
  %s3 = inlined_call_operand.vmem [shape: bf16[512,128], index: 3, kind: output, shape index: {}]
  %s4 = sld [smem:[#allocation0]]
  $region45: #{bottleneck_forward.6} parent=0
    _
  %s6 = ssub.s32 1, %s4
  %s7 = scalar_select 0, %s6, %s4
  loop: start=0, step=1, limit=4
  $region2: #{bottleneck_forward.6} parent=0 // loop_pre_header
    _
  $region3: #{bottleneck_forward.6} parent=0 // loop_header
    %s9 = sphi 0, %s13
    %p10 = scmp.ge.s32.totalorder %s9, 4
    %s19 = sphi 0, %s21
    %s22 = sphi 0, %s19
    %s23 = sphi 0, %s22
    %s39 = sphi 0, %s23
    %s43 = sphi 0, %s43
    %s45 = sphi 0, %s43
    %s46 = sphi 0, %s45
    %s60 = sphi 0, %s46
    %s64 = sphi 0, %s64
    %s66 = sphi 0, %s64
    %s67 = sphi 0, %s66
    %s81 = sphi 0, %s67
    %s87 = sphi 0, %s89
    %s90 = sphi 0, %s87
    %s91 = sphi 0, %s90
    %s107 = sphi 0, %s91
  $region4: #{bottleneck_forward.6} parent=0 // loop_header_branch
    %12 = sbr.rel (%p10) target = $region8
  $region5: #{bottleneck_forward.6} parent=0 // loop_body
    %s14 = ssub.s32 %s9, 1
    %s15 = ssub.s32 %s9, 2
    %s16 = sadd.s32 %s9, 1
    %s17 = ssub.s32 %s9, %s16
    %p18 = scmp.eq.s32.totalorder %s17, 0
    %s20 = sadd.s32 %s19, 1
    %s21 = scalar_select %p18, %s19, %s20
    %p24 = pneg %p18
    %p25 = scmp.eq.s32.totalorder %s9, 1
    %p26 = por %p24, %p25
    %p27 = scmp.ne.s32.totalorder %s19, %s22
    %p28 = scmp.eq.s32.totalorder %s9, 0
    %p29 = por %p27, %p28
    %p30 = scmp.ne.s32.totalorder %s19, %s22
    %p31 = scmp.eq.s32.totalorder %s14, 1
    %p32 = por %p30, %p31
    %p33 = scmp.ne.s32.totalorder %s22, %s23
    %p34 = scmp.eq.s32.totalorder %s14, 0
    %p35 = por %p33, %p34
    %p36 = scmp.ne.s32.totalorder %s22, %s23
    %p37 = scmp.eq.s32.totalorder %s15, 1
    %p38 = por %p36, %p37
    %p40 = scmp.ne.s32.totalorder %s23, %s39
    %p41 = scmp.eq.s32.totalorder %s15, 0
    %p42 = por %p40, %p41
    %s44 = sadd.s32 %s43, 1
    %p47 = scmp.eq.s32.totalorder %s9, 1
    %p48 = scmp.ne.s32.totalorder %s43, %s45
    %p49 = scmp.eq.s32.totalorder %s9, 0
    %p50 = por %p48, %p49
    %p51 = scmp.ne.s32.totalorder %s43, %s45
    %p52 = scmp.eq.s32.totalorder %s14, 1
    %p53 = por %p51, %p52
    %p54 = scmp.ne.s32.totalorder %s45, %s46
    %p55 = scmp.eq.s32.totalorder %s14, 0
    %p56 = por %p54, %p55
    %p57 = scmp.ne.s32.totalorder %s45, %s46
    %p58 = scmp.eq.s32.totalorder %s15, 1
    %p59 = por %p57, %p58
    %p61 = scmp.ne.s32.totalorder %s46, %s60
    %p62 = scmp.eq.s32.totalorder %s15, 0
    %p63 = por %p61, %p62
    %s65 = sadd.s32 %s64, 1
    %p68 = scmp.eq.s32.totalorder %s9, 1
    %p69 = scmp.ne.s32.totalorder %s64, %s66
    %p70 = scmp.eq.s32.totalorder %s9, 0
    %p71 = por %p69, %p70
    %p72 = scmp.ne.s32.totalorder %s64, %s66
    %p73 = scmp.eq.s32.totalorder %s14, 1
    %p74 = por %p72, %p73
    %p75 = scmp.ne.s32.totalorder %s66, %s67
    %p76 = scmp.eq.s32.totalorder %s14, 0
    %p77 = por %p75, %p76
    %p78 = scmp.ne.s32.totalorder %s66, %s67
    %p79 = scmp.eq.s32.totalorder %s15, 1
    %p80 = por %p78, %p79
    %p82 = scmp.ne.s32.totalorder %s67, %s81
    %p83 = scmp.eq.s32.totalorder %s15, 0
    %p84 = por %p82, %p83
    %s85 = ssub.s32 %s9, %s16
    %p86 = scmp.eq.s32.totalorder %s85, 0
    %s88 = sadd.s32 %s87, 1
    %s89 = scalar_select %p86, %s87, %s88
    %p92 = pneg %p86
    %p93 = scmp.eq.s32.totalorder %s9, 1
    %p94 = por %p92, %p93
    %p95 = scmp.ne.s32.totalorder %s87, %s90
    %p96 = scmp.eq.s32.totalorder %s9, 0
    %p97 = por %p95, %p96
    %p98 = scmp.ne.s32.totalorder %s87, %s90
    %p99 = scmp.eq.s32.totalorder %s14, 1
    %p100 = por %p98, %p99
    %p101 = scmp.ne.s32.totalorder %s90, %s91
    %p102 = scmp.eq.s32.totalorder %s14, 0
    %p103 = por %p101, %p102
    %p104 = scmp.ne.s32.totalorder %s90, %s91
    %p105 = scmp.eq.s32.totalorder %s15, 1
    %p106 = por %p104, %p105
    %p108 = scmp.ne.s32.totalorder %s91, %s107
    %p109 = scmp.eq.s32.totalorder %s15, 0
    %p110 = por %p108, %p109
    %p111 = scmp.le.s32.totalorder 1, %s9
    %p112 = scmp.lt.s32.totalorder %s9, 3
    %p113 = pnand %p111, %p112
    %p114 = pneg %p113
    // Predicated region
    $region9: #{bottleneck_forward.6} parent=5 // pred_check
      _
    $region10: #{bottleneck_forward.6} parent=5 // pred_check_branch
      %116 = sbr.rel (%p113) target = $region12
    $region11: #{bottleneck_forward.6} parent=5 // pred_region
      %s117 = ssub.s32 %s9, 1
      // Predicated region
      $region13: #{bottleneck_forward.6} parent=11 // pred_check
        %p118 = pneg %p56
      $region14: #{bottleneck_forward.6} parent=11 // pred_check_branch
        %120 = sbr.rel (%p118) target = $region16
      $region15: #{bottleneck_forward.6} parent=11 // pred_region
        _
      $region16: #{bottleneck_forward.6} parent=11 // pred_fallthru
        _
      // Predicated region
      $region17: #{bottleneck_forward.6} parent=11 // pred_check
        %p121 = pneg %p77
      $region18: #{bottleneck_forward.6} parent=11 // pred_check_branch
        %123 = sbr.rel (%p121) target = $region20
      $region19: #{bottleneck_forward.6} parent=11 // pred_region
        _
      $region20: #{bottleneck_forward.6} parent=11 // pred_fallthru
        _
    $region12: #{bottleneck_forward.6} parent=5 // pred_fallthru
      _
    %p124 = scmp.lt.s32.totalorder %s9, 2
    // Predicated region
    $region21: #{bottleneck_forward.6} parent=5 // pred_check
      %p125 = pneg %p124
    $region22: #{bottleneck_forward.6} parent=5 // pred_check_branch
      %127 = sbr.rel (%p125) target = $region24
    $region23: #{bottleneck_forward.6} parent=5 // pred_region
      // Predicated region
      $region25: #{bottleneck_forward.6} parent=23 // pred_check
        %p128 = pneg %p29
      $region26: #{bottleneck_forward.6} parent=23 // pred_check_branch
        %130 = sbr.rel (%p128) target = $region28
      $region27: #{bottleneck_forward.6} parent=23 // pred_region
        %s131 = smul.u32 32, %s9
        %p132 = scmp.lt.s32.totalorder %s131, 63
        %s133 = scalar_select %p132, %s131, 63
        %s134 = smul.addr %s133, 8
        %s135 = scalar_lea.vmem %s0, %s134
        %s136 = smul.u32 32, %s9
      $region28: #{bottleneck_forward.6} parent=23 // pred_fallthru
        _
    $region24: #{bottleneck_forward.6} parent=5 // pred_fallthru
      _
    %p137 = scmp.le.s32.totalorder 1, %s9
    %p138 = scmp.lt.s32.totalorder %s9, 3
    %p139 = pnand %p137, %p138
    %p140 = pneg %p139
    // Predicated region
    $region29: #{bottleneck_forward.6} parent=5 // pred_check
      _
    $region30: #{bottleneck_forward.6} parent=5 // pred_check_branch
      %142 = sbr.rel (%p139) target = $region32
    $region31: #{bottleneck_forward.6} parent=5 // pred_region
      %s143 = ssub.s32 %s9, 1
      %s144 = smul.u32 32, %s14
      %p145 = scmp.lt.s32.totalorder %s144, 63
      %s146 = scalar_select %p145, %s144, 63
      %s147 = smul.addr %s146, 8
      %s148 = scalar_lea.vmem %s0, %s147
      %p149 = pneg %p35
      %p150 = pneg %p32
      %p151 = pneg %p56
      %p152 = pneg %p53
      %p153 = pneg %p77
      %p154 = pneg %p74
      %p155 = pneg %p103
      %p156 = pneg %p100
      %s157 = smul.u32 32, %s14
      %p158 = scmp.lt.s32.totalorder %s157, 63
      %s159 = scalar_select %p158, %s157, 63
      %s160 = smul.addr %s159, 4
      %s161 = scalar_lea.vmem %s3, %s160
      %s162 = smul.u32 32, %s14
      %p163 = scmp.lt.s32.totalorder %s162, 63
      %s164 = scalar_select %p163, %s162, 63
      %s165 = smul.addr %s164, 8
      %s166 = scalar_lea.vmem %s0, %s165
      %s167 = smul.u32 32, %s14
      %s168 = smul.u32 32, %s14
      %p169 = scmp.lt.s32.totalorder %s168, 63
      %s170 = scalar_select %p169, %s168, 63
      %s171 = smul.addr %s170, 4
      %s172 = scalar_lea.vmem %s3, %s171
      %s173 = smul.u32 32, %s14
      %v174 = vld [vmem:[%s166] sm:$0xff]
      %v175 = vld [vmem:[%s166 + $0x8] sm:$0xff]
      %v176 = vld [vmem:[%s166 + $0x10] sm:$0xff]
      %v177 = vld [vmem:[%s166 + $0x18] sm:$0xff]
      %v178 = vld [vmem:[%s166 + $0x20] sm:$0xff]
      %v179 = vld [vmem:[%s166 + $0x28] sm:$0xff]
      %v180 = vld [vmem:[%s166 + $0x30] sm:$0xff]
      %v181 = vld [vmem:[%s166 + $0x38] sm:$0xff]
      %v182 = vld [vmem:[%s166 + $0x40] sm:$0xff]
      %v183 = vld [vmem:[%s166 + $0x48] sm:$0xff]
      %v184 = vld [vmem:[%s166 + $0x50] sm:$0xff]
      %v185 = vld [vmem:[%s166 + $0x58] sm:$0xff]
      %v186 = vld [vmem:[%s166 + $0x60] sm:$0xff]
      %v187 = vld [vmem:[%s166 + $0x68] sm:$0xff]
      %v188 = vld [vmem:[%s166 + $0x70] sm:$0xff]
      %v189 = vld [vmem:[%s166 + $0x78] sm:$0xff]
      %v190 = vld [vmem:[%s166 + $0x80] sm:$0xff]
      %v191 = vld [vmem:[%s166 + $0x88] sm:$0xff]
      %v192 = vld [vmem:[%s166 + $0x90] sm:$0xff]
      %v193 = vld [vmem:[%s166 + $0x98] sm:$0xff]
      %v194 = vld [vmem:[%s166 + $0xa0] sm:$0xff]
      %v195 = vld [vmem:[%s166 + $0xa8] sm:$0xff]
      %v196 = vld [vmem:[%s166 + $0xb0] sm:$0xff]
      %v197 = vld [vmem:[%s166 + $0xb8] sm:$0xff]
      %v198 = vld [vmem:[%s166 + $0xc0] sm:$0xff]
      %v199 = vld [vmem:[%s166 + $0xc8] sm:$0xff]
      %v200 = vld [vmem:[%s166 + $0xd0] sm:$0xff]
      %v201 = vld [vmem:[%s166 + $0xd8] sm:$0xff]
      %v202 = vld [vmem:[%s166 + $0xe0] sm:$0xff]
      %v203 = vld [vmem:[%s166 + $0xe8] sm:$0xff]
      %v204 = vld [vmem:[%s166 + $0xf0] sm:$0xff]
      %v205 = vld [vmem:[%s166 + $0xf8] sm:$0xff]
      %v206 = vld [vmem:[%s1] sm:$0x1]
      %v208 = vlaneseq
      %v209 = vshrl.u32 %v208, 7
      %v210 = vsub.s32 0, %v209
      %v211 = vrot.slane %v206, %v210
      %v213 = vmul.f32 %v174, %v211
      %v214 = vmul.f32 %v175, %v211
      %v215 = vmul.f32 %v176, %v211
      %v216 = vmul.f32 %v177, %v211
      %v217 = vmul.f32 %v178, %v211
      %v218 = vmul.f32 %v179, %v211
      %v219 = vmul.f32 %v180, %v211
      %v220 = vmul.f32 %v181, %v211
      %v221 = vmul.f32 %v182, %v211
      %v222 = vmul.f32 %v183, %v211
      %v223 = vmul.f32 %v184, %v211
      %v224 = vmul.f32 %v185, %v211
      %v225 = vmul.f32 %v186, %v211
      %v226 = vmul.f32 %v187, %v211
      %v227 = vmul.f32 %v188, %v211
      %v228 = vmul.f32 %v189, %v211
      %v229 = vmul.f32 %v190, %v211
      %v230 = vmul.f32 %v191, %v211
      %v231 = vmul.f32 %v192, %v211
      %v232 = vmul.f32 %v193, %v211
      %v233 = vmul.f32 %v194, %v211
      %v234 = vmul.f32 %v195, %v211
      %v235 = vmul.f32 %v196, %v211
      %v236 = vmul.f32 %v197, %v211
      %v237 = vmul.f32 %v198, %v211
      %v238 = vmul.f32 %v199, %v211
      %v239 = vmul.f32 %v200, %v211
      %v240 = vmul.f32 %v201, %v211
      %v241 = vmul.f32 %v202, %v211
      %v242 = vmul.f32 %v203, %v211
      %v243 = vmul.f32 %v204, %v211
      %v244 = vmul.f32 %v205, %v211
      %v245 = vld [vmem:[%s2] sm:$0x1]
      %v247 = vlaneseq
      %v248 = vshrl.u32 %v247, 7
      %v249 = vsub.s32 0, %v248
      %v250 = vrot.slane %v245, %v249
      %v252 = vadd.f32 %v213, %v250
      %v253 = vadd.f32 %v214, %v250
      %v254 = vadd.f32 %v215, %v250
      %v255 = vadd.f32 %v216, %v250
      %v256 = vadd.f32 %v217, %v250
      %v257 = vadd.f32 %v218, %v250
      %v258 = vadd.f32 %v219, %v250
      %v259 = vadd.f32 %v220, %v250
      %v260 = vadd.f32 %v221, %v250
      %v261 = vadd.f32 %v222, %v250
      %v262 = vadd.f32 %v223, %v250
      %v263 = vadd.f32 %v224, %v250
      %v264 = vadd.f32 %v225, %v250
      %v265 = vadd.f32 %v226, %v250
      %v266 = vadd.f32 %v227, %v250
      %v267 = vadd.f32 %v228, %v250
      %v268 = vadd.f32 %v229, %v250
      %v269 = vadd.f32 %v230, %v250
      %v270 = vadd.f32 %v231, %v250
      %v271 = vadd.f32 %v232, %v250
      %v272 = vadd.f32 %v233, %v250
      %v273 = vadd.f32 %v234, %v250
      %v274 = vadd.f32 %v235, %v250
      %v275 = vadd.f32 %v236, %v250
      %v276 = vadd.f32 %v237, %v250
      %v277 = vadd.f32 %v238, %v250
      %v278 = vadd.f32 %v239, %v250
      %v279 = vadd.f32 %v240, %v250
      %v280 = vadd.f32 %v241, %v250
      %v281 = vadd.f32 %v242, %v250
      %v282 = vadd.f32 %v243, %v250
      %v283 = vadd.f32 %v244, %v250
      %v284 = vmax.f32 %v252, 0.0
      %v285 = vmax.f32 %v253, 0.0
      %v286 = vmax.f32 %v254, 0.0
      %v287 = vmax.f32 %v255, 0.0
      %v288 = vmax.f32 %v256, 0.0
      %v289 = vmax.f32 %v257, 0.0
      %v290 = vmax.f32 %v258, 0.0
      %v291 = vmax.f32 %v259, 0.0
      %v292 = vmax.f32 %v260, 0.0
      %v293 = vmax.f32 %v261, 0.0
      %v294 = vmax.f32 %v262, 0.0
      %v295 = vmax.f32 %v263, 0.0
      %v296 = vmax.f32 %v264, 0.0
      %v297 = vmax.f32 %v265, 0.0
      %v298 = vmax.f32 %v266, 0.0
      %v299 = vmax.f32 %v267, 0.0
      %v300 = vmax.f32 %v268, 0.0
      %v301 = vmax.f32 %v269, 0.0
      %v302 = vmax.f32 %v270, 0.0
      %v303 = vmax.f32 %v271, 0.0
      %v304 = vmax.f32 %v272, 0.0
      %v305 = vmax.f32 %v273, 0.0
      %v306 = vmax.f32 %v274, 0.0
      %v307 = vmax.f32 %v275, 0.0
      %v308 = vmax.f32 %v276, 0.0
      %v309 = vmax.f32 %v277, 0.0
      %v310 = vmax.f32 %v278, 0.0
      %v311 = vmax.f32 %v279, 0.0
      %v312 = vmax.f32 %v280, 0.0
      %v313 = vmax.f32 %v281, 0.0
      %v314 = vmax.f32 %v282, 0.0
      %v315 = vmax.f32 %v283, 0.0
      %v316 = vpack.c.bf16 %v285, %v284
      %v317 = vpack.c.bf16 %v287, %v286
      %v318 = vpack.c.bf16 %v289, %v288
      %v319 = vpack.c.bf16 %v291, %v290
      %v320 = vpack.c.bf16 %v293, %v292
      %v321 = vpack.c.bf16 %v295, %v294
      %v322 = vpack.c.bf16 %v297, %v296
      %v323 = vpack.c.bf16 %v299, %v298
      %v324 = vpack.c.bf16 %v301, %v300
      %v325 = vpack.c.bf16 %v303, %v302
      %v326 = vpack.c.bf16 %v305, %v304
      %v327 = vpack.c.bf16 %v307, %v306
      %v328 = vpack.c.bf16 %v309, %v308
      %v329 = vpack.c.bf16 %v311, %v310
      %v330 = vpack.c.bf16 %v313, %v312
      %v331 = vpack.c.bf16 %v315, %v314
      %v348 = vunpack.c.l.b16 %v316
      %v349 = vunpack.c.h.b16 %v316
      %v350 = vunpack.c.l.b16 %v317
      %v351 = vunpack.c.h.b16 %v317
      %v352 = vunpack.c.l.b16 %v318
      %v353 = vunpack.c.h.b16 %v318
      %v354 = vunpack.c.l.b16 %v319
      %v355 = vunpack.c.h.b16 %v319
      %v356 = vunpack.c.l.b16 %v320
      %v357 = vunpack.c.h.b16 %v320
      %v358 = vunpack.c.l.b16 %v321
      %v359 = vunpack.c.h.b16 %v321
      %v360 = vunpack.c.l.b16 %v322
      %v361 = vunpack.c.h.b16 %v322
      %v362 = vunpack.c.l.b16 %v323
      %v363 = vunpack.c.h.b16 %v323
      %v364 = vunpack.c.l.b16 %v324
      %v365 = vunpack.c.h.b16 %v324
      %v366 = vunpack.c.l.b16 %v325
      %v367 = vunpack.c.h.b16 %v325
      %v368 = vunpack.c.l.b16 %v326
      %v369 = vunpack.c.h.b16 %v326
      %v370 = vunpack.c.l.b16 %v327
      %v371 = vunpack.c.h.b16 %v327
      %v372 = vunpack.c.l.b16 %v328
      %v373 = vunpack.c.h.b16 %v328
      %v374 = vunpack.c.l.b16 %v329
      %v375 = vunpack.c.h.b16 %v329
      %v376 = vunpack.c.l.b16 %v330
      %v377 = vunpack.c.h.b16 %v330
      %v378 = vunpack.c.l.b16 %v331
      %v379 = vunpack.c.h.b16 %v331
      %v380 = vpack.c.b16 %v348, %v348
      %v381 = vpack.c.b16 %v349, %v349
      %v382 = vpack.c.b16 %v350, %v350
      %v383 = vpack.c.b16 %v351, %v351
      %v384 = vpack.c.b16 %v352, %v352
      %v385 = vpack.c.b16 %v353, %v353
      %v386 = vpack.c.b16 %v354, %v354
      %v387 = vpack.c.b16 %v355, %v355
      %v388 = vpack.c.b16 %v356, %v356
      %v389 = vpack.c.b16 %v357, %v357
      %v390 = vpack.c.b16 %v358, %v358
      %v391 = vpack.c.b16 %v359, %v359
      %v392 = vpack.c.b16 %v360, %v360
      %v393 = vpack.c.b16 %v361, %v361
      %v394 = vpack.c.b16 %v362, %v362
      %v395 = vpack.c.b16 %v363, %v363
      %v396 = vpack.c.b16 %v364, %v364
      %v397 = vpack.c.b16 %v365, %v365
      %v398 = vpack.c.b16 %v366, %v366
      %v399 = vpack.c.b16 %v367, %v367
      %v400 = vpack.c.b16 %v368, %v368
      %v401 = vpack.c.b16 %v369, %v369
      %v402 = vpack.c.b16 %v370, %v370
      %v403 = vpack.c.b16 %v371, %v371
      %v404 = vpack.c.b16 %v372, %v372
      %v405 = vpack.c.b16 %v373, %v373
      %v406 = vpack.c.b16 %v374, %v374
      %v407 = vpack.c.b16 %v375, %v375
      %v408 = vpack.c.b16 %v376, %v376
      %v409 = vpack.c.b16 %v377, %v377
      %v410 = vpack.c.b16 %v378, %v378
      %v411 = vpack.c.b16 %v379, %v379
      %444 = vst [vmem:[%s172] sm:$0xf] %v380
      %445 = vst [vmem:[%s172 + $0x4] sm:$0xf] %v381
      %446 = vst [vmem:[%s172 + $0x8] sm:$0xf] %v382
      %447 = vst [vmem:[%s172 + $0xc] sm:$0xf] %v383
      %448 = vst [vmem:[%s172 + $0x10] sm:$0xf] %v384
      %449 = vst [vmem:[%s172 + $0x14] sm:$0xf] %v385
      %450 = vst [vmem:[%s172 + $0x18] sm:$0xf] %v386
      %451 = vst [vmem:[%s172 + $0x1c] sm:$0xf] %v387
      %452 = vst [vmem:[%s172 + $0x20] sm:$0xf] %v388
      %453 = vst [vmem:[%s172 + $0x24] sm:$0xf] %v389
      %454 = vst [vmem:[%s172 + $0x28] sm:$0xf] %v390
      %455 = vst [vmem:[%s172 + $0x2c] sm:$0xf] %v391
      %456 = vst [vmem:[%s172 + $0x30] sm:$0xf] %v392
      %457 = vst [vmem:[%s172 + $0x34] sm:$0xf] %v393
      %458 = vst [vmem:[%s172 + $0x38] sm:$0xf] %v394
      %459 = vst [vmem:[%s172 + $0x3c] sm:$0xf] %v395
      %460 = vst [vmem:[%s172 + $0x40] sm:$0xf] %v396
      %461 = vst [vmem:[%s172 + $0x44] sm:$0xf] %v397
      %462 = vst [vmem:[%s172 + $0x48] sm:$0xf] %v398
      %463 = vst [vmem:[%s172 + $0x4c] sm:$0xf] %v399
      %464 = vst [vmem:[%s172 + $0x50] sm:$0xf] %v400
      %465 = vst [vmem:[%s172 + $0x54] sm:$0xf] %v401
      %466 = vst [vmem:[%s172 + $0x58] sm:$0xf] %v402
      %467 = vst [vmem:[%s172 + $0x5c] sm:$0xf] %v403
      %468 = vst [vmem:[%s172 + $0x60] sm:$0xf] %v404
      %469 = vst [vmem:[%s172 + $0x64] sm:$0xf] %v405
      %470 = vst [vmem:[%s172 + $0x68] sm:$0xf] %v406
      %471 = vst [vmem:[%s172 + $0x6c] sm:$0xf] %v407
      %472 = vst [vmem:[%s172 + $0x70] sm:$0xf] %v408
      %473 = vst [vmem:[%s172 + $0x74] sm:$0xf] %v409
      %474 = vst [vmem:[%s172 + $0x78] sm:$0xf] %v410
      %475 = vst [vmem:[%s172 + $0x7c] sm:$0xf] %v411
      %s476 = smul.u32 32, %s14
      %p477 = scmp.lt.s32.totalorder %s476, 63
      %s478 = scalar_select %p477, %s476, 63
      %s479 = smul.addr %s478, 4
      %s480 = scalar_lea.vmem %s3, %s479
      // Predicated region
      $region33: #{bottleneck_forward.6} parent=31 // pred_check
        %p481 = pneg %p100
      $region34: #{bottleneck_forward.6} parent=31 // pred_check_branch
        %483 = sbr.rel (%p481) target = $region36
      $region35: #{bottleneck_forward.6} parent=31 // pred_region
        %s484 = smul.u32 32, %s14
      $region36: #{bottleneck_forward.6} parent=31 // pred_fallthru
        _
    $region32: #{bottleneck_forward.6} parent=5 // pred_fallthru
      _
    %p485 = scmp.le.s32.totalorder 2, %s9
    // Predicated region
    $region37: #{bottleneck_forward.6} parent=5 // pred_check
      %p486 = pneg %p485
    $region38: #{bottleneck_forward.6} parent=5 // pred_check_branch
      %488 = sbr.rel (%p486) target = $region40
    $region39: #{bottleneck_forward.6} parent=5 // pred_region
      %s489 = ssub.s32 %s9, 2
      // Predicated region
      $region41: #{bottleneck_forward.6} parent=39 // pred_check
        %p490 = pneg %p106
      $region42: #{bottleneck_forward.6} parent=39 // pred_check_branch
        %492 = sbr.rel (%p490) target = $region44
      $region43: #{bottleneck_forward.6} parent=39 // pred_region
        %s493 = smul.u32 32, %s15
        %p494 = scmp.lt.s32.totalorder %s493, 63
        %s495 = scalar_select %p494, %s493, 63
        %s496 = smul.addr %s495, 4
        %s497 = scalar_lea.vmem %s3, %s496
      $region44: #{bottleneck_forward.6} parent=39 // pred_fallthru
        _
    $region40: #{bottleneck_forward.6} parent=5 // pred_fallthru
      _
  $region6: #{bottleneck_forward.6} parent=0 // loop_footer
    %s13 = sadd.s32 1, %s9
  $region7: #{bottleneck_forward.6} parent=0 // loop_footer_branch
    %8 = sbr.rel target = $region3
  $region8: #{bottleneck_forward.6} parent=0 // loop_exit
    _

// kernel: bottleneck_forward.5
$region0: #{bottleneck_forward.5}
  #allocation0 [shape = 'u32[]', space=smem, size = 0x4, offset = 0x4, fixed_abs, tag = 'smem constant byte address 0x4 - core index']
  #allocation1 [shape = 'u32[144,128]{1,0:T(1,128)}', space=vmem, size = 0x12000, scoped, tag = 'internal scratch']
  %s0 = inlined_call_operand.vmem [shape: bf16[512,128], index: 0, kind: input, shape index: {}]
  %s1 = inlined_call_operand.vmem [shape: bf16[128,128], index: 1, kind: input, shape index: {}]
  %s2 = inlined_call_operand.vmem [shape: f32[512,128], index: 2, kind: output, shape index: {0}]
  %s3 = inlined_call_operand.vmem [shape: f32[1,128], index: 3, kind: output, shape index: {1}]
  %s4 = inlined_call_operand.vmem [shape: f32[1,128], index: 4, kind: output, shape index: {2}]
  %5 = xla_tuple %s2, %s3, %s4
  %s6 = sld [smem:[#allocation0]]
  $region61: #{bottleneck_forward.5} parent=0
    _
  %s8 = ssub.s32 1, %s6
  %s9 = scalar_select 0, %s8, %s6
  loop: start=0, step=1, limit=4
  $region2: #{bottleneck_forward.5} parent=0 // loop_pre_header
    _
  $region3: #{bottleneck_forward.5} parent=0 // loop_header
    %s11 = sphi 0, %s15
    %p12 = scmp.ge.s32.totalorder %s11, 4
    %s21 = sphi 0, %s23
    %s24 = sphi 0, %s21
    %s25 = sphi 0, %s24
    %s41 = sphi 0, %s25
    %s45 = sphi 0, %s45
    %s47 = sphi 0, %s45
    %s48 = sphi 0, %s47
    %s62 = sphi 0, %s48
    %s68 = sphi 0, %s70
    %s71 = sphi 0, %s68
    %s72 = sphi 0, %s71
    %s88 = sphi 0, %s72
    %s92 = sphi 0, %s92
    %s94 = sphi 0, %s92
    %s95 = sphi 0, %s94
    %s109 = sphi 0, %s95
    %s113 = sphi 0, %s113
    %s115 = sphi 0, %s113
    %s116 = sphi 0, %s115
    %s130 = sphi 0, %s116
  $region4: #{bottleneck_forward.5} parent=0 // loop_header_branch
    %14 = sbr.rel (%p12) target = $region8
  $region5: #{bottleneck_forward.5} parent=0 // loop_body
    %s16 = ssub.s32 %s11, 1
    %s17 = ssub.s32 %s11, 2
    %s18 = sadd.s32 %s11, 1
    %s19 = ssub.s32 %s11, %s18
    %p20 = scmp.eq.s32.totalorder %s19, 0
    %s22 = sadd.s32 %s21, 1
    %s23 = scalar_select %p20, %s21, %s22
    %p26 = pneg %p20
    %p27 = scmp.eq.s32.totalorder %s11, 1
    %p28 = por %p26, %p27
    %p29 = scmp.ne.s32.totalorder %s21, %s24
    %p30 = scmp.eq.s32.totalorder %s11, 0
    %p31 = por %p29, %p30
    %p32 = scmp.ne.s32.totalorder %s21, %s24
    %p33 = scmp.eq.s32.totalorder %s16, 1
    %p34 = por %p32, %p33
    %p35 = scmp.ne.s32.totalorder %s24, %s25
    %p36 = scmp.eq.s32.totalorder %s16, 0
    %p37 = por %p35, %p36
    %p38 = scmp.ne.s32.totalorder %s24, %s25
    %p39 = scmp.eq.s32.totalorder %s17, 1
    %p40 = por %p38, %p39
    %p42 = scmp.ne.s32.totalorder %s25, %s41
    %p43 = scmp.eq.s32.totalorder %s17, 0
    %p44 = por %p42, %p43
    %s46 = sadd.s32 %s45, 1
    %p49 = scmp.eq.s32.totalorder %s11, 1
    %p50 = scmp.ne.s32.totalorder %s45, %s47
    %p51 = scmp.eq.s32.totalorder %s11, 0
    %p52 = por %p50, %p51
    %p53 = scmp.ne.s32.totalorder %s45, %s47
    %p54 = scmp.eq.s32.totalorder %s16, 1
    %p55 = por %p53, %p54
    %p56 = scmp.ne.s32.totalorder %s47, %s48
    %p57 = scmp.eq.s32.totalorder %s16, 0
    %p58 = por %p56, %p57
    %p59 = scmp.ne.s32.totalorder %s47, %s48
    %p60 = scmp.eq.s32.totalorder %s17, 1
    %p61 = por %p59, %p60
    %p63 = scmp.ne.s32.totalorder %s48, %s62
    %p64 = scmp.eq.s32.totalorder %s17, 0
    %p65 = por %p63, %p64
    %s66 = ssub.s32 %s11, %s18
    %p67 = scmp.eq.s32.totalorder %s66, 0
    %s69 = sadd.s32 %s68, 1
    %s70 = scalar_select %p67, %s68, %s69
    %p73 = pneg %p67
    %p74 = scmp.eq.s32.totalorder %s11, 1
    %p75 = por %p73, %p74
    %p76 = scmp.ne.s32.totalorder %s68, %s71
    %p77 = scmp.eq.s32.totalorder %s11, 0
    %p78 = por %p76, %p77
    %p79 = scmp.ne.s32.totalorder %s68, %s71
    %p80 = scmp.eq.s32.totalorder %s16, 1
    %p81 = por %p79, %p80
    %p82 = scmp.ne.s32.totalorder %s71, %s72
    %p83 = scmp.eq.s32.totalorder %s16, 0
    %p84 = por %p82, %p83
    %p85 = scmp.ne.s32.totalorder %s71, %s72
    %p86 = scmp.eq.s32.totalorder %s17, 1
    %p87 = por %p85, %p86
    %p89 = scmp.ne.s32.totalorder %s72, %s88
    %p90 = scmp.eq.s32.totalorder %s17, 0
    %p91 = por %p89, %p90
    %s93 = sadd.s32 %s92, 1
    %p96 = scmp.eq.s32.totalorder %s11, 1
    %p97 = scmp.ne.s32.totalorder %s92, %s94
    %p98 = scmp.eq.s32.totalorder %s11, 0
    %p99 = por %p97, %p98
    %p100 = scmp.ne.s32.totalorder %s92, %s94
    %p101 = scmp.eq.s32.totalorder %s16, 1
    %p102 = por %p100, %p101
    %p103 = scmp.ne.s32.totalorder %s94, %s95
    %p104 = scmp.eq.s32.totalorder %s16, 0
    %p105 = por %p103, %p104
    %p106 = scmp.ne.s32.totalorder %s94, %s95
    %p107 = scmp.eq.s32.totalorder %s17, 1
    %p108 = por %p106, %p107
    %p110 = scmp.ne.s32.totalorder %s95, %s109
    %p111 = scmp.eq.s32.totalorder %s17, 0
    %p112 = por %p110, %p111
    %s114 = sadd.s32 %s113, 1
    %p117 = scmp.eq.s32.totalorder %s11, 1
    %p118 = scmp.ne.s32.totalorder %s113, %s115
    %p119 = scmp.eq.s32.totalorder %s11, 0
    %p120 = por %p118, %p119
    %p121 = scmp.ne.s32.totalorder %s113, %s115
    %p122 = scmp.eq.s32.totalorder %s16, 1
    %p123 = por %p121, %p122
    %p124 = scmp.ne.s32.totalorder %s115, %s116
    %p125 = scmp.eq.s32.totalorder %s16, 0
    %p126 = por %p124, %p125
    %p127 = scmp.ne.s32.totalorder %s115, %s116
    %p128 = scmp.eq.s32.totalorder %s17, 1
    %p129 = por %p127, %p128
    %p131 = scmp.ne.s32.totalorder %s116, %s130
    %p132 = scmp.eq.s32.totalorder %s17, 0
    %p133 = por %p131, %p132
    %p134 = scmp.le.s32.totalorder 1, %s11
    %p135 = scmp.lt.s32.totalorder %s11, 3
    %p136 = pnand %p134, %p135
    %p137 = pneg %p136
    // Predicated region
    $region9: #{bottleneck_forward.5} parent=5 // pred_check
      _
    $region10: #{bottleneck_forward.5} parent=5 // pred_check_branch
      %139 = sbr.rel (%p136) target = $region12
    $region11: #{bottleneck_forward.5} parent=5 // pred_region
      %s140 = ssub.s32 %s11, 1
      // Predicated region
      $region13: #{bottleneck_forward.5} parent=11 // pred_check
        %p141 = pneg %p58
      $region14: #{bottleneck_forward.5} parent=11 // pred_check_branch
        %143 = sbr.rel (%p141) target = $region16
      $region15: #{bottleneck_forward.5} parent=11 // pred_region
        _
      $region16: #{bottleneck_forward.5} parent=11 // pred_fallthru
        _
    $region12: #{bottleneck_forward.5} parent=5 // pred_fallthru
      _
    %p144 = scmp.lt.s32.totalorder %s11, 2
    // Predicated region
    $region17: #{bottleneck_forward.5} parent=5 // pred_check
      %p145 = pneg %p144
    $region18: #{bottleneck_forward.5} parent=5 // pred_check_branch
      %147 = sbr.rel (%p145) target = $region20
    $region19: #{bottleneck_forward.5} parent=5 // pred_region
      // Predicated region
      $region21: #{bottleneck_forward.5} parent=19 // pred_check
        %p148 = pneg %p31
      $region22: #{bottleneck_forward.5} parent=19 // pred_check_branch
        %150 = sbr.rel (%p148) target = $region24
      $region23: #{bottleneck_forward.5} parent=19 // pred_region
        %s151 = smul.u32 32, %s11
        %p152 = scmp.lt.s32.totalorder %s151, 63
        %s153 = scalar_select %p152, %s151, 63
        %s154 = smul.addr %s153, 4
        %s155 = scalar_lea.vmem %s0, %s154
        %s156 = smul.u32 32, %s11
      $region24: #{bottleneck_forward.5} parent=19 // pred_fallthru
        _
    $region20: #{bottleneck_forward.5} parent=5 // pred_fallthru
      _
    %p157 = scmp.le.s32.totalorder 1, %s11
    %p158 = scmp.lt.s32.totalorder %s11, 3
    %p159 = pnand %p157, %p158
    %p160 = pneg %p159
    // Predicated region
    $region25: #{bottleneck_forward.5} parent=5 // pred_check
      _
    $region26: #{bottleneck_forward.5} parent=5 // pred_check_branch
      %162 = sbr.rel (%p159) target = $region28
    $region27: #{bottleneck_forward.5} parent=5 // pred_region
      %s163 = ssub.s32 %s11, 1
      %s164 = smul.u32 32, %s16
      %p165 = scmp.lt.s32.totalorder %s164, 63
      %s166 = scalar_select %p165, %s164, 63
      %s167 = smul.addr %s166, 4
      %s168 = scalar_lea.vmem %s0, %s167
      %p169 = pneg %p37
      %p170 = pneg %p34
      %p171 = pneg %p58
      %p172 = pneg %p55
      %p173 = pneg %p84
      %p174 = pneg %p81
      %s175 = smul.u32 32, %s16
      %p176 = scmp.lt.s32.totalorder %s175, 63
      %s177 = scalar_select %p176, %s175, 63
      %s178 = smul.addr %s177, 8
      %s179 = scalar_lea.vmem %s2, %s178
      %p180 = pneg %p105
      %p181 = pneg %p102
      %p182 = pneg %p126
      %p183 = pneg %p123
      %s184 = smul.u32 32, %s16
      %p185 = scmp.lt.s32.totalorder %s184, 63
      %s186 = scalar_select %p185, %s184, 63
      %s187 = smul.addr %s186, 4
      %s188 = scalar_lea.vmem %s0, %s187
      %s189 = smul.u32 32, %s16
      %s190 = smul.u32 32, %s16
      %p191 = scmp.lt.s32.totalorder %s190, 63
      %s192 = scalar_select %p191, %s190, 63
      %s193 = smul.addr %s192, 8
      %s194 = scalar_lea.vmem %s2, %s193
      %s195 = smul.u32 32, %s16
      %p197 = scmp.eq.s32.totalorder %s16, 0
      // Predicated region
      $region29: #{bottleneck_forward.5} parent=27 // pred_check
        %p198 = pneg %p197
      $region30: #{bottleneck_forward.5} parent=27 // pred_check_branch
        %200 = sbr.rel (%p198) target = $region32
      $region31: #{bottleneck_forward.5} parent=27 // pred_region
        %201 = vst [vmem:[%s3] sm:$0x1] 0.0
        %202 = vst [vmem:[%s4] sm:$0x1] 0.0
      $region32: #{bottleneck_forward.5} parent=27 // pred_fallthru
        _
      %v203 = vld [vmem:[%s188] sm:$0xf]
      %v204 = vld [vmem:[%s188 + $0x4] sm:$0xf]
      %v205 = vld [vmem:[%s188 + $0x8] sm:$0xf]
      %v206 = vld [vmem:[%s188 + $0xc] sm:$0xf]
      %v207 = vld [vmem:[%s188 + $0x10] sm:$0xf]
      %v208 = vld [vmem:[%s188 + $0x14] sm:$0xf]
      %v209 = vld [vmem:[%s188 + $0x18] sm:$0xf]
      %v210 = vld [vmem:[%s188 + $0x1c] sm:$0xf]
      %v211 = vld [vmem:[%s188 + $0x20] sm:$0xf]
      %v212 = vld [vmem:[%s188 + $0x24] sm:$0xf]
      %v213 = vld [vmem:[%s188 + $0x28] sm:$0xf]
      %v214 = vld [vmem:[%s188 + $0x2c] sm:$0xf]
      %v215 = vld [vmem:[%s188 + $0x30] sm:$0xf]
      %v216 = vld [vmem:[%s188 + $0x34] sm:$0xf]
      %v217 = vld [vmem:[%s188 + $0x38] sm:$0xf]
      %v218 = vld [vmem:[%s188 + $0x3c] sm:$0xf]
      %v219 = vld [vmem:[%s188 + $0x40] sm:$0xf]
      %v220 = vld [vmem:[%s188 + $0x44] sm:$0xf]
      %v221 = vld [vmem:[%s188 + $0x48] sm:$0xf]
      %v222 = vld [vmem:[%s188 + $0x4c] sm:$0xf]
      %v223 = vld [vmem:[%s188 + $0x50] sm:$0xf]
      %v224 = vld [vmem:[%s188 + $0x54] sm:$0xf]
      %v225 = vld [vmem:[%s188 + $0x58] sm:$0xf]
      %v226 = vld [vmem:[%s188 + $0x5c] sm:$0xf]
      %v227 = vld [vmem:[%s188 + $0x60] sm:$0xf]
      %v228 = vld [vmem:[%s188 + $0x64] sm:$0xf]
      %v229 = vld [vmem:[%s188 + $0x68] sm:$0xf]
      %v230 = vld [vmem:[%s188 + $0x6c] sm:$0xf]
      %v231 = vld [vmem:[%s188 + $0x70] sm:$0xf]
      %v232 = vld [vmem:[%s188 + $0x74] sm:$0xf]
      %v233 = vld [vmem:[%s188 + $0x78] sm:$0xf]
      %v234 = vld [vmem:[%s188 + $0x7c] sm:$0xf]
      %v235 = vld [vmem:[%s1] sm:$0xf]
      %v236 = vld [vmem:[%s1 + $0x4] sm:$0xf]
      %v237 = vld [vmem:[%s1 + $0x8] sm:$0xf]
      %v238 = vld [vmem:[%s1 + $0xc] sm:$0xf]
      %v239 = vld [vmem:[%s1 + $0x10] sm:$0xf]
      %v240 = vld [vmem:[%s1 + $0x14] sm:$0xf]
      %v241 = vld [vmem:[%s1 + $0x18] sm:$0xf]
      %v242 = vld [vmem:[%s1 + $0x1c] sm:$0xf]
      %v243 = vld [vmem:[%s1 + $0x20] sm:$0xf]
      %v244 = vld [vmem:[%s1 + $0x24] sm:$0xf]
      %v245 = vld [vmem:[%s1 + $0x28] sm:$0xf]
      %v246 = vld [vmem:[%s1 + $0x2c] sm:$0xf]
      %v247 = vld [vmem:[%s1 + $0x30] sm:$0xf]
      %v248 = vld [vmem:[%s1 + $0x34] sm:$0xf]
      %v249 = vld [vmem:[%s1 + $0x38] sm:$0xf]
      %v250 = vld [vmem:[%s1 + $0x3c] sm:$0xf]
      %v283 = vunpack.c.l.b16 %v203
      %v284 = vunpack.c.l.b16 %v204
      %v285 = vunpack.c.l.b16 %v205
      %v286 = vunpack.c.l.b16 %v206
      %v287 = vunpack.c.l.b16 %v207
      %v288 = vunpack.c.l.b16 %v208
      %v289 = vunpack.c.l.b16 %v209
      %v290 = vunpack.c.l.b16 %v210
      %v291 = vunpack.c.l.b16 %v211
      %v292 = vunpack.c.l.b16 %v212
      %v293 = vunpack.c.l.b16 %v213
      %v294 = vunpack.c.l.b16 %v214
      %v295 = vunpack.c.l.b16 %v215
      %v296 = vunpack.c.l.b16 %v216
      %v297 = vunpack.c.l.b16 %v217
      %v298 = vunpack.c.l.b16 %v218
      %v299 = vunpack.c.l.b16 %v219
      %v300 = vunpack.c.l.b16 %v220
      %v301 = vunpack.c.l.b16 %v221
      %v302 = vunpack.c.l.b16 %v222
      %v303 = vunpack.c.l.b16 %v223
      %v304 = vunpack.c.l.b16 %v224
      %v305 = vunpack.c.l.b16 %v225
      %v306 = vunpack.c.l.b16 %v226
      %v307 = vunpack.c.l.b16 %v227
      %v308 = vunpack.c.l.b16 %v228
      %v309 = vunpack.c.l.b16 %v229
      %v310 = vunpack.c.l.b16 %v230
      %v311 = vunpack.c.l.b16 %v231
      %v312 = vunpack.c.l.b16 %v232
      %v313 = vunpack.c.l.b16 %v233
      %v314 = vunpack.c.l.b16 %v234
      %v315 = vpack.c.b16 %v284, %v283
      %v316 = vpack.c.b16 %v286, %v285
      %v317 = vpack.c.b16 %v288, %v287
      %v318 = vpack.c.b16 %v290, %v289
      %v319 = vpack.c.b16 %v292, %v291
      %v320 = vpack.c.b16 %v294, %v293
      %v321 = vpack.c.b16 %v296, %v295
      %v322 = vpack.c.b16 %v298, %v297
      %v323 = vpack.c.b16 %v300, %v299
      %v324 = vpack.c.b16 %v302, %v301
      %v325 = vpack.c.b16 %v304, %v303
      %v326 = vpack.c.b16 %v306, %v305
      %v327 = vpack.c.b16 %v308, %v307
      %v328 = vpack.c.b16 %v310, %v309
      %v329 = vpack.c.b16 %v312, %v311
      %v330 = vpack.c.b16 %v314, %v313
      %v363 = vunpack.c.l.b16 %v235
      %v364 = vunpack.c.l.b16 %v236
      %v365 = vunpack.c.l.b16 %v237
      %v366 = vunpack.c.l.b16 %v238
      %v367 = vunpack.c.l.b16 %v239
      %v368 = vunpack.c.l.b16 %v240
      %v369 = vunpack.c.l.b16 %v241
      %v370 = vunpack.c.l.b16 %v242
      %v371 = vunpack.c.l.b16 %v243
      %v372 = vunpack.c.l.b16 %v244
      %v373 = vunpack.c.l.b16 %v245
      %v374 = vunpack.c.l.b16 %v246
      %v375 = vunpack.c.l.b16 %v247
      %v376 = vunpack.c.l.b16 %v248
      %v377 = vunpack.c.l.b16 %v249
      %v378 = vunpack.c.l.b16 %v250
      %v379 = vpack.c.b16 %v364, %v363
      %v380 = vpack.c.b16 %v366, %v365
      %v381 = vpack.c.b16 %v368, %v367
      %v382 = vpack.c.b16 %v370, %v369
      %v383 = vpack.c.b16 %v372, %v371
      %v384 = vpack.c.b16 %v374, %v373
      %v385 = vpack.c.b16 %v376, %v375
      %v386 = vpack.c.b16 %v378, %v377
      %395 = vmatprep.subr.bf16.mxu0 0
      %396 = vmatpush1.bf16.msra.mxu0 %v379
      %397 = vmatprep.subr.bf16.mxu0 0
      %398 = vmatpush1.bf16.msra.mxu0 %v380
      %399 = vmatprep.subr.bf16.mxu0 0
      %400 = vmatpush1.bf16.msra.mxu0 %v381
      %401 = vmatprep.subr.bf16.mxu0 0
      %402 = vmatpush1.bf16.msra.mxu0 %v382
      %403 = vmatprep.subr.bf16.mxu0 0
      %404 = vmatpush1.bf16.msra.mxu0 %v383
      %405 = vmatprep.subr.bf16.mxu0 0
      %406 = vmatpush1.bf16.msra.mxu0 %v384
      %407 = vmatprep.subr.bf16.mxu0 0
      %408 = vmatpush1.bf16.msra.mxu0 %v385
      %409 = vmatprep.subr.bf16.mxu0 0
      %410 = vmatpush1.bf16.msra.mxu0 %v386
      %411 = vmatprep.subr.bf16.mxu0 0
      %412 = vmatpush1.bf16.msra.mxu0 0
      %413 = vmatprep.subr.bf16.mxu0 0
      %414 = vmatpush1.bf16.msra.mxu0 0
      %415 = vmatprep.subr.bf16.mxu0 0
      %416 = vmatpush1.bf16.msra.mxu0 0
      %417 = vmatprep.subr.bf16.mxu0 0
      %418 = vmatpush1.bf16.msra.mxu0 0
      %419 = vmatprep.subr.bf16.mxu0 0
      %420 = vmatpush1.bf16.msra.mxu0 0
      %421 = vmatprep.subr.bf16.mxu0 0
      %422 = vmatpush1.bf16.msra.mxu0 0
      %423 = vmatprep.subr.bf16.mxu0 0
      %424 = vmatpush1.bf16.msra.mxu0 0
      %425 = vmatprep.subr.bf16.mxu0 0
      %426 = vmatpush1.bf16.msra.mxu0 0
      %427 = vmatprep.mubr.bf16.mxu0 0
      %428 = vmatmul.mubr.bf16.gmra.mrb[0].mxu0 %v315
      %v429 = vpop.f32.mrb[0].mxu0
      %v430 = vadd.f32 0.0, %v429
      %v431 = vpop.f32.mrb[0].mxu0
      %v432 = vpop.f32.mrb[0].mxu0
      %v433 = vadd.f32 0.0, %v432
      %v434 = vpop.f32.mrb[0].mxu0
      %435 = vmatprep.mubr.bf16.mxu0 0
      %436 = vmatmul.mubr.bf16.gmra.mrb[0].mxu0 %v316
      %v437 = vpop.f32.mrb[0].mxu0
      %v438 = vadd.f32 0.0, %v437
      %v439 = vpop.f32.mrb[0].mxu0
      %v440 = vpop.f32.mrb[0].mxu0
      %v441 = vadd.f32 0.0, %v440
      %v442 = vpop.f32.mrb[0].mxu0
      %443 = vmatprep.mubr.bf16.mxu0 0
      %444 = vmatmul.mubr.bf16.gmra.mrb[0].mxu0 %v317
      %v445 = vpop.f32.mrb[0].mxu0
      %v446 = vadd.f32 0.0, %v445
      %v447 = vpop.f32.mrb[0].mxu0
      %v448 = vpop.f32.mrb[0].mxu0
      %v449 = vadd.f32 0.0, %v448
      %v450 = vpop.f32.mrb[0].mxu0
      %451 = vmatprep.mubr.bf16.mxu0 0
      %452 = vmatmul.mubr.bf16.gmra.mrb[0].mxu0 %v318
      %v453 = vpop.f32.mrb[0].mxu0
      %v454 = vadd.f32 0.0, %v453
      %v455 = vpop.f32.mrb[0].mxu0
      %v456 = vpop.f32.mrb[0].mxu0
      %v457 = vadd.f32 0.0, %v456
      %v458 = vpop.f32.mrb[0].mxu0
      %459 = vmatprep.mubr.bf16.mxu0 0
      %460 = vmatmul.mubr.bf16.gmra.mrb[0].mxu0 %v319
      %v461 = vpop.f32.mrb[0].mxu0
      %v462 = vadd.f32 0.0, %v461
      %v463 = vpop.f32.mrb[0].mxu0
      %v464 = vpop.f32.mrb[0].mxu0
      %v465 = vadd.f32 0.0, %v464
      %v466 = vpop.f32.mrb[0].mxu0
      %467 = vmatprep.mubr.bf16.mxu0 0
      %468 = vmatmul.mubr.bf16.gmra.mrb[0].mxu0 %v320
      %v469 = vpop.f32.mrb[0].mxu0
      %v470 = vadd.f32 0.0, %v469
      %v471 = vpop.f32.mrb[0].mxu0
      %v472 = vpop.f32.mrb[0].mxu0
      %v473 = vadd.f32 0.0, %v472
      %v474 = vpop.f32.mrb[0].mxu0
      %475 = vmatprep.mubr.bf16.mxu0 0
      %476 = vmatmul.mubr.bf16.gmra.mrb[0].mxu0 %v321
      %v477 = vpop.f32.mrb[0].mxu0
      %v478 = vadd.f32 0.0, %v477
      %v479 = vpop.f32.mrb[0].mxu0
      %v480 = vpop.f32.mrb[0].mxu0
      %v481 = vadd.f32 0.0, %v480
      %v482 = vpop.f32.mrb[0].mxu0
      %483 = vmatprep.mubr.bf16.mxu0 0
      %484 = vmatmul.mubr.bf16.gmra.mrb[0].mxu0 %v322
      %v485 = vpop.f32.mrb[0].mxu0
      %v486 = vadd.f32 0.0, %v485
      %v487 = vpop.f32.mrb[0].mxu0
      %v488 = vpop.f32.mrb[0].mxu0
      %v489 = vadd.f32 0.0, %v488
      %v490 = vpop.f32.mrb[0].mxu0
      %491 = vmatprep.mubr.bf16.mxu0 0
      %492 = vmatmul.mubr.bf16.gmra.mrb[0].mxu0 %v323
      %v493 = vpop.f32.mrb[0].mxu0
      %v494 = vadd.f32 0.0, %v493
      %v495 = vpop.f32.mrb[0].mxu0
      %v496 = vpop.f32.mrb[0].mxu0
      %v497 = vadd.f32 0.0, %v496
      %v498 = vpop.f32.mrb[0].mxu0
      %499 = vmatprep.mubr.bf16.mxu0 0
      %500 = vmatmul.mubr.bf16.gmra.mrb[0].mxu0 %v324
      %v501 = vpop.f32.mrb[0].mxu0
      %v502 = vadd.f32 0.0, %v501
      %v503 = vpop.f32.mrb[0].mxu0
      %v504 = vpop.f32.mrb[0].mxu0
      %v505 = vadd.f32 0.0, %v504
      %v506 = vpop.f32.mrb[0].mxu0
      %507 = vmatprep.mubr.bf16.mxu0 0
      %508 = vmatmul.mubr.bf16.gmra.mrb[0].mxu0 %v325
      %v509 = vpop.f32.mrb[0].mxu0
      %v510 = vadd.f32 0.0, %v509
      %v511 = vpop.f32.mrb[0].mxu0
      %v512 = vpop.f32.mrb[0].mxu0
      %v513 = vadd.f32 0.0, %v512
      %v514 = vpop.f32.mrb[0].mxu0
      %515 = vmatprep.mubr.bf16.mxu0 0
      %516 = vmatmul.mubr.bf16.gmra.mrb[0].mxu0 %v326
      %v517 = vpop.f32.mrb[0].mxu0
      %v518 = vadd.f32 0.0, %v517
      %v519 = vpop.f32.mrb[0].mxu0
      %v520 = vpop.f32.mrb[0].mxu0
      %v521 = vadd.f32 0.0, %v520
      %v522 = vpop.f32.mrb[0].mxu0
      %523 = vmatprep.mubr.bf16.mxu0 0
      %524 = vmatmul.mubr.bf16.gmra.mrb[0].mxu0 %v327
      %v525 = vpop.f32.mrb[0].mxu0
      %v526 = vadd.f32 0.0, %v525
      %v527 = vpop.f32.mrb[0].mxu0
      %v528 = vpop.f32.mrb[0].mxu0
      %v529 = vadd.f32 0.0, %v528
      %v530 = vpop.f32.mrb[0].mxu0
      %531 = vmatprep.mubr.bf16.mxu0 0
      %532 = vmatmul.mubr.bf16.gmra.mrb[0].mxu0 %v328
      %v533 = vpop.f32.mrb[0].mxu0
      %v534 = vadd.f32 0.0, %v533
      %v535 = vpop.f32.mrb[0].mxu0
      %v536 = vpop.f32.mrb[0].mxu0
      %v537 = vadd.f32 0.0, %v536
      %v538 = vpop.f32.mrb[0].mxu0
      %539 = vmatprep.mubr.bf16.mxu0 0
      %540 = vmatmul.mubr.bf16.gmra.mrb[0].mxu0 %v329
      %v541 = vpop.f32.mrb[0].mxu0
      %v542 = vadd.f32 0.0, %v541
      %v543 = vpop.f32.mrb[0].mxu0
      %v544 = vpop.f32.mrb[0].mxu0
      %v545 = vadd.f32 0.0, %v544
      %v546 = vpop.f32.mrb[0].mxu0
      %547 = vmatprep.mubr.bf16.mxu0 0
      %548 = vmatmul.mubr.bf16.gmra.mrb[0].mxu0 %v330
      %v549 = vpop.f32.mrb[0].mxu0
      %v550 = vadd.f32 0.0, %v549
      %v551 = vpop.f32.mrb[0].mxu0
      %v552 = vpop.f32.mrb[0].mxu0
      %v553 = vadd.f32 0.0, %v552
      %v554 = vpop.f32.mrb[0].mxu0
      %555 = vdwg.mxu0
      %556 = vst [vmem:[%s194] sm:$0xff] %v430
      %557 = vst [vmem:[%s194 + $0x8] sm:$0xff] %v433
      %558 = vst [vmem:[%s194 + $0x10] sm:$0xff] %v438
      %559 = vst [vmem:[%s194 + $0x18] sm:$0xff] %v441
      %560 = vst [vmem:[%s194 + $0x20] sm:$0xff] %v446
      %561 = vst [vmem:[%s194 + $0x28] sm:$0xff] %v449
      %562 = vst [vmem:[%s194 + $0x30] sm:$0xff] %v454
      %563 = vst [vmem:[%s194 + $0x38] sm:$0xff] %v457
      %564 = vst [vmem:[%s194 + $0x40] sm:$0xff] %v462
      %565 = vst [vmem:[%s194 + $0x48] sm:$0xff] %v465
      %566 = vst [vmem:[%s194 + $0x50] sm:$0xff] %v470
      %567 = vst [vmem:[%s194 + $0x58] sm:$0xff] %v473
      %568 = vst [vmem:[%s194 + $0x60] sm:$0xff] %v478
      %569 = vst [vmem:[%s194 + $0x68] sm:$0xff] %v481
      %570 = vst [vmem:[%s194 + $0x70] sm:$0xff] %v486
      %571 = vst [vmem:[%s194 + $0x78] sm:$0xff] %v489
      %572 = vst [vmem:[%s194 + $0x80] sm:$0xff] %v494
      %573 = vst [vmem:[%s194 + $0x88] sm:$0xff] %v497
      %574 = vst [vmem:[%s194 + $0x90] sm:$0xff] %v502
      %575 = vst [vmem:[%s194 + $0x98] sm:$0xff] %v505
      %576 = vst [vmem:[%s194 + $0xa0] sm:$0xff] %v510
      %577 = vst [vmem:[%s194 + $0xa8] sm:$0xff] %v513
      %578 = vst [vmem:[%s194 + $0xb0] sm:$0xff] %v518
      %579 = vst [vmem:[%s194 + $0xb8] sm:$0xff] %v521
      %580 = vst [vmem:[%s194 + $0xc0] sm:$0xff] %v526
      %581 = vst [vmem:[%s194 + $0xc8] sm:$0xff] %v529
      %582 = vst [vmem:[%s194 + $0xd0] sm:$0xff] %v534
      %583 = vst [vmem:[%s194 + $0xd8] sm:$0xff] %v537
      %584 = vst [vmem:[%s194 + $0xe0] sm:$0xff] %v542
      %585 = vst [vmem:[%s194 + $0xe8] sm:$0xff] %v545
      %586 = vst [vmem:[%s194 + $0xf0] sm:$0xff] %v550
      %587 = vst [vmem:[%s194 + $0xf8] sm:$0xff] %v553
      %v588 = vld [vmem:[%s3] sm:$0x1]
      %v589 = vadd.f32 %v430, %v433
      %v590 = vadd.f32 %v589, %v438
      %v591 = vadd.f32 %v590, %v441
      %v592 = vadd.f32 %v591, %v446
      %v593 = vadd.f32 %v592, %v449
      %v594 = vadd.f32 %v593, %v454
      %v595 = vadd.f32 %v594, %v457
      %v596 = vadd.f32 %v595, %v462
      %v597 = vadd.f32 %v596, %v465
      %v598 = vadd.f32 %v597, %v470
      %v599 = vadd.f32 %v598, %v473
      %v600 = vadd.f32 %v599, %v478
      %v601 = vadd.f32 %v600, %v481
      %v602 = vadd.f32 %v601, %v486
      %v603 = vadd.f32 %v602, %v489
      %v604 = vadd.f32 %v603, %v494
      %v605 = vadd.f32 %v604, %v497
      %v606 = vadd.f32 %v605, %v502
      %v607 = vadd.f32 %v606, %v505
      %v608 = vadd.f32 %v607, %v510
      %v609 = vadd.f32 %v608, %v513
      %v610 = vadd.f32 %v609, %v518
      %v611 = vadd.f32 %v610, %v521
      %v612 = vadd.f32 %v611, %v526
      %v613 = vadd.f32 %v612, %v529
      %v614 = vadd.f32 %v613, %v534
      %v615 = vadd.f32 %v614, %v537
      %v616 = vadd.f32 %v615, %v542
      %v617 = vadd.f32 %v616, %v545
      %v618 = vadd.f32 %v617, %v550
      %v619 = vadd.f32 %v618, %v553
      %v620 = vrot.slane %v619, 4
      %v621 = vadd.f32 %v619, %v620
      %v622 = vrot.slane %v621, 2
      %v623 = vadd.f32 %v621, %v622
      %v624 = vrot.slane %v623, 1
      %v625 = vadd.f32 %v623, %v624
      %v626 = vadd.f32 %v588, %v625
      %627 = vst [vmem:[%s3] sm:$0x1] %v626
      %v628 = vld [vmem:[%s4] sm:$0x1]
      %v629 = vmul.f32 %v430, %v430
      %v630 = vmul.f32 %v433, %v433
      %v631 = vmul.f32 %v438, %v438
      %v632 = vmul.f32 %v441, %v441
      %v633 = vmul.f32 %v446, %v446
      %v634 = vmul.f32 %v449, %v449
      %v635 = vmul.f32 %v454, %v454
      %v636 = vmul.f32 %v457, %v457
      %v637 = vmul.f32 %v462, %v462
      %v638 = vmul.f32 %v465, %v465
      %v639 = vmul.f32 %v470, %v470
      %v640 = vmul.f32 %v473, %v473
      %v641 = vmul.f32 %v478, %v478
      %v642 = vmul.f32 %v481, %v481
      %v643 = vmul.f32 %v486, %v486
      %v644 = vmul.f32 %v489, %v489
      %v645 = vmul.f32 %v494, %v494
      %v646 = vmul.f32 %v497, %v497
      %v647 = vmul.f32 %v502, %v502
      %v648 = vmul.f32 %v505, %v505
      %v649 = vmul.f32 %v510, %v510
      %v650 = vmul.f32 %v513, %v513
      %v651 = vmul.f32 %v518, %v518
      %v652 = vmul.f32 %v521, %v521
      %v653 = vmul.f32 %v526, %v526
      %v654 = vmul.f32 %v529, %v529
      %v655 = vmul.f32 %v534, %v534
      %v656 = vmul.f32 %v537, %v537
      %v657 = vmul.f32 %v542, %v542
      %v658 = vmul.f32 %v545, %v545
      %v659 = vmul.f32 %v550, %v550
      %v660 = vmul.f32 %v553, %v553
      %v661 = vadd.f32 %v629, %v630
      %v662 = vadd.f32 %v661, %v631
      %v663 = vadd.f32 %v662, %v632
      %v664 = vadd.f32 %v663, %v633
      %v665 = vadd.f32 %v664, %v634
      %v666 = vadd.f32 %v665, %v635
      %v667 = vadd.f32 %v666, %v636
      %v668 = vadd.f32 %v667, %v637
      %v669 = vadd.f32 %v668, %v638
      %v670 = vadd.f32 %v669, %v639
      %v671 = vadd.f32 %v670, %v640
      %v672 = vadd.f32 %v671, %v641
      %v673 = vadd.f32 %v672, %v642
      %v674 = vadd.f32 %v673, %v643
      %v675 = vadd.f32 %v674, %v644
      %v676 = vadd.f32 %v675, %v645
      %v677 = vadd.f32 %v676, %v646
      %v678 = vadd.f32 %v677, %v647
      %v679 = vadd.f32 %v678, %v648
      %v680 = vadd.f32 %v679, %v649
      %v681 = vadd.f32 %v680, %v650
      %v682 = vadd.f32 %v681, %v651
      %v683 = vadd.f32 %v682, %v652
      %v684 = vadd.f32 %v683, %v653
      %v685 = vadd.f32 %v684, %v654
      %v686 = vadd.f32 %v685, %v655
      %v687 = vadd.f32 %v686, %v656
      %v688 = vadd.f32 %v687, %v657
      %v689 = vadd.f32 %v688, %v658
      %v690 = vadd.f32 %v689, %v659
      %v691 = vadd.f32 %v690, %v660
      %v692 = vrot.slane %v691, 4
      %v693 = vadd.f32 %v691, %v692
      %v694 = vrot.slane %v693, 2
      %v695 = vadd.f32 %v693, %v694
      %v696 = vrot.slane %v695, 1
      %v697 = vadd.f32 %v695, %v696
      %v698 = vadd.f32 %v628, %v697
      %699 = vst [vmem:[%s4] sm:$0x1] %v698
      %s700 = smul.u32 32, %s16
      %p701 = scmp.lt.s32.totalorder %s700, 63
      %s702 = scalar_select %p701, %s700, 63
      %s703 = smul.addr %s702, 8
      %s704 = scalar_lea.vmem %s2, %s703
      // Predicated region
      $region33: #{bottleneck_forward.5} parent=27 // pred_check
        %p705 = pneg %p81
      $region34: #{bottleneck_forward.5} parent=27 // pred_check_branch
        %707 = sbr.rel (%p705) target = $region36
      $region35: #{bottleneck_forward.5} parent=27 // pred_region
        %s708 = smul.u32 32, %s16
      $region36: #{bottleneck_forward.5} parent=27 // pred_fallthru
        _
      // Predicated region
      $region37: #{bottleneck_forward.5} parent=27 // pred_check
        %p709 = pneg %p102
      $region38: #{bottleneck_forward.5} parent=27 // pred_check_branch
        %711 = sbr.rel (%p709) target = $region40
      $region39: #{bottleneck_forward.5} parent=27 // pred_region
        _
      $region40: #{bottleneck_forward.5} parent=27 // pred_fallthru
        _
      // Predicated region
      $region41: #{bottleneck_forward.5} parent=27 // pred_check
        %p712 = pneg %p123
      $region42: #{bottleneck_forward.5} parent=27 // pred_check_branch
        %714 = sbr.rel (%p712) target = $region44
      $region43: #{bottleneck_forward.5} parent=27 // pred_region
        _
      $region44: #{bottleneck_forward.5} parent=27 // pred_fallthru
        _
      // Predicated region
      $region45: #{bottleneck_forward.5} parent=27 // pred_check
        %p715 = pneg %p102
      $region46: #{bottleneck_forward.5} parent=27 // pred_check_branch
        %717 = sbr.rel (%p715) target = $region48
      $region47: #{bottleneck_forward.5} parent=27 // pred_region
        _
      $region48: #{bottleneck_forward.5} parent=27 // pred_fallthru
        _
      // Predicated region
      $region49: #{bottleneck_forward.5} parent=27 // pred_check
        %p718 = pneg %p123
      $region50: #{bottleneck_forward.5} parent=27 // pred_check_branch
        %720 = sbr.rel (%p718) target = $region52
      $region51: #{bottleneck_forward.5} parent=27 // pred_region
        _
      $region52: #{bottleneck_forward.5} parent=27 // pred_fallthru
        _
    $region28: #{bottleneck_forward.5} parent=5 // pred_fallthru
      _
    %p721 = scmp.le.s32.totalorder 2, %s11
    // Predicated region
    $region53: #{bottleneck_forward.5} parent=5 // pred_check
      %p722 = pneg %p721
    $region54: #{bottleneck_forward.5} parent=5 // pred_check_branch
      %724 = sbr.rel (%p722) target = $region56
    $region55: #{bottleneck_forward.5} parent=5 // pred_region
      %s725 = ssub.s32 %s11, 2
      // Predicated region
      $region57: #{bottleneck_forward.5} parent=55 // pred_check
        %p726 = pneg %p87
      $region58: #{bottleneck_forward.5} parent=55 // pred_check_branch
        %728 = sbr.rel (%p726) target = $region60
      $region59: #{bottleneck_forward.5} parent=55 // pred_region
        %s729 = smul.u32 32, %s17
        %p730 = scmp.lt.s32.totalorder %s729, 63
        %s731 = scalar_select %p730, %s729, 63
        %s732 = smul.addr %s731, 8
        %s733 = scalar_lea.vmem %s2, %s732
      $region60: #{bottleneck_forward.5} parent=55 // pred_fallthru
        _
    $region56: #{bottleneck_forward.5} parent=5 // pred_fallthru
      _
  $region6: #{bottleneck_forward.5} parent=0 // loop_footer
    %s15 = sadd.s32 1, %s11
  $region7: #{bottleneck_forward.5} parent=0 // loop_footer_branch
    %10 = sbr.rel target = $region3
  $region8: #{bottleneck_forward.5} parent=0 // loop_exit
    _

// kernel: bottleneck_forward.8
$region0: #{bottleneck_forward.8}
  #allocation0 [shape = 'u32[]', space=smem, size = 0x4, offset = 0x4, fixed_abs, tag = 'smem constant byte address 0x4 - core index']
  #allocation1 [shape = 'u32[144,128]{1,0:T(1,128)}', space=vmem, size = 0x12000, scoped, tag = 'internal scratch']
  %s0 = inlined_call_operand.vmem [shape: f32[512,128], index: 0, kind: input, shape index: {}]
  %s1 = inlined_call_operand.vmem [shape: f32[1,128], index: 1, kind: input, shape index: {}]
  %s2 = inlined_call_operand.vmem [shape: f32[1,128], index: 2, kind: input, shape index: {}]
  %s3 = inlined_call_operand.vmem [shape: bf16[128,128], index: 3, kind: input, shape index: {}]
  %s4 = inlined_call_operand.vmem [shape: f32[512,128], index: 4, kind: output, shape index: {0}]
  %s5 = inlined_call_operand.vmem [shape: f32[1,128], index: 5, kind: output, shape index: {1}]
  %s6 = inlined_call_operand.vmem [shape: f32[1,128], index: 6, kind: output, shape index: {2}]
  %7 = xla_tuple %s4, %s5, %s6
  %s8 = sld [smem:[#allocation0]]
  $region69: #{bottleneck_forward.8} parent=0
    _
  %s10 = ssub.s32 1, %s8
  %s11 = scalar_select 0, %s10, %s8
  loop: start=0, step=1, limit=4
  $region2: #{bottleneck_forward.8} parent=0 // loop_pre_header
    _
  $region3: #{bottleneck_forward.8} parent=0 // loop_header
    %s13 = sphi 0, %s17
    %p14 = scmp.ge.s32.totalorder %s13, 4
    %s23 = sphi 0, %s25
    %s26 = sphi 0, %s23
    %s27 = sphi 0, %s26
    %s43 = sphi 0, %s27
    %s47 = sphi 0, %s47
    %s49 = sphi 0, %s47
    %s50 = sphi 0, %s49
    %s64 = sphi 0, %s50
    %s68 = sphi 0, %s68
    %s70 = sphi 0, %s68
    %s71 = sphi 0, %s70
    %s85 = sphi 0, %s71
    %s89 = sphi 0, %s89
    %s91 = sphi 0, %s89
    %s92 = sphi 0, %s91
    %s106 = sphi 0, %s92
    %s112 = sphi 0, %s114
    %s115 = sphi 0, %s112
    %s116 = sphi 0, %s115
    %s132 = sphi 0, %s116
    %s136 = sphi 0, %s136
    %s138 = sphi 0, %s136
    %s139 = sphi 0, %s138
    %s153 = sphi 0, %s139
    %s157 = sphi 0, %s157
    %s159 = sphi 0, %s157
    %s160 = sphi 0, %s159
    %s174 = sphi 0, %s160
  $region4: #{bottleneck_forward.8} parent=0 // loop_header_branch
    %16 = sbr.rel (%p14) target = $region8
  $region5: #{bottleneck_forward.8} parent=0 // loop_body
    %s18 = ssub.s32 %s13, 1
    %s19 = ssub.s32 %s13, 2
    %s20 = sadd.s32 %s13, 1
    %s21 = ssub.s32 %s13, %s20
    %p22 = scmp.eq.s32.totalorder %s21, 0
    %s24 = sadd.s32 %s23, 1
    %s25 = scalar_select %p22, %s23, %s24
    %p28 = pneg %p22
    %p29 = scmp.eq.s32.totalorder %s13, 1
    %p30 = por %p28, %p29
    %p31 = scmp.ne.s32.totalorder %s23, %s26
    %p32 = scmp.eq.s32.totalorder %s13, 0
    %p33 = por %p31, %p32
    %p34 = scmp.ne.s32.totalorder %s23, %s26
    %p35 = scmp.eq.s32.totalorder %s18, 1
    %p36 = por %p34, %p35
    %p37 = scmp.ne.s32.totalorder %s26, %s27
    %p38 = scmp.eq.s32.totalorder %s18, 0
    %p39 = por %p37, %p38
    %p40 = scmp.ne.s32.totalorder %s26, %s27
    %p41 = scmp.eq.s32.totalorder %s19, 1
    %p42 = por %p40, %p41
    %p44 = scmp.ne.s32.totalorder %s27, %s43
    %p45 = scmp.eq.s32.totalorder %s19, 0
    %p46 = por %p44, %p45
    %s48 = sadd.s32 %s47, 1
    %p51 = scmp.eq.s32.totalorder %s13, 1
    %p52 = scmp.ne.s32.totalorder %s47, %s49
    %p53 = scmp.eq.s32.totalorder %s13, 0
    %p54 = por %p52, %p53
    %p55 = scmp.ne.s32.totalorder %s47, %s49
    %p56 = scmp.eq.s32.totalorder %s18, 1
    %p57 = por %p55, %p56
    %p58 = scmp.ne.s32.totalorder %s49, %s50
    %p59 = scmp.eq.s32.totalorder %s18, 0
    %p60 = por %p58, %p59
    %p61 = scmp.ne.s32.totalorder %s49, %s50
    %p62 = scmp.eq.s32.totalorder %s19, 1
    %p63 = por %p61, %p62
    %p65 = scmp.ne.s32.totalorder %s50, %s64
    %p66 = scmp.eq.s32.totalorder %s19, 0
    %p67 = por %p65, %p66
    %s69 = sadd.s32 %s68, 1
    %p72 = scmp.eq.s32.totalorder %s13, 1
    %p73 = scmp.ne.s32.totalorder %s68, %s70
    %p74 = scmp.eq.s32.totalorder %s13, 0
    %p75 = por %p73, %p74
    %p76 = scmp.ne.s32.totalorder %s68, %s70
    %p77 = scmp.eq.s32.totalorder %s18, 1
    %p78 = por %p76, %p77
    %p79 = scmp.ne.s32.totalorder %s70, %s71
    %p80 = scmp.eq.s32.totalorder %s18, 0
    %p81 = por %p79, %p80
    %p82 = scmp.ne.s32.totalorder %s70, %s71
    %p83 = scmp.eq.s32.totalorder %s19, 1
    %p84 = por %p82, %p83
    %p86 = scmp.ne.s32.totalorder %s71, %s85
    %p87 = scmp.eq.s32.totalorder %s19, 0
    %p88 = por %p86, %p87
    %s90 = sadd.s32 %s89, 1
    %p93 = scmp.eq.s32.totalorder %s13, 1
    %p94 = scmp.ne.s32.totalorder %s89, %s91
    %p95 = scmp.eq.s32.totalorder %s13, 0
    %p96 = por %p94, %p95
    %p97 = scmp.ne.s32.totalorder %s89, %s91
    %p98 = scmp.eq.s32.totalorder %s18, 1
    %p99 = por %p97, %p98
    %p100 = scmp.ne.s32.totalorder %s91, %s92
    %p101 = scmp.eq.s32.totalorder %s18, 0
    %p102 = por %p100, %p101
    %p103 = scmp.ne.s32.totalorder %s91, %s92
    %p104 = scmp.eq.s32.totalorder %s19, 1
    %p105 = por %p103, %p104
    %p107 = scmp.ne.s32.totalorder %s92, %s106
    %p108 = scmp.eq.s32.totalorder %s19, 0
    %p109 = por %p107, %p108
    %s110 = ssub.s32 %s13, %s20
    %p111 = scmp.eq.s32.totalorder %s110, 0
    %s113 = sadd.s32 %s112, 1
    %s114 = scalar_select %p111, %s112, %s113
    %p117 = pneg %p111
    %p118 = scmp.eq.s32.totalorder %s13, 1
    %p119 = por %p117, %p118
    %p120 = scmp.ne.s32.totalorder %s112, %s115
    %p121 = scmp.eq.s32.totalorder %s13, 0
    %p122 = por %p120, %p121
    %p123 = scmp.ne.s32.totalorder %s112, %s115
    %p124 = scmp.eq.s32.totalorder %s18, 1
    %p125 = por %p123, %p124
    %p126 = scmp.ne.s32.totalorder %s115, %s116
    %p127 = scmp.eq.s32.totalorder %s18, 0
    %p128 = por %p126, %p127
    %p129 = scmp.ne.s32.totalorder %s115, %s116
    %p130 = scmp.eq.s32.totalorder %s19, 1
    %p131 = por %p129, %p130
    %p133 = scmp.ne.s32.totalorder %s116, %s132
    %p134 = scmp.eq.s32.totalorder %s19, 0
    %p135 = por %p133, %p134
    %s137 = sadd.s32 %s136, 1
    %p140 = scmp.eq.s32.totalorder %s13, 1
    %p141 = scmp.ne.s32.totalorder %s136, %s138
    %p142 = scmp.eq.s32.totalorder %s13, 0
    %p143 = por %p141, %p142
    %p144 = scmp.ne.s32.totalorder %s136, %s138
    %p145 = scmp.eq.s32.totalorder %s18, 1
    %p146 = por %p144, %p145
    %p147 = scmp.ne.s32.totalorder %s138, %s139
    %p148 = scmp.eq.s32.totalorder %s18, 0
    %p149 = por %p147, %p148
    %p150 = scmp.ne.s32.totalorder %s138, %s139
    %p151 = scmp.eq.s32.totalorder %s19, 1
    %p152 = por %p150, %p151
    %p154 = scmp.ne.s32.totalorder %s139, %s153
    %p155 = scmp.eq.s32.totalorder %s19, 0
    %p156 = por %p154, %p155
    %s158 = sadd.s32 %s157, 1
    %p161 = scmp.eq.s32.totalorder %s13, 1
    %p162 = scmp.ne.s32.totalorder %s157, %s159
    %p163 = scmp.eq.s32.totalorder %s13, 0
    %p164 = por %p162, %p163
    %p165 = scmp.ne.s32.totalorder %s157, %s159
    %p166 = scmp.eq.s32.totalorder %s18, 1
    %p167 = por %p165, %p166
    %p168 = scmp.ne.s32.totalorder %s159, %s160
    %p169 = scmp.eq.s32.totalorder %s18, 0
    %p170 = por %p168, %p169
    %p171 = scmp.ne.s32.totalorder %s159, %s160
    %p172 = scmp.eq.s32.totalorder %s19, 1
    %p173 = por %p171, %p172
    %p175 = scmp.ne.s32.totalorder %s160, %s174
    %p176 = scmp.eq.s32.totalorder %s19, 0
    %p177 = por %p175, %p176
    %p178 = scmp.le.s32.totalorder 1, %s13
    %p179 = scmp.lt.s32.totalorder %s13, 3
    %p180 = pnand %p178, %p179
    %p181 = pneg %p180
    // Predicated region
    $region9: #{bottleneck_forward.8} parent=5 // pred_check
      _
    $region10: #{bottleneck_forward.8} parent=5 // pred_check_branch
      %183 = sbr.rel (%p180) target = $region12
    $region11: #{bottleneck_forward.8} parent=5 // pred_region
      %s184 = ssub.s32 %s13, 1
      // Predicated region
      $region13: #{bottleneck_forward.8} parent=11 // pred_check
        %p185 = pneg %p60
      $region14: #{bottleneck_forward.8} parent=11 // pred_check_branch
        %187 = sbr.rel (%p185) target = $region16
      $region15: #{bottleneck_forward.8} parent=11 // pred_region
        _
      $region16: #{bottleneck_forward.8} parent=11 // pred_fallthru
        _
      // Predicated region
      $region17: #{bottleneck_forward.8} parent=11 // pred_check
        %p188 = pneg %p81
      $region18: #{bottleneck_forward.8} parent=11 // pred_check_branch
        %190 = sbr.rel (%p188) target = $region20
      $region19: #{bottleneck_forward.8} parent=11 // pred_region
        _
      $region20: #{bottleneck_forward.8} parent=11 // pred_fallthru
        _
      // Predicated region
      $region21: #{bottleneck_forward.8} parent=11 // pred_check
        %p191 = pneg %p102
      $region22: #{bottleneck_forward.8} parent=11 // pred_check_branch
        %193 = sbr.rel (%p191) target = $region24
      $region23: #{bottleneck_forward.8} parent=11 // pred_region
        _
      $region24: #{bottleneck_forward.8} parent=11 // pred_fallthru
        _
    $region12: #{bottleneck_forward.8} parent=5 // pred_fallthru
      _
    %p194 = scmp.lt.s32.totalorder %s13, 2
    // Predicated region
    $region25: #{bottleneck_forward.8} parent=5 // pred_check
      %p195 = pneg %p194
    $region26: #{bottleneck_forward.8} parent=5 // pred_check_branch
      %197 = sbr.rel (%p195) target = $region28
    $region27: #{bottleneck_forward.8} parent=5 // pred_region
      // Predicated region
      $region29: #{bottleneck_forward.8} parent=27 // pred_check
        %p198 = pneg %p33
      $region30: #{bottleneck_forward.8} parent=27 // pred_check_branch
        %200 = sbr.rel (%p198) target = $region32
      $region31: #{bottleneck_forward.8} parent=27 // pred_region
        %s201 = smul.u32 32, %s13
        %p202 = scmp.lt.s32.totalorder %s201, 63
        %s203 = scalar_select %p202, %s201, 63
        %s204 = smul.addr %s203, 8
        %s205 = scalar_lea.vmem %s0, %s204
        %s206 = smul.u32 32, %s13
      $region32: #{bottleneck_forward.8} parent=27 // pred_fallthru
        _
    $region28: #{bottleneck_forward.8} parent=5 // pred_fallthru
      _
    %p207 = scmp.le.s32.totalorder 1, %s13
    %p208 = scmp.lt.s32.totalorder %s13, 3
    %p209 = pnand %p207, %p208
    %p210 = pneg %p209
    // Predicated region
    $region33: #{bottleneck_forward.8} parent=5 // pred_check
      _
    $region34: #{bottleneck_forward.8} parent=5 // pred_check_branch
      %212 = sbr.rel (%p209) target = $region36
    $region35: #{bottleneck_forward.8} parent=5 // pred_region
      %s213 = ssub.s32 %s13, 1
      %s214 = smul.u32 32, %s18
      %p215 = scmp.lt.s32.totalorder %s214, 63
      %s216 = scalar_select %p215, %s214, 63
      %s217 = smul.addr %s216, 8
      %s218 = scalar_lea.vmem %s0, %s217
      %p219 = pneg %p39
      %p220 = pneg %p36
      %p221 = pneg %p60
      %p222 = pneg %p57
      %p223 = pneg %p81
      %p224 = pneg %p78
      %p225 = pneg %p102
      %p226 = pneg %p99
      %p227 = pneg %p128
      %p228 = pneg %p125
      %s229 = smul.u32 32, %s18
      %p230 = scmp.lt.s32.totalorder %s229, 63
      %s231 = scalar_select %p230, %s229, 63
      %s232 = smul.addr %s231, 8
      %s233 = scalar_lea.vmem %s4, %s232
      %p234 = pneg %p149
      %p235 = pneg %p146
      %p236 = pneg %p170
      %p237 = pneg %p167
      %s238 = smul.u32 32, %s18
      %p239 = scmp.lt.s32.totalorder %s238, 63
      %s240 = scalar_select %p239, %s238, 63
      %s241 = smul.addr %s240, 8
      %s242 = scalar_lea.vmem %s0, %s241
      %s243 = smul.u32 32, %s18
      %s244 = smul.u32 32, %s18
      %p245 = scmp.lt.s32.totalorder %s244, 63
      %s246 = scalar_select %p245, %s244, 63
      %s247 = smul.addr %s246, 8
      %s248 = scalar_lea.vmem %s4, %s247
      %s249 = smul.u32 32, %s18
      %p251 = scmp.eq.s32.totalorder %s18, 0
      // Predicated region
      $region37: #{bottleneck_forward.8} parent=35 // pred_check
        %p252 = pneg %p251
      $region38: #{bottleneck_forward.8} parent=35 // pred_check_branch
        %254 = sbr.rel (%p252) target = $region40
      $region39: #{bottleneck_forward.8} parent=35 // pred_region
        %255 = vst [vmem:[%s5] sm:$0x1] 0.0
        %256 = vst [vmem:[%s6] sm:$0x1] 0.0
      $region40: #{bottleneck_forward.8} parent=35 // pred_fallthru
        _
      %v257 = vld [vmem:[%s242] sm:$0xff]
      %v258 = vld [vmem:[%s242 + $0x8] sm:$0xff]
      %v259 = vld [vmem:[%s242 + $0x10] sm:$0xff]
      %v260 = vld [vmem:[%s242 + $0x18] sm:$0xff]
      %v261 = vld [vmem:[%s242 + $0x20] sm:$0xff]
      %v262 = vld [vmem:[%s242 + $0x28] sm:$0xff]
      %v263 = vld [vmem:[%s242 + $0x30] sm:$0xff]
      %v264 = vld [vmem:[%s242 + $0x38] sm:$0xff]
      %v265 = vld [vmem:[%s242 + $0x40] sm:$0xff]
      %v266 = vld [vmem:[%s242 + $0x48] sm:$0xff]
      %v267 = vld [vmem:[%s242 + $0x50] sm:$0xff]
      %v268 = vld [vmem:[%s242 + $0x58] sm:$0xff]
      %v269 = vld [vmem:[%s242 + $0x60] sm:$0xff]
      %v270 = vld [vmem:[%s242 + $0x68] sm:$0xff]
      %v271 = vld [vmem:[%s242 + $0x70] sm:$0xff]
      %v272 = vld [vmem:[%s242 + $0x78] sm:$0xff]
      %v273 = vld [vmem:[%s242 + $0x80] sm:$0xff]
      %v274 = vld [vmem:[%s242 + $0x88] sm:$0xff]
      %v275 = vld [vmem:[%s242 + $0x90] sm:$0xff]
      %v276 = vld [vmem:[%s242 + $0x98] sm:$0xff]
      %v277 = vld [vmem:[%s242 + $0xa0] sm:$0xff]
      %v278 = vld [vmem:[%s242 + $0xa8] sm:$0xff]
      %v279 = vld [vmem:[%s242 + $0xb0] sm:$0xff]
      %v280 = vld [vmem:[%s242 + $0xb8] sm:$0xff]
      %v281 = vld [vmem:[%s242 + $0xc0] sm:$0xff]
      %v282 = vld [vmem:[%s242 + $0xc8] sm:$0xff]
      %v283 = vld [vmem:[%s242 + $0xd0] sm:$0xff]
      %v284 = vld [vmem:[%s242 + $0xd8] sm:$0xff]
      %v285 = vld [vmem:[%s242 + $0xe0] sm:$0xff]
      %v286 = vld [vmem:[%s242 + $0xe8] sm:$0xff]
      %v287 = vld [vmem:[%s242 + $0xf0] sm:$0xff]
      %v288 = vld [vmem:[%s242 + $0xf8] sm:$0xff]
      %v289 = vld [vmem:[%s1] sm:$0x1]
      %v291 = vlaneseq
      %v292 = vshrl.u32 %v291, 7
      %v293 = vsub.s32 0, %v292
      %v294 = vrot.slane %v289, %v293
      %v296 = vmul.f32 %v257, %v294
      %v297 = vmul.f32 %v258, %v294
      %v298 = vmul.f32 %v259, %v294
      %v299 = vmul.f32 %v260, %v294
      %v300 = vmul.f32 %v261, %v294
      %v301 = vmul.f32 %v262, %v294
      %v302 = vmul.f32 %v263, %v294
      %v303 = vmul.f32 %v264, %v294
      %v304 = vmul.f32 %v265, %v294
      %v305 = vmul.f32 %v266, %v294
      %v306 = vmul.f32 %v267, %v294
      %v307 = vmul.f32 %v268, %v294
      %v308 = vmul.f32 %v269, %v294
      %v309 = vmul.f32 %v270, %v294
      %v310 = vmul.f32 %v271, %v294
      %v311 = vmul.f32 %v272, %v294
      %v312 = vmul.f32 %v273, %v294
      %v313 = vmul.f32 %v274, %v294
      %v314 = vmul.f32 %v275, %v294
      %v315 = vmul.f32 %v276, %v294
      %v316 = vmul.f32 %v277, %v294
      %v317 = vmul.f32 %v278, %v294
      %v318 = vmul.f32 %v279, %v294
      %v319 = vmul.f32 %v280, %v294
      %v320 = vmul.f32 %v281, %v294
      %v321 = vmul.f32 %v282, %v294
      %v322 = vmul.f32 %v283, %v294
      %v323 = vmul.f32 %v284, %v294
      %v324 = vmul.f32 %v285, %v294
      %v325 = vmul.f32 %v286, %v294
      %v326 = vmul.f32 %v287, %v294
      %v327 = vmul.f32 %v288, %v294
      %v328 = vld [vmem:[%s2] sm:$0x1]
      %v330 = vlaneseq
      %v331 = vshrl.u32 %v330, 7
      %v332 = vsub.s32 0, %v331
      %v333 = vrot.slane %v328, %v332
      %v335 = vadd.f32 %v296, %v333
      %v336 = vadd.f32 %v297, %v333
      %v337 = vadd.f32 %v298, %v333
      %v338 = vadd.f32 %v299, %v333
      %v339 = vadd.f32 %v300, %v333
      %v340 = vadd.f32 %v301, %v333
      %v341 = vadd.f32 %v302, %v333
      %v342 = vadd.f32 %v303, %v333
      %v343 = vadd.f32 %v304, %v333
      %v344 = vadd.f32 %v305, %v333
      %v345 = vadd.f32 %v306, %v333
      %v346 = vadd.f32 %v307, %v333
      %v347 = vadd.f32 %v308, %v333
      %v348 = vadd.f32 %v309, %v333
      %v349 = vadd.f32 %v310, %v333
      %v350 = vadd.f32 %v311, %v333
      %v351 = vadd.f32 %v312, %v333
      %v352 = vadd.f32 %v313, %v333
      %v353 = vadd.f32 %v314, %v333
      %v354 = vadd.f32 %v315, %v333
      %v355 = vadd.f32 %v316, %v333
      %v356 = vadd.f32 %v317, %v333
      %v357 = vadd.f32 %v318, %v333
      %v358 = vadd.f32 %v319, %v333
      %v359 = vadd.f32 %v320, %v333
      %v360 = vadd.f32 %v321, %v333
      %v361 = vadd.f32 %v322, %v333
      %v362 = vadd.f32 %v323, %v333
      %v363 = vadd.f32 %v324, %v333
      %v364 = vadd.f32 %v325, %v333
      %v365 = vadd.f32 %v326, %v333
      %v366 = vadd.f32 %v327, %v333
      %v367 = vmax.f32 %v335, 0.0
      %v368 = vmax.f32 %v336, 0.0
      %v369 = vmax.f32 %v337, 0.0
      %v370 = vmax.f32 %v338, 0.0
      %v371 = vmax.f32 %v339, 0.0
      %v372 = vmax.f32 %v340, 0.0
      %v373 = vmax.f32 %v341, 0.0
      %v374 = vmax.f32 %v342, 0.0
      %v375 = vmax.f32 %v343, 0.0
      %v376 = vmax.f32 %v344, 0.0
      %v377 = vmax.f32 %v345, 0.0
      %v378 = vmax.f32 %v346, 0.0
      %v379 = vmax.f32 %v347, 0.0
      %v380 = vmax.f32 %v348, 0.0
      %v381 = vmax.f32 %v349, 0.0
      %v382 = vmax.f32 %v350, 0.0
      %v383 = vmax.f32 %v351, 0.0
      %v384 = vmax.f32 %v352, 0.0
      %v385 = vmax.f32 %v353, 0.0
      %v386 = vmax.f32 %v354, 0.0
      %v387 = vmax.f32 %v355, 0.0
      %v388 = vmax.f32 %v356, 0.0
      %v389 = vmax.f32 %v357, 0.0
      %v390 = vmax.f32 %v358, 0.0
      %v391 = vmax.f32 %v359, 0.0
      %v392 = vmax.f32 %v360, 0.0
      %v393 = vmax.f32 %v361, 0.0
      %v394 = vmax.f32 %v362, 0.0
      %v395 = vmax.f32 %v363, 0.0
      %v396 = vmax.f32 %v364, 0.0
      %v397 = vmax.f32 %v365, 0.0
      %v398 = vmax.f32 %v366, 0.0
      %v399 = vpack.c.bf16 %v368, %v367
      %v400 = vpack.c.bf16 %v370, %v369
      %v401 = vpack.c.bf16 %v372, %v371
      %v402 = vpack.c.bf16 %v374, %v373
      %v403 = vpack.c.bf16 %v376, %v375
      %v404 = vpack.c.bf16 %v378, %v377
      %v405 = vpack.c.bf16 %v380, %v379
      %v406 = vpack.c.bf16 %v382, %v381
      %v407 = vpack.c.bf16 %v384, %v383
      %v408 = vpack.c.bf16 %v386, %v385
      %v409 = vpack.c.bf16 %v388, %v387
      %v410 = vpack.c.bf16 %v390, %v389
      %v411 = vpack.c.bf16 %v392, %v391
      %v412 = vpack.c.bf16 %v394, %v393
      %v413 = vpack.c.bf16 %v396, %v395
      %v414 = vpack.c.bf16 %v398, %v397
      %v415 = vld [vmem:[%s3] sm:$0xf]
      %v416 = vld [vmem:[%s3 + $0x4] sm:$0xf]
      %v417 = vld [vmem:[%s3 + $0x8] sm:$0xf]
      %v418 = vld [vmem:[%s3 + $0xc] sm:$0xf]
      %v419 = vld [vmem:[%s3 + $0x10] sm:$0xf]
      %v420 = vld [vmem:[%s3 + $0x14] sm:$0xf]
      %v421 = vld [vmem:[%s3 + $0x18] sm:$0xf]
      %v422 = vld [vmem:[%s3 + $0x1c] sm:$0xf]
      %v423 = vld [vmem:[%s3 + $0x20] sm:$0xf]
      %v424 = vld [vmem:[%s3 + $0x24] sm:$0xf]
      %v425 = vld [vmem:[%s3 + $0x28] sm:$0xf]
      %v426 = vld [vmem:[%s3 + $0x2c] sm:$0xf]
      %v427 = vld [vmem:[%s3 + $0x30] sm:$0xf]
      %v428 = vld [vmem:[%s3 + $0x34] sm:$0xf]
      %v429 = vld [vmem:[%s3 + $0x38] sm:$0xf]
      %v430 = vld [vmem:[%s3 + $0x3c] sm:$0xf]
      %v447 = vunpack.c.l.b16 %v415
      %v448 = vunpack.c.l.b16 %v416
      %v449 = vunpack.c.l.b16 %v417
      %v450 = vunpack.c.l.b16 %v418
      %v451 = vunpack.c.l.b16 %v419
      %v452 = vunpack.c.l.b16 %v420
      %v453 = vunpack.c.l.b16 %v421
      %v454 = vunpack.c.l.b16 %v422
      %v455 = vunpack.c.l.b16 %v423
      %v456 = vunpack.c.l.b16 %v424
      %v457 = vunpack.c.l.b16 %v425
      %v458 = vunpack.c.l.b16 %v426
      %v459 = vunpack.c.l.b16 %v427
      %v460 = vunpack.c.l.b16 %v428
      %v461 = vunpack.c.l.b16 %v429
      %v462 = vunpack.c.l.b16 %v430
      %v463 = vpack.c.b16 %v448, %v447
      %v464 = vpack.c.b16 %v450, %v449
      %v465 = vpack.c.b16 %v452, %v451
      %v466 = vpack.c.b16 %v454, %v453
      %v467 = vpack.c.b16 %v456, %v455
      %v468 = vpack.c.b16 %v458, %v457
      %v469 = vpack.c.b16 %v460, %v459
      %v470 = vpack.c.b16 %v462, %v461
      %479 = vmatprep.subr.bf16.mxu0 0
      %480 = vmatpush1.bf16.msra.mxu0 %v463
      %481 = vmatprep.subr.bf16.mxu0 0
      %482 = vmatpush1.bf16.msra.mxu0 %v464
      %483 = vmatprep.subr.bf16.mxu0 0
      %484 = vmatpush1.bf16.msra.mxu0 %v465
      %485 = vmatprep.subr.bf16.mxu0 0
      %486 = vmatpush1.bf16.msra.mxu0 %v466
      %487 = vmatprep.subr.bf16.mxu0 0
      %488 = vmatpush1.bf16.msra.mxu0 %v467
      %489 = vmatprep.subr.bf16.mxu0 0
      %490 = vmatpush1.bf16.msra.mxu0 %v468
      %491 = vmatprep.subr.bf16.mxu0 0
      %492 = vmatpush1.bf16.msra.mxu0 %v469
      %493 = vmatprep.subr.bf16.mxu0 0
      %494 = vmatpush1.bf16.msra.mxu0 %v470
      %495 = vmatprep.subr.bf16.mxu0 0
      %496 = vmatpush1.bf16.msra.mxu0 0
      %497 = vmatprep.subr.bf16.mxu0 0
      %498 = vmatpush1.bf16.msra.mxu0 0
      %499 = vmatprep.subr.bf16.mxu0 0
      %500 = vmatpush1.bf16.msra.mxu0 0
      %501 = vmatprep.subr.bf16.mxu0 0
      %502 = vmatpush1.bf16.msra.mxu0 0
      %503 = vmatprep.subr.bf16.mxu0 0
      %504 = vmatpush1.bf16.msra.mxu0 0
      %505 = vmatprep.subr.bf16.mxu0 0
      %506 = vmatpush1.bf16.msra.mxu0 0
      %507 = vmatprep.subr.bf16.mxu0 0
      %508 = vmatpush1.bf16.msra.mxu0 0
      %509 = vmatprep.subr.bf16.mxu0 0
      %510 = vmatpush1.bf16.msra.mxu0 0
      %511 = vmatprep.mubr.bf16.mxu0 0
      %512 = vmatmul.mubr.bf16.gmra.mrb[0].mxu0 %v399
      %v513 = vpop.f32.mrb[0].mxu0
      %v514 = vadd.f32 0.0, %v513
      %v515 = vpop.f32.mrb[0].mxu0
      %v516 = vpop.f32.mrb[0].mxu0
      %v517 = vadd.f32 0.0, %v516
      %v518 = vpop.f32.mrb[0].mxu0
      %519 = vmatprep.mubr.bf16.mxu0 0
      %520 = vmatmul.mubr.bf16.gmra.mrb[0].mxu0 %v400
      %v521 = vpop.f32.mrb[0].mxu0
      %v522 = vadd.f32 0.0, %v521
      %v523 = vpop.f32.mrb[0].mxu0
      %v524 = vpop.f32.mrb[0].mxu0
      %v525 = vadd.f32 0.0, %v524
      %v526 = vpop.f32.mrb[0].mxu0
      %527 = vmatprep.mubr.bf16.mxu0 0
      %528 = vmatmul.mubr.bf16.gmra.mrb[0].mxu0 %v401
      %v529 = vpop.f32.mrb[0].mxu0
      %v530 = vadd.f32 0.0, %v529
      %v531 = vpop.f32.mrb[0].mxu0
      %v532 = vpop.f32.mrb[0].mxu0
      %v533 = vadd.f32 0.0, %v532
      %v534 = vpop.f32.mrb[0].mxu0
      %535 = vmatprep.mubr.bf16.mxu0 0
      %536 = vmatmul.mubr.bf16.gmra.mrb[0].mxu0 %v402
      %v537 = vpop.f32.mrb[0].mxu0
      %v538 = vadd.f32 0.0, %v537
      %v539 = vpop.f32.mrb[0].mxu0
      %v540 = vpop.f32.mrb[0].mxu0
      %v541 = vadd.f32 0.0, %v540
      %v542 = vpop.f32.mrb[0].mxu0
      %543 = vmatprep.mubr.bf16.mxu0 0
      %544 = vmatmul.mubr.bf16.gmra.mrb[0].mxu0 %v403
      %v545 = vpop.f32.mrb[0].mxu0
      %v546 = vadd.f32 0.0, %v545
      %v547 = vpop.f32.mrb[0].mxu0
      %v548 = vpop.f32.mrb[0].mxu0
      %v549 = vadd.f32 0.0, %v548
      %v550 = vpop.f32.mrb[0].mxu0
      %551 = vmatprep.mubr.bf16.mxu0 0
      %552 = vmatmul.mubr.bf16.gmra.mrb[0].mxu0 %v404
      %v553 = vpop.f32.mrb[0].mxu0
      %v554 = vadd.f32 0.0, %v553
      %v555 = vpop.f32.mrb[0].mxu0
      %v556 = vpop.f32.mrb[0].mxu0
      %v557 = vadd.f32 0.0, %v556
      %v558 = vpop.f32.mrb[0].mxu0
      %559 = vmatprep.mubr.bf16.mxu0 0
      %560 = vmatmul.mubr.bf16.gmra.mrb[0].mxu0 %v405
      %v561 = vpop.f32.mrb[0].mxu0
      %v562 = vadd.f32 0.0, %v561
      %v563 = vpop.f32.mrb[0].mxu0
      %v564 = vpop.f32.mrb[0].mxu0
      %v565 = vadd.f32 0.0, %v564
      %v566 = vpop.f32.mrb[0].mxu0
      %567 = vmatprep.mubr.bf16.mxu0 0
      %568 = vmatmul.mubr.bf16.gmra.mrb[0].mxu0 %v406
      %v569 = vpop.f32.mrb[0].mxu0
      %v570 = vadd.f32 0.0, %v569
      %v571 = vpop.f32.mrb[0].mxu0
      %v572 = vpop.f32.mrb[0].mxu0
      %v573 = vadd.f32 0.0, %v572
      %v574 = vpop.f32.mrb[0].mxu0
      %575 = vmatprep.mubr.bf16.mxu0 0
      %576 = vmatmul.mubr.bf16.gmra.mrb[0].mxu0 %v407
      %v577 = vpop.f32.mrb[0].mxu0
      %v578 = vadd.f32 0.0, %v577
      %v579 = vpop.f32.mrb[0].mxu0
      %v580 = vpop.f32.mrb[0].mxu0
      %v581 = vadd.f32 0.0, %v580
      %v582 = vpop.f32.mrb[0].mxu0
      %583 = vmatprep.mubr.bf16.mxu0 0
      %584 = vmatmul.mubr.bf16.gmra.mrb[0].mxu0 %v408
      %v585 = vpop.f32.mrb[0].mxu0
      %v586 = vadd.f32 0.0, %v585
      %v587 = vpop.f32.mrb[0].mxu0
      %v588 = vpop.f32.mrb[0].mxu0
      %v589 = vadd.f32 0.0, %v588
      %v590 = vpop.f32.mrb[0].mxu0
      %591 = vmatprep.mubr.bf16.mxu0 0
      %592 = vmatmul.mubr.bf16.gmra.mrb[0].mxu0 %v409
      %v593 = vpop.f32.mrb[0].mxu0
      %v594 = vadd.f32 0.0, %v593
      %v595 = vpop.f32.mrb[0].mxu0
      %v596 = vpop.f32.mrb[0].mxu0
      %v597 = vadd.f32 0.0, %v596
      %v598 = vpop.f32.mrb[0].mxu0
      %599 = vmatprep.mubr.bf16.mxu0 0
      %600 = vmatmul.mubr.bf16.gmra.mrb[0].mxu0 %v410
      %v601 = vpop.f32.mrb[0].mxu0
      %v602 = vadd.f32 0.0, %v601
      %v603 = vpop.f32.mrb[0].mxu0
      %v604 = vpop.f32.mrb[0].mxu0
      %v605 = vadd.f32 0.0, %v604
      %v606 = vpop.f32.mrb[0].mxu0
      %607 = vmatprep.mubr.bf16.mxu0 0
      %608 = vmatmul.mubr.bf16.gmra.mrb[0].mxu0 %v411
      %v609 = vpop.f32.mrb[0].mxu0
      %v610 = vadd.f32 0.0, %v609
      %v611 = vpop.f32.mrb[0].mxu0
      %v612 = vpop.f32.mrb[0].mxu0
      %v613 = vadd.f32 0.0, %v612
      %v614 = vpop.f32.mrb[0].mxu0
      %615 = vmatprep.mubr.bf16.mxu0 0
      %616 = vmatmul.mubr.bf16.gmra.mrb[0].mxu0 %v412
      %v617 = vpop.f32.mrb[0].mxu0
      %v618 = vadd.f32 0.0, %v617
      %v619 = vpop.f32.mrb[0].mxu0
      %v620 = vpop.f32.mrb[0].mxu0
      %v621 = vadd.f32 0.0, %v620
      %v622 = vpop.f32.mrb[0].mxu0
      %623 = vmatprep.mubr.bf16.mxu0 0
      %624 = vmatmul.mubr.bf16.gmra.mrb[0].mxu0 %v413
      %v625 = vpop.f32.mrb[0].mxu0
      %v626 = vadd.f32 0.0, %v625
      %v627 = vpop.f32.mrb[0].mxu0
      %v628 = vpop.f32.mrb[0].mxu0
      %v629 = vadd.f32 0.0, %v628
      %v630 = vpop.f32.mrb[0].mxu0
      %631 = vmatprep.mubr.bf16.mxu0 0
      %632 = vmatmul.mubr.bf16.gmra.mrb[0].mxu0 %v414
      %v633 = vpop.f32.mrb[0].mxu0
      %v634 = vadd.f32 0.0, %v633
      %v635 = vpop.f32.mrb[0].mxu0
      %v636 = vpop.f32.mrb[0].mxu0
      %v637 = vadd.f32 0.0, %v636
      %v638 = vpop.f32.mrb[0].mxu0
      %639 = vdwg.mxu0
      %640 = vst [vmem:[%s248] sm:$0xff] %v514
      %641 = vst [vmem:[%s248 + $0x8] sm:$0xff] %v517
      %642 = vst [vmem:[%s248 + $0x10] sm:$0xff] %v522
      %643 = vst [vmem:[%s248 + $0x18] sm:$0xff] %v525
      %644 = vst [vmem:[%s248 + $0x20] sm:$0xff] %v530
      %645 = vst [vmem:[%s248 + $0x28] sm:$0xff] %v533
      %646 = vst [vmem:[%s248 + $0x30] sm:$0xff] %v538
      %647 = vst [vmem:[%s248 + $0x38] sm:$0xff] %v541
      %648 = vst [vmem:[%s248 + $0x40] sm:$0xff] %v546
      %649 = vst [vmem:[%s248 + $0x48] sm:$0xff] %v549
      %650 = vst [vmem:[%s248 + $0x50] sm:$0xff] %v554
      %651 = vst [vmem:[%s248 + $0x58] sm:$0xff] %v557
      %652 = vst [vmem:[%s248 + $0x60] sm:$0xff] %v562
      %653 = vst [vmem:[%s248 + $0x68] sm:$0xff] %v565
      %654 = vst [vmem:[%s248 + $0x70] sm:$0xff] %v570
      %655 = vst [vmem:[%s248 + $0x78] sm:$0xff] %v573
      %656 = vst [vmem:[%s248 + $0x80] sm:$0xff] %v578
      %657 = vst [vmem:[%s248 + $0x88] sm:$0xff] %v581
      %658 = vst [vmem:[%s248 + $0x90] sm:$0xff] %v586
      %659 = vst [vmem:[%s248 + $0x98] sm:$0xff] %v589
      %660 = vst [vmem:[%s248 + $0xa0] sm:$0xff] %v594
      %661 = vst [vmem:[%s248 + $0xa8] sm:$0xff] %v597
      %662 = vst [vmem:[%s248 + $0xb0] sm:$0xff] %v602
      %663 = vst [vmem:[%s248 + $0xb8] sm:$0xff] %v605
      %664 = vst [vmem:[%s248 + $0xc0] sm:$0xff] %v610
      %665 = vst [vmem:[%s248 + $0xc8] sm:$0xff] %v613
      %666 = vst [vmem:[%s248 + $0xd0] sm:$0xff] %v618
      %667 = vst [vmem:[%s248 + $0xd8] sm:$0xff] %v621
      %668 = vst [vmem:[%s248 + $0xe0] sm:$0xff] %v626
      %669 = vst [vmem:[%s248 + $0xe8] sm:$0xff] %v629
      %670 = vst [vmem:[%s248 + $0xf0] sm:$0xff] %v634
      %671 = vst [vmem:[%s248 + $0xf8] sm:$0xff] %v637
      %v672 = vld [vmem:[%s5] sm:$0x1]
      %v673 = vadd.f32 %v514, %v517
      %v674 = vadd.f32 %v673, %v522
      %v675 = vadd.f32 %v674, %v525
      %v676 = vadd.f32 %v675, %v530
      %v677 = vadd.f32 %v676, %v533
      %v678 = vadd.f32 %v677, %v538
      %v679 = vadd.f32 %v678, %v541
      %v680 = vadd.f32 %v679, %v546
      %v681 = vadd.f32 %v680, %v549
      %v682 = vadd.f32 %v681, %v554
      %v683 = vadd.f32 %v682, %v557
      %v684 = vadd.f32 %v683, %v562
      %v685 = vadd.f32 %v684, %v565
      %v686 = vadd.f32 %v685, %v570
      %v687 = vadd.f32 %v686, %v573
      %v688 = vadd.f32 %v687, %v578
      %v689 = vadd.f32 %v688, %v581
      %v690 = vadd.f32 %v689, %v586
      %v691 = vadd.f32 %v690, %v589
      %v692 = vadd.f32 %v691, %v594
      %v693 = vadd.f32 %v692, %v597
      %v694 = vadd.f32 %v693, %v602
      %v695 = vadd.f32 %v694, %v605
      %v696 = vadd.f32 %v695, %v610
      %v697 = vadd.f32 %v696, %v613
      %v698 = vadd.f32 %v697, %v618
      %v699 = vadd.f32 %v698, %v621
      %v700 = vadd.f32 %v699, %v626
      %v701 = vadd.f32 %v700, %v629
      %v702 = vadd.f32 %v701, %v634
      %v703 = vadd.f32 %v702, %v637
      %v704 = vrot.slane %v703, 4
      %v705 = vadd.f32 %v703, %v704
      %v706 = vrot.slane %v705, 2
      %v707 = vadd.f32 %v705, %v706
      %v708 = vrot.slane %v707, 1
      %v709 = vadd.f32 %v707, %v708
      %v710 = vadd.f32 %v672, %v709
      %711 = vst [vmem:[%s5] sm:$0x1] %v710
      %v712 = vld [vmem:[%s6] sm:$0x1]
      %v713 = vmul.f32 %v514, %v514
      %v714 = vmul.f32 %v517, %v517
      %v715 = vmul.f32 %v522, %v522
      %v716 = vmul.f32 %v525, %v525
      %v717 = vmul.f32 %v530, %v530
      %v718 = vmul.f32 %v533, %v533
      %v719 = vmul.f32 %v538, %v538
      %v720 = vmul.f32 %v541, %v541
      %v721 = vmul.f32 %v546, %v546
      %v722 = vmul.f32 %v549, %v549
      %v723 = vmul.f32 %v554, %v554
      %v724 = vmul.f32 %v557, %v557
      %v725 = vmul.f32 %v562, %v562
      %v726 = vmul.f32 %v565, %v565
      %v727 = vmul.f32 %v570, %v570
      %v728 = vmul.f32 %v573, %v573
      %v729 = vmul.f32 %v578, %v578
      %v730 = vmul.f32 %v581, %v581
      %v731 = vmul.f32 %v586, %v586
      %v732 = vmul.f32 %v589, %v589
      %v733 = vmul.f32 %v594, %v594
      %v734 = vmul.f32 %v597, %v597
      %v735 = vmul.f32 %v602, %v602
      %v736 = vmul.f32 %v605, %v605
      %v737 = vmul.f32 %v610, %v610
      %v738 = vmul.f32 %v613, %v613
      %v739 = vmul.f32 %v618, %v618
      %v740 = vmul.f32 %v621, %v621
      %v741 = vmul.f32 %v626, %v626
      %v742 = vmul.f32 %v629, %v629
      %v743 = vmul.f32 %v634, %v634
      %v744 = vmul.f32 %v637, %v637
      %v745 = vadd.f32 %v713, %v714
      %v746 = vadd.f32 %v745, %v715
      %v747 = vadd.f32 %v746, %v716
      %v748 = vadd.f32 %v747, %v717
      %v749 = vadd.f32 %v748, %v718
      %v750 = vadd.f32 %v749, %v719
      %v751 = vadd.f32 %v750, %v720
      %v752 = vadd.f32 %v751, %v721
      %v753 = vadd.f32 %v752, %v722
      %v754 = vadd.f32 %v753, %v723
      %v755 = vadd.f32 %v754, %v724
      %v756 = vadd.f32 %v755, %v725
      %v757 = vadd.f32 %v756, %v726
      %v758 = vadd.f32 %v757, %v727
      %v759 = vadd.f32 %v758, %v728
      %v760 = vadd.f32 %v759, %v729
      %v761 = vadd.f32 %v760, %v730
      %v762 = vadd.f32 %v761, %v731
      %v763 = vadd.f32 %v762, %v732
      %v764 = vadd.f32 %v763, %v733
      %v765 = vadd.f32 %v764, %v734
      %v766 = vadd.f32 %v765, %v735
      %v767 = vadd.f32 %v766, %v736
      %v768 = vadd.f32 %v767, %v737
      %v769 = vadd.f32 %v768, %v738
      %v770 = vadd.f32 %v769, %v739
      %v771 = vadd.f32 %v770, %v740
      %v772 = vadd.f32 %v771, %v741
      %v773 = vadd.f32 %v772, %v742
      %v774 = vadd.f32 %v773, %v743
      %v775 = vadd.f32 %v774, %v744
      %v776 = vrot.slane %v775, 4
      %v777 = vadd.f32 %v775, %v776
      %v778 = vrot.slane %v777, 2
      %v779 = vadd.f32 %v777, %v778
      %v780 = vrot.slane %v779, 1
      %v781 = vadd.f32 %v779, %v780
      %v782 = vadd.f32 %v712, %v781
      %783 = vst [vmem:[%s6] sm:$0x1] %v782
      %s784 = smul.u32 32, %s18
      %p785 = scmp.lt.s32.totalorder %s784, 63
      %s786 = scalar_select %p785, %s784, 63
      %s787 = smul.addr %s786, 8
      %s788 = scalar_lea.vmem %s4, %s787
      // Predicated region
      $region41: #{bottleneck_forward.8} parent=35 // pred_check
        %p789 = pneg %p125
      $region42: #{bottleneck_forward.8} parent=35 // pred_check_branch
        %791 = sbr.rel (%p789) target = $region44
      $region43: #{bottleneck_forward.8} parent=35 // pred_region
        %s792 = smul.u32 32, %s18
      $region44: #{bottleneck_forward.8} parent=35 // pred_fallthru
        _
      // Predicated region
      $region45: #{bottleneck_forward.8} parent=35 // pred_check
        %p793 = pneg %p146
      $region46: #{bottleneck_forward.8} parent=35 // pred_check_branch
        %795 = sbr.rel (%p793) target = $region48
      $region47: #{bottleneck_forward.8} parent=35 // pred_region
        _
      $region48: #{bottleneck_forward.8} parent=35 // pred_fallthru
        _
      // Predicated region
      $region49: #{bottleneck_forward.8} parent=35 // pred_check
        %p796 = pneg %p167
      $region50: #{bottleneck_forward.8} parent=35 // pred_check_branch
        %798 = sbr.rel (%p796) target = $region52
      $region51: #{bottleneck_forward.8} parent=35 // pred_region
        _
      $region52: #{bottleneck_forward.8} parent=35 // pred_fallthru
        _
      // Predicated region
      $region53: #{bottleneck_forward.8} parent=35 // pred_check
        %p799 = pneg %p146
      $region54: #{bottleneck_forward.8} parent=35 // pred_check_branch
        %801 = sbr.rel (%p799) target = $region56
      $region55: #{bottleneck_forward.8} parent=35 // pred_region
        _
      $region56: #{bottleneck_forward.8} parent=35 // pred_fallthru
        _
      // Predicated region
      $region57: #{bottleneck_forward.8} parent=35 // pred_check
        %p802 = pneg %p167
      $region58: #{bottleneck_forward.8} parent=35 // pred_check_branch
        %804 = sbr.rel (%p802) target = $region60
      $region59: #{bottleneck_forward.8} parent=35 // pred_region
        _
      $region60: #{bottleneck_forward.8} parent=35 // pred_fallthru
        _
    $region36: #{bottleneck_forward.8} parent=5 // pred_fallthru
      _
    %p805 = scmp.le.s32.totalorder 2, %s13
    // Predicated region
    $region61: #{bottleneck_forward.8} parent=5 // pred_check
      %p806 = pneg %p805
    $region62: #{bottleneck_forward.8} parent=5 // pred_check_branch
      %808 = sbr.rel (%p806) target = $region64
    $region63: #{bottleneck_forward.8} parent=5 // pred_region
      %s809 = ssub.s32 %s13, 2
      // Predicated region
      $region65: #{bottleneck_forward.8} parent=63 // pred_check
        %p810 = pneg %p131
      $region66: #{bottleneck_forward.8} parent=63 // pred_check_branch
        %812 = sbr.rel (%p810) target = $region68
      $region67: #{bottleneck_forward.8} parent=63 // pred_region
        %s813 = smul.u32 32, %s19
        %p814 = scmp.lt.s32.totalorder %s813, 63
        %s815 = scalar_select %p814, %s813, 63
        %s816 = smul.addr %s815, 8
        %s817 = scalar_lea.vmem %s4, %s816
      $region68: #{bottleneck_forward.8} parent=63 // pred_fallthru
        _
    $region64: #{bottleneck_forward.8} parent=5 // pred_fallthru
      _
  $region6: #{bottleneck_forward.8} parent=0 // loop_footer
    %s17 = sadd.s32 1, %s13
  $region7: #{bottleneck_forward.8} parent=0 // loop_footer_branch
    %12 = sbr.rel target = $region3
  $region8: #{bottleneck_forward.8} parent=0 // loop_exit
    _

// kernel: bottleneck_forward.9
$region0: #{bottleneck_forward.9}
  #allocation0 [shape = 'u32[]', space=smem, size = 0x4, offset = 0x4, fixed_abs, tag = 'smem constant byte address 0x4 - core index']
  #allocation1 [shape = 'u32[144,128]{1,0:T(1,128)}', space=vmem, size = 0x12000, scoped, tag = 'internal scratch']
  %s0 = inlined_call_operand.vmem [shape: f32[512,128], index: 0, kind: input, shape index: {}]
  %s1 = inlined_call_operand.vmem [shape: f32[1,128], index: 1, kind: input, shape index: {}]
  %s2 = inlined_call_operand.vmem [shape: f32[1,128], index: 2, kind: input, shape index: {}]
  %s3 = inlined_call_operand.vmem [shape: f32[512,128], index: 3, kind: input, shape index: {}]
  %s4 = inlined_call_operand.vmem [shape: f32[512,128], index: 4, kind: output, shape index: {}]
  %s5 = sld [smem:[#allocation0]]
  $region49: #{bottleneck_forward.9} parent=0
    _
  %s7 = ssub.s32 1, %s5
  %s8 = scalar_select 0, %s7, %s5
  loop: start=0, step=1, limit=4
  $region2: #{bottleneck_forward.9} parent=0 // loop_pre_header
    _
  $region3: #{bottleneck_forward.9} parent=0 // loop_header
    %s10 = sphi 0, %s14
    %p11 = scmp.ge.s32.totalorder %s10, 4
    %s20 = sphi 0, %s22
    %s23 = sphi 0, %s20
    %s24 = sphi 0, %s23
    %s40 = sphi 0, %s24
    %s44 = sphi 0, %s44
    %s46 = sphi 0, %s44
    %s47 = sphi 0, %s46
    %s61 = sphi 0, %s47
    %s65 = sphi 0, %s65
    %s67 = sphi 0, %s65
    %s68 = sphi 0, %s67
    %s82 = sphi 0, %s68
    %s88 = sphi 0, %s90
    %s91 = sphi 0, %s88
    %s92 = sphi 0, %s91
    %s108 = sphi 0, %s92
    %s114 = sphi 0, %s116
    %s117 = sphi 0, %s114
    %s118 = sphi 0, %s117
    %s134 = sphi 0, %s118
  $region4: #{bottleneck_forward.9} parent=0 // loop_header_branch
    %13 = sbr.rel (%p11) target = $region8
  $region5: #{bottleneck_forward.9} parent=0 // loop_body
    %s15 = ssub.s32 %s10, 1
    %s16 = ssub.s32 %s10, 2
    %s17 = sadd.s32 %s10, 1
    %s18 = ssub.s32 %s10, %s17
    %p19 = scmp.eq.s32.totalorder %s18, 0
    %s21 = sadd.s32 %s20, 1
    %s22 = scalar_select %p19, %s20, %s21
    %p25 = pneg %p19
    %p26 = scmp.eq.s32.totalorder %s10, 1
    %p27 = por %p25, %p26
    %p28 = scmp.ne.s32.totalorder %s20, %s23
    %p29 = scmp.eq.s32.totalorder %s10, 0
    %p30 = por %p28, %p29
    %p31 = scmp.ne.s32.totalorder %s20, %s23
    %p32 = scmp.eq.s32.totalorder %s15, 1
    %p33 = por %p31, %p32
    %p34 = scmp.ne.s32.totalorder %s23, %s24
    %p35 = scmp.eq.s32.totalorder %s15, 0
    %p36 = por %p34, %p35
    %p37 = scmp.ne.s32.totalorder %s23, %s24
    %p38 = scmp.eq.s32.totalorder %s16, 1
    %p39 = por %p37, %p38
    %p41 = scmp.ne.s32.totalorder %s24, %s40
    %p42 = scmp.eq.s32.totalorder %s16, 0
    %p43 = por %p41, %p42
    %s45 = sadd.s32 %s44, 1
    %p48 = scmp.eq.s32.totalorder %s10, 1
    %p49 = scmp.ne.s32.totalorder %s44, %s46
    %p50 = scmp.eq.s32.totalorder %s10, 0
    %p51 = por %p49, %p50
    %p52 = scmp.ne.s32.totalorder %s44, %s46
    %p53 = scmp.eq.s32.totalorder %s15, 1
    %p54 = por %p52, %p53
    %p55 = scmp.ne.s32.totalorder %s46, %s47
    %p56 = scmp.eq.s32.totalorder %s15, 0
    %p57 = por %p55, %p56
    %p58 = scmp.ne.s32.totalorder %s46, %s47
    %p59 = scmp.eq.s32.totalorder %s16, 1
    %p60 = por %p58, %p59
    %p62 = scmp.ne.s32.totalorder %s47, %s61
    %p63 = scmp.eq.s32.totalorder %s16, 0
    %p64 = por %p62, %p63
    %s66 = sadd.s32 %s65, 1
    %p69 = scmp.eq.s32.totalorder %s10, 1
    %p70 = scmp.ne.s32.totalorder %s65, %s67
    %p71 = scmp.eq.s32.totalorder %s10, 0
    %p72 = por %p70, %p71
    %p73 = scmp.ne.s32.totalorder %s65, %s67
    %p74 = scmp.eq.s32.totalorder %s15, 1
    %p75 = por %p73, %p74
    %p76 = scmp.ne.s32.totalorder %s67, %s68
    %p77 = scmp.eq.s32.totalorder %s15, 0
    %p78 = por %p76, %p77
    %p79 = scmp.ne.s32.totalorder %s67, %s68
    %p80 = scmp.eq.s32.totalorder %s16, 1
    %p81 = por %p79, %p80
    %p83 = scmp.ne.s32.totalorder %s68, %s82
    %p84 = scmp.eq.s32.totalorder %s16, 0
    %p85 = por %p83, %p84
    %s86 = ssub.s32 %s10, %s17
    %p87 = scmp.eq.s32.totalorder %s86, 0
    %s89 = sadd.s32 %s88, 1
    %s90 = scalar_select %p87, %s88, %s89
    %p93 = pneg %p87
    %p94 = scmp.eq.s32.totalorder %s10, 1
    %p95 = por %p93, %p94
    %p96 = scmp.ne.s32.totalorder %s88, %s91
    %p97 = scmp.eq.s32.totalorder %s10, 0
    %p98 = por %p96, %p97
    %p99 = scmp.ne.s32.totalorder %s88, %s91
    %p100 = scmp.eq.s32.totalorder %s15, 1
    %p101 = por %p99, %p100
    %p102 = scmp.ne.s32.totalorder %s91, %s92
    %p103 = scmp.eq.s32.totalorder %s15, 0
    %p104 = por %p102, %p103
    %p105 = scmp.ne.s32.totalorder %s91, %s92
    %p106 = scmp.eq.s32.totalorder %s16, 1
    %p107 = por %p105, %p106
    %p109 = scmp.ne.s32.totalorder %s92, %s108
    %p110 = scmp.eq.s32.totalorder %s16, 0
    %p111 = por %p109, %p110
    %s112 = ssub.s32 %s10, %s17
    %p113 = scmp.eq.s32.totalorder %s112, 0
    %s115 = sadd.s32 %s114, 1
    %s116 = scalar_select %p113, %s114, %s115
    %p119 = pneg %p113
    %p120 = scmp.eq.s32.totalorder %s10, 1
    %p121 = por %p119, %p120
    %p122 = scmp.ne.s32.totalorder %s114, %s117
    %p123 = scmp.eq.s32.totalorder %s10, 0
    %p124 = por %p122, %p123
    %p125 = scmp.ne.s32.totalorder %s114, %s117
    %p126 = scmp.eq.s32.totalorder %s15, 1
    %p127 = por %p125, %p126
    %p128 = scmp.ne.s32.totalorder %s117, %s118
    %p129 = scmp.eq.s32.totalorder %s15, 0
    %p130 = por %p128, %p129
    %p131 = scmp.ne.s32.totalorder %s117, %s118
    %p132 = scmp.eq.s32.totalorder %s16, 1
    %p133 = por %p131, %p132
    %p135 = scmp.ne.s32.totalorder %s118, %s134
    %p136 = scmp.eq.s32.totalorder %s16, 0
    %p137 = por %p135, %p136
    %p138 = scmp.le.s32.totalorder 1, %s10
    %p139 = scmp.lt.s32.totalorder %s10, 3
    %p140 = pnand %p138, %p139
    %p141 = pneg %p140
    // Predicated region
    $region9: #{bottleneck_forward.9} parent=5 // pred_check
      _
    $region10: #{bottleneck_forward.9} parent=5 // pred_check_branch
      %143 = sbr.rel (%p140) target = $region12
    $region11: #{bottleneck_forward.9} parent=5 // pred_region
      %s144 = ssub.s32 %s10, 1
      // Predicated region
      $region13: #{bottleneck_forward.9} parent=11 // pred_check
        %p145 = pneg %p57
      $region14: #{bottleneck_forward.9} parent=11 // pred_check_branch
        %147 = sbr.rel (%p145) target = $region16
      $region15: #{bottleneck_forward.9} parent=11 // pred_region
        _
      $region16: #{bottleneck_forward.9} parent=11 // pred_fallthru
        _
      // Predicated region
      $region17: #{bottleneck_forward.9} parent=11 // pred_check
        %p148 = pneg %p78
      $region18: #{bottleneck_forward.9} parent=11 // pred_check_branch
        %150 = sbr.rel (%p148) target = $region20
      $region19: #{bottleneck_forward.9} parent=11 // pred_region
        _
      $region20: #{bottleneck_forward.9} parent=11 // pred_fallthru
        _
    $region12: #{bottleneck_forward.9} parent=5 // pred_fallthru
      _
    %p151 = scmp.lt.s32.totalorder %s10, 2
    // Predicated region
    $region21: #{bottleneck_forward.9} parent=5 // pred_check
      %p152 = pneg %p151
    $region22: #{bottleneck_forward.9} parent=5 // pred_check_branch
      %154 = sbr.rel (%p152) target = $region24
    $region23: #{bottleneck_forward.9} parent=5 // pred_region
      // Predicated region
      $region25: #{bottleneck_forward.9} parent=23 // pred_check
        %p155 = pneg %p30
      $region26: #{bottleneck_forward.9} parent=23 // pred_check_branch
        %157 = sbr.rel (%p155) target = $region28
      $region27: #{bottleneck_forward.9} parent=23 // pred_region
        %s158 = smul.u32 32, %s10
        %p159 = scmp.lt.s32.totalorder %s158, 63
        %s160 = scalar_select %p159, %s158, 63
        %s161 = smul.addr %s160, 8
        %s162 = scalar_lea.vmem %s0, %s161
        %s163 = smul.u32 32, %s10
      $region28: #{bottleneck_forward.9} parent=23 // pred_fallthru
        _
      // Predicated region
      $region29: #{bottleneck_forward.9} parent=23 // pred_check
        %p164 = pneg %p98
      $region30: #{bottleneck_forward.9} parent=23 // pred_check_branch
        %166 = sbr.rel (%p164) target = $region32
      $region31: #{bottleneck_forward.9} parent=23 // pred_region
        %s167 = smul.u32 32, %s10
        %p168 = scmp.lt.s32.totalorder %s167, 63
        %s169 = scalar_select %p168, %s167, 63
        %s170 = smul.addr %s169, 8
        %s171 = scalar_lea.vmem %s3, %s170
        %s172 = smul.u32 32, %s10
      $region32: #{bottleneck_forward.9} parent=23 // pred_fallthru
        _
    $region24: #{bottleneck_forward.9} parent=5 // pred_fallthru
      _
    %p173 = scmp.le.s32.totalorder 1, %s10
    %p174 = scmp.lt.s32.totalorder %s10, 3
    %p175 = pnand %p173, %p174
    %p176 = pneg %p175
    // Predicated region
    $region33: #{bottleneck_forward.9} parent=5 // pred_check
      _
    $region34: #{bottleneck_forward.9} parent=5 // pred_check_branch
      %178 = sbr.rel (%p175) target = $region36
    $region35: #{bottleneck_forward.9} parent=5 // pred_region
      %s179 = ssub.s32 %s10, 1
      %s180 = smul.u32 32, %s15
      %p181 = scmp.lt.s32.totalorder %s180, 63
      %s182 = scalar_select %p181, %s180, 63
      %s183 = smul.addr %s182, 8
      %s184 = scalar_lea.vmem %s0, %s183
      %p185 = pneg %p36
      %p186 = pneg %p33
      %p187 = pneg %p57
      %p188 = pneg %p54
      %p189 = pneg %p78
      %p190 = pneg %p75
      %s191 = smul.u32 32, %s15
      %p192 = scmp.lt.s32.totalorder %s191, 63
      %s193 = scalar_select %p192, %s191, 63
      %s194 = smul.addr %s193, 8
      %s195 = scalar_lea.vmem %s3, %s194
      %p196 = pneg %p104
      %p197 = pneg %p101
      %p198 = pneg %p130
      %p199 = pneg %p127
      %s200 = smul.u32 32, %s15
      %p201 = scmp.lt.s32.totalorder %s200, 63
      %s202 = scalar_select %p201, %s200, 63
      %s203 = smul.addr %s202, 8
      %s204 = scalar_lea.vmem %s4, %s203
      %s205 = smul.u32 32, %s15
      %p206 = scmp.lt.s32.totalorder %s205, 63
      %s207 = scalar_select %p206, %s205, 63
      %s208 = smul.addr %s207, 8
      %s209 = scalar_lea.vmem %s0, %s208
      %s210 = smul.u32 32, %s15
      %s211 = smul.u32 32, %s15
      %p212 = scmp.lt.s32.totalorder %s211, 63
      %s213 = scalar_select %p212, %s211, 63
      %s214 = smul.addr %s213, 8
      %s215 = scalar_lea.vmem %s3, %s214
      %s216 = smul.u32 32, %s15
      %s217 = smul.u32 32, %s15
      %p218 = scmp.lt.s32.totalorder %s217, 63
      %s219 = scalar_select %p218, %s217, 63
      %s220 = smul.addr %s219, 8
      %s221 = scalar_lea.vmem %s4, %s220
      %s222 = smul.u32 32, %s15
      %v223 = vld [vmem:[%s209] sm:$0xff]
      %v224 = vld [vmem:[%s209 + $0x8] sm:$0xff]
      %v225 = vld [vmem:[%s209 + $0x10] sm:$0xff]
      %v226 = vld [vmem:[%s209 + $0x18] sm:$0xff]
      %v227 = vld [vmem:[%s209 + $0x20] sm:$0xff]
      %v228 = vld [vmem:[%s209 + $0x28] sm:$0xff]
      %v229 = vld [vmem:[%s209 + $0x30] sm:$0xff]
      %v230 = vld [vmem:[%s209 + $0x38] sm:$0xff]
      %v231 = vld [vmem:[%s209 + $0x40] sm:$0xff]
      %v232 = vld [vmem:[%s209 + $0x48] sm:$0xff]
      %v233 = vld [vmem:[%s209 + $0x50] sm:$0xff]
      %v234 = vld [vmem:[%s209 + $0x58] sm:$0xff]
      %v235 = vld [vmem:[%s209 + $0x60] sm:$0xff]
      %v236 = vld [vmem:[%s209 + $0x68] sm:$0xff]
      %v237 = vld [vmem:[%s209 + $0x70] sm:$0xff]
      %v238 = vld [vmem:[%s209 + $0x78] sm:$0xff]
      %v239 = vld [vmem:[%s209 + $0x80] sm:$0xff]
      %v240 = vld [vmem:[%s209 + $0x88] sm:$0xff]
      %v241 = vld [vmem:[%s209 + $0x90] sm:$0xff]
      %v242 = vld [vmem:[%s209 + $0x98] sm:$0xff]
      %v243 = vld [vmem:[%s209 + $0xa0] sm:$0xff]
      %v244 = vld [vmem:[%s209 + $0xa8] sm:$0xff]
      %v245 = vld [vmem:[%s209 + $0xb0] sm:$0xff]
      %v246 = vld [vmem:[%s209 + $0xb8] sm:$0xff]
      %v247 = vld [vmem:[%s209 + $0xc0] sm:$0xff]
      %v248 = vld [vmem:[%s209 + $0xc8] sm:$0xff]
      %v249 = vld [vmem:[%s209 + $0xd0] sm:$0xff]
      %v250 = vld [vmem:[%s209 + $0xd8] sm:$0xff]
      %v251 = vld [vmem:[%s209 + $0xe0] sm:$0xff]
      %v252 = vld [vmem:[%s209 + $0xe8] sm:$0xff]
      %v253 = vld [vmem:[%s209 + $0xf0] sm:$0xff]
      %v254 = vld [vmem:[%s209 + $0xf8] sm:$0xff]
      %v255 = vld [vmem:[%s1] sm:$0x1]
      %v257 = vlaneseq
      %v258 = vshrl.u32 %v257, 7
      %v259 = vsub.s32 0, %v258
      %v260 = vrot.slane %v255, %v259
      %v262 = vmul.f32 %v223, %v260
      %v263 = vmul.f32 %v224, %v260
      %v264 = vmul.f32 %v225, %v260
      %v265 = vmul.f32 %v226, %v260
      %v266 = vmul.f32 %v227, %v260
      %v267 = vmul.f32 %v228, %v260
      %v268 = vmul.f32 %v229, %v260
      %v269 = vmul.f32 %v230, %v260
      %v270 = vmul.f32 %v231, %v260
      %v271 = vmul.f32 %v232, %v260
      %v272 = vmul.f32 %v233, %v260
      %v273 = vmul.f32 %v234, %v260
      %v274 = vmul.f32 %v235, %v260
      %v275 = vmul.f32 %v236, %v260
      %v276 = vmul.f32 %v237, %v260
      %v277 = vmul.f32 %v238, %v260
      %v278 = vmul.f32 %v239, %v260
      %v279 = vmul.f32 %v240, %v260
      %v280 = vmul.f32 %v241, %v260
      %v281 = vmul.f32 %v242, %v260
      %v282 = vmul.f32 %v243, %v260
      %v283 = vmul.f32 %v244, %v260
      %v284 = vmul.f32 %v245, %v260
      %v285 = vmul.f32 %v246, %v260
      %v286 = vmul.f32 %v247, %v260
      %v287 = vmul.f32 %v248, %v260
      %v288 = vmul.f32 %v249, %v260
      %v289 = vmul.f32 %v250, %v260
      %v290 = vmul.f32 %v251, %v260
      %v291 = vmul.f32 %v252, %v260
      %v292 = vmul.f32 %v253, %v260
      %v293 = vmul.f32 %v254, %v260
      %v294 = vld [vmem:[%s2] sm:$0x1]
      %v296 = vlaneseq
      %v297 = vshrl.u32 %v296, 7
      %v298 = vsub.s32 0, %v297
      %v299 = vrot.slane %v294, %v298
      %v301 = vadd.f32 %v262, %v299
      %v302 = vadd.f32 %v263, %v299
      %v303 = vadd.f32 %v264, %v299
      %v304 = vadd.f32 %v265, %v299
      %v305 = vadd.f32 %v266, %v299
      %v306 = vadd.f32 %v267, %v299
      %v307 = vadd.f32 %v268, %v299
      %v308 = vadd.f32 %v269, %v299
      %v309 = vadd.f32 %v270, %v299
      %v310 = vadd.f32 %v271, %v299
      %v311 = vadd.f32 %v272, %v299
      %v312 = vadd.f32 %v273, %v299
      %v313 = vadd.f32 %v274, %v299
      %v314 = vadd.f32 %v275, %v299
      %v315 = vadd.f32 %v276, %v299
      %v316 = vadd.f32 %v277, %v299
      %v317 = vadd.f32 %v278, %v299
      %v318 = vadd.f32 %v279, %v299
      %v319 = vadd.f32 %v280, %v299
      %v320 = vadd.f32 %v281, %v299
      %v321 = vadd.f32 %v282, %v299
      %v322 = vadd.f32 %v283, %v299
      %v323 = vadd.f32 %v284, %v299
      %v324 = vadd.f32 %v285, %v299
      %v325 = vadd.f32 %v286, %v299
      %v326 = vadd.f32 %v287, %v299
      %v327 = vadd.f32 %v288, %v299
      %v328 = vadd.f32 %v289, %v299
      %v329 = vadd.f32 %v290, %v299
      %v330 = vadd.f32 %v291, %v299
      %v331 = vadd.f32 %v292, %v299
      %v332 = vadd.f32 %v293, %v299
      %v333 = vld [vmem:[%s215] sm:$0xff]
      %v334 = vld [vmem:[%s215 + $0x8] sm:$0xff]
      %v335 = vld [vmem:[%s215 + $0x10] sm:$0xff]
      %v336 = vld [vmem:[%s215 + $0x18] sm:$0xff]
      %v337 = vld [vmem:[%s215 + $0x20] sm:$0xff]
      %v338 = vld [vmem:[%s215 + $0x28] sm:$0xff]
      %v339 = vld [vmem:[%s215 + $0x30] sm:$0xff]
      %v340 = vld [vmem:[%s215 + $0x38] sm:$0xff]
      %v341 = vld [vmem:[%s215 + $0x40] sm:$0xff]
      %v342 = vld [vmem:[%s215 + $0x48] sm:$0xff]
      %v343 = vld [vmem:[%s215 + $0x50] sm:$0xff]
      %v344 = vld [vmem:[%s215 + $0x58] sm:$0xff]
      %v345 = vld [vmem:[%s215 + $0x60] sm:$0xff]
      %v346 = vld [vmem:[%s215 + $0x68] sm:$0xff]
      %v347 = vld [vmem:[%s215 + $0x70] sm:$0xff]
      %v348 = vld [vmem:[%s215 + $0x78] sm:$0xff]
      %v349 = vld [vmem:[%s215 + $0x80] sm:$0xff]
      %v350 = vld [vmem:[%s215 + $0x88] sm:$0xff]
      %v351 = vld [vmem:[%s215 + $0x90] sm:$0xff]
      %v352 = vld [vmem:[%s215 + $0x98] sm:$0xff]
      %v353 = vld [vmem:[%s215 + $0xa0] sm:$0xff]
      %v354 = vld [vmem:[%s215 + $0xa8] sm:$0xff]
      %v355 = vld [vmem:[%s215 + $0xb0] sm:$0xff]
      %v356 = vld [vmem:[%s215 + $0xb8] sm:$0xff]
      %v357 = vld [vmem:[%s215 + $0xc0] sm:$0xff]
      %v358 = vld [vmem:[%s215 + $0xc8] sm:$0xff]
      %v359 = vld [vmem:[%s215 + $0xd0] sm:$0xff]
      %v360 = vld [vmem:[%s215 + $0xd8] sm:$0xff]
      %v361 = vld [vmem:[%s215 + $0xe0] sm:$0xff]
      %v362 = vld [vmem:[%s215 + $0xe8] sm:$0xff]
      %v363 = vld [vmem:[%s215 + $0xf0] sm:$0xff]
      %v364 = vld [vmem:[%s215 + $0xf8] sm:$0xff]
      %v365 = vadd.f32 %v301, %v333
      %v366 = vadd.f32 %v302, %v334
      %v367 = vadd.f32 %v303, %v335
      %v368 = vadd.f32 %v304, %v336
      %v369 = vadd.f32 %v305, %v337
      %v370 = vadd.f32 %v306, %v338
      %v371 = vadd.f32 %v307, %v339
      %v372 = vadd.f32 %v308, %v340
      %v373 = vadd.f32 %v309, %v341
      %v374 = vadd.f32 %v310, %v342
      %v375 = vadd.f32 %v311, %v343
      %v376 = vadd.f32 %v312, %v344
      %v377 = vadd.f32 %v313, %v345
      %v378 = vadd.f32 %v314, %v346
      %v379 = vadd.f32 %v315, %v347
      %v380 = vadd.f32 %v316, %v348
      %v381 = vadd.f32 %v317, %v349
      %v382 = vadd.f32 %v318, %v350
      %v383 = vadd.f32 %v319, %v351
      %v384 = vadd.f32 %v320, %v352
      %v385 = vadd.f32 %v321, %v353
      %v386 = vadd.f32 %v322, %v354
      %v387 = vadd.f32 %v323, %v355
      %v388 = vadd.f32 %v324, %v356
      %v389 = vadd.f32 %v325, %v357
      %v390 = vadd.f32 %v326, %v358
      %v391 = vadd.f32 %v327, %v359
      %v392 = vadd.f32 %v328, %v360
      %v393 = vadd.f32 %v329, %v361
      %v394 = vadd.f32 %v330, %v362
      %v395 = vadd.f32 %v331, %v363
      %v396 = vadd.f32 %v332, %v364
      %v397 = vmax.f32 %v365, 0.0
      %v398 = vmax.f32 %v366, 0.0
      %v399 = vmax.f32 %v367, 0.0
      %v400 = vmax.f32 %v368, 0.0
      %v401 = vmax.f32 %v369, 0.0
      %v402 = vmax.f32 %v370, 0.0
      %v403 = vmax.f32 %v371, 0.0
      %v404 = vmax.f32 %v372, 0.0
      %v405 = vmax.f32 %v373, 0.0
      %v406 = vmax.f32 %v374, 0.0
      %v407 = vmax.f32 %v375, 0.0
      %v408 = vmax.f32 %v376, 0.0
      %v409 = vmax.f32 %v377, 0.0
      %v410 = vmax.f32 %v378, 0.0
      %v411 = vmax.f32 %v379, 0.0
      %v412 = vmax.f32 %v380, 0.0
      %v413 = vmax.f32 %v381, 0.0
      %v414 = vmax.f32 %v382, 0.0
      %v415 = vmax.f32 %v383, 0.0
      %v416 = vmax.f32 %v384, 0.0
      %v417 = vmax.f32 %v385, 0.0
      %v418 = vmax.f32 %v386, 0.0
      %v419 = vmax.f32 %v387, 0.0
      %v420 = vmax.f32 %v388, 0.0
      %v421 = vmax.f32 %v389, 0.0
      %v422 = vmax.f32 %v390, 0.0
      %v423 = vmax.f32 %v391, 0.0
      %v424 = vmax.f32 %v392, 0.0
      %v425 = vmax.f32 %v393, 0.0
      %v426 = vmax.f32 %v394, 0.0
      %v427 = vmax.f32 %v395, 0.0
      %v428 = vmax.f32 %v396, 0.0
      %429 = vst [vmem:[%s221] sm:$0xff] %v397
      %430 = vst [vmem:[%s221 + $0x8] sm:$0xff] %v398
      %431 = vst [vmem:[%s221 + $0x10] sm:$0xff] %v399
      %432 = vst [vmem:[%s221 + $0x18] sm:$0xff] %v400
      %433 = vst [vmem:[%s221 + $0x20] sm:$0xff] %v401
      %434 = vst [vmem:[%s221 + $0x28] sm:$0xff] %v402
      %435 = vst [vmem:[%s221 + $0x30] sm:$0xff] %v403
      %436 = vst [vmem:[%s221 + $0x38] sm:$0xff] %v404
      %437 = vst [vmem:[%s221 + $0x40] sm:$0xff] %v405
      %438 = vst [vmem:[%s221 + $0x48] sm:$0xff] %v406
      %439 = vst [vmem:[%s221 + $0x50] sm:$0xff] %v407
      %440 = vst [vmem:[%s221 + $0x58] sm:$0xff] %v408
      %441 = vst [vmem:[%s221 + $0x60] sm:$0xff] %v409
      %442 = vst [vmem:[%s221 + $0x68] sm:$0xff] %v410
      %443 = vst [vmem:[%s221 + $0x70] sm:$0xff] %v411
      %444 = vst [vmem:[%s221 + $0x78] sm:$0xff] %v412
      %445 = vst [vmem:[%s221 + $0x80] sm:$0xff] %v413
      %446 = vst [vmem:[%s221 + $0x88] sm:$0xff] %v414
      %447 = vst [vmem:[%s221 + $0x90] sm:$0xff] %v415
      %448 = vst [vmem:[%s221 + $0x98] sm:$0xff] %v416
      %449 = vst [vmem:[%s221 + $0xa0] sm:$0xff] %v417
      %450 = vst [vmem:[%s221 + $0xa8] sm:$0xff] %v418
      %451 = vst [vmem:[%s221 + $0xb0] sm:$0xff] %v419
      %452 = vst [vmem:[%s221 + $0xb8] sm:$0xff] %v420
      %453 = vst [vmem:[%s221 + $0xc0] sm:$0xff] %v421
      %454 = vst [vmem:[%s221 + $0xc8] sm:$0xff] %v422
      %455 = vst [vmem:[%s221 + $0xd0] sm:$0xff] %v423
      %456 = vst [vmem:[%s221 + $0xd8] sm:$0xff] %v424
      %457 = vst [vmem:[%s221 + $0xe0] sm:$0xff] %v425
      %458 = vst [vmem:[%s221 + $0xe8] sm:$0xff] %v426
      %459 = vst [vmem:[%s221 + $0xf0] sm:$0xff] %v427
      %460 = vst [vmem:[%s221 + $0xf8] sm:$0xff] %v428
      %s461 = smul.u32 32, %s15
      %p462 = scmp.lt.s32.totalorder %s461, 63
      %s463 = scalar_select %p462, %s461, 63
      %s464 = smul.addr %s463, 8
      %s465 = scalar_lea.vmem %s4, %s464
      // Predicated region
      $region37: #{bottleneck_forward.9} parent=35 // pred_check
        %p466 = pneg %p127
      $region38: #{bottleneck_forward.9} parent=35 // pred_check_branch
        %468 = sbr.rel (%p466) target = $region40
      $region39: #{bottleneck_forward.9} parent=35 // pred_region
        %s469 = smul.u32 32, %s15
      $region40: #{bottleneck_forward.9} parent=35 // pred_fallthru
        _
    $region36: #{bottleneck_forward.9} parent=5 // pred_fallthru
      _
    %p470 = scmp.le.s32.totalorder 2, %s10
    // Predicated region
    $region41: #{bottleneck_forward.9} parent=5 // pred_check
      %p471 = pneg %p470
    $region42: #{bottleneck_forward.9} parent=5 // pred_check_branch
      %473 = sbr.rel (%p471) target = $region44
    $region43: #{bottleneck_forward.9} parent=5 // pred_region
      %s474 = ssub.s32 %s10, 2
      // Predicated region
      $region45: #{bottleneck_forward.9} parent=43 // pred_check
        %p475 = pneg %p133
      $region46: #{bottleneck_forward.9} parent=43 // pred_check_branch
        %477 = sbr.rel (%p475) target = $region48
      $region47: #{bottleneck_forward.9} parent=43 // pred_region
        %s478 = smul.u32 32, %s16
        %p479 = scmp.lt.s32.totalorder %s478, 63
        %s480 = scalar_select %p479, %s478, 63
        %s481 = smul.addr %s480, 8
        %s482 = scalar_lea.vmem %s4, %s481
      $region48: #{bottleneck_forward.9} parent=43 // pred_fallthru
        _
    $region44: #{bottleneck_forward.9} parent=5 // pred_fallthru
      _
  $region6: #{bottleneck_forward.9} parent=0 // loop_footer
    %s14 = sadd.s32 1, %s10
  $region7: #{bottleneck_forward.9} parent=0 // loop_footer_branch
    %9 = sbr.rel target = $region3
  $region8: #{bottleneck_forward.9} parent=0 // loop_exit
    _

// kernel: bottleneck_forward.7
$region0: #{bottleneck_forward.7}
  #allocation0 [shape = 'u32[]', space=smem, size = 0x4, offset = 0x4, fixed_abs, tag = 'smem constant byte address 0x4 - core index']
  #allocation1 [shape = 'u32[144,128]{1,0:T(1,128)}', space=vmem, size = 0x12000, scoped, tag = 'internal scratch']
  %s0 = inlined_call_operand.vmem [shape: bf16[2,304,128], index: 0, kind: input, shape index: {}]
  %s1 = inlined_call_operand.vmem [shape: bf16[9,128,128], index: 1, kind: input, shape index: {}]
  %s2 = inlined_call_operand.vmem [shape: f32[2,256,128], index: 2, kind: output, shape index: {0}]
  %s3 = inlined_call_operand.vmem [shape: f32[1,128], index: 3, kind: output, shape index: {1}]
  %s4 = inlined_call_operand.vmem [shape: f32[1,128], index: 4, kind: output, shape index: {2}]
  %5 = xla_tuple %s2, %s3, %s4
  %s6 = sld [smem:[#allocation0]]
  $region61: #{bottleneck_forward.7} parent=0
    _
  %s8 = ssub.s32 1, %s6
  %s9 = scalar_select 0, %s8, %s6
  loop: start=0, step=1, limit=4
  $region2: #{bottleneck_forward.7} parent=0 // loop_pre_header
    _
  $region3: #{bottleneck_forward.7} parent=0 // loop_header
    %s11 = sphi 0, %s15
    %p12 = scmp.ge.s32.totalorder %s11, 4
    %s21 = sphi 0, %s23
    %s24 = sphi 0, %s21
    %s25 = sphi 0, %s24
    %s41 = sphi 0, %s25
    %s45 = sphi 0, %s45
    %s47 = sphi 0, %s45
    %s48 = sphi 0, %s47
    %s62 = sphi 0, %s48
    %s68 = sphi 0, %s70
    %s71 = sphi 0, %s68
    %s72 = sphi 0, %s71
    %s88 = sphi 0, %s72
    %s92 = sphi 0, %s92
    %s94 = sphi 0, %s92
    %s95 = sphi 0, %s94
    %s109 = sphi 0, %s95
    %s113 = sphi 0, %s113
    %s115 = sphi 0, %s113
    %s116 = sphi 0, %s115
    %s130 = sphi 0, %s116
  $region4: #{bottleneck_forward.7} parent=0 // loop_header_branch
    %14 = sbr.rel (%p12) target = $region8
  $region5: #{bottleneck_forward.7} parent=0 // loop_body
    %s16 = ssub.s32 %s11, 1
    %s17 = ssub.s32 %s11, 2
    %s18 = sadd.s32 %s11, 1
    %s19 = ssub.s32 %s11, %s18
    %p20 = scmp.eq.s32.totalorder %s19, 0
    %s22 = sadd.s32 %s21, 1
    %s23 = scalar_select %p20, %s21, %s22
    %p26 = pneg %p20
    %p27 = scmp.eq.s32.totalorder %s11, 1
    %p28 = por %p26, %p27
    %p29 = scmp.ne.s32.totalorder %s21, %s24
    %p30 = scmp.eq.s32.totalorder %s11, 0
    %p31 = por %p29, %p30
    %p32 = scmp.ne.s32.totalorder %s21, %s24
    %p33 = scmp.eq.s32.totalorder %s16, 1
    %p34 = por %p32, %p33
    %p35 = scmp.ne.s32.totalorder %s24, %s25
    %p36 = scmp.eq.s32.totalorder %s16, 0
    %p37 = por %p35, %p36
    %p38 = scmp.ne.s32.totalorder %s24, %s25
    %p39 = scmp.eq.s32.totalorder %s17, 1
    %p40 = por %p38, %p39
    %p42 = scmp.ne.s32.totalorder %s25, %s41
    %p43 = scmp.eq.s32.totalorder %s17, 0
    %p44 = por %p42, %p43
    %s46 = sadd.s32 %s45, 1
    %p49 = scmp.eq.s32.totalorder %s11, 1
    %p50 = scmp.ne.s32.totalorder %s45, %s47
    %p51 = scmp.eq.s32.totalorder %s11, 0
    %p52 = por %p50, %p51
    %p53 = scmp.ne.s32.totalorder %s45, %s47
    %p54 = scmp.eq.s32.totalorder %s16, 1
    %p55 = por %p53, %p54
    %p56 = scmp.ne.s32.totalorder %s47, %s48
    %p57 = scmp.eq.s32.totalorder %s16, 0
    %p58 = por %p56, %p57
    %p59 = scmp.ne.s32.totalorder %s47, %s48
    %p60 = scmp.eq.s32.totalorder %s17, 1
    %p61 = por %p59, %p60
    %p63 = scmp.ne.s32.totalorder %s48, %s62
    %p64 = scmp.eq.s32.totalorder %s17, 0
    %p65 = por %p63, %p64
    %s66 = ssub.s32 %s11, %s18
    %p67 = scmp.eq.s32.totalorder %s66, 0
    %s69 = sadd.s32 %s68, 1
    %s70 = scalar_select %p67, %s68, %s69
    %p73 = pneg %p67
    %p74 = scmp.eq.s32.totalorder %s11, 1
    %p75 = por %p73, %p74
    %p76 = scmp.ne.s32.totalorder %s68, %s71
    %p77 = scmp.eq.s32.totalorder %s11, 0
    %p78 = por %p76, %p77
    %p79 = scmp.ne.s32.totalorder %s68, %s71
    %p80 = scmp.eq.s32.totalorder %s16, 1
    %p81 = por %p79, %p80
    %p82 = scmp.ne.s32.totalorder %s71, %s72
    %p83 = scmp.eq.s32.totalorder %s16, 0
    %p84 = por %p82, %p83
    %p85 = scmp.ne.s32.totalorder %s71, %s72
    %p86 = scmp.eq.s32.totalorder %s17, 1
    %p87 = por %p85, %p86
    %p89 = scmp.ne.s32.totalorder %s72, %s88
    %p90 = scmp.eq.s32.totalorder %s17, 0
    %p91 = por %p89, %p90
    %s93 = sadd.s32 %s92, 1
    %p96 = scmp.eq.s32.totalorder %s11, 1
    %p97 = scmp.ne.s32.totalorder %s92, %s94
    %p98 = scmp.eq.s32.totalorder %s11, 0
    %p99 = por %p97, %p98
    %p100 = scmp.ne.s32.totalorder %s92, %s94
    %p101 = scmp.eq.s32.totalorder %s16, 1
    %p102 = por %p100, %p101
    %p103 = scmp.ne.s32.totalorder %s94, %s95
    %p104 = scmp.eq.s32.totalorder %s16, 0
    %p105 = por %p103, %p104
    %p106 = scmp.ne.s32.totalorder %s94, %s95
    %p107 = scmp.eq.s32.totalorder %s17, 1
    %p108 = por %p106, %p107
    %p110 = scmp.ne.s32.totalorder %s95, %s109
    %p111 = scmp.eq.s32.totalorder %s17, 0
    %p112 = por %p110, %p111
    %s114 = sadd.s32 %s113, 1
    %p117 = scmp.eq.s32.totalorder %s11, 1
    %p118 = scmp.ne.s32.totalorder %s113, %s115
    %p119 = scmp.eq.s32.totalorder %s11, 0
    %p120 = por %p118, %p119
    %p121 = scmp.ne.s32.totalorder %s113, %s115
    %p122 = scmp.eq.s32.totalorder %s16, 1
    %p123 = por %p121, %p122
    %p124 = scmp.ne.s32.totalorder %s115, %s116
    %p125 = scmp.eq.s32.totalorder %s16, 0
    %p126 = por %p124, %p125
    %p127 = scmp.ne.s32.totalorder %s115, %s116
    %p128 = scmp.eq.s32.totalorder %s17, 1
    %p129 = por %p127, %p128
    %p131 = scmp.ne.s32.totalorder %s116, %s130
    %p132 = scmp.eq.s32.totalorder %s17, 0
    %p133 = por %p131, %p132
    %p134 = scmp.le.s32.totalorder 1, %s11
    %p135 = scmp.lt.s32.totalorder %s11, 3
    %p136 = pnand %p134, %p135
    %p137 = pneg %p136
    // Predicated region
    $region9: #{bottleneck_forward.7} parent=5 // pred_check
      _
    $region10: #{bottleneck_forward.7} parent=5 // pred_check_branch
      %139 = sbr.rel (%p136) target = $region12
    $region11: #{bottleneck_forward.7} parent=5 // pred_region
      %s140 = ssub.s32 %s11, 1
      // Predicated region
      $region13: #{bottleneck_forward.7} parent=11 // pred_check
        %p141 = pneg %p58
      $region14: #{bottleneck_forward.7} parent=11 // pred_check_branch
        %143 = sbr.rel (%p141) target = $region16
      $region15: #{bottleneck_forward.7} parent=11 // pred_region
        _
      $region16: #{bottleneck_forward.7} parent=11 // pred_fallthru
        _
    $region12: #{bottleneck_forward.7} parent=5 // pred_fallthru
      _
    %p144 = scmp.lt.s32.totalorder %s11, 2
    // Predicated region
    $region17: #{bottleneck_forward.7} parent=5 // pred_check
      %p145 = pneg %p144
    $region18: #{bottleneck_forward.7} parent=5 // pred_check_branch
      %147 = sbr.rel (%p145) target = $region20
    $region19: #{bottleneck_forward.7} parent=5 // pred_region
      // Predicated region
      $region21: #{bottleneck_forward.7} parent=19 // pred_check
        %p148 = pneg %p31
      $region22: #{bottleneck_forward.7} parent=19 // pred_check_branch
        %150 = sbr.rel (%p148) target = $region24
      $region23: #{bottleneck_forward.7} parent=19 // pred_region
        %p151 = scmp.lt.s32.totalorder %s11, 1
        %s152 = scalar_select %p151, %s11, 1
        %s153 = smul.addr %s152, 38
        %s154 = smul.addr %s153, 4
        %s155 = scalar_lea.vmem %s0, %s154
      $region24: #{bottleneck_forward.7} parent=19 // pred_fallthru
        _
    $region20: #{bottleneck_forward.7} parent=5 // pred_fallthru
      _
    %p156 = scmp.le.s32.totalorder 1, %s11
    %p157 = scmp.lt.s32.totalorder %s11, 3
    %p158 = pnand %p156, %p157
    %p159 = pneg %p158
    // Predicated region
    $region25: #{bottleneck_forward.7} parent=5 // pred_check
      _
    $region26: #{bottleneck_forward.7} parent=5 // pred_check_branch
      %161 = sbr.rel (%p158) target = $region28
    $region27: #{bottleneck_forward.7} parent=5 // pred_region
      %s162 = ssub.s32 %s11, 1
      %p163 = scmp.lt.s32.totalorder %s16, 1
      %s164 = scalar_select %p163, %s16, 1
      %s165 = smul.addr %s164, 38
      %s166 = smul.addr %s165, 4
      %s167 = scalar_lea.vmem %s0, %s166
      %p168 = pneg %p37
      %p169 = pneg %p34
      %p170 = pneg %p58
      %p171 = pneg %p55
      %p172 = pneg %p84
      %p173 = pneg %p81
      %p174 = scmp.lt.s32.totalorder %s16, 1
      %s175 = scalar_select %p174, %s16, 1
      %s176 = smul.addr %s175, 32
      %s177 = smul.addr %s176, 8
      %s178 = scalar_lea.vmem %s2, %s177
      %p179 = pneg %p105
      %p180 = pneg %p102
      %p181 = pneg %p126
      %p182 = pneg %p123
      %p183 = scmp.lt.s32.totalorder %s16, 1
      %s184 = scalar_select %p183, %s16, 1
      %s185 = smul.addr %s184, 38
      %s186 = smul.addr %s185, 4
      %s187 = scalar_lea.vmem %s0, %s186
      %p188 = scmp.lt.s32.totalorder %s16, 1
      %s189 = scalar_select %p188, %s16, 1
      %s190 = smul.addr %s189, 32
      %s191 = smul.addr %s190, 8
      %s192 = scalar_lea.vmem %s2, %s191
      %p196 = scmp.eq.s32.totalorder %s16, 0
      // Predicated region
      $region29: #{bottleneck_forward.7} parent=27 // pred_check
        %p197 = pneg %p196
      $region30: #{bottleneck_forward.7} parent=27 // pred_check_branch
        %199 = sbr.rel (%p197) target = $region32
      $region31: #{bottleneck_forward.7} parent=27 // pred_region
        %200 = vst [vmem:[%s3] sm:$0x1] 0.0
        %201 = vst [vmem:[%s4] sm:$0x1] 0.0
      $region32: #{bottleneck_forward.7} parent=27 // pred_fallthru
        _
      %v202 = vlaneseq
      %v203 = vshrl.u32 %v202, 7
      %v204 = vadd.s32 %v203, 8
      %v205 = vadd.s32 %v203, 16
      %v206 = vadd.s32 %v203, 24
      %v207 = vadd.s32 %v203, 32
      %v208 = vadd.s32 %v203, 40
      %v209 = vadd.s32 %v203, 48
      %v210 = vadd.s32 %v203, 56
      %v211 = vadd.s32 %v203, 64
      %v212 = vadd.s32 %v203, 72
      %v213 = vadd.s32 %v203, 80
      %v214 = vadd.s32 %v203, 88
      %v215 = vadd.s32 %v203, 96
      %v216 = vadd.s32 %v203, 104
      %v217 = vadd.s32 %v203, 112
      %v218 = vadd.s32 %v203, 120
      %v219 = vadd.s32 %v203, 128
      %v220 = vadd.s32 %v203, 136
      %v221 = vadd.s32 %v203, 144
      %v222 = vadd.s32 %v203, 152
      %v223 = vadd.s32 %v203, 160
      %v224 = vadd.s32 %v203, 168
      %v225 = vadd.s32 %v203, 176
      %v226 = vadd.s32 %v203, 184
      %v227 = vadd.s32 %v203, 192
      %v228 = vadd.s32 %v203, 200
      %v229 = vadd.s32 %v203, 208
      %v230 = vadd.s32 %v203, 216
      %v231 = vadd.s32 %v203, 224
      %v232 = vadd.s32 %v203, 232
      %v233 = vadd.s32 %v203, 240
      %v234 = vadd.s32 %v203, 248
      %vm235 = vcmp.lt.s32.totalorder %v203, 0
      %v236 = vsub.s32 0, %v203
      %v237 = vsel %vm235, %v236, %v203
      %v238 = vshrl.u32 %v237, 4
      %v239 = vand.u32 %v237, 15
      %v240 = vsub.s32 0, %v239
      %v241 = vsel %vm235, %v240, %v239
      %vm242 = vcmp.lt.s32.totalorder %v204, 0
      %v243 = vsub.s32 0, %v204
      %v244 = vsel %vm242, %v243, %v204
      %v245 = vshrl.u32 %v244, 4
      %v246 = vand.u32 %v244, 15
      %v247 = vsub.s32 0, %v246
      %v248 = vsel %vm242, %v247, %v246
      %vm249 = vcmp.lt.s32.totalorder %v205, 0
      %v250 = vsub.s32 0, %v205
      %v251 = vsel %vm249, %v250, %v205
      %v252 = vshrl.u32 %v251, 4
      %v253 = vand.u32 %v251, 15
      %v254 = vsub.s32 0, %v253
      %v255 = vsel %vm249, %v254, %v253
      %vm256 = vcmp.lt.s32.totalorder %v206, 0
      %v257 = vsub.s32 0, %v206
      %v258 = vsel %vm256, %v257, %v206
      %v259 = vshrl.u32 %v258, 4
      %v260 = vand.u32 %v258, 15
      %v261 = vsub.s32 0, %v260
      %v262 = vsel %vm256, %v261, %v260
      %vm263 = vcmp.lt.s32.totalorder %v207, 0
      %v264 = vsub.s32 0, %v207
      %v265 = vsel %vm263, %v264, %v207
      %v266 = vshrl.u32 %v265, 4
      %v267 = vand.u32 %v265, 15
      %v268 = vsub.s32 0, %v267
      %v269 = vsel %vm263, %v268, %v267
      %vm270 = vcmp.lt.s32.totalorder %v208, 0
      %v271 = vsub.s32 0, %v208
      %v272 = vsel %vm270, %v271, %v208
      %v273 = vshrl.u32 %v272, 4
      %v274 = vand.u32 %v272, 15
      %v275 = vsub.s32 0, %v274
      %v276 = vsel %vm270, %v275, %v274
      %vm277 = vcmp.lt.s32.totalorder %v209, 0
      %v278 = vsub.s32 0, %v209
      %v279 = vsel %vm277, %v278, %v209
      %v280 = vshrl.u32 %v279, 4
      %v281 = vand.u32 %v279, 15
      %v282 = vsub.s32 0, %v281
      %v283 = vsel %vm277, %v282, %v281
      %vm284 = vcmp.lt.s32.totalorder %v210, 0
      %v285 = vsub.s32 0, %v210
      %v286 = vsel %vm284, %v285, %v210
      %v287 = vshrl.u32 %v286, 4
      %v288 = vand.u32 %v286, 15
      %v289 = vsub.s32 0, %v288
      %v290 = vsel %vm284, %v289, %v288
      %vm291 = vcmp.lt.s32.totalorder %v211, 0
      %v292 = vsub.s32 0, %v211
      %v293 = vsel %vm291, %v292, %v211
      %v294 = vshrl.u32 %v293, 4
      %v295 = vand.u32 %v293, 15
      %v296 = vsub.s32 0, %v295
      %v297 = vsel %vm291, %v296, %v295
      %vm298 = vcmp.lt.s32.totalorder %v212, 0
      %v299 = vsub.s32 0, %v212
      %v300 = vsel %vm298, %v299, %v212
      %v301 = vshrl.u32 %v300, 4
      %v302 = vand.u32 %v300, 15
      %v303 = vsub.s32 0, %v302
      %v304 = vsel %vm298, %v303, %v302
      %vm305 = vcmp.lt.s32.totalorder %v213, 0
      %v306 = vsub.s32 0, %v213
      %v307 = vsel %vm305, %v306, %v213
      %v308 = vshrl.u32 %v307, 4
      %v309 = vand.u32 %v307, 15
      %v310 = vsub.s32 0, %v309
      %v311 = vsel %vm305, %v310, %v309
      %vm312 = vcmp.lt.s32.totalorder %v214, 0
      %v313 = vsub.s32 0, %v214
      %v314 = vsel %vm312, %v313, %v214
      %v315 = vshrl.u32 %v314, 4
      %v316 = vand.u32 %v314, 15
      %v317 = vsub.s32 0, %v316
      %v318 = vsel %vm312, %v317, %v316
      %vm319 = vcmp.lt.s32.totalorder %v215, 0
      %v320 = vsub.s32 0, %v215
      %v321 = vsel %vm319, %v320, %v215
      %v322 = vshrl.u32 %v321, 4
      %v323 = vand.u32 %v321, 15
      %v324 = vsub.s32 0, %v323
      %v325 = vsel %vm319, %v324, %v323
      %vm326 = vcmp.lt.s32.totalorder %v216, 0
      %v327 = vsub.s32 0, %v216
      %v328 = vsel %vm326, %v327, %v216
      %v329 = vshrl.u32 %v328, 4
      %v330 = vand.u32 %v328, 15
      %v331 = vsub.s32 0, %v330
      %v332 = vsel %vm326, %v331, %v330
      %vm333 = vcmp.lt.s32.totalorder %v217, 0
      %v334 = vsub.s32 0, %v217
      %v335 = vsel %vm333, %v334, %v217
      %v336 = vshrl.u32 %v335, 4
      %v337 = vand.u32 %v335, 15
      %v338 = vsub.s32 0, %v337
      %v339 = vsel %vm333, %v338, %v337
      %vm340 = vcmp.lt.s32.totalorder %v218, 0
      %v341 = vsub.s32 0, %v218
      %v342 = vsel %vm340, %v341, %v218
      %v343 = vshrl.u32 %v342, 4
      %v344 = vand.u32 %v342, 15
      %v345 = vsub.s32 0, %v344
      %v346 = vsel %vm340, %v345, %v344
      %vm347 = vcmp.lt.s32.totalorder %v219, 0
      %v348 = vsub.s32 0, %v219
      %v349 = vsel %vm347, %v348, %v219
      %v350 = vshrl.u32 %v349, 4
      %v351 = vand.u32 %v349, 15
      %v352 = vsub.s32 0, %v351
      %v353 = vsel %vm347, %v352, %v351
      %vm354 = vcmp.lt.s32.totalorder %v220, 0
      %v355 = vsub.s32 0, %v220
      %v356 = vsel %vm354, %v355, %v220
      %v357 = vshrl.u32 %v356, 4
      %v358 = vand.u32 %v356, 15
      %v359 = vsub.s32 0, %v358
      %v360 = vsel %vm354, %v359, %v358
      %vm361 = vcmp.lt.s32.totalorder %v221, 0
      %v362 = vsub.s32 0, %v221
      %v363 = vsel %vm361, %v362, %v221
      %v364 = vshrl.u32 %v363, 4
      %v365 = vand.u32 %v363, 15
      %v366 = vsub.s32 0, %v365
      %v367 = vsel %vm361, %v366, %v365
      %vm368 = vcmp.lt.s32.totalorder %v222, 0
      %v369 = vsub.s32 0, %v222
      %v370 = vsel %vm368, %v369, %v222
      %v371 = vshrl.u32 %v370, 4
      %v372 = vand.u32 %v370, 15
      %v373 = vsub.s32 0, %v372
      %v374 = vsel %vm368, %v373, %v372
      %vm375 = vcmp.lt.s32.totalorder %v223, 0
      %v376 = vsub.s32 0, %v223
      %v377 = vsel %vm375, %v376, %v223
      %v378 = vshrl.u32 %v377, 4
      %v379 = vand.u32 %v377, 15
      %v380 = vsub.s32 0, %v379
      %v381 = vsel %vm375, %v380, %v379
      %vm382 = vcmp.lt.s32.totalorder %v224, 0
      %v383 = vsub.s32 0, %v224
      %v384 = vsel %vm382, %v383, %v224
      %v385 = vshrl.u32 %v384, 4
      %v386 = vand.u32 %v384, 15
      %v387 = vsub.s32 0, %v386
      %v388 = vsel %vm382, %v387, %v386
      %vm389 = vcmp.lt.s32.totalorder %v225, 0
      %v390 = vsub.s32 0, %v225
      %v391 = vsel %vm389, %v390, %v225
      %v392 = vshrl.u32 %v391, 4
      %v393 = vand.u32 %v391, 15
      %v394 = vsub.s32 0, %v393
      %v395 = vsel %vm389, %v394, %v393
      %vm396 = vcmp.lt.s32.totalorder %v226, 0
      %v397 = vsub.s32 0, %v226
      %v398 = vsel %vm396, %v397, %v226
      %v399 = vshrl.u32 %v398, 4
      %v400 = vand.u32 %v398, 15
      %v401 = vsub.s32 0, %v400
      %v402 = vsel %vm396, %v401, %v400
      %vm403 = vcmp.lt.s32.totalorder %v227, 0
      %v404 = vsub.s32 0, %v227
      %v405 = vsel %vm403, %v404, %v227
      %v406 = vshrl.u32 %v405, 4
      %v407 = vand.u32 %v405, 15
      %v408 = vsub.s32 0, %v407
      %v409 = vsel %vm403, %v408, %v407
      %vm410 = vcmp.lt.s32.totalorder %v228, 0
      %v411 = vsub.s32 0, %v228
      %v412 = vsel %vm410, %v411, %v228
      %v413 = vshrl.u32 %v412, 4
      %v414 = vand.u32 %v412, 15
      %v415 = vsub.s32 0, %v414
      %v416 = vsel %vm410, %v415, %v414
      %vm417 = vcmp.lt.s32.totalorder %v229, 0
      %v418 = vsub.s32 0, %v229
      %v419 = vsel %vm417, %v418, %v229
      %v420 = vshrl.u32 %v419, 4
      %v421 = vand.u32 %v419, 15
      %v422 = vsub.s32 0, %v421
      %v423 = vsel %vm417, %v422, %v421
      %vm424 = vcmp.lt.s32.totalorder %v230, 0
      %v425 = vsub.s32 0, %v230
      %v426 = vsel %vm424, %v425, %v230
      %v427 = vshrl.u32 %v426, 4
      %v428 = vand.u32 %v426, 15
      %v429 = vsub.s32 0, %v428
      %v430 = vsel %vm424, %v429, %v428
      %vm431 = vcmp.lt.s32.totalorder %v231, 0
      %v432 = vsub.s32 0, %v231
      %v433 = vsel %vm431, %v432, %v231
      %v434 = vshrl.u32 %v433, 4
      %v435 = vand.u32 %v433, 15
      %v436 = vsub.s32 0, %v435
      %v437 = vsel %vm431, %v436, %v435
      %vm438 = vcmp.lt.s32.totalorder %v232, 0
      %v439 = vsub.s32 0, %v232
      %v440 = vsel %vm438, %v439, %v232
      %v441 = vshrl.u32 %v440, 4
      %v442 = vand.u32 %v440, 15
      %v443 = vsub.s32 0, %v442
      %v444 = vsel %vm438, %v443, %v442
      %vm445 = vcmp.lt.s32.totalorder %v233, 0
      %v446 = vsub.s32 0, %v233
      %v447 = vsel %vm445, %v446, %v233
      %v448 = vshrl.u32 %v447, 4
      %v449 = vand.u32 %v447, 15
      %v450 = vsub.s32 0, %v449
      %v451 = vsel %vm445, %v450, %v449
      %vm452 = vcmp.lt.s32.totalorder %v234, 0
      %v453 = vsub.s32 0, %v234
      %v454 = vsel %vm452, %v453, %v234
      %v455 = vshrl.u32 %v454, 4
      %v456 = vand.u32 %v454, 15
      %v457 = vsub.s32 0, %v456
      %v458 = vsel %vm452, %v457, %v456
      %vm459 = vcmp.ne.s32.totalorder %v241, 0
      %vm460 = vcmp.ne.s32.totalorder %v248, 0
      %vm461 = vcmp.ne.s32.totalorder %v255, 0
      %vm462 = vcmp.ne.s32.totalorder %v262, 0
      %vm463 = vcmp.ne.s32.totalorder %v269, 0
      %vm464 = vcmp.ne.s32.totalorder %v276, 0
      %vm465 = vcmp.ne.s32.totalorder %v283, 0
      %vm466 = vcmp.ne.s32.totalorder %v290, 0
      %vm467 = vcmp.ne.s32.totalorder %v297, 0
      %vm468 = vcmp.ne.s32.totalorder %v304, 0
      %vm469 = vcmp.ne.s32.totalorder %v311, 0
      %vm470 = vcmp.ne.s32.totalorder %v318, 0
      %vm471 = vcmp.ne.s32.totalorder %v325, 0
      %vm472 = vcmp.ne.s32.totalorder %v332, 0
      %vm473 = vcmp.ne.s32.totalorder %v339, 0
      %vm474 = vcmp.ne.s32.totalorder %v346, 0
      %vm475 = vcmp.ne.s32.totalorder %v353, 0
      %vm476 = vcmp.ne.s32.totalorder %v360, 0
      %vm477 = vcmp.ne.s32.totalorder %v367, 0
      %vm478 = vcmp.ne.s32.totalorder %v374, 0
      %vm479 = vcmp.ne.s32.totalorder %v381, 0
      %vm480 = vcmp.ne.s32.totalorder %v388, 0
      %vm481 = vcmp.ne.s32.totalorder %v395, 0
      %vm482 = vcmp.ne.s32.totalorder %v402, 0
      %vm483 = vcmp.ne.s32.totalorder %v409, 0
      %vm484 = vcmp.ne.s32.totalorder %v416, 0
      %vm485 = vcmp.ne.s32.totalorder %v423, 0
      %vm486 = vcmp.ne.s32.totalorder %v430, 0
      %vm487 = vcmp.ne.s32.totalorder %v437, 0
      %vm488 = vcmp.ne.s32.totalorder %v444, 0
      %vm489 = vcmp.ne.s32.totalorder %v451, 0
      %vm490 = vcmp.ne.s32.totalorder %v458, 0
      %vm491 = vcmp.lt.s32.totalorder %v241, 0
      %vm492 = vcmp.lt.s32.totalorder %v248, 0
      %vm493 = vcmp.lt.s32.totalorder %v255, 0
      %vm494 = vcmp.lt.s32.totalorder %v262, 0
      %vm495 = vcmp.lt.s32.totalorder %v269, 0
      %vm496 = vcmp.lt.s32.totalorder %v276, 0
      %vm497 = vcmp.lt.s32.totalorder %v283, 0
      %vm498 = vcmp.lt.s32.totalorder %v290, 0
      %vm499 = vcmp.lt.s32.totalorder %v297, 0
      %vm500 = vcmp.lt.s32.totalorder %v304, 0
      %vm501 = vcmp.lt.s32.totalorder %v311, 0
      %vm502 = vcmp.lt.s32.totalorder %v318, 0
      %vm503 = vcmp.lt.s32.totalorder %v325, 0
      %vm504 = vcmp.lt.s32.totalorder %v332, 0
      %vm505 = vcmp.lt.s32.totalorder %v339, 0
      %vm506 = vcmp.lt.s32.totalorder %v346, 0
      %vm507 = vcmp.lt.s32.totalorder %v353, 0
      %vm508 = vcmp.lt.s32.totalorder %v360, 0
      %vm509 = vcmp.lt.s32.totalorder %v367, 0
      %vm510 = vcmp.lt.s32.totalorder %v374, 0
      %vm511 = vcmp.lt.s32.totalorder %v381, 0
      %vm512 = vcmp.lt.s32.totalorder %v388, 0
      %vm513 = vcmp.lt.s32.totalorder %v395, 0
      %vm514 = vcmp.lt.s32.totalorder %v402, 0
      %vm515 = vcmp.lt.s32.totalorder %v409, 0
      %vm516 = vcmp.lt.s32.totalorder %v416, 0
      %vm517 = vcmp.lt.s32.totalorder %v423, 0
      %vm518 = vcmp.lt.s32.totalorder %v430, 0
      %vm519 = vcmp.lt.s32.totalorder %v437, 0
      %vm520 = vcmp.lt.s32.totalorder %v444, 0
      %vm521 = vcmp.lt.s32.totalorder %v451, 0
      %vm522 = vcmp.lt.s32.totalorder %v458, 0
      %vm523 = vmand %vm491, %vm459
      %vm524 = vmand %vm492, %vm460
      %vm525 = vmand %vm493, %vm461
      %vm526 = vmand %vm494, %vm462
      %vm527 = vmand %vm495, %vm463
      %vm528 = vmand %vm496, %vm464
      %vm529 = vmand %vm497, %vm465
      %vm530 = vmand %vm498, %vm466
      %vm531 = vmand %vm499, %vm467
      %vm532 = vmand %vm500, %vm468
      %vm533 = vmand %vm501, %vm469
      %vm534 = vmand %vm502, %vm470
      %vm535 = vmand %vm503, %vm471
      %vm536 = vmand %vm504, %vm472
      %vm537 = vmand %vm505, %vm473
      %vm538 = vmand %vm506, %vm474
      %vm539 = vmand %vm507, %vm475
      %vm540 = vmand %vm508, %vm476
      %vm541 = vmand %vm509, %vm477
      %vm542 = vmand %vm510, %vm478
      %vm543 = vmand %vm511, %vm479
      %vm544 = vmand %vm512, %vm480
      %vm545 = vmand %vm513, %vm481
      %vm546 = vmand %vm514, %vm482
      %vm547 = vmand %vm515, %vm483
      %vm548 = vmand %vm516, %vm484
      %vm549 = vmand %vm517, %vm485
      %vm550 = vmand %vm518, %vm486
      %vm551 = vmand %vm519, %vm487
      %vm552 = vmand %vm520, %vm488
      %vm553 = vmand %vm521, %vm489
      %vm554 = vmand %vm522, %vm490
      %v555 = vadd.s32 %v241, 16
      %v556 = vadd.s32 %v248, 16
      %v557 = vadd.s32 %v255, 16
      %v558 = vadd.s32 %v262, 16
      %v559 = vadd.s32 %v269, 16
      %v560 = vadd.s32 %v276, 16
      %v561 = vadd.s32 %v283, 16
      %v562 = vadd.s32 %v290, 16
      %v563 = vadd.s32 %v297, 16
      %v564 = vadd.s32 %v304, 16
      %v565 = vadd.s32 %v311, 16
      %v566 = vadd.s32 %v318, 16
      %v567 = vadd.s32 %v325, 16
      %v568 = vadd.s32 %v332, 16
      %v569 = vadd.s32 %v339, 16
      %v570 = vadd.s32 %v346, 16
      %v571 = vadd.s32 %v353, 16
      %v572 = vadd.s32 %v360, 16
      %v573 = vadd.s32 %v367, 16
      %v574 = vadd.s32 %v374, 16
      %v575 = vadd.s32 %v381, 16
      %v576 = vadd.s32 %v388, 16
      %v577 = vadd.s32 %v395, 16
      %v578 = vadd.s32 %v402, 16
      %v579 = vadd.s32 %v409, 16
      %v580 = vadd.s32 %v416, 16
      %v581 = vadd.s32 %v423, 16
      %v582 = vadd.s32 %v430, 16
      %v583 = vadd.s32 %v437, 16
      %v584 = vadd.s32 %v444, 16
      %v585 = vadd.s32 %v451, 16
      %v586 = vadd.s32 %v458, 16
      %v587 = vsel %vm523, %v555, %v241
      %v588 = vsel %vm524, %v556, %v248
      %v589 = vsel %vm525, %v557, %v255
      %v590 = vsel %vm526, %v558, %v262
      %v591 = vsel %vm527, %v559, %v269
      %v592 = vsel %vm528, %v560, %v276
      %v593 = vsel %vm529, %v561, %v283
      %v594 = vsel %vm530, %v562, %v290
      %v595 = vsel %vm531, %v563, %v297
      %v596 = vsel %vm532, %v564, %v304
      %v597 = vsel %vm533, %v565, %v311
      %v598 = vsel %vm534, %v566, %v318
      %v599 = vsel %vm535, %v567, %v325
      %v600 = vsel %vm536, %v568, %v332
      %v601 = vsel %vm537, %v569, %v339
      %v602 = vsel %vm538, %v570, %v346
      %v603 = vsel %vm539, %v571, %v353
      %v604 = vsel %vm540, %v572, %v360
      %v605 = vsel %vm541, %v573, %v367
      %v606 = vsel %vm542, %v574, %v374
      %v607 = vsel %vm543, %v575, %v381
      %v608 = vsel %vm544, %v576, %v388
      %v609 = vsel %vm545, %v577, %v395
      %v610 = vsel %vm546, %v578, %v402
      %v611 = vsel %vm547, %v579, %v409
      %v612 = vsel %vm548, %v580, %v416
      %v613 = vsel %vm549, %v581, %v423
      %v614 = vsel %vm550, %v582, %v430
      %v615 = vsel %vm551, %v583, %v437
      %v616 = vsel %vm552, %v584, %v444
      %v617 = vsel %vm553, %v585, %v451
      %v618 = vsel %vm554, %v586, %v458
      %vm619 = vcmp.eq.s32.totalorder %v587, 0
      %vm620 = vcmp.eq.s32.totalorder %v588, 0
      %vm621 = vcmp.eq.s32.totalorder %v589, 0
      %vm622 = vcmp.eq.s32.totalorder %v590, 0
      %vm623 = vcmp.eq.s32.totalorder %v591, 0
      %vm624 = vcmp.eq.s32.totalorder %v592, 0
      %vm625 = vcmp.eq.s32.totalorder %v593, 0
      %vm626 = vcmp.eq.s32.totalorder %v594, 0
      %vm627 = vcmp.eq.s32.totalorder %v595, 0
      %vm628 = vcmp.eq.s32.totalorder %v596, 0
      %vm629 = vcmp.eq.s32.totalorder %v597, 0
      %vm630 = vcmp.eq.s32.totalorder %v598, 0
      %vm631 = vcmp.eq.s32.totalorder %v599, 0
      %vm632 = vcmp.eq.s32.totalorder %v600, 0
      %vm633 = vcmp.eq.s32.totalorder %v601, 0
      %vm634 = vcmp.eq.s32.totalorder %v602, 0
      %vm635 = vcmp.eq.s32.totalorder %v603, 0
      %vm636 = vcmp.eq.s32.totalorder %v604, 0
      %vm637 = vcmp.eq.s32.totalorder %v605, 0
      %vm638 = vcmp.eq.s32.totalorder %v606, 0
      %vm639 = vcmp.eq.s32.totalorder %v607, 0
      %vm640 = vcmp.eq.s32.totalorder %v608, 0
      %vm641 = vcmp.eq.s32.totalorder %v609, 0
      %vm642 = vcmp.eq.s32.totalorder %v610, 0
      %vm643 = vcmp.eq.s32.totalorder %v611, 0
      %vm644 = vcmp.eq.s32.totalorder %v612, 0
      %vm645 = vcmp.eq.s32.totalorder %v613, 0
      %vm646 = vcmp.eq.s32.totalorder %v614, 0
      %vm647 = vcmp.eq.s32.totalorder %v615, 0
      %vm648 = vcmp.eq.s32.totalorder %v616, 0
      %vm649 = vcmp.eq.s32.totalorder %v617, 0
      %vm650 = vcmp.eq.s32.totalorder %v618, 0
      %vm651 = vcmp.eq.s32.totalorder %v587, 15
      %vm652 = vcmp.eq.s32.totalorder %v588, 15
      %vm653 = vcmp.eq.s32.totalorder %v589, 15
      %vm654 = vcmp.eq.s32.totalorder %v590, 15
      %vm655 = vcmp.eq.s32.totalorder %v591, 15
      %vm656 = vcmp.eq.s32.totalorder %v592, 15
      %vm657 = vcmp.eq.s32.totalorder %v593, 15
      %vm658 = vcmp.eq.s32.totalorder %v594, 15
      %vm659 = vcmp.eq.s32.totalorder %v595, 15
      %vm660 = vcmp.eq.s32.totalorder %v596, 15
      %vm661 = vcmp.eq.s32.totalorder %v597, 15
      %vm662 = vcmp.eq.s32.totalorder %v598, 15
      %vm663 = vcmp.eq.s32.totalorder %v599, 15
      %vm664 = vcmp.eq.s32.totalorder %v600, 15
      %vm665 = vcmp.eq.s32.totalorder %v601, 15
      %vm666 = vcmp.eq.s32.totalorder %v602, 15
      %vm667 = vcmp.eq.s32.totalorder %v603, 15
      %vm668 = vcmp.eq.s32.totalorder %v604, 15
      %vm669 = vcmp.eq.s32.totalorder %v605, 15
      %vm670 = vcmp.eq.s32.totalorder %v606, 15
      %vm671 = vcmp.eq.s32.totalorder %v607, 15
      %vm672 = vcmp.eq.s32.totalorder %v608, 15
      %vm673 = vcmp.eq.s32.totalorder %v609, 15
      %vm674 = vcmp.eq.s32.totalorder %v610, 15
      %vm675 = vcmp.eq.s32.totalorder %v611, 15
      %vm676 = vcmp.eq.s32.totalorder %v612, 15
      %vm677 = vcmp.eq.s32.totalorder %v613, 15
      %vm678 = vcmp.eq.s32.totalorder %v614, 15
      %vm679 = vcmp.eq.s32.totalorder %v615, 15
      %vm680 = vcmp.eq.s32.totalorder %v616, 15
      %vm681 = vcmp.eq.s32.totalorder %v617, 15
      %vm682 = vcmp.eq.s32.totalorder %v618, 15
      %v683 = vld [vmem:[%s187] sm:$0x8]
      %v684 = vld [vmem:[%s187 + $0x4] sm:$0xf]
      %v685 = vld [vmem:[%s187 + $0x8] sm:$0xf]
      %v686 = vld [vmem:[%s187 + $0xc] sm:$0xf]
      %v687 = vld [vmem:[%s187 + $0x10] sm:$0xf]
      %v688 = vld [vmem:[%s187 + $0x14] sm:$0xf]
      %v689 = vld [vmem:[%s187 + $0x18] sm:$0xf]
      %v690 = vld [vmem:[%s187 + $0x1c] sm:$0xf]
      %v691 = vld [vmem:[%s187 + $0x20] sm:$0xf]
      %v692 = vld [vmem:[%s187 + $0x24] sm:$0xf]
      %v693 = vld [vmem:[%s187 + $0x28] sm:$0xf]
      %v694 = vld [vmem:[%s187 + $0x2c] sm:$0xf]
      %v695 = vld [vmem:[%s187 + $0x30] sm:$0xf]
      %v696 = vld [vmem:[%s187 + $0x34] sm:$0xf]
      %v697 = vld [vmem:[%s187 + $0x38] sm:$0xf]
      %v698 = vld [vmem:[%s187 + $0x3c] sm:$0xf]
      %v699 = vld [vmem:[%s187 + $0x40] sm:$0xf]
      %v700 = vld [vmem:[%s187 + $0x44] sm:$0xf]
      %v701 = vld [vmem:[%s187 + $0x48] sm:$0xf]
      %v702 = vld [vmem:[%s187 + $0x4c] sm:$0xf]
      %v703 = vld [vmem:[%s187 + $0x50] sm:$0xf]
      %v704 = vld [vmem:[%s187 + $0x54] sm:$0xf]
      %v705 = vld [vmem:[%s187 + $0x58] sm:$0xf]
      %v706 = vld [vmem:[%s187 + $0x5c] sm:$0xf]
      %v707 = vld [vmem:[%s187 + $0x60] sm:$0xf]
      %v708 = vld [vmem:[%s187 + $0x64] sm:$0xf]
      %v709 = vld [vmem:[%s187 + $0x68] sm:$0xf]
      %v710 = vld [vmem:[%s187 + $0x6c] sm:$0xf]
      %v711 = vld [vmem:[%s187 + $0x70] sm:$0xf]
      %v712 = vld [vmem:[%s187 + $0x74] sm:$0xf]
      %v713 = vld [vmem:[%s187 + $0x78] sm:$0xf]
      %v714 = vld [vmem:[%s187 + $0x7c] sm:$0xf]
      %v715 = vld [vmem:[%s187 + $0x80] sm:$0xf]
      %v716 = vsel %vm619, 1, 0
      %v717 = vsel %vm620, 1, 0
      %v718 = vsel %vm621, 1, 0
      %v719 = vsel %vm622, 1, 0
      %v720 = vsel %vm623, 1, 0
      %v721 = vsel %vm624, 1, 0
      %v722 = vsel %vm625, 1, 0
      %v723 = vsel %vm626, 1, 0
      %v724 = vsel %vm627, 1, 0
      %v725 = vsel %vm628, 1, 0
      %v726 = vsel %vm629, 1, 0
      %v727 = vsel %vm630, 1, 0
      %v728 = vsel %vm631, 1, 0
      %v729 = vsel %vm632, 1, 0
      %v730 = vsel %vm633, 1, 0
      %v731 = vsel %vm634, 1, 0
      %v732 = vsel %vm635, 1, 0
      %v733 = vsel %vm636, 1, 0
      %v734 = vsel %vm637, 1, 0
      %v735 = vsel %vm638, 1, 0
      %v736 = vsel %vm639, 1, 0
      %v737 = vsel %vm640, 1, 0
      %v738 = vsel %vm641, 1, 0
      %v739 = vsel %vm642, 1, 0
      %v740 = vsel %vm643, 1, 0
      %v741 = vsel %vm644, 1, 0
      %v742 = vsel %vm645, 1, 0
      %v743 = vsel %vm646, 1, 0
      %v744 = vsel %vm647, 1, 0
      %v745 = vsel %vm648, 1, 0
      %v746 = vsel %vm649, 1, 0
      %v747 = vsel %vm650, 1, 0
      %vm748 = vcmp.eq.s32.totalorder %v716, 1
      %vm749 = vcmp.eq.s32.totalorder %v717, 1
      %vm750 = vcmp.eq.s32.totalorder %v718, 1
      %vm751 = vcmp.eq.s32.totalorder %v719, 1
      %vm752 = vcmp.eq.s32.totalorder %v720, 1
      %vm753 = vcmp.eq.s32.totalorder %v721, 1
      %vm754 = vcmp.eq.s32.totalorder %v722, 1
      %vm755 = vcmp.eq.s32.totalorder %v723, 1
      %vm756 = vcmp.eq.s32.totalorder %v724, 1
      %vm757 = vcmp.eq.s32.totalorder %v725, 1
      %vm758 = vcmp.eq.s32.totalorder %v726, 1
      %vm759 = vcmp.eq.s32.totalorder %v727, 1
      %vm760 = vcmp.eq.s32.totalorder %v728, 1
      %vm761 = vcmp.eq.s32.totalorder %v729, 1
      %vm762 = vcmp.eq.s32.totalorder %v730, 1
      %vm763 = vcmp.eq.s32.totalorder %v731, 1
      %vm764 = vcmp.eq.s32.totalorder %v732, 1
      %vm765 = vcmp.eq.s32.totalorder %v733, 1
      %vm766 = vcmp.eq.s32.totalorder %v734, 1
      %vm767 = vcmp.eq.s32.totalorder %v735, 1
      %vm768 = vcmp.eq.s32.totalorder %v736, 1
      %vm769 = vcmp.eq.s32.totalorder %v737, 1
      %vm770 = vcmp.eq.s32.totalorder %v738, 1
      %vm771 = vcmp.eq.s32.totalorder %v739, 1
      %vm772 = vcmp.eq.s32.totalorder %v740, 1
      %vm773 = vcmp.eq.s32.totalorder %v741, 1
      %vm774 = vcmp.eq.s32.totalorder %v742, 1
      %vm775 = vcmp.eq.s32.totalorder %v743, 1
      %vm776 = vcmp.eq.s32.totalorder %v744, 1
      %vm777 = vcmp.eq.s32.totalorder %v745, 1
      %vm778 = vcmp.eq.s32.totalorder %v746, 1
      %vm779 = vcmp.eq.s32.totalorder %v747, 1
      %vm780 = vmpackc.low %vm748, %vm748
      %vm781 = vmpackc.low %vm749, %vm749
      %vm782 = vmpackc.low %vm750, %vm750
      %vm783 = vmpackc.low %vm751, %vm751
      %vm784 = vmpackc.low %vm752, %vm752
      %vm785 = vmpackc.low %vm753, %vm753
      %vm786 = vmpackc.low %vm754, %vm754
      %vm787 = vmpackc.low %vm755, %vm755
      %vm788 = vmpackc.low %vm756, %vm756
      %vm789 = vmpackc.low %vm757, %vm757
      %vm790 = vmpackc.low %vm758, %vm758
      %vm791 = vmpackc.low %vm759, %vm759
      %vm792 = vmpackc.low %vm760, %vm760
      %vm793 = vmpackc.low %vm761, %vm761
      %vm794 = vmpackc.low %vm762, %vm762
      %vm795 = vmpackc.low %vm763, %vm763
      %vm796 = vmpackc.low %vm764, %vm764
      %vm797 = vmpackc.low %vm765, %vm765
      %vm798 = vmpackc.low %vm766, %vm766
      %vm799 = vmpackc.low %vm767, %vm767
      %vm800 = vmpackc.low %vm768, %vm768
      %vm801 = vmpackc.low %vm769, %vm769
      %vm802 = vmpackc.low %vm770, %vm770
      %vm803 = vmpackc.low %vm771, %vm771
      %vm804 = vmpackc.low %vm772, %vm772
      %vm805 = vmpackc.low %vm773, %vm773
      %vm806 = vmpackc.low %vm774, %vm774
      %vm807 = vmpackc.low %vm775, %vm775
      %vm808 = vmpackc.low %vm776, %vm776
      %vm809 = vmpackc.low %vm777, %vm777
      %vm810 = vmpackc.low %vm778, %vm778
      %vm811 = vmpackc.low %vm779, %vm779
      %v812 = vsel %vm780, 65537, 0
      %v813 = vsel %vm781, 65537, 0
      %v814 = vsel %vm782, 65537, 0
      %v815 = vsel %vm783, 65537, 0
      %v816 = vsel %vm784, 65537, 0
      %v817 = vsel %vm785, 65537, 0
      %v818 = vsel %vm786, 65537, 0
      %v819 = vsel %vm787, 65537, 0
      %v820 = vsel %vm788, 65537, 0
      %v821 = vsel %vm789, 65537, 0
      %v822 = vsel %vm790, 65537, 0
      %v823 = vsel %vm791, 65537, 0
      %v824 = vsel %vm792, 65537, 0
      %v825 = vsel %vm793, 65537, 0
      %v826 = vsel %vm794, 65537, 0
      %v827 = vsel %vm795, 65537, 0
      %v828 = vsel %vm796, 65537, 0
      %v829 = vsel %vm797, 65537, 0
      %v830 = vsel %vm798, 65537, 0
      %v831 = vsel %vm799, 65537, 0
      %v832 = vsel %vm800, 65537, 0
      %v833 = vsel %vm801, 65537, 0
      %v834 = vsel %vm802, 65537, 0
      %v835 = vsel %vm803, 65537, 0
      %v836 = vsel %vm804, 65537, 0
      %v837 = vsel %vm805, 65537, 0
      %v838 = vsel %vm806, 65537, 0
      %v839 = vsel %vm807, 65537, 0
      %v840 = vsel %vm808, 65537, 0
      %v841 = vsel %vm809, 65537, 0
      %v842 = vsel %vm810, 65537, 0
      %v843 = vsel %vm811, 65537, 0
      %vm844 = vsmask.f32 3328
      %vm845 = vsmask.f32 7440
      %vm846 = vmor %vm844, %vm845
      %v848 = vshll.u32 %v812, 16
      %v850 = vrot.slane %v848, 5
      %v851 = vshrl.u32 %v812, 16
      %v853 = vrot.slane %v851, 4
      %v854 = vor.u32 %v853, %v850
      %v855 = vrot.slane %v854, 4
      %v857 = vshll.u32 %v813, 16
      %v859 = vrot.slane %v857, 5
      %v860 = vsel %vm846, %v855, %v859
      %v861 = vshrl.u32 %v813, 16
      %v863 = vrot.slane %v861, 4
      %v864 = vor.u32 %v863, %v859
      %v865 = vrot.slane %v864, 4
      %v867 = vshll.u32 %v814, 16
      %v869 = vrot.slane %v867, 5
      %v870 = vsel %vm846, %v865, %v869
      %v871 = vshrl.u32 %v814, 16
      %v873 = vrot.slane %v871, 4
      %v874 = vor.u32 %v873, %v869
      %v875 = vrot.slane %v874, 4
      %v877 = vshll.u32 %v815, 16
      %v879 = vrot.slane %v877, 5
      %v880 = vsel %vm846, %v875, %v879
      %v881 = vshrl.u32 %v815, 16
      %v883 = vrot.slane %v881, 4
      %v884 = vor.u32 %v883, %v879
      %v885 = vrot.slane %v884, 4
      %v887 = vshll.u32 %v816, 16
      %v889 = vrot.slane %v887, 5
      %v890 = vsel %vm846, %v885, %v889
      %v891 = vshrl.u32 %v816, 16
      %v893 = vrot.slane %v891, 4
      %v894 = vor.u32 %v893, %v889
      %v895 = vrot.slane %v894, 4
      %v897 = vshll.u32 %v817, 16
      %v899 = vrot.slane %v897, 5
      %v900 = vsel %vm846, %v895, %v899
      %v901 = vshrl.u32 %v817, 16
      %v903 = vrot.slane %v901, 4
      %v904 = vor.u32 %v903, %v899
      %v905 = vrot.slane %v904, 4
      %v907 = vshll.u32 %v818, 16
      %v909 = vrot.slane %v907, 5
      %v910 = vsel %vm846, %v905, %v909
      %v911 = vshrl.u32 %v818, 16
      %v913 = vrot.slane %v911, 4
      %v914 = vor.u32 %v913, %v909
      %v915 = vrot.slane %v914, 4
      %v917 = vshll.u32 %v819, 16
      %v919 = vrot.slane %v917, 5
      %v920 = vsel %vm846, %v915, %v919
      %v921 = vshrl.u32 %v819, 16
      %v923 = vrot.slane %v921, 4
      %v924 = vor.u32 %v923, %v919
      %v925 = vrot.slane %v924, 4
      %v927 = vshll.u32 %v820, 16
      %v929 = vrot.slane %v927, 5
      %v930 = vsel %vm846, %v925, %v929
      %v931 = vshrl.u32 %v820, 16
      %v933 = vrot.slane %v931, 4
      %v934 = vor.u32 %v933, %v929
      %v935 = vrot.slane %v934, 4
      %v937 = vshll.u32 %v821, 16
      %v939 = vrot.slane %v937, 5
      %v940 = vsel %vm846, %v935, %v939
      %v941 = vshrl.u32 %v821, 16
      %v943 = vrot.slane %v941, 4
      %v944 = vor.u32 %v943, %v939
      %v945 = vrot.slane %v944, 4
      %v947 = vshll.u32 %v822, 16
      %v949 = vrot.slane %v947, 5
      %v950 = vsel %vm846, %v945, %v949
      %v951 = vshrl.u32 %v822, 16
      %v953 = vrot.slane %v951, 4
      %v954 = vor.u32 %v953, %v949
      %v955 = vrot.slane %v954, 4
      %v957 = vshll.u32 %v823, 16
      %v959 = vrot.slane %v957, 5
      %v960 = vsel %vm846, %v955, %v959
      %v961 = vshrl.u32 %v823, 16
      %v963 = vrot.slane %v961, 4
      %v964 = vor.u32 %v963, %v959
      %v965 = vrot.slane %v964, 4
      %v967 = vshll.u32 %v824, 16
      %v969 = vrot.slane %v967, 5
      %v970 = vsel %vm846, %v965, %v969
      %v971 = vshrl.u32 %v824, 16
      %v973 = vrot.slane %v971, 4
      %v974 = vor.u32 %v973, %v969
      %v975 = vrot.slane %v974, 4
      %v977 = vshll.u32 %v825, 16
      %v979 = vrot.slane %v977, 5
      %v980 = vsel %vm846, %v975, %v979
      %v981 = vshrl.u32 %v825, 16
      %v983 = vrot.slane %v981, 4
      %v984 = vor.u32 %v983, %v979
      %v985 = vrot.slane %v984, 4
      %v987 = vshll.u32 %v826, 16
      %v989 = vrot.slane %v987, 5
      %v990 = vsel %vm846, %v985, %v989
      %v991 = vshrl.u32 %v826, 16
      %v993 = vrot.slane %v991, 4
      %v994 = vor.u32 %v993, %v989
      %v995 = vrot.slane %v994, 4
      %v997 = vshll.u32 %v827, 16
      %v999 = vrot.slane %v997, 5
      %v1000 = vsel %vm846, %v995, %v999
      %v1001 = vshrl.u32 %v827, 16
      %v1003 = vrot.slane %v1001, 4
      %v1004 = vor.u32 %v1003, %v999
      %v1005 = vrot.slane %v1004, 4
      %v1007 = vshll.u32 %v828, 16
      %v1009 = vrot.slane %v1007, 5
      %v1010 = vsel %vm846, %v1005, %v1009
      %v1011 = vshrl.u32 %v828, 16
      %v1013 = vrot.slane %v1011, 4
      %v1014 = vor.u32 %v1013, %v1009
      %v1015 = vrot.slane %v1014, 4
      %v1017 = vshll.u32 %v829, 16
      %v1019 = vrot.slane %v1017, 5
      %v1020 = vsel %vm846, %v1015, %v1019
      %v1021 = vshrl.u32 %v829, 16
      %v1023 = vrot.slane %v1021, 4
      %v1024 = vor.u32 %v1023, %v1019
      %v1025 = vrot.slane %v1024, 4
      %v1027 = vshll.u32 %v830, 16
      %v1029 = vrot.slane %v1027, 5
      %v1030 = vsel %vm846, %v1025, %v1029
      %v1031 = vshrl.u32 %v830, 16
      %v1033 = vrot.slane %v1031, 4
      %v1034 = vor.u32 %v1033, %v1029
      %v1035 = vrot.slane %v1034, 4
      %v1037 = vshll.u32 %v831, 16
      %v1039 = vrot.slane %v1037, 5
      %v1040 = vsel %vm846, %v1035, %v1039
      %v1041 = vshrl.u32 %v831, 16
      %v1043 = vrot.slane %v1041, 4
      %v1044 = vor.u32 %v1043, %v1039
      %v1045 = vrot.slane %v1044, 4
      %v1047 = vshll.u32 %v832, 16
      %v1049 = vrot.slane %v1047, 5
      %v1050 = vsel %vm846, %v1045, %v1049
      %v1051 = vshrl.u32 %v832, 16
      %v1053 = vrot.slane %v1051, 4
      %v1054 = vor.u32 %v1053, %v1049
      %v1055 = vrot.slane %v1054, 4
      %v1057 = vshll.u32 %v833, 16
      %v1059 = vrot.slane %v1057, 5
      %v1060 = vsel %vm846, %v1055, %v1059
      %v1061 = vshrl.u32 %v833, 16
      %v1063 = vrot.slane %v1061, 4
      %v1064 = vor.u32 %v1063, %v1059
      %v1065 = vrot.slane %v1064, 4
      %v1067 = vshll.u32 %v834, 16
      %v1069 = vrot.slane %v1067, 5
      %v1070 = vsel %vm846, %v1065, %v1069
      %v1071 = vshrl.u32 %v834, 16
      %v1073 = vrot.slane %v1071, 4
      %v1074 = vor.u32 %v1073, %v1069
      %v1075 = vrot.slane %v1074, 4
      %v1077 = vshll.u32 %v835, 16
      %v1079 = vrot.slane %v1077, 5
      %v1080 = vsel %vm846, %v1075, %v1079
      %v1081 = vshrl.u32 %v835, 16
      %v1083 = vrot.slane %v1081, 4
      %v1084 = vor.u32 %v1083, %v1079
      %v1085 = vrot.slane %v1084, 4
      %v1087 = vshll.u32 %v836, 16
      %v1089 = vrot.slane %v1087, 5
      %v1090 = vsel %vm846, %v1085, %v1089
      %v1091 = vshrl.u32 %v836, 16
      %v1093 = vrot.slane %v1091, 4
      %v1094 = vor.u32 %v1093, %v1089
      %v1095 = vrot.slane %v1094, 4
      %v1097 = vshll.u32 %v837, 16
      %v1099 = vrot.slane %v1097, 5
      %v1100 = vsel %vm846, %v1095, %v1099
      %v1101 = vshrl.u32 %v837, 16
      %v1103 = vrot.slane %v1101, 4
      %v1104 = vor.u32 %v1103, %v1099
      %v1105 = vrot.slane %v1104, 4
      %v1107 = vshll.u32 %v838, 16
      %v1109 = vrot.slane %v1107, 5
      %v1110 = vsel %vm846, %v1105, %v1109
      %v1111 = vshrl.u32 %v838, 16
      %v1113 = vrot.slane %v1111, 4
      %v1114 = vor.u32 %v1113, %v1109
      %v1115 = vrot.slane %v1114, 4
      %v1117 = vshll.u32 %v839, 16
      %v1119 = vrot.slane %v1117, 5
      %v1120 = vsel %vm846, %v1115, %v1119
      %v1121 = vshrl.u32 %v839, 16
      %v1123 = vrot.slane %v1121, 4
      %v1124 = vor.u32 %v1123, %v1119
      %v1125 = vrot.slane %v1124, 4
      %v1127 = vshll.u32 %v840, 16
      %v1129 = vrot.slane %v1127, 5
      %v1130 = vsel %vm846, %v1125, %v1129
      %v1131 = vshrl.u32 %v840, 16
      %v1133 = vrot.slane %v1131, 4
      %v1134 = vor.u32 %v1133, %v1129
      %v1135 = vrot.slane %v1134, 4
      %v1137 = vshll.u32 %v841, 16
      %v1139 = vrot.slane %v1137, 5
      %v1140 = vsel %vm846, %v1135, %v1139
      %v1141 = vshrl.u32 %v841, 16
      %v1143 = vrot.slane %v1141, 4
      %v1144 = vor.u32 %v1143, %v1139
      %v1145 = vrot.slane %v1144, 4
      %v1147 = vshll.u32 %v842, 16
      %v1149 = vrot.slane %v1147, 5
      %v1150 = vsel %vm846, %v1145, %v1149
      %v1151 = vshrl.u32 %v842, 16
      %v1153 = vrot.slane %v1151, 4
      %v1154 = vor.u32 %v1153, %v1149
      %v1155 = vrot.slane %v1154, 4
      %v1157 = vshll.u32 %v843, 16
      %v1159 = vrot.slane %v1157, 5
      %v1160 = vsel %vm846, %v1155, %v1159
      %v1161 = vshrl.u32 %v843, 16
      %v1163 = vrot.slane %v1161, 4
      %v1164 = vor.u32 %v1163, %v1159
      %v1165 = vrot.slane %v1164, 4
      %vm1166 = vcmp.ne.s16.totalorder %v850, 0
      %vm1167 = vcmp.ne.s16.totalorder %v860, 0
      %vm1168 = vcmp.ne.s16.totalorder %v870, 0
      %vm1169 = vcmp.ne.s16.totalorder %v880, 0
      %vm1170 = vcmp.ne.s16.totalorder %v890, 0
      %vm1171 = vcmp.ne.s16.totalorder %v900, 0
      %vm1172 = vcmp.ne.s16.totalorder %v910, 0
      %vm1173 = vcmp.ne.s16.totalorder %v920, 0
      %vm1174 = vcmp.ne.s16.totalorder %v930, 0
      %vm1175 = vcmp.ne.s16.totalorder %v940, 0
      %vm1176 = vcmp.ne.s16.totalorder %v950, 0
      %vm1177 = vcmp.ne.s16.totalorder %v960, 0
      %vm1178 = vcmp.ne.s16.totalorder %v970, 0
      %vm1179 = vcmp.ne.s16.totalorder %v980, 0
      %vm1180 = vcmp.ne.s16.totalorder %v990, 0
      %vm1181 = vcmp.ne.s16.totalorder %v1000, 0
      %vm1182 = vcmp.ne.s16.totalorder %v1010, 0
      %vm1183 = vcmp.ne.s16.totalorder %v1020, 0
      %vm1184 = vcmp.ne.s16.totalorder %v1030, 0
      %vm1185 = vcmp.ne.s16.totalorder %v1040, 0
      %vm1186 = vcmp.ne.s16.totalorder %v1050, 0
      %vm1187 = vcmp.ne.s16.totalorder %v1060, 0
      %vm1188 = vcmp.ne.s16.totalorder %v1070, 0
      %vm1189 = vcmp.ne.s16.totalorder %v1080, 0
      %vm1190 = vcmp.ne.s16.totalorder %v1090, 0
      %vm1191 = vcmp.ne.s16.totalorder %v1100, 0
      %vm1192 = vcmp.ne.s16.totalorder %v1110, 0
      %vm1193 = vcmp.ne.s16.totalorder %v1120, 0
      %vm1194 = vcmp.ne.s16.totalorder %v1130, 0
      %vm1195 = vcmp.ne.s16.totalorder %v1140, 0
      %vm1196 = vcmp.ne.s16.totalorder %v1150, 0
      %vm1197 = vcmp.ne.s16.totalorder %v1160, 0
      %vm1198 = vcmp.ne.s16.totalorder %v1165, 0
      %v1199 = vsel %vm1166, 0, %v683
      %v1200 = vsel %vm1167, 0, %v684
      %v1201 = vsel %vm1168, 0, %v685
      %v1202 = vsel %vm1169, 0, %v686
      %v1203 = vsel %vm1170, 0, %v687
      %v1204 = vsel %vm1171, 0, %v688
      %v1205 = vsel %vm1172, 0, %v689
      %v1206 = vsel %vm1173, 0, %v690
      %v1207 = vsel %vm1174, 0, %v691
      %v1208 = vsel %vm1175, 0, %v692
      %v1209 = vsel %vm1176, 0, %v693
      %v1210 = vsel %vm1177, 0, %v694
      %v1211 = vsel %vm1178, 0, %v695
      %v1212 = vsel %vm1179, 0, %v696
      %v1213 = vsel %vm1180, 0, %v697
      %v1214 = vsel %vm1181, 0, %v698
      %v1215 = vsel %vm1182, 0, %v699
      %v1216 = vsel %vm1183, 0, %v700
      %v1217 = vsel %vm1184, 0, %v701
      %v1218 = vsel %vm1185, 0, %v702
      %v1219 = vsel %vm1186, 0, %v703
      %v1220 = vsel %vm1187, 0, %v704
      %v1221 = vsel %vm1188, 0, %v705
      %v1222 = vsel %vm1189, 0, %v706
      %v1223 = vsel %vm1190, 0, %v707
      %v1224 = vsel %vm1191, 0, %v708
      %v1225 = vsel %vm1192, 0, %v709
      %v1226 = vsel %vm1193, 0, %v710
      %v1227 = vsel %vm1194, 0, %v711
      %v1228 = vsel %vm1195, 0, %v712
      %v1229 = vsel %vm1196, 0, %v713
      %v1230 = vsel %vm1197, 0, %v714
      %v1231 = vsel %vm1198, 0, %v715
      %v1232 = vld [vmem:[%s1] sm:$0xf]
      %v1233 = vld [vmem:[%s1 + $0x4] sm:$0xf]
      %v1234 = vld [vmem:[%s1 + $0x8] sm:$0xf]
      %v1235 = vld [vmem:[%s1 + $0xc] sm:$0xf]
      %v1236 = vld [vmem:[%s1 + $0x10] sm:$0xf]
      %v1237 = vld [vmem:[%s1 + $0x14] sm:$0xf]
      %v1238 = vld [vmem:[%s1 + $0x18] sm:$0xf]
      %v1239 = vld [vmem:[%s1 + $0x1c] sm:$0xf]
      %v1240 = vld [vmem:[%s1 + $0x20] sm:$0xf]
      %v1241 = vld [vmem:[%s1 + $0x24] sm:$0xf]
      %v1242 = vld [vmem:[%s1 + $0x28] sm:$0xf]
      %v1243 = vld [vmem:[%s1 + $0x2c] sm:$0xf]
      %v1244 = vld [vmem:[%s1 + $0x30] sm:$0xf]
      %v1245 = vld [vmem:[%s1 + $0x34] sm:$0xf]
      %v1246 = vld [vmem:[%s1 + $0x38] sm:$0xf]
      %v1247 = vld [vmem:[%s1 + $0x3c] sm:$0xf]
      %s1248 = scalar_lea.vmem %s1, 64
      %v1249 = vld [vmem:[%s1248] sm:$0xf]
      %v1250 = vld [vmem:[%s1248 + $0x4] sm:$0xf]
      %v1251 = vld [vmem:[%s1248 + $0x8] sm:$0xf]
      %v1252 = vld [vmem:[%s1248 + $0xc] sm:$0xf]
      %v1253 = vld [vmem:[%s1248 + $0x10] sm:$0xf]
      %v1254 = vld [vmem:[%s1248 + $0x14] sm:$0xf]
      %v1255 = vld [vmem:[%s1248 + $0x18] sm:$0xf]
      %v1256 = vld [vmem:[%s1248 + $0x1c] sm:$0xf]
      %v1257 = vld [vmem:[%s1248 + $0x20] sm:$0xf]
      %v1258 = vld [vmem:[%s1248 + $0x24] sm:$0xf]
      %v1259 = vld [vmem:[%s1248 + $0x28] sm:$0xf]
      %v1260 = vld [vmem:[%s1248 + $0x2c] sm:$0xf]
      %v1261 = vld [vmem:[%s1248 + $0x30] sm:$0xf]
      %v1262 = vld [vmem:[%s1248 + $0x34] sm:$0xf]
      %v1263 = vld [vmem:[%s1248 + $0x38] sm:$0xf]
      %v1264 = vld [vmem:[%s1248 + $0x3c] sm:$0xf]
      %v1297 = vunpack.c.l.b16 %v684
      %v1298 = vunpack.c.l.b16 %v685
      %v1299 = vunpack.c.l.b16 %v686
      %v1300 = vunpack.c.l.b16 %v687
      %v1301 = vunpack.c.l.b16 %v688
      %v1302 = vunpack.c.l.b16 %v689
      %v1303 = vunpack.c.l.b16 %v690
      %v1304 = vunpack.c.l.b16 %v691
      %v1305 = vunpack.c.l.b16 %v692
      %v1306 = vunpack.c.l.b16 %v693
      %v1307 = vunpack.c.l.b16 %v694
      %v1308 = vunpack.c.l.b16 %v695
      %v1309 = vunpack.c.l.b16 %v696
      %v1310 = vunpack.c.l.b16 %v697
      %v1311 = vunpack.c.l.b16 %v698
      %v1312 = vunpack.c.l.b16 %v699
      %v1313 = vunpack.c.l.b16 %v700
      %v1314 = vunpack.c.l.b16 %v701
      %v1315 = vunpack.c.l.b16 %v702
      %v1316 = vunpack.c.l.b16 %v703
      %v1317 = vunpack.c.l.b16 %v704
      %v1318 = vunpack.c.l.b16 %v705
      %v1319 = vunpack.c.l.b16 %v706
      %v1320 = vunpack.c.l.b16 %v707
      %v1321 = vunpack.c.l.b16 %v708
      %v1322 = vunpack.c.l.b16 %v709
      %v1323 = vunpack.c.l.b16 %v710
      %v1324 = vunpack.c.l.b16 %v711
      %v1325 = vunpack.c.l.b16 %v712
      %v1326 = vunpack.c.l.b16 %v713
      %v1327 = vunpack.c.l.b16 %v714
      %v1328 = vunpack.c.l.b16 %v715
      %v1329 = vpack.c.b16 %v1298, %v1297
      %v1330 = vpack.c.b16 %v1300, %v1299
      %v1331 = vpack.c.b16 %v1302, %v1301
      %v1332 = vpack.c.b16 %v1304, %v1303
      %v1333 = vpack.c.b16 %v1306, %v1305
      %v1334 = vpack.c.b16 %v1308, %v1307
      %v1335 = vpack.c.b16 %v1310, %v1309
      %v1336 = vpack.c.b16 %v1312, %v1311
      %v1337 = vpack.c.b16 %v1314, %v1313
      %v1338 = vpack.c.b16 %v1316, %v1315
      %v1339 = vpack.c.b16 %v1318, %v1317
      %v1340 = vpack.c.b16 %v1320, %v1319
      %v1341 = vpack.c.b16 %v1322, %v1321
      %v1342 = vpack.c.b16 %v1324, %v1323
      %v1343 = vpack.c.b16 %v1326, %v1325
      %v1344 = vpack.c.b16 %v1328, %v1327
      %v1377 = vunpack.c.l.b16 %v1249
      %v1378 = vunpack.c.l.b16 %v1250
      %v1379 = vunpack.c.l.b16 %v1251
      %v1380 = vunpack.c.l.b16 %v1252
      %v1381 = vunpack.c.l.b16 %v1253
      %v1382 = vunpack.c.l.b16 %v1254
      %v1383 = vunpack.c.l.b16 %v1255
      %v1384 = vunpack.c.l.b16 %v1256
      %v1385 = vunpack.c.l.b16 %v1257
      %v1386 = vunpack.c.l.b16 %v1258
      %v1387 = vunpack.c.l.b16 %v1259
      %v1388 = vunpack.c.l.b16 %v1260
      %v1389 = vunpack.c.l.b16 %v1261
      %v1390 = vunpack.c.l.b16 %v1262
      %v1391 = vunpack.c.l.b16 %v1263
      %v1392 = vunpack.c.l.b16 %v1264
      %v1393 = vpack.c.b16 %v1378, %v1377
      %v1394 = vpack.c.b16 %v1380, %v1379
      %v1395 = vpack.c.b16 %v1382, %v1381
      %v1396 = vpack.c.b16 %v1384, %v1383
      %v1397 = vpack.c.b16 %v1386, %v1385
      %v1398 = vpack.c.b16 %v1388, %v1387
      %v1399 = vpack.c.b16 %v1390, %v1389
      %v1400 = vpack.c.b16 %v1392, %v1391
      %1409 = vmatprep.subr.bf16.mxu0 0
      %1410 = vmatpush1.bf16.msra.mxu0 %v1393
      %1411 = vmatprep.subr.bf16.mxu0 0
      %1412 = vmatpush1.bf16.msra.mxu0 %v1394
      %1413 = vmatprep.subr.bf16.mxu0 0
      %1414 = vmatpush1.bf16.msra.mxu0 %v1395
      %1415 = vmatprep.subr.bf16.mxu0 0
      %1416 = vmatpush1.bf16.msra.mxu0 %v1396
      %1417 = vmatprep.subr.bf16.mxu0 0
      %1418 = vmatpush1.bf16.msra.mxu0 %v1397
      %1419 = vmatprep.subr.bf16.mxu0 0
      %1420 = vmatpush1.bf16.msra.mxu0 %v1398
      %1421 = vmatprep.subr.bf16.mxu0 0
      %1422 = vmatpush1.bf16.msra.mxu0 %v1399
      %1423 = vmatprep.subr.bf16.mxu0 0
      %1424 = vmatpush1.bf16.msra.mxu0 %v1400
      %1425 = vmatprep.subr.bf16.mxu0 0
      %1426 = vmatpush1.bf16.msra.mxu0 0
      %1427 = vmatprep.subr.bf16.mxu0 0
      %1428 = vmatpush1.bf16.msra.mxu0 0
      %1429 = vmatprep.subr.bf16.mxu0 0
      %1430 = vmatpush1.bf16.msra.mxu0 0
      %1431 = vmatprep.subr.bf16.mxu0 0
      %1432 = vmatpush1.bf16.msra.mxu0 0
      %1433 = vmatprep.subr.bf16.mxu0 0
      %1434 = vmatpush1.bf16.msra.mxu0 0
      %1435 = vmatprep.subr.bf16.mxu0 0
      %1436 = vmatpush1.bf16.msra.mxu0 0
      %1437 = vmatprep.subr.bf16.mxu0 0
      %1438 = vmatpush1.bf16.msra.mxu0 0
      %1439 = vmatprep.subr.bf16.mxu0 0
      %1440 = vmatpush1.bf16.msra.mxu0 0
      %1441 = vmatprep.mubr.bf16.mxu0 0
      %1442 = vmatmul.mubr.bf16.gmra.mrb[0].mxu0 %v1329
      %v1443 = vpop.f32.mrb[0].mxu0
      %v1444 = vadd.f32 0.0, %v1443
      %v1445 = vpop.f32.mrb[0].mxu0
      %v1446 = vpop.f32.mrb[0].mxu0
      %v1447 = vadd.f32 0.0, %v1446
      %v1448 = vpop.f32.mrb[0].mxu0
      %1449 = vmatprep.mubr.bf16.mxu0 0
      %1450 = vmatmul.mubr.bf16.gmra.mrb[0].mxu0 %v1330
      %v1451 = vpop.f32.mrb[0].mxu0
      %v1452 = vadd.f32 0.0, %v1451
      %v1453 = vpop.f32.mrb[0].mxu0
      %v1454 = vpop.f32.mrb[0].mxu0
      %v1455 = vadd.f32 0.0, %v1454
      %v1456 = vpop.f32.mrb[0].mxu0
      %1457 = vmatprep.mubr.bf16.mxu0 0
      %1458 = vmatmul.mubr.bf16.gmra.mrb[0].mxu0 %v1331
      %v1459 = vpop.f32.mrb[0].mxu0
      %v1460 = vadd.f32 0.0, %v1459
      %v1461 = vpop.f32.mrb[0].mxu0
      %v1462 = vpop.f32.mrb[0].mxu0
      %v1463 = vadd.f32 0.0, %v1462
      %v1464 = vpop.f32.mrb[0].mxu0
      %1465 = vmatprep.mubr.bf16.mxu0 0
      %1466 = vmatmul.mubr.bf16.gmra.mrb[0].mxu0 %v1332
      %v1467 = vpop.f32.mrb[0].mxu0
      %v1468 = vadd.f32 0.0, %v1467
      %v1469 = vpop.f32.mrb[0].mxu0
      %v1470 = vpop.f32.mrb[0].mxu0
      %v1471 = vadd.f32 0.0, %v1470
      %v1472 = vpop.f32.mrb[0].mxu0
      %1473 = vmatprep.mubr.bf16.mxu0 0
      %1474 = vmatmul.mubr.bf16.gmra.mrb[0].mxu0 %v1333
      %v1475 = vpop.f32.mrb[0].mxu0
      %v1476 = vadd.f32 0.0, %v1475
      %v1477 = vpop.f32.mrb[0].mxu0
      %v1478 = vpop.f32.mrb[0].mxu0
      %v1479 = vadd.f32 0.0, %v1478
      %v1480 = vpop.f32.mrb[0].mxu0
      %1481 = vmatprep.mubr.bf16.mxu0 0
      %1482 = vmatmul.mubr.bf16.gmra.mrb[0].mxu0 %v1334
      %v1483 = vpop.f32.mrb[0].mxu0
      %v1484 = vadd.f32 0.0, %v1483
      %v1485 = vpop.f32.mrb[0].mxu0
      %v1486 = vpop.f32.mrb[0].mxu0
      %v1487 = vadd.f32 0.0, %v1486
      %v1488 = vpop.f32.mrb[0].mxu0
      %1489 = vmatprep.mubr.bf16.mxu0 0
      %1490 = vmatmul.mubr.bf16.gmra.mrb[0].mxu0 %v1335
      %v1491 = vpop.f32.mrb[0].mxu0
      %v1492 = vadd.f32 0.0, %v1491
      %v1493 = vpop.f32.mrb[0].mxu0
      %v1494 = vpop.f32.mrb[0].mxu0
      %v1495 = vadd.f32 0.0, %v1494
      %v1496 = vpop.f32.mrb[0].mxu0
      %1497 = vmatprep.mubr.bf16.mxu0 0
      %1498 = vmatmul.mubr.bf16.gmra.mrb[0].mxu0 %v1336
      %v1499 = vpop.f32.mrb[0].mxu0
      %v1500 = vadd.f32 0.0, %v1499
      %v1501 = vpop.f32.mrb[0].mxu0
      %v1502 = vpop.f32.mrb[0].mxu0
      %v1503 = vadd.f32 0.0, %v1502
      %v1504 = vpop.f32.mrb[0].mxu0
      %1505 = vmatprep.mubr.bf16.mxu0 0
      %1506 = vmatmul.mubr.bf16.gmra.mrb[0].mxu0 %v1337
      %v1507 = vpop.f32.mrb[0].mxu0
      %v1508 = vadd.f32 0.0, %v1507
      %v1509 = vpop.f32.mrb[0].mxu0
      %v1510 = vpop.f32.mrb[0].mxu0
      %v1511 = vadd.f32 0.0, %v1510
      %v1512 = vpop.f32.mrb[0].mxu0
      %1513 = vmatprep.mubr.bf16.mxu0 0
      %1514 = vmatmul.mubr.bf16.gmra.mrb[0].mxu0 %v1338
      %v1515 = vpop.f32.mrb[0].mxu0
      %v1516 = vadd.f32 0.0, %v1515
      %v1517 = vpop.f32.mrb[0].mxu0
      %v1518 = vpop.f32.mrb[0].mxu0
      %v1519 = vadd.f32 0.0, %v1518
      %v1520 = vpop.f32.mrb[0].mxu0
      %1521 = vmatprep.mubr.bf16.mxu0 0
      %1522 = vmatmul.mubr.bf16.gmra.mrb[0].mxu0 %v1339
      %v1523 = vpop.f32.mrb[0].mxu0
      %v1524 = vadd.f32 0.0, %v1523
      %v1525 = vpop.f32.mrb[0].mxu0
      %v1526 = vpop.f32.mrb[0].mxu0
      %v1527 = vadd.f32 0.0, %v1526
      %v1528 = vpop.f32.mrb[0].mxu0
      %1529 = vmatprep.mubr.bf16.mxu0 0
      %1530 = vmatmul.mubr.bf16.gmra.mrb[0].mxu0 %v1340
      %v1531 = vpop.f32.mrb[0].mxu0
      %v1532 = vadd.f32 0.0, %v1531
      %v1533 = vpop.f32.mrb[0].mxu0
      %v1534 = vpop.f32.mrb[0].mxu0
      %v1535 = vadd.f32 0.0, %v1534
      %v1536 = vpop.f32.mrb[0].mxu0
      %1537 = vmatprep.mubr.bf16.mxu0 0
      %1538 = vmatmul.mubr.bf16.gmra.mrb[0].mxu0 %v1341
      %v1539 = vpop.f32.mrb[0].mxu0
      %v1540 = vadd.f32 0.0, %v1539
      %v1541 = vpop.f32.mrb[0].mxu0
      %v1542 = vpop.f32.mrb[0].mxu0
      %v1543 = vadd.f32 0.0, %v1542
      %v1544 = vpop.f32.mrb[0].mxu0
      %1545 = vmatprep.mubr.bf16.mxu0 0
      %1546 = vmatmul.mubr.bf16.gmra.mrb[0].mxu0 %v1342
      %v1547 = vpop.f32.mrb[0].mxu0
      %v1548 = vadd.f32 0.0, %v1547
      %v1549 = vpop.f32.mrb[0].mxu0
      %v1550 = vpop.f32.mrb[0].mxu0
      %v1551 = vadd.f32 0.0, %v1550
      %v1552 = vpop.f32.mrb[0].mxu0
      %1553 = vmatprep.mubr.bf16.mxu0 0
      %1554 = vmatmul.mubr.bf16.gmra.mrb[0].mxu0 %v1343
      %v1555 = vpop.f32.mrb[0].mxu0
      %v1556 = vadd.f32 0.0, %v1555
      %v1557 = vpop.f32.mrb[0].mxu0
      %v1558 = vpop.f32.mrb[0].mxu0
      %v1559 = vadd.f32 0.0, %v1558
      %v1560 = vpop.f32.mrb[0].mxu0
      %1561 = vmatprep.mubr.bf16.mxu0 0
      %1562 = vmatmul.mubr.bf16.gmra.mrb[0].mxu0 %v1344
      %v1563 = vpop.f32.mrb[0].mxu0
      %v1564 = vadd.f32 0.0, %v1563
      %v1565 = vpop.f32.mrb[0].mxu0
      %v1566 = vpop.f32.mrb[0].mxu0
      %v1567 = vadd.f32 0.0, %v1566
      %v1568 = vpop.f32.mrb[0].mxu0
      %1569 = vdwg.mxu0
      %v1603 = vunpack.c.l.b16 %v1199
      %v1604 = vunpack.c.l.b16 %v1200
      %v1605 = vunpack.c.l.b16 %v1201
      %v1606 = vunpack.c.l.b16 %v1202
      %v1607 = vunpack.c.l.b16 %v1203
      %v1608 = vunpack.c.l.b16 %v1204
      %v1609 = vunpack.c.l.b16 %v1205
      %v1610 = vunpack.c.l.b16 %v1206
      %v1611 = vunpack.c.l.b16 %v1207
      %v1612 = vunpack.c.l.b16 %v1208
      %v1613 = vunpack.c.l.b16 %v1209
      %v1614 = vunpack.c.l.b16 %v1210
      %v1615 = vunpack.c.l.b16 %v1211
      %v1616 = vunpack.c.l.b16 %v1212
      %v1617 = vunpack.c.l.b16 %v1213
      %v1618 = vunpack.c.l.b16 %v1214
      %v1619 = vunpack.c.l.b16 %v1215
      %v1620 = vunpack.c.l.b16 %v1216
      %v1621 = vunpack.c.l.b16 %v1217
      %v1622 = vunpack.c.l.b16 %v1218
      %v1623 = vunpack.c.l.b16 %v1219
      %v1624 = vunpack.c.l.b16 %v1220
      %v1625 = vunpack.c.l.b16 %v1221
      %v1626 = vunpack.c.l.b16 %v1222
      %v1627 = vunpack.c.l.b16 %v1223
      %v1628 = vunpack.c.l.b16 %v1224
      %v1629 = vunpack.c.l.b16 %v1225
      %v1630 = vunpack.c.l.b16 %v1226
      %v1631 = vunpack.c.l.b16 %v1227
      %v1632 = vunpack.c.l.b16 %v1228
      %v1633 = vunpack.c.l.b16 %v1229
      %v1634 = vunpack.c.l.b16 %v1230
      %v1635 = vunpack.c.l.b16 %v1231
      %v1636 = vpack.c.b16 %v1604, %v1603
      %v1637 = vpack.c.b16 %v1606, %v1605
      %v1638 = vpack.c.b16 %v1608, %v1607
      %v1639 = vpack.c.b16 %v1610, %v1609
      %v1640 = vpack.c.b16 %v1612, %v1611
      %v1641 = vpack.c.b16 %v1614, %v1613
      %v1642 = vpack.c.b16 %v1616, %v1615
      %v1643 = vpack.c.b16 %v1618, %v1617
      %v1644 = vpack.c.b16 %v1620, %v1619
      %v1645 = vpack.c.b16 %v1622, %v1621
      %v1646 = vpack.c.b16 %v1624, %v1623
      %v1647 = vpack.c.b16 %v1626, %v1625
      %v1648 = vpack.c.b16 %v1628, %v1627
      %v1649 = vpack.c.b16 %v1630, %v1629
      %v1650 = vpack.c.b16 %v1632, %v1631
      %v1651 = vpack.c.b16 %v1634, %v1633
      %v1652 = vpack.c.b16 %v1635, %v1635
      %vm1653 = vsmask.f32 4352
      %v1655 = vshrl.u32 %v1636, 16
      %v1657 = vrot.slane %v1655, 3
      %v1658 = vshll.u32 %v1636, 16
      %v1660 = vrot.slane %v1658, 4
      %v1661 = vor.u32 %v1657, %v1660
      %v1663 = vshrl.u32 %v1637, 16
      %v1665 = vrot.slane %v1663, 3
      %v1666 = vshll.u32 %v1637, 16
      %v1668 = vrot.slane %v1666, 4
      %v1669 = vor.u32 %v1665, %v1668
      %v1670 = vsel %vm1653, %v1661, %v1669
      %v1672 = vshrl.u32 %v1638, 16
      %v1674 = vrot.slane %v1672, 3
      %v1675 = vshll.u32 %v1638, 16
      %v1677 = vrot.slane %v1675, 4
      %v1678 = vor.u32 %v1674, %v1677
      %v1679 = vsel %vm1653, %v1669, %v1678
      %v1681 = vshrl.u32 %v1639, 16
      %v1683 = vrot.slane %v1681, 3
      %v1684 = vshll.u32 %v1639, 16
      %v1686 = vrot.slane %v1684, 4
      %v1687 = vor.u32 %v1683, %v1686
      %v1688 = vsel %vm1653, %v1678, %v1687
      %v1690 = vshrl.u32 %v1640, 16
      %v1692 = vrot.slane %v1690, 3
      %v1693 = vshll.u32 %v1640, 16
      %v1695 = vrot.slane %v1693, 4
      %v1696 = vor.u32 %v1692, %v1695
      %v1697 = vsel %vm1653, %v1687, %v1696
      %v1699 = vshrl.u32 %v1641, 16
      %v1701 = vrot.slane %v1699, 3
      %v1702 = vshll.u32 %v1641, 16
      %v1704 = vrot.slane %v1702, 4
      %v1705 = vor.u32 %v1701, %v1704
      %v1706 = vsel %vm1653, %v1696, %v1705
      %v1708 = vshrl.u32 %v1642, 16
      %v1710 = vrot.slane %v1708, 3
      %v1711 = vshll.u32 %v1642, 16
      %v1713 = vrot.slane %v1711, 4
      %v1714 = vor.u32 %v1710, %v1713
      %v1715 = vsel %vm1653, %v1705, %v1714
      %v1717 = vshrl.u32 %v1643, 16
      %v1719 = vrot.slane %v1717, 3
      %v1720 = vshll.u32 %v1643, 16
      %v1722 = vrot.slane %v1720, 4
      %v1723 = vor.u32 %v1719, %v1722
      %v1724 = vsel %vm1653, %v1714, %v1723
      %v1726 = vshrl.u32 %v1644, 16
      %v1728 = vrot.slane %v1726, 3
      %v1729 = vshll.u32 %v1644, 16
      %v1731 = vrot.slane %v1729, 4
      %v1732 = vor.u32 %v1728, %v1731
      %v1733 = vsel %vm1653, %v1723, %v1732
      %v1735 = vshrl.u32 %v1645, 16
      %v1737 = vrot.slane %v1735, 3
      %v1738 = vshll.u32 %v1645, 16
      %v1740 = vrot.slane %v1738, 4
      %v1741 = vor.u32 %v1737, %v1740
      %v1742 = vsel %vm1653, %v1732, %v1741
      %v1744 = vshrl.u32 %v1646, 16
      %v1746 = vrot.slane %v1744, 3
      %v1747 = vshll.u32 %v1646, 16
      %v1749 = vrot.slane %v1747, 4
      %v1750 = vor.u32 %v1746, %v1749
      %v1751 = vsel %vm1653, %v1741, %v1750
      %v1753 = vshrl.u32 %v1647, 16
      %v1755 = vrot.slane %v1753, 3
      %v1756 = vshll.u32 %v1647, 16
      %v1758 = vrot.slane %v1756, 4
      %v1759 = vor.u32 %v1755, %v1758
      %v1760 = vsel %vm1653, %v1750, %v1759
      %v1762 = vshrl.u32 %v1648, 16
      %v1764 = vrot.slane %v1762, 3
      %v1765 = vshll.u32 %v1648, 16
      %v1767 = vrot.slane %v1765, 4
      %v1768 = vor.u32 %v1764, %v1767
      %v1769 = vsel %vm1653, %v1759, %v1768
      %v1771 = vshrl.u32 %v1649, 16
      %v1773 = vrot.slane %v1771, 3
      %v1774 = vshll.u32 %v1649, 16
      %v1776 = vrot.slane %v1774, 4
      %v1777 = vor.u32 %v1773, %v1776
      %v1778 = vsel %vm1653, %v1768, %v1777
      %v1780 = vshrl.u32 %v1650, 16
      %v1782 = vrot.slane %v1780, 3
      %v1783 = vshll.u32 %v1650, 16
      %v1785 = vrot.slane %v1783, 4
      %v1786 = vor.u32 %v1782, %v1785
      %v1787 = vsel %vm1653, %v1777, %v1786
      %v1789 = vshrl.u32 %v1651, 16
      %v1791 = vrot.slane %v1789, 3
      %v1792 = vshll.u32 %v1651, 16
      %v1794 = vrot.slane %v1792, 4
      %v1795 = vor.u32 %v1791, %v1794
      %v1796 = vsel %vm1653, %v1786, %v1795
      %v1798 = vshrl.u32 %v1652, 16
      %v1800 = vrot.slane %v1798, 3
      %v1801 = vshll.u32 %v1652, 16
      %v1803 = vrot.slane %v1801, 4
      %v1804 = vor.u32 %v1800, %v1803
      %v1805 = vsel %vm1653, %v1795, %v1804
      %v1838 = vunpack.c.l.b16 %v1232
      %v1839 = vunpack.c.l.b16 %v1233
      %v1840 = vunpack.c.l.b16 %v1234
      %v1841 = vunpack.c.l.b16 %v1235
      %v1842 = vunpack.c.l.b16 %v1236
      %v1843 = vunpack.c.l.b16 %v1237
      %v1844 = vunpack.c.l.b16 %v1238
      %v1845 = vunpack.c.l.b16 %v1239
      %v1846 = vunpack.c.l.b16 %v1240
      %v1847 = vunpack.c.l.b16 %v1241
      %v1848 = vunpack.c.l.b16 %v1242
      %v1849 = vunpack.c.l.b16 %v1243
      %v1850 = vunpack.c.l.b16 %v1244
      %v1851 = vunpack.c.l.b16 %v1245
      %v1852 = vunpack.c.l.b16 %v1246
      %v1853 = vunpack.c.l.b16 %v1247
      %v1854 = vpack.c.b16 %v1839, %v1838
      %v1855 = vpack.c.b16 %v1841, %v1840
      %v1856 = vpack.c.b16 %v1843, %v1842
      %v1857 = vpack.c.b16 %v1845, %v1844
      %v1858 = vpack.c.b16 %v1847, %v1846
      %v1859 = vpack.c.b16 %v1849, %v1848
      %v1860 = vpack.c.b16 %v1851, %v1850
      %v1861 = vpack.c.b16 %v1853, %v1852
      %1870 = vmatprep.subr.bf16.mxu0 0
      %1871 = vmatpush1.bf16.msra.mxu0 %v1854
      %1872 = vmatprep.subr.bf16.mxu0 0
      %1873 = vmatpush1.bf16.msra.mxu0 %v1855
      %1874 = vmatprep.subr.bf16.mxu0 0
      %1875 = vmatpush1.bf16.msra.mxu0 %v1856
      %1876 = vmatprep.subr.bf16.mxu0 0
      %1877 = vmatpush1.bf16.msra.mxu0 %v1857
      %1878 = vmatprep.subr.bf16.mxu0 0
      %1879 = vmatpush1.bf16.msra.mxu0 %v1858
      %1880 = vmatprep.subr.bf16.mxu0 0
      %1881 = vmatpush1.bf16.msra.mxu0 %v1859
      %1882 = vmatprep.subr.bf16.mxu0 0
      %1883 = vmatpush1.bf16.msra.mxu0 %v1860
      %1884 = vmatprep.subr.bf16.mxu0 0
      %1885 = vmatpush1.bf16.msra.mxu0 %v1861
      %1886 = vmatprep.subr.bf16.mxu0 0
      %1887 = vmatpush1.bf16.msra.mxu0 0
      %1888 = vmatprep.subr.bf16.mxu0 0
      %1889 = vmatpush1.bf16.msra.mxu0 0
      %1890 = vmatprep.subr.bf16.mxu0 0
      %1891 = vmatpush1.bf16.msra.mxu0 0
      %1892 = vmatprep.subr.bf16.mxu0 0
      %1893 = vmatpush1.bf16.msra.mxu0 0
      %1894 = vmatprep.subr.bf16.mxu0 0
      %1895 = vmatpush1.bf16.msra.mxu0 0
      %1896 = vmatprep.subr.bf16.mxu0 0
      %1897 = vmatpush1.bf16.msra.mxu0 0
      %1898 = vmatprep.subr.bf16.mxu0 0
      %1899 = vmatpush1.bf16.msra.mxu0 0
      %1900 = vmatprep.subr.bf16.mxu0 0
      %1901 = vmatpush1.bf16.msra.mxu0 0
      %1902 = vmatprep.mubr.bf16.mxu0 0
      %1903 = vmatmul.mubr.bf16.gmra.mrb[0].mxu0 %v1670
      %v1904 = vpop.f32.mrb[0].mxu0
      %v1905 = vadd.f32 %v1444, %v1904
      %v1906 = vpop.f32.mrb[0].mxu0
      %v1907 = vpop.f32.mrb[0].mxu0
      %v1908 = vadd.f32 %v1447, %v1907
      %v1909 = vpop.f32.mrb[0].mxu0
      %1910 = vmatprep.mubr.bf16.mxu0 0
      %1911 = vmatmul.mubr.bf16.gmra.mrb[0].mxu0 %v1679
      %v1912 = vpop.f32.mrb[0].mxu0
      %v1913 = vadd.f32 %v1452, %v1912
      %v1914 = vpop.f32.mrb[0].mxu0
      %v1915 = vpop.f32.mrb[0].mxu0
      %v1916 = vadd.f32 %v1455, %v1915
      %v1917 = vpop.f32.mrb[0].mxu0
      %1918 = vmatprep.mubr.bf16.mxu0 0
      %1919 = vmatmul.mubr.bf16.gmra.mrb[0].mxu0 %v1688
      %v1920 = vpop.f32.mrb[0].mxu0
      %v1921 = vadd.f32 %v1460, %v1920
      %v1922 = vpop.f32.mrb[0].mxu0
      %v1923 = vpop.f32.mrb[0].mxu0
      %v1924 = vadd.f32 %v1463, %v1923
      %v1925 = vpop.f32.mrb[0].mxu0
      %1926 = vmatprep.mubr.bf16.mxu0 0
      %1927 = vmatmul.mubr.bf16.gmra.mrb[0].mxu0 %v1697
      %v1928 = vpop.f32.mrb[0].mxu0
      %v1929 = vadd.f32 %v1468, %v1928
      %v1930 = vpop.f32.mrb[0].mxu0
      %v1931 = vpop.f32.mrb[0].mxu0
      %v1932 = vadd.f32 %v1471, %v1931
      %v1933 = vpop.f32.mrb[0].mxu0
      %1934 = vmatprep.mubr.bf16.mxu0 0
      %1935 = vmatmul.mubr.bf16.gmra.mrb[0].mxu0 %v1706
      %v1936 = vpop.f32.mrb[0].mxu0
      %v1937 = vadd.f32 %v1476, %v1936
      %v1938 = vpop.f32.mrb[0].mxu0
      %v1939 = vpop.f32.mrb[0].mxu0
      %v1940 = vadd.f32 %v1479, %v1939
      %v1941 = vpop.f32.mrb[0].mxu0
      %1942 = vmatprep.mubr.bf16.mxu0 0
      %1943 = vmatmul.mubr.bf16.gmra.mrb[0].mxu0 %v1715
      %v1944 = vpop.f32.mrb[0].mxu0
      %v1945 = vadd.f32 %v1484, %v1944
      %v1946 = vpop.f32.mrb[0].mxu0
      %v1947 = vpop.f32.mrb[0].mxu0
      %v1948 = vadd.f32 %v1487, %v1947
      %v1949 = vpop.f32.mrb[0].mxu0
      %1950 = vmatprep.mubr.bf16.mxu0 0
      %1951 = vmatmul.mubr.bf16.gmra.mrb[0].mxu0 %v1724
      %v1952 = vpop.f32.mrb[0].mxu0
      %v1953 = vadd.f32 %v1492, %v1952
      %v1954 = vpop.f32.mrb[0].mxu0
      %v1955 = vpop.f32.mrb[0].mxu0
      %v1956 = vadd.f32 %v1495, %v1955
      %v1957 = vpop.f32.mrb[0].mxu0
      %1958 = vmatprep.mubr.bf16.mxu0 0
      %1959 = vmatmul.mubr.bf16.gmra.mrb[0].mxu0 %v1733
      %v1960 = vpop.f32.mrb[0].mxu0
      %v1961 = vadd.f32 %v1500, %v1960
      %v1962 = vpop.f32.mrb[0].mxu0
      %v1963 = vpop.f32.mrb[0].mxu0
      %v1964 = vadd.f32 %v1503, %v1963
      %v1965 = vpop.f32.mrb[0].mxu0
      %1966 = vmatprep.mubr.bf16.mxu0 0
      %1967 = vmatmul.mubr.bf16.gmra.mrb[0].mxu0 %v1742
      %v1968 = vpop.f32.mrb[0].mxu0
      %v1969 = vadd.f32 %v1508, %v1968
      %v1970 = vpop.f32.mrb[0].mxu0
      %v1971 = vpop.f32.mrb[0].mxu0
      %v1972 = vadd.f32 %v1511, %v1971
      %v1973 = vpop.f32.mrb[0].mxu0
      %1974 = vmatprep.mubr.bf16.mxu0 0
      %1975 = vmatmul.mubr.bf16.gmra.mrb[0].mxu0 %v1751
      %v1976 = vpop.f32.mrb[0].mxu0
      %v1977 = vadd.f32 %v1516, %v1976
      %v1978 = vpop.f32.mrb[0].mxu0
      %v1979 = vpop.f32.mrb[0].mxu0
      %v1980 = vadd.f32 %v1519, %v1979
      %v1981 = vpop.f32.mrb[0].mxu0
      %1982 = vmatprep.mubr.bf16.mxu0 0
      %1983 = vmatmul.mubr.bf16.gmra.mrb[0].mxu0 %v1760
      %v1984 = vpop.f32.mrb[0].mxu0
      %v1985 = vadd.f32 %v1524, %v1984
      %v1986 = vpop.f32.mrb[0].mxu0
      %v1987 = vpop.f32.mrb[0].mxu0
      %v1988 = vadd.f32 %v1527, %v1987
      %v1989 = vpop.f32.mrb[0].mxu0
      %1990 = vmatprep.mubr.bf16.mxu0 0
      %1991 = vmatmul.mubr.bf16.gmra.mrb[0].mxu0 %v1769
      %v1992 = vpop.f32.mrb[0].mxu0
      %v1993 = vadd.f32 %v1532, %v1992
      %v1994 = vpop.f32.mrb[0].mxu0
      %v1995 = vpop.f32.mrb[0].mxu0
      %v1996 = vadd.f32 %v1535, %v1995
      %v1997 = vpop.f32.mrb[0].mxu0
      %1998 = vmatprep.mubr.bf16.mxu0 0
      %1999 = vmatmul.mubr.bf16.gmra.mrb[0].mxu0 %v1778
      %v2000 = vpop.f32.mrb[0].mxu0
      %v2001 = vadd.f32 %v1540, %v2000
      %v2002 = vpop.f32.mrb[0].mxu0
      %v2003 = vpop.f32.mrb[0].mxu0
      %v2004 = vadd.f32 %v1543, %v2003
      %v2005 = vpop.f32.mrb[0].mxu0
      %2006 = vmatprep.mubr.bf16.mxu0 0
      %2007 = vmatmul.mubr.bf16.gmra.mrb[0].mxu0 %v1787
      %v2008 = vpop.f32.mrb[0].mxu0
      %v2009 = vadd.f32 %v1548, %v2008
      %v2010 = vpop.f32.mrb[0].mxu0
      %v2011 = vpop.f32.mrb[0].mxu0
      %v2012 = vadd.f32 %v1551, %v2011
      %v2013 = vpop.f32.mrb[0].mxu0
      %2014 = vmatprep.mubr.bf16.mxu0 0
      %2015 = vmatmul.mubr.bf16.gmra.mrb[0].mxu0 %v1796
      %v2016 = vpop.f32.mrb[0].mxu0
      %v2017 = vadd.f32 %v1556, %v2016
      %v2018 = vpop.f32.mrb[0].mxu0
      %v2019 = vpop.f32.mrb[0].mxu0
      %v2020 = vadd.f32 %v1559, %v2019
      %v2021 = vpop.f32.mrb[0].mxu0
      %2022 = vmatprep.mubr.bf16.mxu0 0
      %2023 = vmatmul.mubr.bf16.gmra.mrb[0].mxu0 %v1805
      %v2024 = vpop.f32.mrb[0].mxu0
      %v2025 = vadd.f32 %v1564, %v2024
      %v2026 = vpop.f32.mrb[0].mxu0
      %v2027 = vpop.f32.mrb[0].mxu0
      %v2028 = vadd.f32 %v1567, %v2027
      %v2029 = vpop.f32.mrb[0].mxu0
      %2030 = vdwg.mxu0
      %v2031 = vld [vmem:[%s187 + $0x4] sm:$0xf]
      %v2032 = vld [vmem:[%s187 + $0x8] sm:$0xf]
      %v2033 = vld [vmem:[%s187 + $0xc] sm:$0xf]
      %v2034 = vld [vmem:[%s187 + $0x10] sm:$0xf]
      %v2035 = vld [vmem:[%s187 + $0x14] sm:$0xf]
      %v2036 = vld [vmem:[%s187 + $0x18] sm:$0xf]
      %v2037 = vld [vmem:[%s187 + $0x1c] sm:$0xf]
      %v2038 = vld [vmem:[%s187 + $0x20] sm:$0xf]
      %v2039 = vld [vmem:[%s187 + $0x24] sm:$0xf]
      %v2040 = vld [vmem:[%s187 + $0x28] sm:$0xf]
      %v2041 = vld [vmem:[%s187 + $0x2c] sm:$0xf]
      %v2042 = vld [vmem:[%s187 + $0x30] sm:$0xf]
      %v2043 = vld [vmem:[%s187 + $0x34] sm:$0xf]
      %v2044 = vld [vmem:[%s187 + $0x38] sm:$0xf]
      %v2045 = vld [vmem:[%s187 + $0x3c] sm:$0xf]
      %v2046 = vld [vmem:[%s187 + $0x40] sm:$0xf]
      %v2047 = vld [vmem:[%s187 + $0x44] sm:$0xf]
      %v2048 = vld [vmem:[%s187 + $0x48] sm:$0xf]
      %v2049 = vld [vmem:[%s187 + $0x4c] sm:$0xf]
      %v2050 = vld [vmem:[%s187 + $0x50] sm:$0xf]
      %v2051 = vld [vmem:[%s187 + $0x54] sm:$0xf]
      %v2052 = vld [vmem:[%s187 + $0x58] sm:$0xf]
      %v2053 = vld [vmem:[%s187 + $0x5c] sm:$0xf]
      %v2054 = vld [vmem:[%s187 + $0x60] sm:$0xf]
      %v2055 = vld [vmem:[%s187 + $0x64] sm:$0xf]
      %v2056 = vld [vmem:[%s187 + $0x68] sm:$0xf]
      %v2057 = vld [vmem:[%s187 + $0x6c] sm:$0xf]
      %v2058 = vld [vmem:[%s187 + $0x70] sm:$0xf]
      %v2059 = vld [vmem:[%s187 + $0x74] sm:$0xf]
      %v2060 = vld [vmem:[%s187 + $0x78] sm:$0xf]
      %v2061 = vld [vmem:[%s187 + $0x7c] sm:$0xf]
      %v2062 = vld [vmem:[%s187 + $0x80] sm:$0xf]
      %v2063 = vld [vmem:[%s187 + $0x84] sm:$0x1]
      %v2064 = vsel %vm651, 1, 0
      %v2065 = vsel %vm652, 1, 0
      %v2066 = vsel %vm653, 1, 0
      %v2067 = vsel %vm654, 1, 0
      %v2068 = vsel %vm655, 1, 0
      %v2069 = vsel %vm656, 1, 0
      %v2070 = vsel %vm657, 1, 0
      %v2071 = vsel %vm658, 1, 0
      %v2072 = vsel %vm659, 1, 0
      %v2073 = vsel %vm660, 1, 0
      %v2074 = vsel %vm661, 1, 0
      %v2075 = vsel %vm662, 1, 0
      %v2076 = vsel %vm663, 1, 0
      %v2077 = vsel %vm664, 1, 0
      %v2078 = vsel %vm665, 1, 0
      %v2079 = vsel %vm666, 1, 0
      %v2080 = vsel %vm667, 1, 0
      %v2081 = vsel %vm668, 1, 0
      %v2082 = vsel %vm669, 1, 0
      %v2083 = vsel %vm670, 1, 0
      %v2084 = vsel %vm671, 1, 0
      %v2085 = vsel %vm672, 1, 0
      %v2086 = vsel %vm673, 1, 0
      %v2087 = vsel %vm674, 1, 0
      %v2088 = vsel %vm675, 1, 0
      %v2089 = vsel %vm676, 1, 0
      %v2090 = vsel %vm677, 1, 0
      %v2091 = vsel %vm678, 1, 0
      %v2092 = vsel %vm679, 1, 0
      %v2093 = vsel %vm680, 1, 0
      %v2094 = vsel %vm681, 1, 0
      %v2095 = vsel %vm682, 1, 0
      %vm2096 = vcmp.eq.s32.totalorder %v2064, 1
      %vm2097 = vcmp.eq.s32.totalorder %v2065, 1
      %vm2098 = vcmp.eq.s32.totalorder %v2066, 1
      %vm2099 = vcmp.eq.s32.totalorder %v2067, 1
      %vm2100 = vcmp.eq.s32.totalorder %v2068, 1
      %vm2101 = vcmp.eq.s32.totalorder %v2069, 1
      %vm2102 = vcmp.eq.s32.totalorder %v2070, 1
      %vm2103 = vcmp.eq.s32.totalorder %v2071, 1
      %vm2104 = vcmp.eq.s32.totalorder %v2072, 1
      %vm2105 = vcmp.eq.s32.totalorder %v2073, 1
      %vm2106 = vcmp.eq.s32.totalorder %v2074, 1
      %vm2107 = vcmp.eq.s32.totalorder %v2075, 1
      %vm2108 = vcmp.eq.s32.totalorder %v2076, 1
      %vm2109 = vcmp.eq.s32.totalorder %v2077, 1
      %vm2110 = vcmp.eq.s32.totalorder %v2078, 1
      %vm2111 = vcmp.eq.s32.totalorder %v2079, 1
      %vm2112 = vcmp.eq.s32.totalorder %v2080, 1
      %vm2113 = vcmp.eq.s32.totalorder %v2081, 1
      %vm2114 = vcmp.eq.s32.totalorder %v2082, 1
      %vm2115 = vcmp.eq.s32.totalorder %v2083, 1
      %vm2116 = vcmp.eq.s32.totalorder %v2084, 1
      %vm2117 = vcmp.eq.s32.totalorder %v2085, 1
      %vm2118 = vcmp.eq.s32.totalorder %v2086, 1
      %vm2119 = vcmp.eq.s32.totalorder %v2087, 1
      %vm2120 = vcmp.eq.s32.totalorder %v2088, 1
      %vm2121 = vcmp.eq.s32.totalorder %v2089, 1
      %vm2122 = vcmp.eq.s32.totalorder %v2090, 1
      %vm2123 = vcmp.eq.s32.totalorder %v2091, 1
      %vm2124 = vcmp.eq.s32.totalorder %v2092, 1
      %vm2125 = vcmp.eq.s32.totalorder %v2093, 1
      %vm2126 = vcmp.eq.s32.totalorder %v2094, 1
      %vm2127 = vcmp.eq.s32.totalorder %v2095, 1
      %vm2128 = vmpackc.low %vm2096, %vm2096
      %vm2129 = vmpackc.low %vm2097, %vm2097
      %vm2130 = vmpackc.low %vm2098, %vm2098
      %vm2131 = vmpackc.low %vm2099, %vm2099
      %vm2132 = vmpackc.low %vm2100, %vm2100
      %vm2133 = vmpackc.low %vm2101, %vm2101
      %vm2134 = vmpackc.low %vm2102, %vm2102
      %vm2135 = vmpackc.low %vm2103, %vm2103
      %vm2136 = vmpackc.low %vm2104, %vm2104
      %vm2137 = vmpackc.low %vm2105, %vm2105
      %vm2138 = vmpackc.low %vm2106, %vm2106
      %vm2139 = vmpackc.low %vm2107, %vm2107
      %vm2140 = vmpackc.low %vm2108, %vm2108
      %vm2141 = vmpackc.low %vm2109, %vm2109
      %vm2142 = vmpackc.low %vm2110, %vm2110
      %vm2143 = vmpackc.low %vm2111, %vm2111
      %vm2144 = vmpackc.low %vm2112, %vm2112
      %vm2145 = vmpackc.low %vm2113, %vm2113
      %vm2146 = vmpackc.low %vm2114, %vm2114
      %vm2147 = vmpackc.low %vm2115, %vm2115
      %vm2148 = vmpackc.low %vm2116, %vm2116
      %vm2149 = vmpackc.low %vm2117, %vm2117
      %vm2150 = vmpackc.low %vm2118, %vm2118
      %vm2151 = vmpackc.low %vm2119, %vm2119
      %vm2152 = vmpackc.low %vm2120, %vm2120
      %vm2153 = vmpackc.low %vm2121, %vm2121
      %vm2154 = vmpackc.low %vm2122, %vm2122
      %vm2155 = vmpackc.low %vm2123, %vm2123
      %vm2156 = vmpackc.low %vm2124, %vm2124
      %vm2157 = vmpackc.low %vm2125, %vm2125
      %vm2158 = vmpackc.low %vm2126, %vm2126
      %vm2159 = vmpackc.low %vm2127, %vm2127
      %v2160 = vsel %vm2128, 65537, 0
      %v2161 = vsel %vm2129, 65537, 0
      %v2162 = vsel %vm2130, 65537, 0
      %v2163 = vsel %vm2131, 65537, 0
      %v2164 = vsel %vm2132, 65537, 0
      %v2165 = vsel %vm2133, 65537, 0
      %v2166 = vsel %vm2134, 65537, 0
      %v2167 = vsel %vm2135, 65537, 0
      %v2168 = vsel %vm2136, 65537, 0
      %v2169 = vsel %vm2137, 65537, 0
      %v2170 = vsel %vm2138, 65537, 0
      %v2171 = vsel %vm2139, 65537, 0
      %v2172 = vsel %vm2140, 65537, 0
      %v2173 = vsel %vm2141, 65537, 0
      %v2174 = vsel %vm2142, 65537, 0
      %v2175 = vsel %vm2143, 65537, 0
      %v2176 = vsel %vm2144, 65537, 0
      %v2177 = vsel %vm2145, 65537, 0
      %v2178 = vsel %vm2146, 65537, 0
      %v2179 = vsel %vm2147, 65537, 0
      %v2180 = vsel %vm2148, 65537, 0
      %v2181 = vsel %vm2149, 65537, 0
      %v2182 = vsel %vm2150, 65537, 0
      %v2183 = vsel %vm2151, 65537, 0
      %v2184 = vsel %vm2152, 65537, 0
      %v2185 = vsel %vm2153, 65537, 0
      %v2186 = vsel %vm2154, 65537, 0
      %v2187 = vsel %vm2155, 65537, 0
      %v2188 = vsel %vm2156, 65537, 0
      %v2189 = vsel %vm2157, 65537, 0
      %v2190 = vsel %vm2158, 65537, 0
      %v2191 = vsel %vm2159, 65537, 0
      %vm2192 = vsmask.f32 256
      %vm2193 = vsmask.f32 4368
      %vm2194 = vmor %vm2192, %vm2193
      %v2196 = vshrl.u32 %v2160, 16
      %v2198 = vrot.slane %v2196, 7
      %v2199 = vshll.u32 %v2160, 16
      %v2201 = vor.u32 %v2198, %v2199
      %v2202 = vrot.slane %v2198, 4
      %v2204 = vshrl.u32 %v2161, 16
      %v2206 = vrot.slane %v2204, 7
      %v2207 = vshll.u32 %v2161, 16
      %v2209 = vor.u32 %v2206, %v2207
      %v2210 = vsel %vm2194, %v2202, %v2209
      %v2211 = vrot.slane %v2206, 4
      %v2213 = vshrl.u32 %v2162, 16
      %v2215 = vrot.slane %v2213, 7
      %v2216 = vshll.u32 %v2162, 16
      %v2218 = vor.u32 %v2215, %v2216
      %v2219 = vsel %vm2194, %v2211, %v2218
      %v2220 = vrot.slane %v2215, 4
      %v2222 = vshrl.u32 %v2163, 16
      %v2224 = vrot.slane %v2222, 7
      %v2225 = vshll.u32 %v2163, 16
      %v2227 = vor.u32 %v2224, %v2225
      %v2228 = vsel %vm2194, %v2220, %v2227
      %v2229 = vrot.slane %v2224, 4
      %v2231 = vshrl.u32 %v2164, 16
      %v2233 = vrot.slane %v2231, 7
      %v2234 = vshll.u32 %v2164, 16
      %v2236 = vor.u32 %v2233, %v2234
      %v2237 = vsel %vm2194, %v2229, %v2236
      %v2238 = vrot.slane %v2233, 4
      %v2240 = vshrl.u32 %v2165, 16
      %v2242 = vrot.slane %v2240, 7
      %v2243 = vshll.u32 %v2165, 16
      %v2245 = vor.u32 %v2242, %v2243
      %v2246 = vsel %vm2194, %v2238, %v2245
      %v2247 = vrot.slane %v2242, 4
      %v2249 = vshrl.u32 %v2166, 16
      %v2251 = vrot.slane %v2249, 7
      %v2252 = vshll.u32 %v2166, 16
      %v2254 = vor.u32 %v2251, %v2252
      %v2255 = vsel %vm2194, %v2247, %v2254
      %v2256 = vrot.slane %v2251, 4
      %v2258 = vshrl.u32 %v2167, 16
      %v2260 = vrot.slane %v2258, 7
      %v2261 = vshll.u32 %v2167, 16
      %v2263 = vor.u32 %v2260, %v2261
      %v2264 = vsel %vm2194, %v2256, %v2263
      %v2265 = vrot.slane %v2260, 4
      %v2267 = vshrl.u32 %v2168, 16
      %v2269 = vrot.slane %v2267, 7
      %v2270 = vshll.u32 %v2168, 16
      %v2272 = vor.u32 %v2269, %v2270
      %v2273 = vsel %vm2194, %v2265, %v2272
      %v2274 = vrot.slane %v2269, 4
      %v2276 = vshrl.u32 %v2169, 16
      %v2278 = vrot.slane %v2276, 7
      %v2279 = vshll.u32 %v2169, 16
      %v2281 = vor.u32 %v2278, %v2279
      %v2282 = vsel %vm2194, %v2274, %v2281
      %v2283 = vrot.slane %v2278, 4
      %v2285 = vshrl.u32 %v2170, 16
      %v2287 = vrot.slane %v2285, 7
      %v2288 = vshll.u32 %v2170, 16
      %v2290 = vor.u32 %v2287, %v2288
      %v2291 = vsel %vm2194, %v2283, %v2290
      %v2292 = vrot.slane %v2287, 4
      %v2294 = vshrl.u32 %v2171, 16
      %v2296 = vrot.slane %v2294, 7
      %v2297 = vshll.u32 %v2171, 16
      %v2299 = vor.u32 %v2296, %v2297
      %v2300 = vsel %vm2194, %v2292, %v2299
      %v2301 = vrot.slane %v2296, 4
      %v2303 = vshrl.u32 %v2172, 16
      %v2305 = vrot.slane %v2303, 7
      %v2306 = vshll.u32 %v2172, 16
      %v2308 = vor.u32 %v2305, %v2306
      %v2309 = vsel %vm2194, %v2301, %v2308
      %v2310 = vrot.slane %v2305, 4
      %v2312 = vshrl.u32 %v2173, 16
      %v2314 = vrot.slane %v2312, 7
      %v2315 = vshll.u32 %v2173, 16
      %v2317 = vor.u32 %v2314, %v2315
      %v2318 = vsel %vm2194, %v2310, %v2317
      %v2319 = vrot.slane %v2314, 4
      %v2321 = vshrl.u32 %v2174, 16
      %v2323 = vrot.slane %v2321, 7
      %v2324 = vshll.u32 %v2174, 16
      %v2326 = vor.u32 %v2323, %v2324
      %v2327 = vsel %vm2194, %v2319, %v2326
      %v2328 = vrot.slane %v2323, 4
      %v2330 = vshrl.u32 %v2175, 16
      %v2332 = vrot.slane %v2330, 7
      %v2333 = vshll.u32 %v2175, 16
      %v2335 = vor.u32 %v2332, %v2333
      %v2336 = vsel %vm2194, %v2328, %v2335
      %v2337 = vrot.slane %v2332, 4
      %v2339 = vshrl.u32 %v2176, 16
      %v2341 = vrot.slane %v2339, 7
      %v2342 = vshll.u32 %v2176, 16
      %v2344 = vor.u32 %v2341, %v2342
      %v2345 = vsel %vm2194, %v2337, %v2344
      %v2346 = vrot.slane %v2341, 4
      %v2348 = vshrl.u32 %v2177, 16
      %v2350 = vrot.slane %v2348, 7
      %v2351 = vshll.u32 %v2177, 16
      %v2353 = vor.u32 %v2350, %v2351
      %v2354 = vsel %vm2194, %v2346, %v2353
      %v2355 = vrot.slane %v2350, 4
      %v2357 = vshrl.u32 %v2178, 16
      %v2359 = vrot.slane %v2357, 7
      %v2360 = vshll.u32 %v2178, 16
      %v2362 = vor.u32 %v2359, %v2360
      %v2363 = vsel %vm2194, %v2355, %v2362
      %v2364 = vrot.slane %v2359, 4
      %v2366 = vshrl.u32 %v2179, 16
      %v2368 = vrot.slane %v2366, 7
      %v2369 = vshll.u32 %v2179, 16
      %v2371 = vor.u32 %v2368, %v2369
      %v2372 = vsel %vm2194, %v2364, %v2371
      %v2373 = vrot.slane %v2368, 4
      %v2375 = vshrl.u32 %v2180, 16
      %v2377 = vrot.slane %v2375, 7
      %v2378 = vshll.u32 %v2180, 16
      %v2380 = vor.u32 %v2377, %v2378
      %v2381 = vsel %vm2194, %v2373, %v2380
      %v2382 = vrot.slane %v2377, 4
      %v2384 = vshrl.u32 %v2181, 16
      %v2386 = vrot.slane %v2384, 7
      %v2387 = vshll.u32 %v2181, 16
      %v2389 = vor.u32 %v2386, %v2387
      %v2390 = vsel %vm2194, %v2382, %v2389
      %v2391 = vrot.slane %v2386, 4
      %v2393 = vshrl.u32 %v2182, 16
      %v2395 = vrot.slane %v2393, 7
      %v2396 = vshll.u32 %v2182, 16
      %v2398 = vor.u32 %v2395, %v2396
      %v2399 = vsel %vm2194, %v2391, %v2398
      %v2400 = vrot.slane %v2395, 4
      %v2402 = vshrl.u32 %v2183, 16
      %v2404 = vrot.slane %v2402, 7
      %v2405 = vshll.u32 %v2183, 16
      %v2407 = vor.u32 %v2404, %v2405
      %v2408 = vsel %vm2194, %v2400, %v2407
      %v2409 = vrot.slane %v2404, 4
      %v2411 = vshrl.u32 %v2184, 16
      %v2413 = vrot.slane %v2411, 7
      %v2414 = vshll.u32 %v2184, 16
      %v2416 = vor.u32 %v2413, %v2414
      %v2417 = vsel %vm2194, %v2409, %v2416
      %v2418 = vrot.slane %v2413, 4
      %v2420 = vshrl.u32 %v2185, 16
      %v2422 = vrot.slane %v2420, 7
      %v2423 = vshll.u32 %v2185, 16
      %v2425 = vor.u32 %v2422, %v2423
      %v2426 = vsel %vm2194, %v2418, %v2425
      %v2427 = vrot.slane %v2422, 4
      %v2429 = vshrl.u32 %v2186, 16
      %v2431 = vrot.slane %v2429, 7
      %v2432 = vshll.u32 %v2186, 16
      %v2434 = vor.u32 %v2431, %v2432
      %v2435 = vsel %vm2194, %v2427, %v2434
      %v2436 = vrot.slane %v2431, 4
      %v2438 = vshrl.u32 %v2187, 16
      %v2440 = vrot.slane %v2438, 7
      %v2441 = vshll.u32 %v2187, 16
      %v2443 = vor.u32 %v2440, %v2441
      %v2444 = vsel %vm2194, %v2436, %v2443
      %v2445 = vrot.slane %v2440, 4
      %v2447 = vshrl.u32 %v2188, 16
      %v2449 = vrot.slane %v2447, 7
      %v2450 = vshll.u32 %v2188, 16
      %v2452 = vor.u32 %v2449, %v2450
      %v2453 = vsel %vm2194, %v2445, %v2452
      %v2454 = vrot.slane %v2449, 4
      %v2456 = vshrl.u32 %v2189, 16
      %v2458 = vrot.slane %v2456, 7
      %v2459 = vshll.u32 %v2189, 16
      %v2461 = vor.u32 %v2458, %v2459
      %v2462 = vsel %vm2194, %v2454, %v2461
      %v2463 = vrot.slane %v2458, 4
      %v2465 = vshrl.u32 %v2190, 16
      %v2467 = vrot.slane %v2465, 7
      %v2468 = vshll.u32 %v2190, 16
      %v2470 = vor.u32 %v2467, %v2468
      %v2471 = vsel %vm2194, %v2463, %v2470
      %v2472 = vrot.slane %v2467, 4
      %v2474 = vshrl.u32 %v2191, 16
      %v2476 = vrot.slane %v2474, 7
      %v2477 = vshll.u32 %v2191, 16
      %v2479 = vor.u32 %v2476, %v2477
      %v2480 = vsel %vm2194, %v2472, %v2479
      %v2481 = vrot.slane %v2476, 4
      %vm2482 = vcmp.ne.s16.totalorder %v2201, 0
      %vm2483 = vcmp.ne.s16.totalorder %v2210, 0
      %vm2484 = vcmp.ne.s16.totalorder %v2219, 0
      %vm2485 = vcmp.ne.s16.totalorder %v2228, 0
      %vm2486 = vcmp.ne.s16.totalorder %v2237, 0
      %vm2487 = vcmp.ne.s16.totalorder %v2246, 0
      %vm2488 = vcmp.ne.s16.totalorder %v2255, 0
      %vm2489 = vcmp.ne.s16.totalorder %v2264, 0
      %vm2490 = vcmp.ne.s16.totalorder %v2273, 0
      %vm2491 = vcmp.ne.s16.totalorder %v2282, 0
      %vm2492 = vcmp.ne.s16.totalorder %v2291, 0
      %vm2493 = vcmp.ne.s16.totalorder %v2300, 0
      %vm2494 = vcmp.ne.s16.totalorder %v2309, 0
      %vm2495 = vcmp.ne.s16.totalorder %v2318, 0
      %vm2496 = vcmp.ne.s16.totalorder %v2327, 0
      %vm2497 = vcmp.ne.s16.totalorder %v2336, 0
      %vm2498 = vcmp.ne.s16.totalorder %v2345, 0
      %vm2499 = vcmp.ne.s16.totalorder %v2354, 0
      %vm2500 = vcmp.ne.s16.totalorder %v2363, 0
      %vm2501 = vcmp.ne.s16.totalorder %v2372, 0
      %vm2502 = vcmp.ne.s16.totalorder %v2381, 0
      %vm2503 = vcmp.ne.s16.totalorder %v2390, 0
      %vm2504 = vcmp.ne.s16.totalorder %v2399, 0
      %vm2505 = vcmp.ne.s16.totalorder %v2408, 0
      %vm2506 = vcmp.ne.s16.totalorder %v2417, 0
      %vm2507 = vcmp.ne.s16.totalorder %v2426, 0
      %vm2508 = vcmp.ne.s16.totalorder %v2435, 0
      %vm2509 = vcmp.ne.s16.totalorder %v2444, 0
      %vm2510 = vcmp.ne.s16.totalorder %v2453, 0
      %vm2511 = vcmp.ne.s16.totalorder %v2462, 0
      %vm2512 = vcmp.ne.s16.totalorder %v2471, 0
      %vm2513 = vcmp.ne.s16.totalorder %v2480, 0
      %vm2514 = vcmp.ne.s16.totalorder %v2481, 0
      %v2515 = vsel %vm2482, 0, %v2031
      %v2516 = vsel %vm2483, 0, %v2032
      %v2517 = vsel %vm2484, 0, %v2033
      %v2518 = vsel %vm2485, 0, %v2034
      %v2519 = vsel %vm2486, 0, %v2035
      %v2520 = vsel %vm2487, 0, %v2036
      %v2521 = vsel %vm2488, 0, %v2037
      %v2522 = vsel %vm2489, 0, %v2038
      %v2523 = vsel %vm2490, 0, %v2039
      %v2524 = vsel %vm2491, 0, %v2040
      %v2525 = vsel %vm2492, 0, %v2041
      %v2526 = vsel %vm2493, 0, %v2042
      %v2527 = vsel %vm2494, 0, %v2043
      %v2528 = vsel %vm2495, 0, %v2044
      %v2529 = vsel %vm2496, 0, %v2045
      %v2530 = vsel %vm2497, 0, %v2046
      %v2531 = vsel %vm2498, 0, %v2047
      %v2532 = vsel %vm2499, 0, %v2048
      %v2533 = vsel %vm2500, 0, %v2049
      %v2534 = vsel %vm2501, 0, %v2050
      %v2535 = vsel %vm2502, 0, %v2051
      %v2536 = vsel %vm2503, 0, %v2052
      %v2537 = vsel %vm2504, 0, %v2053
      %v2538 = vsel %vm2505, 0, %v2054
      %v2539 = vsel %vm2506, 0, %v2055
      %v2540 = vsel %vm2507, 0, %v2056
      %v2541 = vsel %vm2508, 0, %v2057
      %v2542 = vsel %vm2509, 0, %v2058
      %v2543 = vsel %vm2510, 0, %v2059
      %v2544 = vsel %vm2511, 0, %v2060
      %v2545 = vsel %vm2512, 0, %v2061
      %v2546 = vsel %vm2513, 0, %v2062
      %v2547 = vsel %vm2514, 0, %v2063
      %s2548 = scalar_lea.vmem %s1, 128
      %v2549 = vld [vmem:[%s2548] sm:$0xf]
      %v2550 = vld [vmem:[%s2548 + $0x4] sm:$0xf]
      %v2551 = vld [vmem:[%s2548 + $0x8] sm:$0xf]
      %v2552 = vld [vmem:[%s2548 + $0xc] sm:$0xf]
      %v2553 = vld [vmem:[%s2548 + $0x10] sm:$0xf]
      %v2554 = vld [vmem:[%s2548 + $0x14] sm:$0xf]
      %v2555 = vld [vmem:[%s2548 + $0x18] sm:$0xf]
      %v2556 = vld [vmem:[%s2548 + $0x1c] sm:$0xf]
      %v2557 = vld [vmem:[%s2548 + $0x20] sm:$0xf]
      %v2558 = vld [vmem:[%s2548 + $0x24] sm:$0xf]
      %v2559 = vld [vmem:[%s2548 + $0x28] sm:$0xf]
      %v2560 = vld [vmem:[%s2548 + $0x2c] sm:$0xf]
      %v2561 = vld [vmem:[%s2548 + $0x30] sm:$0xf]
      %v2562 = vld [vmem:[%s2548 + $0x34] sm:$0xf]
      %v2563 = vld [vmem:[%s2548 + $0x38] sm:$0xf]
      %v2564 = vld [vmem:[%s2548 + $0x3c] sm:$0xf]
      %v2598 = vunpack.c.l.b16 %v2515
      %v2599 = vunpack.c.l.b16 %v2516
      %v2600 = vunpack.c.l.b16 %v2517
      %v2601 = vunpack.c.l.b16 %v2518
      %v2602 = vunpack.c.l.b16 %v2519
      %v2603 = vunpack.c.l.b16 %v2520
      %v2604 = vunpack.c.l.b16 %v2521
      %v2605 = vunpack.c.l.b16 %v2522
      %v2606 = vunpack.c.l.b16 %v2523
      %v2607 = vunpack.c.l.b16 %v2524
      %v2608 = vunpack.c.l.b16 %v2525
      %v2609 = vunpack.c.l.b16 %v2526
      %v2610 = vunpack.c.l.b16 %v2527
      %v2611 = vunpack.c.l.b16 %v2528
      %v2612 = vunpack.c.l.b16 %v2529
      %v2613 = vunpack.c.l.b16 %v2530
      %v2614 = vunpack.c.l.b16 %v2531
      %v2615 = vunpack.c.l.b16 %v2532
      %v2616 = vunpack.c.l.b16 %v2533
      %v2617 = vunpack.c.l.b16 %v2534
      %v2618 = vunpack.c.l.b16 %v2535
      %v2619 = vunpack.c.l.b16 %v2536
      %v2620 = vunpack.c.l.b16 %v2537
      %v2621 = vunpack.c.l.b16 %v2538
      %v2622 = vunpack.c.l.b16 %v2539
      %v2623 = vunpack.c.l.b16 %v2540
      %v2624 = vunpack.c.l.b16 %v2541
      %v2625 = vunpack.c.l.b16 %v2542
      %v2626 = vunpack.c.l.b16 %v2543
      %v2627 = vunpack.c.l.b16 %v2544
      %v2628 = vunpack.c.l.b16 %v2545
      %v2629 = vunpack.c.l.b16 %v2546
      %v2630 = vunpack.c.l.b16 %v2547
      %v2631 = vpack.c.b16 %v2599, %v2598
      %v2632 = vpack.c.b16 %v2601, %v2600
      %v2633 = vpack.c.b16 %v2603, %v2602
      %v2634 = vpack.c.b16 %v2605, %v2604
      %v2635 = vpack.c.b16 %v2607, %v2606
      %v2636 = vpack.c.b16 %v2609, %v2608
      %v2637 = vpack.c.b16 %v2611, %v2610
      %v2638 = vpack.c.b16 %v2613, %v2612
      %v2639 = vpack.c.b16 %v2615, %v2614
      %v2640 = vpack.c.b16 %v2617, %v2616
      %v2641 = vpack.c.b16 %v2619, %v2618
      %v2642 = vpack.c.b16 %v2621, %v2620
      %v2643 = vpack.c.b16 %v2623, %v2622
      %v2644 = vpack.c.b16 %v2625, %v2624
      %v2645 = vpack.c.b16 %v2627, %v2626
      %v2646 = vpack.c.b16 %v2629, %v2628
      %v2647 = vpack.c.b16 %v2630, %v2630
      %vm2648 = vsmask.f32 7424
      %v2650 = vshrl.u32 %v2631, 16
      %v2652 = vshll.u32 %v2631, 16
      %v2654 = vrot.slane %v2652, 1
      %v2655 = vor.u32 %v2650, %v2654
      %v2657 = vshll.u32 %v2632, 16
      %v2659 = vrot.slane %v2657, 1
      %v2660 = vsel %vm2648, %v2655, %v2659
      %v2661 = vshrl.u32 %v2632, 16
      %v2663 = vor.u32 %v2661, %v2659
      %v2665 = vshll.u32 %v2633, 16
      %v2667 = vrot.slane %v2665, 1
      %v2668 = vsel %vm2648, %v2663, %v2667
      %v2669 = vshrl.u32 %v2633, 16
      %v2671 = vor.u32 %v2669, %v2667
      %v2673 = vshll.u32 %v2634, 16
      %v2675 = vrot.slane %v2673, 1
      %v2676 = vsel %vm2648, %v2671, %v2675
      %v2677 = vshrl.u32 %v2634, 16
      %v2679 = vor.u32 %v2677, %v2675
      %v2681 = vshll.u32 %v2635, 16
      %v2683 = vrot.slane %v2681, 1
      %v2684 = vsel %vm2648, %v2679, %v2683
      %v2685 = vshrl.u32 %v2635, 16
      %v2687 = vor.u32 %v2685, %v2683
      %v2689 = vshll.u32 %v2636, 16
      %v2691 = vrot.slane %v2689, 1
      %v2692 = vsel %vm2648, %v2687, %v2691
      %v2693 = vshrl.u32 %v2636, 16
      %v2695 = vor.u32 %v2693, %v2691
      %v2697 = vshll.u32 %v2637, 16
      %v2699 = vrot.slane %v2697, 1
      %v2700 = vsel %vm2648, %v2695, %v2699
      %v2701 = vshrl.u32 %v2637, 16
      %v2703 = vor.u32 %v2701, %v2699
      %v2705 = vshll.u32 %v2638, 16
      %v2707 = vrot.slane %v2705, 1
      %v2708 = vsel %vm2648, %v2703, %v2707
      %v2709 = vshrl.u32 %v2638, 16
      %v2711 = vor.u32 %v2709, %v2707
      %v2713 = vshll.u32 %v2639, 16
      %v2715 = vrot.slane %v2713, 1
      %v2716 = vsel %vm2648, %v2711, %v2715
      %v2717 = vshrl.u32 %v2639, 16
      %v2719 = vor.u32 %v2717, %v2715
      %v2721 = vshll.u32 %v2640, 16
      %v2723 = vrot.slane %v2721, 1
      %v2724 = vsel %vm2648, %v2719, %v2723
      %v2725 = vshrl.u32 %v2640, 16
      %v2727 = vor.u32 %v2725, %v2723
      %v2729 = vshll.u32 %v2641, 16
      %v2731 = vrot.slane %v2729, 1
      %v2732 = vsel %vm2648, %v2727, %v2731
      %v2733 = vshrl.u32 %v2641, 16
      %v2735 = vor.u32 %v2733, %v2731
      %v2737 = vshll.u32 %v2642, 16
      %v2739 = vrot.slane %v2737, 1
      %v2740 = vsel %vm2648, %v2735, %v2739
      %v2741 = vshrl.u32 %v2642, 16
      %v2743 = vor.u32 %v2741, %v2739
      %v2745 = vshll.u32 %v2643, 16
      %v2747 = vrot.slane %v2745, 1
      %v2748 = vsel %vm2648, %v2743, %v2747
      %v2749 = vshrl.u32 %v2643, 16
      %v2751 = vor.u32 %v2749, %v2747
      %v2753 = vshll.u32 %v2644, 16
      %v2755 = vrot.slane %v2753, 1
      %v2756 = vsel %vm2648, %v2751, %v2755
      %v2757 = vshrl.u32 %v2644, 16
      %v2759 = vor.u32 %v2757, %v2755
      %v2761 = vshll.u32 %v2645, 16
      %v2763 = vrot.slane %v2761, 1
      %v2764 = vsel %vm2648, %v2759, %v2763
      %v2765 = vshrl.u32 %v2645, 16
      %v2767 = vor.u32 %v2765, %v2763
      %v2769 = vshll.u32 %v2646, 16
      %v2771 = vrot.slane %v2769, 1
      %v2772 = vsel %vm2648, %v2767, %v2771
      %v2773 = vshrl.u32 %v2646, 16
      %v2775 = vor.u32 %v2773, %v2771
      %v2777 = vshll.u32 %v2647, 16
      %v2779 = vrot.slane %v2777, 1
      %v2780 = vsel %vm2648, %v2775, %v2779
      %v2813 = vunpack.c.l.b16 %v2549
      %v2814 = vunpack.c.l.b16 %v2550
      %v2815 = vunpack.c.l.b16 %v2551
      %v2816 = vunpack.c.l.b16 %v2552
      %v2817 = vunpack.c.l.b16 %v2553
      %v2818 = vunpack.c.l.b16 %v2554
      %v2819 = vunpack.c.l.b16 %v2555
      %v2820 = vunpack.c.l.b16 %v2556
      %v2821 = vunpack.c.l.b16 %v2557
      %v2822 = vunpack.c.l.b16 %v2558
      %v2823 = vunpack.c.l.b16 %v2559
      %v2824 = vunpack.c.l.b16 %v2560
      %v2825 = vunpack.c.l.b16 %v2561
      %v2826 = vunpack.c.l.b16 %v2562
      %v2827 = vunpack.c.l.b16 %v2563
      %v2828 = vunpack.c.l.b16 %v2564
      %v2829 = vpack.c.b16 %v2814, %v2813
      %v2830 = vpack.c.b16 %v2816, %v2815
      %v2831 = vpack.c.b16 %v2818, %v2817
      %v2832 = vpack.c.b16 %v2820, %v2819
      %v2833 = vpack.c.b16 %v2822, %v2821
      %v2834 = vpack.c.b16 %v2824, %v2823
      %v2835 = vpack.c.b16 %v2826, %v2825
      %v2836 = vpack.c.b16 %v2828, %v2827
      %2845 = vmatprep.subr.bf16.mxu0 0
      %2846 = vmatpush1.bf16.msra.mxu0 %v2829
      %2847 = vmatprep.subr.bf16.mxu0 0
      %2848 = vmatpush1.bf16.msra.mxu0 %v2830
      %2849 = vmatprep.subr.bf16.mxu0 0
      %2850 = vmatpush1.bf16.msra.mxu0 %v2831
      %2851 = vmatprep.subr.bf16.mxu0 0
      %2852 = vmatpush1.bf16.msra.mxu0 %v2832
      %2853 = vmatprep.subr.bf16.mxu0 0
      %2854 = vmatpush1.bf16.msra.mxu0 %v2833
      %2855 = vmatprep.subr.bf16.mxu0 0
      %2856 = vmatpush1.bf16.msra.mxu0 %v2834
      %2857 = vmatprep.subr.bf16.mxu0 0
      %2858 = vmatpush1.bf16.msra.mxu0 %v2835
      %2859 = vmatprep.subr.bf16.mxu0 0
      %2860 = vmatpush1.bf16.msra.mxu0 %v2836
      %2861 = vmatprep.subr.bf16.mxu0 0
      %2862 = vmatpush1.bf16.msra.mxu0 0
      %2863 = vmatprep.subr.bf16.mxu0 0
      %2864 = vmatpush1.bf16.msra.mxu0 0
      %2865 = vmatprep.subr.bf16.mxu0 0
      %2866 = vmatpush1.bf16.msra.mxu0 0
      %2867 = vmatprep.subr.bf16.mxu0 0
      %2868 = vmatpush1.bf16.msra.mxu0 0
      %2869 = vmatprep.subr.bf16.mxu0 0
      %2870 = vmatpush1.bf16.msra.mxu0 0
      %2871 = vmatprep.subr.bf16.mxu0 0
      %2872 = vmatpush1.bf16.msra.mxu0 0
      %2873 = vmatprep.subr.bf16.mxu0 0
      %2874 = vmatpush1.bf16.msra.mxu0 0
      %2875 = vmatprep.subr.bf16.mxu0 0
      %2876 = vmatpush1.bf16.msra.mxu0 0
      %2877 = vmatprep.mubr.bf16.mxu0 0
      %2878 = vmatmul.mubr.bf16.gmra.mrb[0].mxu0 %v2660
      %v2879 = vpop.f32.mrb[0].mxu0
      %v2880 = vadd.f32 0.0, %v2879
      %v2881 = vpop.f32.mrb[0].mxu0
      %v2882 = vpop.f32.mrb[0].mxu0
      %v2883 = vadd.f32 0.0, %v2882
      %v2884 = vpop.f32.mrb[0].mxu0
      %2885 = vmatprep.mubr.bf16.mxu0 0
      %2886 = vmatmul.mubr.bf16.gmra.mrb[0].mxu0 %v2668
      %v2887 = vpop.f32.mrb[0].mxu0
      %v2888 = vadd.f32 0.0, %v2887
      %v2889 = vpop.f32.mrb[0].mxu0
      %v2890 = vpop.f32.mrb[0].mxu0
      %v2891 = vadd.f32 0.0, %v2890
      %v2892 = vpop.f32.mrb[0].mxu0
      %2893 = vmatprep.mubr.bf16.mxu0 0
      %2894 = vmatmul.mubr.bf16.gmra.mrb[0].mxu0 %v2676
      %v2895 = vpop.f32.mrb[0].mxu0
      %v2896 = vadd.f32 0.0, %v2895
      %v2897 = vpop.f32.mrb[0].mxu0
      %v2898 = vpop.f32.mrb[0].mxu0
      %v2899 = vadd.f32 0.0, %v2898
      %v2900 = vpop.f32.mrb[0].mxu0
      %2901 = vmatprep.mubr.bf16.mxu0 0
      %2902 = vmatmul.mubr.bf16.gmra.mrb[0].mxu0 %v2684
      %v2903 = vpop.f32.mrb[0].mxu0
      %v2904 = vadd.f32 0.0, %v2903
      %v2905 = vpop.f32.mrb[0].mxu0
      %v2906 = vpop.f32.mrb[0].mxu0
      %v2907 = vadd.f32 0.0, %v2906
      %v2908 = vpop.f32.mrb[0].mxu0
      %2909 = vmatprep.mubr.bf16.mxu0 0
      %2910 = vmatmul.mubr.bf16.gmra.mrb[0].mxu0 %v2692
      %v2911 = vpop.f32.mrb[0].mxu0
      %v2912 = vadd.f32 0.0, %v2911
      %v2913 = vpop.f32.mrb[0].mxu0
      %v2914 = vpop.f32.mrb[0].mxu0
      %v2915 = vadd.f32 0.0, %v2914
      %v2916 = vpop.f32.mrb[0].mxu0
      %2917 = vmatprep.mubr.bf16.mxu0 0
      %2918 = vmatmul.mubr.bf16.gmra.mrb[0].mxu0 %v2700
      %v2919 = vpop.f32.mrb[0].mxu0
      %v2920 = vadd.f32 0.0, %v2919
      %v2921 = vpop.f32.mrb[0].mxu0
      %v2922 = vpop.f32.mrb[0].mxu0
      %v2923 = vadd.f32 0.0, %v2922
      %v2924 = vpop.f32.mrb[0].mxu0
      %2925 = vmatprep.mubr.bf16.mxu0 0
      %2926 = vmatmul.mubr.bf16.gmra.mrb[0].mxu0 %v2708
      %v2927 = vpop.f32.mrb[0].mxu0
      %v2928 = vadd.f32 0.0, %v2927
      %v2929 = vpop.f32.mrb[0].mxu0
      %v2930 = vpop.f32.mrb[0].mxu0
      %v2931 = vadd.f32 0.0, %v2930
      %v2932 = vpop.f32.mrb[0].mxu0
      %2933 = vmatprep.mubr.bf16.mxu0 0
      %2934 = vmatmul.mubr.bf16.gmra.mrb[0].mxu0 %v2716
      %v2935 = vpop.f32.mrb[0].mxu0
      %v2936 = vadd.f32 0.0, %v2935
      %v2937 = vpop.f32.mrb[0].mxu0
      %v2938 = vpop.f32.mrb[0].mxu0
      %v2939 = vadd.f32 0.0, %v2938
      %v2940 = vpop.f32.mrb[0].mxu0
      %2941 = vmatprep.mubr.bf16.mxu0 0
      %2942 = vmatmul.mubr.bf16.gmra.mrb[0].mxu0 %v2724
      %v2943 = vpop.f32.mrb[0].mxu0
      %v2944 = vadd.f32 0.0, %v2943
      %v2945 = vpop.f32.mrb[0].mxu0
      %v2946 = vpop.f32.mrb[0].mxu0
      %v2947 = vadd.f32 0.0, %v2946
      %v2948 = vpop.f32.mrb[0].mxu0
      %2949 = vmatprep.mubr.bf16.mxu0 0
      %2950 = vmatmul.mubr.bf16.gmra.mrb[0].mxu0 %v2732
      %v2951 = vpop.f32.mrb[0].mxu0
      %v2952 = vadd.f32 0.0, %v2951
      %v2953 = vpop.f32.mrb[0].mxu0
      %v2954 = vpop.f32.mrb[0].mxu0
      %v2955 = vadd.f32 0.0, %v2954
      %v2956 = vpop.f32.mrb[0].mxu0
      %2957 = vmatprep.mubr.bf16.mxu0 0
      %2958 = vmatmul.mubr.bf16.gmra.mrb[0].mxu0 %v2740
      %v2959 = vpop.f32.mrb[0].mxu0
      %v2960 = vadd.f32 0.0, %v2959
      %v2961 = vpop.f32.mrb[0].mxu0
      %v2962 = vpop.f32.mrb[0].mxu0
      %v2963 = vadd.f32 0.0, %v2962
      %v2964 = vpop.f32.mrb[0].mxu0
      %2965 = vmatprep.mubr.bf16.mxu0 0
      %2966 = vmatmul.mubr.bf16.gmra.mrb[0].mxu0 %v2748
      %v2967 = vpop.f32.mrb[0].mxu0
      %v2968 = vadd.f32 0.0, %v2967
      %v2969 = vpop.f32.mrb[0].mxu0
      %v2970 = vpop.f32.mrb[0].mxu0
      %v2971 = vadd.f32 0.0, %v2970
      %v2972 = vpop.f32.mrb[0].mxu0
      %2973 = vmatprep.mubr.bf16.mxu0 0
      %2974 = vmatmul.mubr.bf16.gmra.mrb[0].mxu0 %v2756
      %v2975 = vpop.f32.mrb[0].mxu0
      %v2976 = vadd.f32 0.0, %v2975
      %v2977 = vpop.f32.mrb[0].mxu0
      %v2978 = vpop.f32.mrb[0].mxu0
      %v2979 = vadd.f32 0.0, %v2978
      %v2980 = vpop.f32.mrb[0].mxu0
      %2981 = vmatprep.mubr.bf16.mxu0 0
      %2982 = vmatmul.mubr.bf16.gmra.mrb[0].mxu0 %v2764
      %v2983 = vpop.f32.mrb[0].mxu0
      %v2984 = vadd.f32 0.0, %v2983
      %v2985 = vpop.f32.mrb[0].mxu0
      %v2986 = vpop.f32.mrb[0].mxu0
      %v2987 = vadd.f32 0.0, %v2986
      %v2988 = vpop.f32.mrb[0].mxu0
      %2989 = vmatprep.mubr.bf16.mxu0 0
      %2990 = vmatmul.mubr.bf16.gmra.mrb[0].mxu0 %v2772
      %v2991 = vpop.f32.mrb[0].mxu0
      %v2992 = vadd.f32 0.0, %v2991
      %v2993 = vpop.f32.mrb[0].mxu0
      %v2994 = vpop.f32.mrb[0].mxu0
      %v2995 = vadd.f32 0.0, %v2994
      %v2996 = vpop.f32.mrb[0].mxu0
      %2997 = vmatprep.mubr.bf16.mxu0 0
      %2998 = vmatmul.mubr.bf16.gmra.mrb[0].mxu0 %v2780
      %v2999 = vpop.f32.mrb[0].mxu0
      %v3000 = vadd.f32 0.0, %v2999
      %v3001 = vpop.f32.mrb[0].mxu0
      %v3002 = vpop.f32.mrb[0].mxu0
      %v3003 = vadd.f32 0.0, %v3002
      %v3004 = vpop.f32.mrb[0].mxu0
      %3005 = vdwg.mxu0
      %v3006 = vadd.f32 %v1905, %v2880
      %v3007 = vadd.f32 %v1908, %v2883
      %v3008 = vadd.f32 %v1913, %v2888
      %v3009 = vadd.f32 %v1916, %v2891
      %v3010 = vadd.f32 %v1921, %v2896
      %v3011 = vadd.f32 %v1924, %v2899
      %v3012 = vadd.f32 %v1929, %v2904
      %v3013 = vadd.f32 %v1932, %v2907
      %v3014 = vadd.f32 %v1937, %v2912
      %v3015 = vadd.f32 %v1940, %v2915
      %v3016 = vadd.f32 %v1945, %v2920
      %v3017 = vadd.f32 %v1948, %v2923
      %v3018 = vadd.f32 %v1953, %v2928
      %v3019 = vadd.f32 %v1956, %v2931
      %v3020 = vadd.f32 %v1961, %v2936
      %v3021 = vadd.f32 %v1964, %v2939
      %v3022 = vadd.f32 %v1969, %v2944
      %v3023 = vadd.f32 %v1972, %v2947
      %v3024 = vadd.f32 %v1977, %v2952
      %v3025 = vadd.f32 %v1980, %v2955
      %v3026 = vadd.f32 %v1985, %v2960
      %v3027 = vadd.f32 %v1988, %v2963
      %v3028 = vadd.f32 %v1993, %v2968
      %v3029 = vadd.f32 %v1996, %v2971
      %v3030 = vadd.f32 %v2001, %v2976
      %v3031 = vadd.f32 %v2004, %v2979
      %v3032 = vadd.f32 %v2009, %v2984
      %v3033 = vadd.f32 %v2012, %v2987
      %v3034 = vadd.f32 %v2017, %v2992
      %v3035 = vadd.f32 %v2020, %v2995
      %v3036 = vadd.f32 %v2025, %v3000
      %v3037 = vadd.f32 %v2028, %v3003
      %v3038 = vld [vmem:[%s187 + $0x8] sm:$0x8]
      %v3039 = vld [vmem:[%s187 + $0xc] sm:$0xf]
      %v3040 = vld [vmem:[%s187 + $0x10] sm:$0xf]
      %v3041 = vld [vmem:[%s187 + $0x14] sm:$0xf]
      %v3042 = vld [vmem:[%s187 + $0x18] sm:$0xf]
      %v3043 = vld [vmem:[%s187 + $0x1c] sm:$0xf]
      %v3044 = vld [vmem:[%s187 + $0x20] sm:$0xf]
      %v3045 = vld [vmem:[%s187 + $0x24] sm:$0xf]
      %v3046 = vld [vmem:[%s187 + $0x28] sm:$0xf]
      %v3047 = vld [vmem:[%s187 + $0x2c] sm:$0xf]
      %v3048 = vld [vmem:[%s187 + $0x30] sm:$0xf]
      %v3049 = vld [vmem:[%s187 + $0x34] sm:$0xf]
      %v3050 = vld [vmem:[%s187 + $0x38] sm:$0xf]
      %v3051 = vld [vmem:[%s187 + $0x3c] sm:$0xf]
      %v3052 = vld [vmem:[%s187 + $0x40] sm:$0xf]
      %v3053 = vld [vmem:[%s187 + $0x44] sm:$0xf]
      %v3054 = vld [vmem:[%s187 + $0x48] sm:$0xf]
      %v3055 = vld [vmem:[%s187 + $0x4c] sm:$0xf]
      %v3056 = vld [vmem:[%s187 + $0x50] sm:$0xf]
      %v3057 = vld [vmem:[%s187 + $0x54] sm:$0xf]
      %v3058 = vld [vmem:[%s187 + $0x58] sm:$0xf]
      %v3059 = vld [vmem:[%s187 + $0x5c] sm:$0xf]
      %v3060 = vld [vmem:[%s187 + $0x60] sm:$0xf]
      %v3061 = vld [vmem:[%s187 + $0x64] sm:$0xf]
      %v3062 = vld [vmem:[%s187 + $0x68] sm:$0xf]
      %v3063 = vld [vmem:[%s187 + $0x6c] sm:$0xf]
      %v3064 = vld [vmem:[%s187 + $0x70] sm:$0xf]
      %v3065 = vld [vmem:[%s187 + $0x74] sm:$0xf]
      %v3066 = vld [vmem:[%s187 + $0x78] sm:$0xf]
      %v3067 = vld [vmem:[%s187 + $0x7c] sm:$0xf]
      %v3068 = vld [vmem:[%s187 + $0x80] sm:$0xf]
      %v3069 = vld [vmem:[%s187 + $0x84] sm:$0xf]
      %v3070 = vld [vmem:[%s187 + $0x88] sm:$0xf]
      %v3071 = vsel %vm1166, 0, %v3038
      %v3072 = vsel %vm1167, 0, %v3039
      %v3073 = vsel %vm1168, 0, %v3040
      %v3074 = vsel %vm1169, 0, %v3041
      %v3075 = vsel %vm1170, 0, %v3042
      %v3076 = vsel %vm1171, 0, %v3043
      %v3077 = vsel %vm1172, 0, %v3044
      %v3078 = vsel %vm1173, 0, %v3045
      %v3079 = vsel %vm1174, 0, %v3046
      %v3080 = vsel %vm1175, 0, %v3047
      %v3081 = vsel %vm1176, 0, %v3048
      %v3082 = vsel %vm1177, 0, %v3049
      %v3083 = vsel %vm1178, 0, %v3050
      %v3084 = vsel %vm1179, 0, %v3051
      %v3085 = vsel %vm1180, 0, %v3052
      %v3086 = vsel %vm1181, 0, %v3053
      %v3087 = vsel %vm1182, 0, %v3054
      %v3088 = vsel %vm1183, 0, %v3055
      %v3089 = vsel %vm1184, 0, %v3056
      %v3090 = vsel %vm1185, 0, %v3057
      %v3091 = vsel %vm1186, 0, %v3058
      %v3092 = vsel %vm1187, 0, %v3059
      %v3093 = vsel %vm1188, 0, %v3060
      %v3094 = vsel %vm1189, 0, %v3061
      %v3095 = vsel %vm1190, 0, %v3062
      %v3096 = vsel %vm1191, 0, %v3063
      %v3097 = vsel %vm1192, 0, %v3064
      %v3098 = vsel %vm1193, 0, %v3065
      %v3099 = vsel %vm1194, 0, %v3066
      %v3100 = vsel %vm1195, 0, %v3067
      %v3101 = vsel %vm1196, 0, %v3068
      %v3102 = vsel %vm1197, 0, %v3069
      %v3103 = vsel %vm1198, 0, %v3070
      %s3104 = scalar_lea.vmem %s1, 192
      %v3105 = vld [vmem:[%s3104] sm:$0xf]
      %v3106 = vld [vmem:[%s3104 + $0x4] sm:$0xf]
      %v3107 = vld [vmem:[%s3104 + $0x8] sm:$0xf]
      %v3108 = vld [vmem:[%s3104 + $0xc] sm:$0xf]
      %v3109 = vld [vmem:[%s3104 + $0x10] sm:$0xf]
      %v3110 = vld [vmem:[%s3104 + $0x14] sm:$0xf]
      %v3111 = vld [vmem:[%s3104 + $0x18] sm:$0xf]
      %v3112 = vld [vmem:[%s3104 + $0x1c] sm:$0xf]
      %v3113 = vld [vmem:[%s3104 + $0x20] sm:$0xf]
      %v3114 = vld [vmem:[%s3104 + $0x24] sm:$0xf]
      %v3115 = vld [vmem:[%s3104 + $0x28] sm:$0xf]
      %v3116 = vld [vmem:[%s3104 + $0x2c] sm:$0xf]
      %v3117 = vld [vmem:[%s3104 + $0x30] sm:$0xf]
      %v3118 = vld [vmem:[%s3104 + $0x34] sm:$0xf]
      %v3119 = vld [vmem:[%s3104 + $0x38] sm:$0xf]
      %v3120 = vld [vmem:[%s3104 + $0x3c] sm:$0xf]
      %v3154 = vunpack.c.l.b16 %v3071
      %v3155 = vunpack.c.l.b16 %v3072
      %v3156 = vunpack.c.l.b16 %v3073
      %v3157 = vunpack.c.l.b16 %v3074
      %v3158 = vunpack.c.l.b16 %v3075
      %v3159 = vunpack.c.l.b16 %v3076
      %v3160 = vunpack.c.l.b16 %v3077
      %v3161 = vunpack.c.l.b16 %v3078
      %v3162 = vunpack.c.l.b16 %v3079
      %v3163 = vunpack.c.l.b16 %v3080
      %v3164 = vunpack.c.l.b16 %v3081
      %v3165 = vunpack.c.l.b16 %v3082
      %v3166 = vunpack.c.l.b16 %v3083
      %v3167 = vunpack.c.l.b16 %v3084
      %v3168 = vunpack.c.l.b16 %v3085
      %v3169 = vunpack.c.l.b16 %v3086
      %v3170 = vunpack.c.l.b16 %v3087
      %v3171 = vunpack.c.l.b16 %v3088
      %v3172 = vunpack.c.l.b16 %v3089
      %v3173 = vunpack.c.l.b16 %v3090
      %v3174 = vunpack.c.l.b16 %v3091
      %v3175 = vunpack.c.l.b16 %v3092
      %v3176 = vunpack.c.l.b16 %v3093
      %v3177 = vunpack.c.l.b16 %v3094
      %v3178 = vunpack.c.l.b16 %v3095
      %v3179 = vunpack.c.l.b16 %v3096
      %v3180 = vunpack.c.l.b16 %v3097
      %v3181 = vunpack.c.l.b16 %v3098
      %v3182 = vunpack.c.l.b16 %v3099
      %v3183 = vunpack.c.l.b16 %v3100
      %v3184 = vunpack.c.l.b16 %v3101
      %v3185 = vunpack.c.l.b16 %v3102
      %v3186 = vunpack.c.l.b16 %v3103
      %v3187 = vpack.c.b16 %v3155, %v3154
      %v3188 = vpack.c.b16 %v3157, %v3156
      %v3189 = vpack.c.b16 %v3159, %v3158
      %v3190 = vpack.c.b16 %v3161, %v3160
      %v3191 = vpack.c.b16 %v3163, %v3162
      %v3192 = vpack.c.b16 %v3165, %v3164
      %v3193 = vpack.c.b16 %v3167, %v3166
      %v3194 = vpack.c.b16 %v3169, %v3168
      %v3195 = vpack.c.b16 %v3171, %v3170
      %v3196 = vpack.c.b16 %v3173, %v3172
      %v3197 = vpack.c.b16 %v3175, %v3174
      %v3198 = vpack.c.b16 %v3177, %v3176
      %v3199 = vpack.c.b16 %v3179, %v3178
      %v3200 = vpack.c.b16 %v3181, %v3180
      %v3201 = vpack.c.b16 %v3183, %v3182
      %v3202 = vpack.c.b16 %v3185, %v3184
      %v3203 = vpack.c.b16 %v3186, %v3186
      %v3205 = vshrl.u32 %v3187, 16
      %v3207 = vrot.slane %v3205, 3
      %v3208 = vshll.u32 %v3187, 16
      %v3210 = vrot.slane %v3208, 4
      %v3211 = vor.u32 %v3207, %v3210
      %v3213 = vshrl.u32 %v3188, 16
      %v3215 = vrot.slane %v3213, 3
      %v3216 = vshll.u32 %v3188, 16
      %v3218 = vrot.slane %v3216, 4
      %v3219 = vor.u32 %v3215, %v3218
      %v3220 = vsel %vm1653, %v3211, %v3219
      %v3222 = vshrl.u32 %v3189, 16
      %v3224 = vrot.slane %v3222, 3
      %v3225 = vshll.u32 %v3189, 16
      %v3227 = vrot.slane %v3225, 4
      %v3228 = vor.u32 %v3224, %v3227
      %v3229 = vsel %vm1653, %v3219, %v3228
      %v3231 = vshrl.u32 %v3190, 16
      %v3233 = vrot.slane %v3231, 3
      %v3234 = vshll.u32 %v3190, 16
      %v3236 = vrot.slane %v3234, 4
      %v3237 = vor.u32 %v3233, %v3236
      %v3238 = vsel %vm1653, %v3228, %v3237
      %v3240 = vshrl.u32 %v3191, 16
      %v3242 = vrot.slane %v3240, 3
      %v3243 = vshll.u32 %v3191, 16
      %v3245 = vrot.slane %v3243, 4
      %v3246 = vor.u32 %v3242, %v3245
      %v3247 = vsel %vm1653, %v3237, %v3246
      %v3249 = vshrl.u32 %v3192, 16
      %v3251 = vrot.slane %v3249, 3
      %v3252 = vshll.u32 %v3192, 16
      %v3254 = vrot.slane %v3252, 4
      %v3255 = vor.u32 %v3251, %v3254
      %v3256 = vsel %vm1653, %v3246, %v3255
      %v3258 = vshrl.u32 %v3193, 16
      %v3260 = vrot.slane %v3258, 3
      %v3261 = vshll.u32 %v3193, 16
      %v3263 = vrot.slane %v3261, 4
      %v3264 = vor.u32 %v3260, %v3263
      %v3265 = vsel %vm1653, %v3255, %v3264
      %v3267 = vshrl.u32 %v3194, 16
      %v3269 = vrot.slane %v3267, 3
      %v3270 = vshll.u32 %v3194, 16
      %v3272 = vrot.slane %v3270, 4
      %v3273 = vor.u32 %v3269, %v3272
      %v3274 = vsel %vm1653, %v3264, %v3273
      %v3276 = vshrl.u32 %v3195, 16
      %v3278 = vrot.slane %v3276, 3
      %v3279 = vshll.u32 %v3195, 16
      %v3281 = vrot.slane %v3279, 4
      %v3282 = vor.u32 %v3278, %v3281
      %v3283 = vsel %vm1653, %v3273, %v3282
      %v3285 = vshrl.u32 %v3196, 16
      %v3287 = vrot.slane %v3285, 3
      %v3288 = vshll.u32 %v3196, 16
      %v3290 = vrot.slane %v3288, 4
      %v3291 = vor.u32 %v3287, %v3290
      %v3292 = vsel %vm1653, %v3282, %v3291
      %v3294 = vshrl.u32 %v3197, 16
      %v3296 = vrot.slane %v3294, 3
      %v3297 = vshll.u32 %v3197, 16
      %v3299 = vrot.slane %v3297, 4
      %v3300 = vor.u32 %v3296, %v3299
      %v3301 = vsel %vm1653, %v3291, %v3300
      %v3303 = vshrl.u32 %v3198, 16
      %v3305 = vrot.slane %v3303, 3
      %v3306 = vshll.u32 %v3198, 16
      %v3308 = vrot.slane %v3306, 4
      %v3309 = vor.u32 %v3305, %v3308
      %v3310 = vsel %vm1653, %v3300, %v3309
      %v3312 = vshrl.u32 %v3199, 16
      %v3314 = vrot.slane %v3312, 3
      %v3315 = vshll.u32 %v3199, 16
      %v3317 = vrot.slane %v3315, 4
      %v3318 = vor.u32 %v3314, %v3317
      %v3319 = vsel %vm1653, %v3309, %v3318
      %v3321 = vshrl.u32 %v3200, 16
      %v3323 = vrot.slane %v3321, 3
      %v3324 = vshll.u32 %v3200, 16
      %v3326 = vrot.slane %v3324, 4
      %v3327 = vor.u32 %v3323, %v3326
      %v3328 = vsel %vm1653, %v3318, %v3327
      %v3330 = vshrl.u32 %v3201, 16
      %v3332 = vrot.slane %v3330, 3
      %v3333 = vshll.u32 %v3201, 16
      %v3335 = vrot.slane %v3333, 4
      %v3336 = vor.u32 %v3332, %v3335
      %v3337 = vsel %vm1653, %v3327, %v3336
      %v3339 = vshrl.u32 %v3202, 16
      %v3341 = vrot.slane %v3339, 3
      %v3342 = vshll.u32 %v3202, 16
      %v3344 = vrot.slane %v3342, 4
      %v3345 = vor.u32 %v3341, %v3344
      %v3346 = vsel %vm1653, %v3336, %v3345
      %v3348 = vshrl.u32 %v3203, 16
      %v3350 = vrot.slane %v3348, 3
      %v3351 = vshll.u32 %v3203, 16
      %v3353 = vrot.slane %v3351, 4
      %v3354 = vor.u32 %v3350, %v3353
      %v3355 = vsel %vm1653, %v3345, %v3354
      %v3388 = vunpack.c.l.b16 %v3105
      %v3389 = vunpack.c.l.b16 %v3106
      %v3390 = vunpack.c.l.b16 %v3107
      %v3391 = vunpack.c.l.b16 %v3108
      %v3392 = vunpack.c.l.b16 %v3109
      %v3393 = vunpack.c.l.b16 %v3110
      %v3394 = vunpack.c.l.b16 %v3111
      %v3395 = vunpack.c.l.b16 %v3112
      %v3396 = vunpack.c.l.b16 %v3113
      %v3397 = vunpack.c.l.b16 %v3114
      %v3398 = vunpack.c.l.b16 %v3115
      %v3399 = vunpack.c.l.b16 %v3116
      %v3400 = vunpack.c.l.b16 %v3117
      %v3401 = vunpack.c.l.b16 %v3118
      %v3402 = vunpack.c.l.b16 %v3119
      %v3403 = vunpack.c.l.b16 %v3120
      %v3404 = vpack.c.b16 %v3389, %v3388
      %v3405 = vpack.c.b16 %v3391, %v3390
      %v3406 = vpack.c.b16 %v3393, %v3392
      %v3407 = vpack.c.b16 %v3395, %v3394
      %v3408 = vpack.c.b16 %v3397, %v3396
      %v3409 = vpack.c.b16 %v3399, %v3398
      %v3410 = vpack.c.b16 %v3401, %v3400
      %v3411 = vpack.c.b16 %v3403, %v3402
      %3420 = vmatprep.subr.bf16.mxu0 0
      %3421 = vmatpush1.bf16.msra.mxu0 %v3404
      %3422 = vmatprep.subr.bf16.mxu0 0
      %3423 = vmatpush1.bf16.msra.mxu0 %v3405
      %3424 = vmatprep.subr.bf16.mxu0 0
      %3425 = vmatpush1.bf16.msra.mxu0 %v3406
      %3426 = vmatprep.subr.bf16.mxu0 0
      %3427 = vmatpush1.bf16.msra.mxu0 %v3407
      %3428 = vmatprep.subr.bf16.mxu0 0
      %3429 = vmatpush1.bf16.msra.mxu0 %v3408
      %3430 = vmatprep.subr.bf16.mxu0 0
      %3431 = vmatpush1.bf16.msra.mxu0 %v3409
      %3432 = vmatprep.subr.bf16.mxu0 0
      %3433 = vmatpush1.bf16.msra.mxu0 %v3410
      %3434 = vmatprep.subr.bf16.mxu0 0
      %3435 = vmatpush1.bf16.msra.mxu0 %v3411
      %3436 = vmatprep.subr.bf16.mxu0 0
      %3437 = vmatpush1.bf16.msra.mxu0 0
      %3438 = vmatprep.subr.bf16.mxu0 0
      %3439 = vmatpush1.bf16.msra.mxu0 0
      %3440 = vmatprep.subr.bf16.mxu0 0
      %3441 = vmatpush1.bf16.msra.mxu0 0
      %3442 = vmatprep.subr.bf16.mxu0 0
      %3443 = vmatpush1.bf16.msra.mxu0 0
      %3444 = vmatprep.subr.bf16.mxu0 0
      %3445 = vmatpush1.bf16.msra.mxu0 0
      %3446 = vmatprep.subr.bf16.mxu0 0
      %3447 = vmatpush1.bf16.msra.mxu0 0
      %3448 = vmatprep.subr.bf16.mxu0 0
      %3449 = vmatpush1.bf16.msra.mxu0 0
      %3450 = vmatprep.subr.bf16.mxu0 0
      %3451 = vmatpush1.bf16.msra.mxu0 0
      %3452 = vmatprep.mubr.bf16.mxu0 0
      %3453 = vmatmul.mubr.bf16.gmra.mrb[0].mxu0 %v3220
      %v3454 = vpop.f32.mrb[0].mxu0
      %v3455 = vadd.f32 0.0, %v3454
      %v3456 = vpop.f32.mrb[0].mxu0
      %v3457 = vpop.f32.mrb[0].mxu0
      %v3458 = vadd.f32 0.0, %v3457
      %v3459 = vpop.f32.mrb[0].mxu0
      %3460 = vmatprep.mubr.bf16.mxu0 0
      %3461 = vmatmul.mubr.bf16.gmra.mrb[0].mxu0 %v3229
      %v3462 = vpop.f32.mrb[0].mxu0
      %v3463 = vadd.f32 0.0, %v3462
      %v3464 = vpop.f32.mrb[0].mxu0
      %v3465 = vpop.f32.mrb[0].mxu0
      %v3466 = vadd.f32 0.0, %v3465
      %v3467 = vpop.f32.mrb[0].mxu0
      %3468 = vmatprep.mubr.bf16.mxu0 0
      %3469 = vmatmul.mubr.bf16.gmra.mrb[0].mxu0 %v3238
      %v3470 = vpop.f32.mrb[0].mxu0
      %v3471 = vadd.f32 0.0, %v3470
      %v3472 = vpop.f32.mrb[0].mxu0
      %v3473 = vpop.f32.mrb[0].mxu0
      %v3474 = vadd.f32 0.0, %v3473
      %v3475 = vpop.f32.mrb[0].mxu0
      %3476 = vmatprep.mubr.bf16.mxu0 0
      %3477 = vmatmul.mubr.bf16.gmra.mrb[0].mxu0 %v3247
      %v3478 = vpop.f32.mrb[0].mxu0
      %v3479 = vadd.f32 0.0, %v3478
      %v3480 = vpop.f32.mrb[0].mxu0
      %v3481 = vpop.f32.mrb[0].mxu0
      %v3482 = vadd.f32 0.0, %v3481
      %v3483 = vpop.f32.mrb[0].mxu0
      %3484 = vmatprep.mubr.bf16.mxu0 0
      %3485 = vmatmul.mubr.bf16.gmra.mrb[0].mxu0 %v3256
      %v3486 = vpop.f32.mrb[0].mxu0
      %v3487 = vadd.f32 0.0, %v3486
      %v3488 = vpop.f32.mrb[0].mxu0
      %v3489 = vpop.f32.mrb[0].mxu0
      %v3490 = vadd.f32 0.0, %v3489
      %v3491 = vpop.f32.mrb[0].mxu0
      %3492 = vmatprep.mubr.bf16.mxu0 0
      %3493 = vmatmul.mubr.bf16.gmra.mrb[0].mxu0 %v3265
      %v3494 = vpop.f32.mrb[0].mxu0
      %v3495 = vadd.f32 0.0, %v3494
      %v3496 = vpop.f32.mrb[0].mxu0
      %v3497 = vpop.f32.mrb[0].mxu0
      %v3498 = vadd.f32 0.0, %v3497
      %v3499 = vpop.f32.mrb[0].mxu0
      %3500 = vmatprep.mubr.bf16.mxu0 0
      %3501 = vmatmul.mubr.bf16.gmra.mrb[0].mxu0 %v3274
      %v3502 = vpop.f32.mrb[0].mxu0
      %v3503 = vadd.f32 0.0, %v3502
      %v3504 = vpop.f32.mrb[0].mxu0
      %v3505 = vpop.f32.mrb[0].mxu0
      %v3506 = vadd.f32 0.0, %v3505
      %v3507 = vpop.f32.mrb[0].mxu0
      %3508 = vmatprep.mubr.bf16.mxu0 0
      %3509 = vmatmul.mubr.bf16.gmra.mrb[0].mxu0 %v3283
      %v3510 = vpop.f32.mrb[0].mxu0
      %v3511 = vadd.f32 0.0, %v3510
      %v3512 = vpop.f32.mrb[0].mxu0
      %v3513 = vpop.f32.mrb[0].mxu0
      %v3514 = vadd.f32 0.0, %v3513
      %v3515 = vpop.f32.mrb[0].mxu0
      %3516 = vmatprep.mubr.bf16.mxu0 0
      %3517 = vmatmul.mubr.bf16.gmra.mrb[0].mxu0 %v3292
      %v3518 = vpop.f32.mrb[0].mxu0
      %v3519 = vadd.f32 0.0, %v3518
      %v3520 = vpop.f32.mrb[0].mxu0
      %v3521 = vpop.f32.mrb[0].mxu0
      %v3522 = vadd.f32 0.0, %v3521
      %v3523 = vpop.f32.mrb[0].mxu0
      %3524 = vmatprep.mubr.bf16.mxu0 0
      %3525 = vmatmul.mubr.bf16.gmra.mrb[0].mxu0 %v3301
      %v3526 = vpop.f32.mrb[0].mxu0
      %v3527 = vadd.f32 0.0, %v3526
      %v3528 = vpop.f32.mrb[0].mxu0
      %v3529 = vpop.f32.mrb[0].mxu0
      %v3530 = vadd.f32 0.0, %v3529
      %v3531 = vpop.f32.mrb[0].mxu0
      %3532 = vmatprep.mubr.bf16.mxu0 0
      %3533 = vmatmul.mubr.bf16.gmra.mrb[0].mxu0 %v3310
      %v3534 = vpop.f32.mrb[0].mxu0
      %v3535 = vadd.f32 0.0, %v3534
      %v3536 = vpop.f32.mrb[0].mxu0
      %v3537 = vpop.f32.mrb[0].mxu0
      %v3538 = vadd.f32 0.0, %v3537
      %v3539 = vpop.f32.mrb[0].mxu0
      %3540 = vmatprep.mubr.bf16.mxu0 0
      %3541 = vmatmul.mubr.bf16.gmra.mrb[0].mxu0 %v3319
      %v3542 = vpop.f32.mrb[0].mxu0
      %v3543 = vadd.f32 0.0, %v3542
      %v3544 = vpop.f32.mrb[0].mxu0
      %v3545 = vpop.f32.mrb[0].mxu0
      %v3546 = vadd.f32 0.0, %v3545
      %v3547 = vpop.f32.mrb[0].mxu0
      %3548 = vmatprep.mubr.bf16.mxu0 0
      %3549 = vmatmul.mubr.bf16.gmra.mrb[0].mxu0 %v3328
      %v3550 = vpop.f32.mrb[0].mxu0
      %v3551 = vadd.f32 0.0, %v3550
      %v3552 = vpop.f32.mrb[0].mxu0
      %v3553 = vpop.f32.mrb[0].mxu0
      %v3554 = vadd.f32 0.0, %v3553
      %v3555 = vpop.f32.mrb[0].mxu0
      %3556 = vmatprep.mubr.bf16.mxu0 0
      %3557 = vmatmul.mubr.bf16.gmra.mrb[0].mxu0 %v3337
      %v3558 = vpop.f32.mrb[0].mxu0
      %v3559 = vadd.f32 0.0, %v3558
      %v3560 = vpop.f32.mrb[0].mxu0
      %v3561 = vpop.f32.mrb[0].mxu0
      %v3562 = vadd.f32 0.0, %v3561
      %v3563 = vpop.f32.mrb[0].mxu0
      %3564 = vmatprep.mubr.bf16.mxu0 0
      %3565 = vmatmul.mubr.bf16.gmra.mrb[0].mxu0 %v3346
      %v3566 = vpop.f32.mrb[0].mxu0
      %v3567 = vadd.f32 0.0, %v3566
      %v3568 = vpop.f32.mrb[0].mxu0
      %v3569 = vpop.f32.mrb[0].mxu0
      %v3570 = vadd.f32 0.0, %v3569
      %v3571 = vpop.f32.mrb[0].mxu0
      %3572 = vmatprep.mubr.bf16.mxu0 0
      %3573 = vmatmul.mubr.bf16.gmra.mrb[0].mxu0 %v3355
      %v3574 = vpop.f32.mrb[0].mxu0
      %v3575 = vadd.f32 0.0, %v3574
      %v3576 = vpop.f32.mrb[0].mxu0
      %v3577 = vpop.f32.mrb[0].mxu0
      %v3578 = vadd.f32 0.0, %v3577
      %v3579 = vpop.f32.mrb[0].mxu0
      %3580 = vdwg.mxu0
      %v3581 = vadd.f32 %v3006, %v3455
      %v3582 = vadd.f32 %v3007, %v3458
      %v3583 = vadd.f32 %v3008, %v3463
      %v3584 = vadd.f32 %v3009, %v3466
      %v3585 = vadd.f32 %v3010, %v3471
      %v3586 = vadd.f32 %v3011, %v3474
      %v3587 = vadd.f32 %v3012, %v3479
      %v3588 = vadd.f32 %v3013, %v3482
      %v3589 = vadd.f32 %v3014, %v3487
      %v3590 = vadd.f32 %v3015, %v3490
      %v3591 = vadd.f32 %v3016, %v3495
      %v3592 = vadd.f32 %v3017, %v3498
      %v3593 = vadd.f32 %v3018, %v3503
      %v3594 = vadd.f32 %v3019, %v3506
      %v3595 = vadd.f32 %v3020, %v3511
      %v3596 = vadd.f32 %v3021, %v3514
      %v3597 = vadd.f32 %v3022, %v3519
      %v3598 = vadd.f32 %v3023, %v3522
      %v3599 = vadd.f32 %v3024, %v3527
      %v3600 = vadd.f32 %v3025, %v3530
      %v3601 = vadd.f32 %v3026, %v3535
      %v3602 = vadd.f32 %v3027, %v3538
      %v3603 = vadd.f32 %v3028, %v3543
      %v3604 = vadd.f32 %v3029, %v3546
      %v3605 = vadd.f32 %v3030, %v3551
      %v3606 = vadd.f32 %v3031, %v3554
      %v3607 = vadd.f32 %v3032, %v3559
      %v3608 = vadd.f32 %v3033, %v3562
      %v3609 = vadd.f32 %v3034, %v3567
      %v3610 = vadd.f32 %v3035, %v3570
      %v3611 = vadd.f32 %v3036, %v3575
      %v3612 = vadd.f32 %v3037, %v3578
      %s3613 = scalar_lea.vmem %s1, 256
      %v3614 = vld [vmem:[%s3613] sm:$0xf]
      %v3615 = vld [vmem:[%s3613 + $0x4] sm:$0xf]
      %v3616 = vld [vmem:[%s3613 + $0x8] sm:$0xf]
      %v3617 = vld [vmem:[%s3613 + $0xc] sm:$0xf]
      %v3618 = vld [vmem:[%s3613 + $0x10] sm:$0xf]
      %v3619 = vld [vmem:[%s3613 + $0x14] sm:$0xf]
      %v3620 = vld [vmem:[%s3613 + $0x18] sm:$0xf]
      %v3621 = vld [vmem:[%s3613 + $0x1c] sm:$0xf]
      %v3622 = vld [vmem:[%s3613 + $0x20] sm:$0xf]
      %v3623 = vld [vmem:[%s3613 + $0x24] sm:$0xf]
      %v3624 = vld [vmem:[%s3613 + $0x28] sm:$0xf]
      %v3625 = vld [vmem:[%s3613 + $0x2c] sm:$0xf]
      %v3626 = vld [vmem:[%s3613 + $0x30] sm:$0xf]
      %v3627 = vld [vmem:[%s3613 + $0x34] sm:$0xf]
      %v3628 = vld [vmem:[%s3613 + $0x38] sm:$0xf]
      %v3629 = vld [vmem:[%s3613 + $0x3c] sm:$0xf]
      %v3662 = vunpack.c.l.b16 %v3039
      %v3663 = vunpack.c.l.b16 %v3040
      %v3664 = vunpack.c.l.b16 %v3041
      %v3665 = vunpack.c.l.b16 %v3042
      %v3666 = vunpack.c.l.b16 %v3043
      %v3667 = vunpack.c.l.b16 %v3044
      %v3668 = vunpack.c.l.b16 %v3045
      %v3669 = vunpack.c.l.b16 %v3046
      %v3670 = vunpack.c.l.b16 %v3047
      %v3671 = vunpack.c.l.b16 %v3048
      %v3672 = vunpack.c.l.b16 %v3049
      %v3673 = vunpack.c.l.b16 %v3050
      %v3674 = vunpack.c.l.b16 %v3051
      %v3675 = vunpack.c.l.b16 %v3052
      %v3676 = vunpack.c.l.b16 %v3053
      %v3677 = vunpack.c.l.b16 %v3054
      %v3678 = vunpack.c.l.b16 %v3055
      %v3679 = vunpack.c.l.b16 %v3056
      %v3680 = vunpack.c.l.b16 %v3057
      %v3681 = vunpack.c.l.b16 %v3058
      %v3682 = vunpack.c.l.b16 %v3059
      %v3683 = vunpack.c.l.b16 %v3060
      %v3684 = vunpack.c.l.b16 %v3061
      %v3685 = vunpack.c.l.b16 %v3062
      %v3686 = vunpack.c.l.b16 %v3063
      %v3687 = vunpack.c.l.b16 %v3064
      %v3688 = vunpack.c.l.b16 %v3065
      %v3689 = vunpack.c.l.b16 %v3066
      %v3690 = vunpack.c.l.b16 %v3067
      %v3691 = vunpack.c.l.b16 %v3068
      %v3692 = vunpack.c.l.b16 %v3069
      %v3693 = vunpack.c.l.b16 %v3070
      %v3694 = vpack.c.b16 %v3663, %v3662
      %v3695 = vpack.c.b16 %v3665, %v3664
      %v3696 = vpack.c.b16 %v3667, %v3666
      %v3697 = vpack.c.b16 %v3669, %v3668
      %v3698 = vpack.c.b16 %v3671, %v3670
      %v3699 = vpack.c.b16 %v3673, %v3672
      %v3700 = vpack.c.b16 %v3675, %v3674
      %v3701 = vpack.c.b16 %v3677, %v3676
      %v3702 = vpack.c.b16 %v3679, %v3678
      %v3703 = vpack.c.b16 %v3681, %v3680
      %v3704 = vpack.c.b16 %v3683, %v3682
      %v3705 = vpack.c.b16 %v3685, %v3684
      %v3706 = vpack.c.b16 %v3687, %v3686
      %v3707 = vpack.c.b16 %v3689, %v3688
      %v3708 = vpack.c.b16 %v3691, %v3690
      %v3709 = vpack.c.b16 %v3693, %v3692
      %v3742 = vunpack.c.l.b16 %v3614
      %v3743 = vunpack.c.l.b16 %v3615
      %v3744 = vunpack.c.l.b16 %v3616
      %v3745 = vunpack.c.l.b16 %v3617
      %v3746 = vunpack.c.l.b16 %v3618
      %v3747 = vunpack.c.l.b16 %v3619
      %v3748 = vunpack.c.l.b16 %v3620
      %v3749 = vunpack.c.l.b16 %v3621
      %v3750 = vunpack.c.l.b16 %v3622
      %v3751 = vunpack.c.l.b16 %v3623
      %v3752 = vunpack.c.l.b16 %v3624
      %v3753 = vunpack.c.l.b16 %v3625
      %v3754 = vunpack.c.l.b16 %v3626
      %v3755 = vunpack.c.l.b16 %v3627
      %v3756 = vunpack.c.l.b16 %v3628
      %v3757 = vunpack.c.l.b16 %v3629
      %v3758 = vpack.c.b16 %v3743, %v3742
      %v3759 = vpack.c.b16 %v3745, %v3744
      %v3760 = vpack.c.b16 %v3747, %v3746
      %v3761 = vpack.c.b16 %v3749, %v3748
      %v3762 = vpack.c.b16 %v3751, %v3750
      %v3763 = vpack.c.b16 %v3753, %v3752
      %v3764 = vpack.c.b16 %v3755, %v3754
      %v3765 = vpack.c.b16 %v3757, %v3756
      %3774 = vmatprep.subr.bf16.mxu0 0
      %3775 = vmatpush1.bf16.msra.mxu0 %v3758
      %3776 = vmatprep.subr.bf16.mxu0 0
      %3777 = vmatpush1.bf16.msra.mxu0 %v3759
      %3778 = vmatprep.subr.bf16.mxu0 0
      %3779 = vmatpush1.bf16.msra.mxu0 %v3760
      %3780 = vmatprep.subr.bf16.mxu0 0
      %3781 = vmatpush1.bf16.msra.mxu0 %v3761
      %3782 = vmatprep.subr.bf16.mxu0 0
      %3783 = vmatpush1.bf16.msra.mxu0 %v3762
      %3784 = vmatprep.subr.bf16.mxu0 0
      %3785 = vmatpush1.bf16.msra.mxu0 %v3763
      %3786 = vmatprep.subr.bf16.mxu0 0
      %3787 = vmatpush1.bf16.msra.mxu0 %v3764
      %3788 = vmatprep.subr.bf16.mxu0 0
      %3789 = vmatpush1.bf16.msra.mxu0 %v3765
      %3790 = vmatprep.subr.bf16.mxu0 0
      %3791 = vmatpush1.bf16.msra.mxu0 0
      %3792 = vmatprep.subr.bf16.mxu0 0
      %3793 = vmatpush1.bf16.msra.mxu0 0
      %3794 = vmatprep.subr.bf16.mxu0 0
      %3795 = vmatpush1.bf16.msra.mxu0 0
      %3796 = vmatprep.subr.bf16.mxu0 0
      %3797 = vmatpush1.bf16.msra.mxu0 0
      %3798 = vmatprep.subr.bf16.mxu0 0
      %3799 = vmatpush1.bf16.msra.mxu0 0
      %3800 = vmatprep.subr.bf16.mxu0 0
      %3801 = vmatpush1.bf16.msra.mxu0 0
      %3802 = vmatprep.subr.bf16.mxu0 0
      %3803 = vmatpush1.bf16.msra.mxu0 0
      %3804 = vmatprep.subr.bf16.mxu0 0
      %3805 = vmatpush1.bf16.msra.mxu0 0
      %3806 = vmatprep.mubr.bf16.mxu0 0
      %3807 = vmatmul.mubr.bf16.gmra.mrb[0].mxu0 %v3694
      %v3808 = vpop.f32.mrb[0].mxu0
      %v3809 = vadd.f32 0.0, %v3808
      %v3810 = vpop.f32.mrb[0].mxu0
      %v3811 = vpop.f32.mrb[0].mxu0
      %v3812 = vadd.f32 0.0, %v3811
      %v3813 = vpop.f32.mrb[0].mxu0
      %3814 = vmatprep.mubr.bf16.mxu0 0
      %3815 = vmatmul.mubr.bf16.gmra.mrb[0].mxu0 %v3695
      %v3816 = vpop.f32.mrb[0].mxu0
      %v3817 = vadd.f32 0.0, %v3816
      %v3818 = vpop.f32.mrb[0].mxu0
      %v3819 = vpop.f32.mrb[0].mxu0
      %v3820 = vadd.f32 0.0, %v3819
      %v3821 = vpop.f32.mrb[0].mxu0
      %3822 = vmatprep.mubr.bf16.mxu0 0
      %3823 = vmatmul.mubr.bf16.gmra.mrb[0].mxu0 %v3696
      %v3824 = vpop.f32.mrb[0].mxu0
      %v3825 = vadd.f32 0.0, %v3824
      %v3826 = vpop.f32.mrb[0].mxu0
      %v3827 = vpop.f32.mrb[0].mxu0
      %v3828 = vadd.f32 0.0, %v3827
      %v3829 = vpop.f32.mrb[0].mxu0
      %3830 = vmatprep.mubr.bf16.mxu0 0
      %3831 = vmatmul.mubr.bf16.gmra.mrb[0].mxu0 %v3697
      %v3832 = vpop.f32.mrb[0].mxu0
      %v3833 = vadd.f32 0.0, %v3832
      %v3834 = vpop.f32.mrb[0].mxu0
      %v3835 = vpop.f32.mrb[0].mxu0
      %v3836 = vadd.f32 0.0, %v3835
      %v3837 = vpop.f32.mrb[0].mxu0
      %3838 = vmatprep.mubr.bf16.mxu0 0
      %3839 = vmatmul.mubr.bf16.gmra.mrb[0].mxu0 %v3698
      %v3840 = vpop.f32.mrb[0].mxu0
      %v3841 = vadd.f32 0.0, %v3840
      %v3842 = vpop.f32.mrb[0].mxu0
      %v3843 = vpop.f32.mrb[0].mxu0
      %v3844 = vadd.f32 0.0, %v3843
      %v3845 = vpop.f32.mrb[0].mxu0
      %3846 = vmatprep.mubr.bf16.mxu0 0
      %3847 = vmatmul.mubr.bf16.gmra.mrb[0].mxu0 %v3699
      %v3848 = vpop.f32.mrb[0].mxu0
      %v3849 = vadd.f32 0.0, %v3848
      %v3850 = vpop.f32.mrb[0].mxu0
      %v3851 = vpop.f32.mrb[0].mxu0
      %v3852 = vadd.f32 0.0, %v3851
      %v3853 = vpop.f32.mrb[0].mxu0
      %3854 = vmatprep.mubr.bf16.mxu0 0
      %3855 = vmatmul.mubr.bf16.gmra.mrb[0].mxu0 %v3700
      %v3856 = vpop.f32.mrb[0].mxu0
      %v3857 = vadd.f32 0.0, %v3856
      %v3858 = vpop.f32.mrb[0].mxu0
      %v3859 = vpop.f32.mrb[0].mxu0
      %v3860 = vadd.f32 0.0, %v3859
      %v3861 = vpop.f32.mrb[0].mxu0
      %3862 = vmatprep.mubr.bf16.mxu0 0
      %3863 = vmatmul.mubr.bf16.gmra.mrb[0].mxu0 %v3701
      %v3864 = vpop.f32.mrb[0].mxu0
      %v3865 = vadd.f32 0.0, %v3864
      %v3866 = vpop.f32.mrb[0].mxu0
      %v3867 = vpop.f32.mrb[0].mxu0
      %v3868 = vadd.f32 0.0, %v3867
      %v3869 = vpop.f32.mrb[0].mxu0
      %3870 = vmatprep.mubr.bf16.mxu0 0
      %3871 = vmatmul.mubr.bf16.gmra.mrb[0].mxu0 %v3702
      %v3872 = vpop.f32.mrb[0].mxu0
      %v3873 = vadd.f32 0.0, %v3872
      %v3874 = vpop.f32.mrb[0].mxu0
      %v3875 = vpop.f32.mrb[0].mxu0
      %v3876 = vadd.f32 0.0, %v3875
      %v3877 = vpop.f32.mrb[0].mxu0
      %3878 = vmatprep.mubr.bf16.mxu0 0
      %3879 = vmatmul.mubr.bf16.gmra.mrb[0].mxu0 %v3703
      %v3880 = vpop.f32.mrb[0].mxu0
      %v3881 = vadd.f32 0.0, %v3880
      %v3882 = vpop.f32.mrb[0].mxu0
      %v3883 = vpop.f32.mrb[0].mxu0
      %v3884 = vadd.f32 0.0, %v3883
      %v3885 = vpop.f32.mrb[0].mxu0
      %3886 = vmatprep.mubr.bf16.mxu0 0
      %3887 = vmatmul.mubr.bf16.gmra.mrb[0].mxu0 %v3704
      %v3888 = vpop.f32.mrb[0].mxu0
      %v3889 = vadd.f32 0.0, %v3888
      %v3890 = vpop.f32.mrb[0].mxu0
      %v3891 = vpop.f32.mrb[0].mxu0
      %v3892 = vadd.f32 0.0, %v3891
      %v3893 = vpop.f32.mrb[0].mxu0
      %3894 = vmatprep.mubr.bf16.mxu0 0
      %3895 = vmatmul.mubr.bf16.gmra.mrb[0].mxu0 %v3705
      %v3896 = vpop.f32.mrb[0].mxu0
      %v3897 = vadd.f32 0.0, %v3896
      %v3898 = vpop.f32.mrb[0].mxu0
      %v3899 = vpop.f32.mrb[0].mxu0
      %v3900 = vadd.f32 0.0, %v3899
      %v3901 = vpop.f32.mrb[0].mxu0
      %3902 = vmatprep.mubr.bf16.mxu0 0
      %3903 = vmatmul.mubr.bf16.gmra.mrb[0].mxu0 %v3706
      %v3904 = vpop.f32.mrb[0].mxu0
      %v3905 = vadd.f32 0.0, %v3904
      %v3906 = vpop.f32.mrb[0].mxu0
      %v3907 = vpop.f32.mrb[0].mxu0
      %v3908 = vadd.f32 0.0, %v3907
      %v3909 = vpop.f32.mrb[0].mxu0
      %3910 = vmatprep.mubr.bf16.mxu0 0
      %3911 = vmatmul.mubr.bf16.gmra.mrb[0].mxu0 %v3707
      %v3912 = vpop.f32.mrb[0].mxu0
      %v3913 = vadd.f32 0.0, %v3912
      %v3914 = vpop.f32.mrb[0].mxu0
      %v3915 = vpop.f32.mrb[0].mxu0
      %v3916 = vadd.f32 0.0, %v3915
      %v3917 = vpop.f32.mrb[0].mxu0
      %3918 = vmatprep.mubr.bf16.mxu0 0
      %3919 = vmatmul.mubr.bf16.gmra.mrb[0].mxu0 %v3708
      %v3920 = vpop.f32.mrb[0].mxu0
      %v3921 = vadd.f32 0.0, %v3920
      %v3922 = vpop.f32.mrb[0].mxu0
      %v3923 = vpop.f32.mrb[0].mxu0
      %v3924 = vadd.f32 0.0, %v3923
      %v3925 = vpop.f32.mrb[0].mxu0
      %3926 = vmatprep.mubr.bf16.mxu0 0
      %3927 = vmatmul.mubr.bf16.gmra.mrb[0].mxu0 %v3709
      %v3928 = vpop.f32.mrb[0].mxu0
      %v3929 = vadd.f32 0.0, %v3928
      %v3930 = vpop.f32.mrb[0].mxu0
      %v3931 = vpop.f32.mrb[0].mxu0
      %v3932 = vadd.f32 0.0, %v3931
      %v3933 = vpop.f32.mrb[0].mxu0
      %3934 = vdwg.mxu0
      %v3935 = vadd.f32 %v3581, %v3809
      %v3936 = vadd.f32 %v3582, %v3812
      %v3937 = vadd.f32 %v3583, %v3817
      %v3938 = vadd.f32 %v3584, %v3820
      %v3939 = vadd.f32 %v3585, %v3825
      %v3940 = vadd.f32 %v3586, %v3828
      %v3941 = vadd.f32 %v3587, %v3833
      %v3942 = vadd.f32 %v3588, %v3836
      %v3943 = vadd.f32 %v3589, %v3841
      %v3944 = vadd.f32 %v3590, %v3844
      %v3945 = vadd.f32 %v3591, %v3849
      %v3946 = vadd.f32 %v3592, %v3852
      %v3947 = vadd.f32 %v3593, %v3857
      %v3948 = vadd.f32 %v3594, %v3860
      %v3949 = vadd.f32 %v3595, %v3865
      %v3950 = vadd.f32 %v3596, %v3868
      %v3951 = vadd.f32 %v3597, %v3873
      %v3952 = vadd.f32 %v3598, %v3876
      %v3953 = vadd.f32 %v3599, %v3881
      %v3954 = vadd.f32 %v3600, %v3884
      %v3955 = vadd.f32 %v3601, %v3889
      %v3956 = vadd.f32 %v3602, %v3892
      %v3957 = vadd.f32 %v3603, %v3897
      %v3958 = vadd.f32 %v3604, %v3900
      %v3959 = vadd.f32 %v3605, %v3905
      %v3960 = vadd.f32 %v3606, %v3908
      %v3961 = vadd.f32 %v3607, %v3913
      %v3962 = vadd.f32 %v3608, %v3916
      %v3963 = vadd.f32 %v3609, %v3921
      %v3964 = vadd.f32 %v3610, %v3924
      %v3965 = vadd.f32 %v3611, %v3929
      %v3966 = vadd.f32 %v3612, %v3932
      %v3967 = vld [vmem:[%s187 + $0xc] sm:$0xf]
      %v3968 = vld [vmem:[%s187 + $0x10] sm:$0xf]
      %v3969 = vld [vmem:[%s187 + $0x14] sm:$0xf]
      %v3970 = vld [vmem:[%s187 + $0x18] sm:$0xf]
      %v3971 = vld [vmem:[%s187 + $0x1c] sm:$0xf]
      %v3972 = vld [vmem:[%s187 + $0x20] sm:$0xf]
      %v3973 = vld [vmem:[%s187 + $0x24] sm:$0xf]
      %v3974 = vld [vmem:[%s187 + $0x28] sm:$0xf]
      %v3975 = vld [vmem:[%s187 + $0x2c] sm:$0xf]
      %v3976 = vld [vmem:[%s187 + $0x30] sm:$0xf]
      %v3977 = vld [vmem:[%s187 + $0x34] sm:$0xf]
      %v3978 = vld [vmem:[%s187 + $0x38] sm:$0xf]
      %v3979 = vld [vmem:[%s187 + $0x3c] sm:$0xf]
      %v3980 = vld [vmem:[%s187 + $0x40] sm:$0xf]
      %v3981 = vld [vmem:[%s187 + $0x44] sm:$0xf]
      %v3982 = vld [vmem:[%s187 + $0x48] sm:$0xf]
      %v3983 = vld [vmem:[%s187 + $0x4c] sm:$0xf]
      %v3984 = vld [vmem:[%s187 + $0x50] sm:$0xf]
      %v3985 = vld [vmem:[%s187 + $0x54] sm:$0xf]
      %v3986 = vld [vmem:[%s187 + $0x58] sm:$0xf]
      %v3987 = vld [vmem:[%s187 + $0x5c] sm:$0xf]
      %v3988 = vld [vmem:[%s187 + $0x60] sm:$0xf]
      %v3989 = vld [vmem:[%s187 + $0x64] sm:$0xf]
      %v3990 = vld [vmem:[%s187 + $0x68] sm:$0xf]
      %v3991 = vld [vmem:[%s187 + $0x6c] sm:$0xf]
      %v3992 = vld [vmem:[%s187 + $0x70] sm:$0xf]
      %v3993 = vld [vmem:[%s187 + $0x74] sm:$0xf]
      %v3994 = vld [vmem:[%s187 + $0x78] sm:$0xf]
      %v3995 = vld [vmem:[%s187 + $0x7c] sm:$0xf]
      %v3996 = vld [vmem:[%s187 + $0x80] sm:$0xf]
      %v3997 = vld [vmem:[%s187 + $0x84] sm:$0xf]
      %v3998 = vld [vmem:[%s187 + $0x88] sm:$0xf]
      %v3999 = vld [vmem:[%s187 + $0x8c] sm:$0x1]
      %v4000 = vsel %vm2482, 0, %v3967
      %v4001 = vsel %vm2483, 0, %v3968
      %v4002 = vsel %vm2484, 0, %v3969
      %v4003 = vsel %vm2485, 0, %v3970
      %v4004 = vsel %vm2486, 0, %v3971
      %v4005 = vsel %vm2487, 0, %v3972
      %v4006 = vsel %vm2488, 0, %v3973
      %v4007 = vsel %vm2489, 0, %v3974
      %v4008 = vsel %vm2490, 0, %v3975
      %v4009 = vsel %vm2491, 0, %v3976
      %v4010 = vsel %vm2492, 0, %v3977
      %v4011 = vsel %vm2493, 0, %v3978
      %v4012 = vsel %vm2494, 0, %v3979
      %v4013 = vsel %vm2495, 0, %v3980
      %v4014 = vsel %vm2496, 0, %v3981
      %v4015 = vsel %vm2497, 0, %v3982
      %v4016 = vsel %vm2498, 0, %v3983
      %v4017 = vsel %vm2499, 0, %v3984
      %v4018 = vsel %vm2500, 0, %v3985
      %v4019 = vsel %vm2501, 0, %v3986
      %v4020 = vsel %vm2502, 0, %v3987
      %v4021 = vsel %vm2503, 0, %v3988
      %v4022 = vsel %vm2504, 0, %v3989
      %v4023 = vsel %vm2505, 0, %v3990
      %v4024 = vsel %vm2506, 0, %v3991
      %v4025 = vsel %vm2507, 0, %v3992
      %v4026 = vsel %vm2508, 0, %v3993
      %v4027 = vsel %vm2509, 0, %v3994
      %v4028 = vsel %vm2510, 0, %v3995
      %v4029 = vsel %vm2511, 0, %v3996
      %v4030 = vsel %vm2512, 0, %v3997
      %v4031 = vsel %vm2513, 0, %v3998
      %v4032 = vsel %vm2514, 0, %v3999
      %s4033 = scalar_lea.vmem %s1, 320
      %v4034 = vld [vmem:[%s4033] sm:$0xf]
      %v4035 = vld [vmem:[%s4033 + $0x4] sm:$0xf]
      %v4036 = vld [vmem:[%s4033 + $0x8] sm:$0xf]
      %v4037 = vld [vmem:[%s4033 + $0xc] sm:$0xf]
      %v4038 = vld [vmem:[%s4033 + $0x10] sm:$0xf]
      %v4039 = vld [vmem:[%s4033 + $0x14] sm:$0xf]
      %v4040 = vld [vmem:[%s4033 + $0x18] sm:$0xf]
      %v4041 = vld [vmem:[%s4033 + $0x1c] sm:$0xf]
      %v4042 = vld [vmem:[%s4033 + $0x20] sm:$0xf]
      %v4043 = vld [vmem:[%s4033 + $0x24] sm:$0xf]
      %v4044 = vld [vmem:[%s4033 + $0x28] sm:$0xf]
      %v4045 = vld [vmem:[%s4033 + $0x2c] sm:$0xf]
      %v4046 = vld [vmem:[%s4033 + $0x30] sm:$0xf]
      %v4047 = vld [vmem:[%s4033 + $0x34] sm:$0xf]
      %v4048 = vld [vmem:[%s4033 + $0x38] sm:$0xf]
      %v4049 = vld [vmem:[%s4033 + $0x3c] sm:$0xf]
      %v4083 = vunpack.c.l.b16 %v4000
      %v4084 = vunpack.c.l.b16 %v4001
      %v4085 = vunpack.c.l.b16 %v4002
      %v4086 = vunpack.c.l.b16 %v4003
      %v4087 = vunpack.c.l.b16 %v4004
      %v4088 = vunpack.c.l.b16 %v4005
      %v4089 = vunpack.c.l.b16 %v4006
      %v4090 = vunpack.c.l.b16 %v4007
      %v4091 = vunpack.c.l.b16 %v4008
      %v4092 = vunpack.c.l.b16 %v4009
      %v4093 = vunpack.c.l.b16 %v4010
      %v4094 = vunpack.c.l.b16 %v4011
      %v4095 = vunpack.c.l.b16 %v4012
      %v4096 = vunpack.c.l.b16 %v4013
      %v4097 = vunpack.c.l.b16 %v4014
      %v4098 = vunpack.c.l.b16 %v4015
      %v4099 = vunpack.c.l.b16 %v4016
      %v4100 = vunpack.c.l.b16 %v4017
      %v4101 = vunpack.c.l.b16 %v4018
      %v4102 = vunpack.c.l.b16 %v4019
      %v4103 = vunpack.c.l.b16 %v4020
      %v4104 = vunpack.c.l.b16 %v4021
      %v4105 = vunpack.c.l.b16 %v4022
      %v4106 = vunpack.c.l.b16 %v4023
      %v4107 = vunpack.c.l.b16 %v4024
      %v4108 = vunpack.c.l.b16 %v4025
      %v4109 = vunpack.c.l.b16 %v4026
      %v4110 = vunpack.c.l.b16 %v4027
      %v4111 = vunpack.c.l.b16 %v4028
      %v4112 = vunpack.c.l.b16 %v4029
      %v4113 = vunpack.c.l.b16 %v4030
      %v4114 = vunpack.c.l.b16 %v4031
      %v4115 = vunpack.c.l.b16 %v4032
      %v4116 = vpack.c.b16 %v4084, %v4083
      %v4117 = vpack.c.b16 %v4086, %v4085
      %v4118 = vpack.c.b16 %v4088, %v4087
      %v4119 = vpack.c.b16 %v4090, %v4089
      %v4120 = vpack.c.b16 %v4092, %v4091
      %v4121 = vpack.c.b16 %v4094, %v4093
      %v4122 = vpack.c.b16 %v4096, %v4095
      %v4123 = vpack.c.b16 %v4098, %v4097
      %v4124 = vpack.c.b16 %v4100, %v4099
      %v4125 = vpack.c.b16 %v4102, %v4101
      %v4126 = vpack.c.b16 %v4104, %v4103
      %v4127 = vpack.c.b16 %v4106, %v4105
      %v4128 = vpack.c.b16 %v4108, %v4107
      %v4129 = vpack.c.b16 %v4110, %v4109
      %v4130 = vpack.c.b16 %v4112, %v4111
      %v4131 = vpack.c.b16 %v4114, %v4113
      %v4132 = vpack.c.b16 %v4115, %v4115
      %v4134 = vshrl.u32 %v4116, 16
      %v4136 = vshll.u32 %v4116, 16
      %v4138 = vrot.slane %v4136, 1
      %v4139 = vor.u32 %v4134, %v4138
      %v4141 = vshll.u32 %v4117, 16
      %v4143 = vrot.slane %v4141, 1
      %v4144 = vsel %vm2648, %v4139, %v4143
      %v4145 = vshrl.u32 %v4117, 16
      %v4147 = vor.u32 %v4145, %v4143
      %v4149 = vshll.u32 %v4118, 16
      %v4151 = vrot.slane %v4149, 1
      %v4152 = vsel %vm2648, %v4147, %v4151
      %v4153 = vshrl.u32 %v4118, 16
      %v4155 = vor.u32 %v4153, %v4151
      %v4157 = vshll.u32 %v4119, 16
      %v4159 = vrot.slane %v4157, 1
      %v4160 = vsel %vm2648, %v4155, %v4159
      %v4161 = vshrl.u32 %v4119, 16
      %v4163 = vor.u32 %v4161, %v4159
      %v4165 = vshll.u32 %v4120, 16
      %v4167 = vrot.slane %v4165, 1
      %v4168 = vsel %vm2648, %v4163, %v4167
      %v4169 = vshrl.u32 %v4120, 16
      %v4171 = vor.u32 %v4169, %v4167
      %v4173 = vshll.u32 %v4121, 16
      %v4175 = vrot.slane %v4173, 1
      %v4176 = vsel %vm2648, %v4171, %v4175
      %v4177 = vshrl.u32 %v4121, 16
      %v4179 = vor.u32 %v4177, %v4175
      %v4181 = vshll.u32 %v4122, 16
      %v4183 = vrot.slane %v4181, 1
      %v4184 = vsel %vm2648, %v4179, %v4183
      %v4185 = vshrl.u32 %v4122, 16
      %v4187 = vor.u32 %v4185, %v4183
      %v4189 = vshll.u32 %v4123, 16
      %v4191 = vrot.slane %v4189, 1
      %v4192 = vsel %vm2648, %v4187, %v4191
      %v4193 = vshrl.u32 %v4123, 16
      %v4195 = vor.u32 %v4193, %v4191
      %v4197 = vshll.u32 %v4124, 16
      %v4199 = vrot.slane %v4197, 1
      %v4200 = vsel %vm2648, %v4195, %v4199
      %v4201 = vshrl.u32 %v4124, 16
      %v4203 = vor.u32 %v4201, %v4199
      %v4205 = vshll.u32 %v4125, 16
      %v4207 = vrot.slane %v4205, 1
      %v4208 = vsel %vm2648, %v4203, %v4207
      %v4209 = vshrl.u32 %v4125, 16
      %v4211 = vor.u32 %v4209, %v4207
      %v4213 = vshll.u32 %v4126, 16
      %v4215 = vrot.slane %v4213, 1
      %v4216 = vsel %vm2648, %v4211, %v4215
      %v4217 = vshrl.u32 %v4126, 16
      %v4219 = vor.u32 %v4217, %v4215
      %v4221 = vshll.u32 %v4127, 16
      %v4223 = vrot.slane %v4221, 1
      %v4224 = vsel %vm2648, %v4219, %v4223
      %v4225 = vshrl.u32 %v4127, 16
      %v4227 = vor.u32 %v4225, %v4223
      %v4229 = vshll.u32 %v4128, 16
      %v4231 = vrot.slane %v4229, 1
      %v4232 = vsel %vm2648, %v4227, %v4231
      %v4233 = vshrl.u32 %v4128, 16
      %v4235 = vor.u32 %v4233, %v4231
      %v4237 = vshll.u32 %v4129, 16
      %v4239 = vrot.slane %v4237, 1
      %v4240 = vsel %vm2648, %v4235, %v4239
      %v4241 = vshrl.u32 %v4129, 16
      %v4243 = vor.u32 %v4241, %v4239
      %v4245 = vshll.u32 %v4130, 16
      %v4247 = vrot.slane %v4245, 1
      %v4248 = vsel %vm2648, %v4243, %v4247
      %v4249 = vshrl.u32 %v4130, 16
      %v4251 = vor.u32 %v4249, %v4247
      %v4253 = vshll.u32 %v4131, 16
      %v4255 = vrot.slane %v4253, 1
      %v4256 = vsel %vm2648, %v4251, %v4255
      %v4257 = vshrl.u32 %v4131, 16
      %v4259 = vor.u32 %v4257, %v4255
      %v4261 = vshll.u32 %v4132, 16
      %v4263 = vrot.slane %v4261, 1
      %v4264 = vsel %vm2648, %v4259, %v4263
      %v4297 = vunpack.c.l.b16 %v4034
      %v4298 = vunpack.c.l.b16 %v4035
      %v4299 = vunpack.c.l.b16 %v4036
      %v4300 = vunpack.c.l.b16 %v4037
      %v4301 = vunpack.c.l.b16 %v4038
      %v4302 = vunpack.c.l.b16 %v4039
      %v4303 = vunpack.c.l.b16 %v4040
      %v4304 = vunpack.c.l.b16 %v4041
      %v4305 = vunpack.c.l.b16 %v4042
      %v4306 = vunpack.c.l.b16 %v4043
      %v4307 = vunpack.c.l.b16 %v4044
      %v4308 = vunpack.c.l.b16 %v4045
      %v4309 = vunpack.c.l.b16 %v4046
      %v4310 = vunpack.c.l.b16 %v4047
      %v4311 = vunpack.c.l.b16 %v4048
      %v4312 = vunpack.c.l.b16 %v4049
      %v4313 = vpack.c.b16 %v4298, %v4297
      %v4314 = vpack.c.b16 %v4300, %v4299
      %v4315 = vpack.c.b16 %v4302, %v4301
      %v4316 = vpack.c.b16 %v4304, %v4303
      %v4317 = vpack.c.b16 %v4306, %v4305
      %v4318 = vpack.c.b16 %v4308, %v4307
      %v4319 = vpack.c.b16 %v4310, %v4309
      %v4320 = vpack.c.b16 %v4312, %v4311
      %4329 = vmatprep.subr.bf16.mxu0 0
      %4330 = vmatpush1.bf16.msra.mxu0 %v4313
      %4331 = vmatprep.subr.bf16.mxu0 0
      %4332 = vmatpush1.bf16.msra.mxu0 %v4314
      %4333 = vmatprep.subr.bf16.mxu0 0
      %4334 = vmatpush1.bf16.msra.mxu0 %v4315
      %4335 = vmatprep.subr.bf16.mxu0 0
      %4336 = vmatpush1.bf16.msra.mxu0 %v4316
      %4337 = vmatprep.subr.bf16.mxu0 0
      %4338 = vmatpush1.bf16.msra.mxu0 %v4317
      %4339 = vmatprep.subr.bf16.mxu0 0
      %4340 = vmatpush1.bf16.msra.mxu0 %v4318
      %4341 = vmatprep.subr.bf16.mxu0 0
      %4342 = vmatpush1.bf16.msra.mxu0 %v4319
      %4343 = vmatprep.subr.bf16.mxu0 0
      %4344 = vmatpush1.bf16.msra.mxu0 %v4320
      %4345 = vmatprep.subr.bf16.mxu0 0
      %4346 = vmatpush1.bf16.msra.mxu0 0
      %4347 = vmatprep.subr.bf16.mxu0 0
      %4348 = vmatpush1.bf16.msra.mxu0 0
      %4349 = vmatprep.subr.bf16.mxu0 0
      %4350 = vmatpush1.bf16.msra.mxu0 0
      %4351 = vmatprep.subr.bf16.mxu0 0
      %4352 = vmatpush1.bf16.msra.mxu0 0
      %4353 = vmatprep.subr.bf16.mxu0 0
      %4354 = vmatpush1.bf16.msra.mxu0 0
      %4355 = vmatprep.subr.bf16.mxu0 0
      %4356 = vmatpush1.bf16.msra.mxu0 0
      %4357 = vmatprep.subr.bf16.mxu0 0
      %4358 = vmatpush1.bf16.msra.mxu0 0
      %4359 = vmatprep.subr.bf16.mxu0 0
      %4360 = vmatpush1.bf16.msra.mxu0 0
      %4361 = vmatprep.mubr.bf16.mxu0 0
      %4362 = vmatmul.mubr.bf16.gmra.mrb[0].mxu0 %v4144
      %v4363 = vpop.f32.mrb[0].mxu0
      %v4364 = vadd.f32 0.0, %v4363
      %v4365 = vpop.f32.mrb[0].mxu0
      %v4366 = vpop.f32.mrb[0].mxu0
      %v4367 = vadd.f32 0.0, %v4366
      %v4368 = vpop.f32.mrb[0].mxu0
      %4369 = vmatprep.mubr.bf16.mxu0 0
      %4370 = vmatmul.mubr.bf16.gmra.mrb[0].mxu0 %v4152
      %v4371 = vpop.f32.mrb[0].mxu0
      %v4372 = vadd.f32 0.0, %v4371
      %v4373 = vpop.f32.mrb[0].mxu0
      %v4374 = vpop.f32.mrb[0].mxu0
      %v4375 = vadd.f32 0.0, %v4374
      %v4376 = vpop.f32.mrb[0].mxu0
      %4377 = vmatprep.mubr.bf16.mxu0 0
      %4378 = vmatmul.mubr.bf16.gmra.mrb[0].mxu0 %v4160
      %v4379 = vpop.f32.mrb[0].mxu0
      %v4380 = vadd.f32 0.0, %v4379
      %v4381 = vpop.f32.mrb[0].mxu0
      %v4382 = vpop.f32.mrb[0].mxu0
      %v4383 = vadd.f32 0.0, %v4382
      %v4384 = vpop.f32.mrb[0].mxu0
      %4385 = vmatprep.mubr.bf16.mxu0 0
      %4386 = vmatmul.mubr.bf16.gmra.mrb[0].mxu0 %v4168
      %v4387 = vpop.f32.mrb[0].mxu0
      %v4388 = vadd.f32 0.0, %v4387
      %v4389 = vpop.f32.mrb[0].mxu0
      %v4390 = vpop.f32.mrb[0].mxu0
      %v4391 = vadd.f32 0.0, %v4390
      %v4392 = vpop.f32.mrb[0].mxu0
      %4393 = vmatprep.mubr.bf16.mxu0 0
      %4394 = vmatmul.mubr.bf16.gmra.mrb[0].mxu0 %v4176
      %v4395 = vpop.f32.mrb[0].mxu0
      %v4396 = vadd.f32 0.0, %v4395
      %v4397 = vpop.f32.mrb[0].mxu0
      %v4398 = vpop.f32.mrb[0].mxu0
      %v4399 = vadd.f32 0.0, %v4398
      %v4400 = vpop.f32.mrb[0].mxu0
      %4401 = vmatprep.mubr.bf16.mxu0 0
      %4402 = vmatmul.mubr.bf16.gmra.mrb[0].mxu0 %v4184
      %v4403 = vpop.f32.mrb[0].mxu0
      %v4404 = vadd.f32 0.0, %v4403
      %v4405 = vpop.f32.mrb[0].mxu0
      %v4406 = vpop.f32.mrb[0].mxu0
      %v4407 = vadd.f32 0.0, %v4406
      %v4408 = vpop.f32.mrb[0].mxu0
      %4409 = vmatprep.mubr.bf16.mxu0 0
      %4410 = vmatmul.mubr.bf16.gmra.mrb[0].mxu0 %v4192
      %v4411 = vpop.f32.mrb[0].mxu0
      %v4412 = vadd.f32 0.0, %v4411
      %v4413 = vpop.f32.mrb[0].mxu0
      %v4414 = vpop.f32.mrb[0].mxu0
      %v4415 = vadd.f32 0.0, %v4414
      %v4416 = vpop.f32.mrb[0].mxu0
      %4417 = vmatprep.mubr.bf16.mxu0 0
      %4418 = vmatmul.mubr.bf16.gmra.mrb[0].mxu0 %v4200
      %v4419 = vpop.f32.mrb[0].mxu0
      %v4420 = vadd.f32 0.0, %v4419
      %v4421 = vpop.f32.mrb[0].mxu0
      %v4422 = vpop.f32.mrb[0].mxu0
      %v4423 = vadd.f32 0.0, %v4422
      %v4424 = vpop.f32.mrb[0].mxu0
      %4425 = vmatprep.mubr.bf16.mxu0 0
      %4426 = vmatmul.mubr.bf16.gmra.mrb[0].mxu0 %v4208
      %v4427 = vpop.f32.mrb[0].mxu0
      %v4428 = vadd.f32 0.0, %v4427
      %v4429 = vpop.f32.mrb[0].mxu0
      %v4430 = vpop.f32.mrb[0].mxu0
      %v4431 = vadd.f32 0.0, %v4430
      %v4432 = vpop.f32.mrb[0].mxu0
      %4433 = vmatprep.mubr.bf16.mxu0 0
      %4434 = vmatmul.mubr.bf16.gmra.mrb[0].mxu0 %v4216
      %v4435 = vpop.f32.mrb[0].mxu0
      %v4436 = vadd.f32 0.0, %v4435
      %v4437 = vpop.f32.mrb[0].mxu0
      %v4438 = vpop.f32.mrb[0].mxu0
      %v4439 = vadd.f32 0.0, %v4438
      %v4440 = vpop.f32.mrb[0].mxu0
      %4441 = vmatprep.mubr.bf16.mxu0 0
      %4442 = vmatmul.mubr.bf16.gmra.mrb[0].mxu0 %v4224
      %v4443 = vpop.f32.mrb[0].mxu0
      %v4444 = vadd.f32 0.0, %v4443
      %v4445 = vpop.f32.mrb[0].mxu0
      %v4446 = vpop.f32.mrb[0].mxu0
      %v4447 = vadd.f32 0.0, %v4446
      %v4448 = vpop.f32.mrb[0].mxu0
      %4449 = vmatprep.mubr.bf16.mxu0 0
      %4450 = vmatmul.mubr.bf16.gmra.mrb[0].mxu0 %v4232
      %v4451 = vpop.f32.mrb[0].mxu0
      %v4452 = vadd.f32 0.0, %v4451
      %v4453 = vpop.f32.mrb[0].mxu0
      %v4454 = vpop.f32.mrb[0].mxu0
      %v4455 = vadd.f32 0.0, %v4454
      %v4456 = vpop.f32.mrb[0].mxu0
      %4457 = vmatprep.mubr.bf16.mxu0 0
      %4458 = vmatmul.mubr.bf16.gmra.mrb[0].mxu0 %v4240
      %v4459 = vpop.f32.mrb[0].mxu0
      %v4460 = vadd.f32 0.0, %v4459
      %v4461 = vpop.f32.mrb[0].mxu0
      %v4462 = vpop.f32.mrb[0].mxu0
      %v4463 = vadd.f32 0.0, %v4462
      %v4464 = vpop.f32.mrb[0].mxu0
      %4465 = vmatprep.mubr.bf16.mxu0 0
      %4466 = vmatmul.mubr.bf16.gmra.mrb[0].mxu0 %v4248
      %v4467 = vpop.f32.mrb[0].mxu0
      %v4468 = vadd.f32 0.0, %v4467
      %v4469 = vpop.f32.mrb[0].mxu0
      %v4470 = vpop.f32.mrb[0].mxu0
      %v4471 = vadd.f32 0.0, %v4470
      %v4472 = vpop.f32.mrb[0].mxu0
      %4473 = vmatprep.mubr.bf16.mxu0 0
      %4474 = vmatmul.mubr.bf16.gmra.mrb[0].mxu0 %v4256
      %v4475 = vpop.f32.mrb[0].mxu0
      %v4476 = vadd.f32 0.0, %v4475
      %v4477 = vpop.f32.mrb[0].mxu0
      %v4478 = vpop.f32.mrb[0].mxu0
      %v4479 = vadd.f32 0.0, %v4478
      %v4480 = vpop.f32.mrb[0].mxu0
      %4481 = vmatprep.mubr.bf16.mxu0 0
      %4482 = vmatmul.mubr.bf16.gmra.mrb[0].mxu0 %v4264
      %v4483 = vpop.f32.mrb[0].mxu0
      %v4484 = vadd.f32 0.0, %v4483
      %v4485 = vpop.f32.mrb[0].mxu0
      %v4486 = vpop.f32.mrb[0].mxu0
      %v4487 = vadd.f32 0.0, %v4486
      %v4488 = vpop.f32.mrb[0].mxu0
      %4489 = vdwg.mxu0
      %v4490 = vadd.f32 %v3935, %v4364
      %v4491 = vadd.f32 %v3936, %v4367
      %v4492 = vadd.f32 %v3937, %v4372
      %v4493 = vadd.f32 %v3938, %v4375
      %v4494 = vadd.f32 %v3939, %v4380
      %v4495 = vadd.f32 %v3940, %v4383
      %v4496 = vadd.f32 %v3941, %v4388
      %v4497 = vadd.f32 %v3942, %v4391
      %v4498 = vadd.f32 %v3943, %v4396
      %v4499 = vadd.f32 %v3944, %v4399
      %v4500 = vadd.f32 %v3945, %v4404
      %v4501 = vadd.f32 %v3946, %v4407
      %v4502 = vadd.f32 %v3947, %v4412
      %v4503 = vadd.f32 %v3948, %v4415
      %v4504 = vadd.f32 %v3949, %v4420
      %v4505 = vadd.f32 %v3950, %v4423
      %v4506 = vadd.f32 %v3951, %v4428
      %v4507 = vadd.f32 %v3952, %v4431
      %v4508 = vadd.f32 %v3953, %v4436
      %v4509 = vadd.f32 %v3954, %v4439
      %v4510 = vadd.f32 %v3955, %v4444
      %v4511 = vadd.f32 %v3956, %v4447
      %v4512 = vadd.f32 %v3957, %v4452
      %v4513 = vadd.f32 %v3958, %v4455
      %v4514 = vadd.f32 %v3959, %v4460
      %v4515 = vadd.f32 %v3960, %v4463
      %v4516 = vadd.f32 %v3961, %v4468
      %v4517 = vadd.f32 %v3962, %v4471
      %v4518 = vadd.f32 %v3963, %v4476
      %v4519 = vadd.f32 %v3964, %v4479
      %v4520 = vadd.f32 %v3965, %v4484
      %v4521 = vadd.f32 %v3966, %v4487
      %v4522 = vld [vmem:[%s187 + $0x10] sm:$0x8]
      %v4523 = vld [vmem:[%s187 + $0x14] sm:$0xf]
      %v4524 = vld [vmem:[%s187 + $0x18] sm:$0xf]
      %v4525 = vld [vmem:[%s187 + $0x1c] sm:$0xf]
      %v4526 = vld [vmem:[%s187 + $0x20] sm:$0xf]
      %v4527 = vld [vmem:[%s187 + $0x24] sm:$0xf]
      %v4528 = vld [vmem:[%s187 + $0x28] sm:$0xf]
      %v4529 = vld [vmem:[%s187 + $0x2c] sm:$0xf]
      %v4530 = vld [vmem:[%s187 + $0x30] sm:$0xf]
      %v4531 = vld [vmem:[%s187 + $0x34] sm:$0xf]
      %v4532 = vld [vmem:[%s187 + $0x38] sm:$0xf]
      %v4533 = vld [vmem:[%s187 + $0x3c] sm:$0xf]
      %v4534 = vld [vmem:[%s187 + $0x40] sm:$0xf]
      %v4535 = vld [vmem:[%s187 + $0x44] sm:$0xf]
      %v4536 = vld [vmem:[%s187 + $0x48] sm:$0xf]
      %v4537 = vld [vmem:[%s187 + $0x4c] sm:$0xf]
      %v4538 = vld [vmem:[%s187 + $0x50] sm:$0xf]
      %v4539 = vld [vmem:[%s187 + $0x54] sm:$0xf]
      %v4540 = vld [vmem:[%s187 + $0x58] sm:$0xf]
      %v4541 = vld [vmem:[%s187 + $0x5c] sm:$0xf]
      %v4542 = vld [vmem:[%s187 + $0x60] sm:$0xf]
      %v4543 = vld [vmem:[%s187 + $0x64] sm:$0xf]
      %v4544 = vld [vmem:[%s187 + $0x68] sm:$0xf]
      %v4545 = vld [vmem:[%s187 + $0x6c] sm:$0xf]
      %v4546 = vld [vmem:[%s187 + $0x70] sm:$0xf]
      %v4547 = vld [vmem:[%s187 + $0x74] sm:$0xf]
      %v4548 = vld [vmem:[%s187 + $0x78] sm:$0xf]
      %v4549 = vld [vmem:[%s187 + $0x7c] sm:$0xf]
      %v4550 = vld [vmem:[%s187 + $0x80] sm:$0xf]
      %v4551 = vld [vmem:[%s187 + $0x84] sm:$0xf]
      %v4552 = vld [vmem:[%s187 + $0x88] sm:$0xf]
      %v4553 = vld [vmem:[%s187 + $0x8c] sm:$0xf]
      %v4554 = vld [vmem:[%s187 + $0x90] sm:$0xf]
      %v4555 = vsel %vm1166, 0, %v4522
      %v4556 = vsel %vm1167, 0, %v4523
      %v4557 = vsel %vm1168, 0, %v4524
      %v4558 = vsel %vm1169, 0, %v4525
      %v4559 = vsel %vm1170, 0, %v4526
      %v4560 = vsel %vm1171, 0, %v4527
      %v4561 = vsel %vm1172, 0, %v4528
      %v4562 = vsel %vm1173, 0, %v4529
      %v4563 = vsel %vm1174, 0, %v4530
      %v4564 = vsel %vm1175, 0, %v4531
      %v4565 = vsel %vm1176, 0, %v4532
      %v4566 = vsel %vm1177, 0, %v4533
      %v4567 = vsel %vm1178, 0, %v4534
      %v4568 = vsel %vm1179, 0, %v4535
      %v4569 = vsel %vm1180, 0, %v4536
      %v4570 = vsel %vm1181, 0, %v4537
      %v4571 = vsel %vm1182, 0, %v4538
      %v4572 = vsel %vm1183, 0, %v4539
      %v4573 = vsel %vm1184, 0, %v4540
      %v4574 = vsel %vm1185, 0, %v4541
      %v4575 = vsel %vm1186, 0, %v4542
      %v4576 = vsel %vm1187, 0, %v4543
      %v4577 = vsel %vm1188, 0, %v4544
      %v4578 = vsel %vm1189, 0, %v4545
      %v4579 = vsel %vm1190, 0, %v4546
      %v4580 = vsel %vm1191, 0, %v4547
      %v4581 = vsel %vm1192, 0, %v4548
      %v4582 = vsel %vm1193, 0, %v4549
      %v4583 = vsel %vm1194, 0, %v4550
      %v4584 = vsel %vm1195, 0, %v4551
      %v4585 = vsel %vm1196, 0, %v4552
      %v4586 = vsel %vm1197, 0, %v4553
      %v4587 = vsel %vm1198, 0, %v4554
      %s4588 = scalar_lea.vmem %s1, 384
      %v4589 = vld [vmem:[%s4588] sm:$0xf]
      %v4590 = vld [vmem:[%s4588 + $0x4] sm:$0xf]
      %v4591 = vld [vmem:[%s4588 + $0x8] sm:$0xf]
      %v4592 = vld [vmem:[%s4588 + $0xc] sm:$0xf]
      %v4593 = vld [vmem:[%s4588 + $0x10] sm:$0xf]
      %v4594 = vld [vmem:[%s4588 + $0x14] sm:$0xf]
      %v4595 = vld [vmem:[%s4588 + $0x18] sm:$0xf]
      %v4596 = vld [vmem:[%s4588 + $0x1c] sm:$0xf]
      %v4597 = vld [vmem:[%s4588 + $0x20] sm:$0xf]
      %v4598 = vld [vmem:[%s4588 + $0x24] sm:$0xf]
      %v4599 = vld [vmem:[%s4588 + $0x28] sm:$0xf]
      %v4600 = vld [vmem:[%s4588 + $0x2c] sm:$0xf]
      %v4601 = vld [vmem:[%s4588 + $0x30] sm:$0xf]
      %v4602 = vld [vmem:[%s4588 + $0x34] sm:$0xf]
      %v4603 = vld [vmem:[%s4588 + $0x38] sm:$0xf]
      %v4604 = vld [vmem:[%s4588 + $0x3c] sm:$0xf]
      %v4638 = vunpack.c.l.b16 %v4555
      %v4639 = vunpack.c.l.b16 %v4556
      %v4640 = vunpack.c.l.b16 %v4557
      %v4641 = vunpack.c.l.b16 %v4558
      %v4642 = vunpack.c.l.b16 %v4559
      %v4643 = vunpack.c.l.b16 %v4560
      %v4644 = vunpack.c.l.b16 %v4561
      %v4645 = vunpack.c.l.b16 %v4562
      %v4646 = vunpack.c.l.b16 %v4563
      %v4647 = vunpack.c.l.b16 %v4564
      %v4648 = vunpack.c.l.b16 %v4565
      %v4649 = vunpack.c.l.b16 %v4566
      %v4650 = vunpack.c.l.b16 %v4567
      %v4651 = vunpack.c.l.b16 %v4568
      %v4652 = vunpack.c.l.b16 %v4569
      %v4653 = vunpack.c.l.b16 %v4570
      %v4654 = vunpack.c.l.b16 %v4571
      %v4655 = vunpack.c.l.b16 %v4572
      %v4656 = vunpack.c.l.b16 %v4573
      %v4657 = vunpack.c.l.b16 %v4574
      %v4658 = vunpack.c.l.b16 %v4575
      %v4659 = vunpack.c.l.b16 %v4576
      %v4660 = vunpack.c.l.b16 %v4577
      %v4661 = vunpack.c.l.b16 %v4578
      %v4662 = vunpack.c.l.b16 %v4579
      %v4663 = vunpack.c.l.b16 %v4580
      %v4664 = vunpack.c.l.b16 %v4581
      %v4665 = vunpack.c.l.b16 %v4582
      %v4666 = vunpack.c.l.b16 %v4583
      %v4667 = vunpack.c.l.b16 %v4584
      %v4668 = vunpack.c.l.b16 %v4585
      %v4669 = vunpack.c.l.b16 %v4586
      %v4670 = vunpack.c.l.b16 %v4587
      %v4671 = vpack.c.b16 %v4639, %v4638
      %v4672 = vpack.c.b16 %v4641, %v4640
      %v4673 = vpack.c.b16 %v4643, %v4642
      %v4674 = vpack.c.b16 %v4645, %v4644
      %v4675 = vpack.c.b16 %v4647, %v4646
      %v4676 = vpack.c.b16 %v4649, %v4648
      %v4677 = vpack.c.b16 %v4651, %v4650
      %v4678 = vpack.c.b16 %v4653, %v4652
      %v4679 = vpack.c.b16 %v4655, %v4654
      %v4680 = vpack.c.b16 %v4657, %v4656
      %v4681 = vpack.c.b16 %v4659, %v4658
      %v4682 = vpack.c.b16 %v4661, %v4660
      %v4683 = vpack.c.b16 %v4663, %v4662
      %v4684 = vpack.c.b16 %v4665, %v4664
      %v4685 = vpack.c.b16 %v4667, %v4666
      %v4686 = vpack.c.b16 %v4669, %v4668
      %v4687 = vpack.c.b16 %v4670, %v4670
      %v4689 = vshrl.u32 %v4671, 16
      %v4691 = vrot.slane %v4689, 3
      %v4692 = vshll.u32 %v4671, 16
      %v4694 = vrot.slane %v4692, 4
      %v4695 = vor.u32 %v4691, %v4694
      %v4697 = vshrl.u32 %v4672, 16
      %v4699 = vrot.slane %v4697, 3
      %v4700 = vshll.u32 %v4672, 16
      %v4702 = vrot.slane %v4700, 4
      %v4703 = vor.u32 %v4699, %v4702
      %v4704 = vsel %vm1653, %v4695, %v4703
      %v4706 = vshrl.u32 %v4673, 16
      %v4708 = vrot.slane %v4706, 3
      %v4709 = vshll.u32 %v4673, 16
      %v4711 = vrot.slane %v4709, 4
      %v4712 = vor.u32 %v4708, %v4711
      %v4713 = vsel %vm1653, %v4703, %v4712
      %v4715 = vshrl.u32 %v4674, 16
      %v4717 = vrot.slane %v4715, 3
      %v4718 = vshll.u32 %v4674, 16
      %v4720 = vrot.slane %v4718, 4
      %v4721 = vor.u32 %v4717, %v4720
      %v4722 = vsel %vm1653, %v4712, %v4721
      %v4724 = vshrl.u32 %v4675, 16
      %v4726 = vrot.slane %v4724, 3
      %v4727 = vshll.u32 %v4675, 16
      %v4729 = vrot.slane %v4727, 4
      %v4730 = vor.u32 %v4726, %v4729
      %v4731 = vsel %vm1653, %v4721, %v4730
      %v4733 = vshrl.u32 %v4676, 16
      %v4735 = vrot.slane %v4733, 3
      %v4736 = vshll.u32 %v4676, 16
      %v4738 = vrot.slane %v4736, 4
      %v4739 = vor.u32 %v4735, %v4738
      %v4740 = vsel %vm1653, %v4730, %v4739
      %v4742 = vshrl.u32 %v4677, 16
      %v4744 = vrot.slane %v4742, 3
      %v4745 = vshll.u32 %v4677, 16
      %v4747 = vrot.slane %v4745, 4
      %v4748 = vor.u32 %v4744, %v4747
      %v4749 = vsel %vm1653, %v4739, %v4748
      %v4751 = vshrl.u32 %v4678, 16
      %v4753 = vrot.slane %v4751, 3
      %v4754 = vshll.u32 %v4678, 16
      %v4756 = vrot.slane %v4754, 4
      %v4757 = vor.u32 %v4753, %v4756
      %v4758 = vsel %vm1653, %v4748, %v4757
      %v4760 = vshrl.u32 %v4679, 16
      %v4762 = vrot.slane %v4760, 3
      %v4763 = vshll.u32 %v4679, 16
      %v4765 = vrot.slane %v4763, 4
      %v4766 = vor.u32 %v4762, %v4765
      %v4767 = vsel %vm1653, %v4757, %v4766
      %v4769 = vshrl.u32 %v4680, 16
      %v4771 = vrot.slane %v4769, 3
      %v4772 = vshll.u32 %v4680, 16
      %v4774 = vrot.slane %v4772, 4
      %v4775 = vor.u32 %v4771, %v4774
      %v4776 = vsel %vm1653, %v4766, %v4775
      %v4778 = vshrl.u32 %v4681, 16
      %v4780 = vrot.slane %v4778, 3
      %v4781 = vshll.u32 %v4681, 16
      %v4783 = vrot.slane %v4781, 4
      %v4784 = vor.u32 %v4780, %v4783
      %v4785 = vsel %vm1653, %v4775, %v4784
      %v4787 = vshrl.u32 %v4682, 16
      %v4789 = vrot.slane %v4787, 3
      %v4790 = vshll.u32 %v4682, 16
      %v4792 = vrot.slane %v4790, 4
      %v4793 = vor.u32 %v4789, %v4792
      %v4794 = vsel %vm1653, %v4784, %v4793
      %v4796 = vshrl.u32 %v4683, 16
      %v4798 = vrot.slane %v4796, 3
      %v4799 = vshll.u32 %v4683, 16
      %v4801 = vrot.slane %v4799, 4
      %v4802 = vor.u32 %v4798, %v4801
      %v4803 = vsel %vm1653, %v4793, %v4802
      %v4805 = vshrl.u32 %v4684, 16
      %v4807 = vrot.slane %v4805, 3
      %v4808 = vshll.u32 %v4684, 16
      %v4810 = vrot.slane %v4808, 4
      %v4811 = vor.u32 %v4807, %v4810
      %v4812 = vsel %vm1653, %v4802, %v4811
      %v4814 = vshrl.u32 %v4685, 16
      %v4816 = vrot.slane %v4814, 3
      %v4817 = vshll.u32 %v4685, 16
      %v4819 = vrot.slane %v4817, 4
      %v4820 = vor.u32 %v4816, %v4819
      %v4821 = vsel %vm1653, %v4811, %v4820
      %v4823 = vshrl.u32 %v4686, 16
      %v4825 = vrot.slane %v4823, 3
      %v4826 = vshll.u32 %v4686, 16
      %v4828 = vrot.slane %v4826, 4
      %v4829 = vor.u32 %v4825, %v4828
      %v4830 = vsel %vm1653, %v4820, %v4829
      %v4832 = vshrl.u32 %v4687, 16
      %v4834 = vrot.slane %v4832, 3
      %v4835 = vshll.u32 %v4687, 16
      %v4837 = vrot.slane %v4835, 4
      %v4838 = vor.u32 %v4834, %v4837
      %v4839 = vsel %vm1653, %v4829, %v4838
      %v4872 = vunpack.c.l.b16 %v4589
      %v4873 = vunpack.c.l.b16 %v4590
      %v4874 = vunpack.c.l.b16 %v4591
      %v4875 = vunpack.c.l.b16 %v4592
      %v4876 = vunpack.c.l.b16 %v4593
      %v4877 = vunpack.c.l.b16 %v4594
      %v4878 = vunpack.c.l.b16 %v4595
      %v4879 = vunpack.c.l.b16 %v4596
      %v4880 = vunpack.c.l.b16 %v4597
      %v4881 = vunpack.c.l.b16 %v4598
      %v4882 = vunpack.c.l.b16 %v4599
      %v4883 = vunpack.c.l.b16 %v4600
      %v4884 = vunpack.c.l.b16 %v4601
      %v4885 = vunpack.c.l.b16 %v4602
      %v4886 = vunpack.c.l.b16 %v4603
      %v4887 = vunpack.c.l.b16 %v4604
      %v4888 = vpack.c.b16 %v4873, %v4872
      %v4889 = vpack.c.b16 %v4875, %v4874
      %v4890 = vpack.c.b16 %v4877, %v4876
      %v4891 = vpack.c.b16 %v4879, %v4878
      %v4892 = vpack.c.b16 %v4881, %v4880
      %v4893 = vpack.c.b16 %v4883, %v4882
      %v4894 = vpack.c.b16 %v4885, %v4884
      %v4895 = vpack.c.b16 %v4887, %v4886
      %4904 = vmatprep.subr.bf16.mxu0 0
      %4905 = vmatpush1.bf16.msra.mxu0 %v4888
      %4906 = vmatprep.subr.bf16.mxu0 0
      %4907 = vmatpush1.bf16.msra.mxu0 %v4889
      %4908 = vmatprep.subr.bf16.mxu0 0
      %4909 = vmatpush1.bf16.msra.mxu0 %v4890
      %4910 = vmatprep.subr.bf16.mxu0 0
      %4911 = vmatpush1.bf16.msra.mxu0 %v4891
      %4912 = vmatprep.subr.bf16.mxu0 0
      %4913 = vmatpush1.bf16.msra.mxu0 %v4892
      %4914 = vmatprep.subr.bf16.mxu0 0
      %4915 = vmatpush1.bf16.msra.mxu0 %v4893
      %4916 = vmatprep.subr.bf16.mxu0 0
      %4917 = vmatpush1.bf16.msra.mxu0 %v4894
      %4918 = vmatprep.subr.bf16.mxu0 0
      %4919 = vmatpush1.bf16.msra.mxu0 %v4895
      %4920 = vmatprep.subr.bf16.mxu0 0
      %4921 = vmatpush1.bf16.msra.mxu0 0
      %4922 = vmatprep.subr.bf16.mxu0 0
      %4923 = vmatpush1.bf16.msra.mxu0 0
      %4924 = vmatprep.subr.bf16.mxu0 0
      %4925 = vmatpush1.bf16.msra.mxu0 0
      %4926 = vmatprep.subr.bf16.mxu0 0
      %4927 = vmatpush1.bf16.msra.mxu0 0
      %4928 = vmatprep.subr.bf16.mxu0 0
      %4929 = vmatpush1.bf16.msra.mxu0 0
      %4930 = vmatprep.subr.bf16.mxu0 0
      %4931 = vmatpush1.bf16.msra.mxu0 0
      %4932 = vmatprep.subr.bf16.mxu0 0
      %4933 = vmatpush1.bf16.msra.mxu0 0
      %4934 = vmatprep.subr.bf16.mxu0 0
      %4935 = vmatpush1.bf16.msra.mxu0 0
      %4936 = vmatprep.mubr.bf16.mxu0 0
      %4937 = vmatmul.mubr.bf16.gmra.mrb[0].mxu0 %v4704
      %v4938 = vpop.f32.mrb[0].mxu0
      %v4939 = vadd.f32 0.0, %v4938
      %v4940 = vpop.f32.mrb[0].mxu0
      %v4941 = vpop.f32.mrb[0].mxu0
      %v4942 = vadd.f32 0.0, %v4941
      %v4943 = vpop.f32.mrb[0].mxu0
      %4944 = vmatprep.mubr.bf16.mxu0 0
      %4945 = vmatmul.mubr.bf16.gmra.mrb[0].mxu0 %v4713
      %v4946 = vpop.f32.mrb[0].mxu0
      %v4947 = vadd.f32 0.0, %v4946
      %v4948 = vpop.f32.mrb[0].mxu0
      %v4949 = vpop.f32.mrb[0].mxu0
      %v4950 = vadd.f32 0.0, %v4949
      %v4951 = vpop.f32.mrb[0].mxu0
      %4952 = vmatprep.mubr.bf16.mxu0 0
      %4953 = vmatmul.mubr.bf16.gmra.mrb[0].mxu0 %v4722
      %v4954 = vpop.f32.mrb[0].mxu0
      %v4955 = vadd.f32 0.0, %v4954
      %v4956 = vpop.f32.mrb[0].mxu0
      %v4957 = vpop.f32.mrb[0].mxu0
      %v4958 = vadd.f32 0.0, %v4957
      %v4959 = vpop.f32.mrb[0].mxu0
      %4960 = vmatprep.mubr.bf16.mxu0 0
      %4961 = vmatmul.mubr.bf16.gmra.mrb[0].mxu0 %v4731
      %v4962 = vpop.f32.mrb[0].mxu0
      %v4963 = vadd.f32 0.0, %v4962
      %v4964 = vpop.f32.mrb[0].mxu0
      %v4965 = vpop.f32.mrb[0].mxu0
      %v4966 = vadd.f32 0.0, %v4965
      %v4967 = vpop.f32.mrb[0].mxu0
      %4968 = vmatprep.mubr.bf16.mxu0 0
      %4969 = vmatmul.mubr.bf16.gmra.mrb[0].mxu0 %v4740
      %v4970 = vpop.f32.mrb[0].mxu0
      %v4971 = vadd.f32 0.0, %v4970
      %v4972 = vpop.f32.mrb[0].mxu0
      %v4973 = vpop.f32.mrb[0].mxu0
      %v4974 = vadd.f32 0.0, %v4973
      %v4975 = vpop.f32.mrb[0].mxu0
      %4976 = vmatprep.mubr.bf16.mxu0 0
      %4977 = vmatmul.mubr.bf16.gmra.mrb[0].mxu0 %v4749
      %v4978 = vpop.f32.mrb[0].mxu0
      %v4979 = vadd.f32 0.0, %v4978
      %v4980 = vpop.f32.mrb[0].mxu0
      %v4981 = vpop.f32.mrb[0].mxu0
      %v4982 = vadd.f32 0.0, %v4981
      %v4983 = vpop.f32.mrb[0].mxu0
      %4984 = vmatprep.mubr.bf16.mxu0 0
      %4985 = vmatmul.mubr.bf16.gmra.mrb[0].mxu0 %v4758
      %v4986 = vpop.f32.mrb[0].mxu0
      %v4987 = vadd.f32 0.0, %v4986
      %v4988 = vpop.f32.mrb[0].mxu0
      %v4989 = vpop.f32.mrb[0].mxu0
      %v4990 = vadd.f32 0.0, %v4989
      %v4991 = vpop.f32.mrb[0].mxu0
      %4992 = vmatprep.mubr.bf16.mxu0 0
      %4993 = vmatmul.mubr.bf16.gmra.mrb[0].mxu0 %v4767
      %v4994 = vpop.f32.mrb[0].mxu0
      %v4995 = vadd.f32 0.0, %v4994
      %v4996 = vpop.f32.mrb[0].mxu0
      %v4997 = vpop.f32.mrb[0].mxu0
      %v4998 = vadd.f32 0.0, %v4997
      %v4999 = vpop.f32.mrb[0].mxu0
      %5000 = vmatprep.mubr.bf16.mxu0 0
      %5001 = vmatmul.mubr.bf16.gmra.mrb[0].mxu0 %v4776
      %v5002 = vpop.f32.mrb[0].mxu0
      %v5003 = vadd.f32 0.0, %v5002
      %v5004 = vpop.f32.mrb[0].mxu0
      %v5005 = vpop.f32.mrb[0].mxu0
      %v5006 = vadd.f32 0.0, %v5005
      %v5007 = vpop.f32.mrb[0].mxu0
      %5008 = vmatprep.mubr.bf16.mxu0 0
      %5009 = vmatmul.mubr.bf16.gmra.mrb[0].mxu0 %v4785
      %v5010 = vpop.f32.mrb[0].mxu0
      %v5011 = vadd.f32 0.0, %v5010
      %v5012 = vpop.f32.mrb[0].mxu0
      %v5013 = vpop.f32.mrb[0].mxu0
      %v5014 = vadd.f32 0.0, %v5013
      %v5015 = vpop.f32.mrb[0].mxu0
      %5016 = vmatprep.mubr.bf16.mxu0 0
      %5017 = vmatmul.mubr.bf16.gmra.mrb[0].mxu0 %v4794
      %v5018 = vpop.f32.mrb[0].mxu0
      %v5019 = vadd.f32 0.0, %v5018
      %v5020 = vpop.f32.mrb[0].mxu0
      %v5021 = vpop.f32.mrb[0].mxu0
      %v5022 = vadd.f32 0.0, %v5021
      %v5023 = vpop.f32.mrb[0].mxu0
      %5024 = vmatprep.mubr.bf16.mxu0 0
      %5025 = vmatmul.mubr.bf16.gmra.mrb[0].mxu0 %v4803
      %v5026 = vpop.f32.mrb[0].mxu0
      %v5027 = vadd.f32 0.0, %v5026
      %v5028 = vpop.f32.mrb[0].mxu0
      %v5029 = vpop.f32.mrb[0].mxu0
      %v5030 = vadd.f32 0.0, %v5029
      %v5031 = vpop.f32.mrb[0].mxu0
      %5032 = vmatprep.mubr.bf16.mxu0 0
      %5033 = vmatmul.mubr.bf16.gmra.mrb[0].mxu0 %v4812
      %v5034 = vpop.f32.mrb[0].mxu0
      %v5035 = vadd.f32 0.0, %v5034
      %v5036 = vpop.f32.mrb[0].mxu0
      %v5037 = vpop.f32.mrb[0].mxu0
      %v5038 = vadd.f32 0.0, %v5037
      %v5039 = vpop.f32.mrb[0].mxu0
      %5040 = vmatprep.mubr.bf16.mxu0 0
      %5041 = vmatmul.mubr.bf16.gmra.mrb[0].mxu0 %v4821
      %v5042 = vpop.f32.mrb[0].mxu0
      %v5043 = vadd.f32 0.0, %v5042
      %v5044 = vpop.f32.mrb[0].mxu0
      %v5045 = vpop.f32.mrb[0].mxu0
      %v5046 = vadd.f32 0.0, %v5045
      %v5047 = vpop.f32.mrb[0].mxu0
      %5048 = vmatprep.mubr.bf16.mxu0 0
      %5049 = vmatmul.mubr.bf16.gmra.mrb[0].mxu0 %v4830
      %v5050 = vpop.f32.mrb[0].mxu0
      %v5051 = vadd.f32 0.0, %v5050
      %v5052 = vpop.f32.mrb[0].mxu0
      %v5053 = vpop.f32.mrb[0].mxu0
      %v5054 = vadd.f32 0.0, %v5053
      %v5055 = vpop.f32.mrb[0].mxu0
      %5056 = vmatprep.mubr.bf16.mxu0 0
      %5057 = vmatmul.mubr.bf16.gmra.mrb[0].mxu0 %v4839
      %v5058 = vpop.f32.mrb[0].mxu0
      %v5059 = vadd.f32 0.0, %v5058
      %v5060 = vpop.f32.mrb[0].mxu0
      %v5061 = vpop.f32.mrb[0].mxu0
      %v5062 = vadd.f32 0.0, %v5061
      %v5063 = vpop.f32.mrb[0].mxu0
      %5064 = vdwg.mxu0
      %v5065 = vadd.f32 %v4490, %v4939
      %v5066 = vadd.f32 %v4491, %v4942
      %v5067 = vadd.f32 %v4492, %v4947
      %v5068 = vadd.f32 %v4493, %v4950
      %v5069 = vadd.f32 %v4494, %v4955
      %v5070 = vadd.f32 %v4495, %v4958
      %v5071 = vadd.f32 %v4496, %v4963
      %v5072 = vadd.f32 %v4497, %v4966
      %v5073 = vadd.f32 %v4498, %v4971
      %v5074 = vadd.f32 %v4499, %v4974
      %v5075 = vadd.f32 %v4500, %v4979
      %v5076 = vadd.f32 %v4501, %v4982
      %v5077 = vadd.f32 %v4502, %v4987
      %v5078 = vadd.f32 %v4503, %v4990
      %v5079 = vadd.f32 %v4504, %v4995
      %v5080 = vadd.f32 %v4505, %v4998
      %v5081 = vadd.f32 %v4506, %v5003
      %v5082 = vadd.f32 %v4507, %v5006
      %v5083 = vadd.f32 %v4508, %v5011
      %v5084 = vadd.f32 %v4509, %v5014
      %v5085 = vadd.f32 %v4510, %v5019
      %v5086 = vadd.f32 %v4511, %v5022
      %v5087 = vadd.f32 %v4512, %v5027
      %v5088 = vadd.f32 %v4513, %v5030
      %v5089 = vadd.f32 %v4514, %v5035
      %v5090 = vadd.f32 %v4515, %v5038
      %v5091 = vadd.f32 %v4516, %v5043
      %v5092 = vadd.f32 %v4517, %v5046
      %v5093 = vadd.f32 %v4518, %v5051
      %v5094 = vadd.f32 %v4519, %v5054
      %v5095 = vadd.f32 %v4520, %v5059
      %v5096 = vadd.f32 %v4521, %v5062
      %s5097 = scalar_lea.vmem %s1, 448
      %v5098 = vld [vmem:[%s5097] sm:$0xf]
      %v5099 = vld [vmem:[%s5097 + $0x4] sm:$0xf]
      %v5100 = vld [vmem:[%s5097 + $0x8] sm:$0xf]
      %v5101 = vld [vmem:[%s5097 + $0xc] sm:$0xf]
      %v5102 = vld [vmem:[%s5097 + $0x10] sm:$0xf]
      %v5103 = vld [vmem:[%s5097 + $0x14] sm:$0xf]
      %v5104 = vld [vmem:[%s5097 + $0x18] sm:$0xf]
      %v5105 = vld [vmem:[%s5097 + $0x1c] sm:$0xf]
      %v5106 = vld [vmem:[%s5097 + $0x20] sm:$0xf]
      %v5107 = vld [vmem:[%s5097 + $0x24] sm:$0xf]
      %v5108 = vld [vmem:[%s5097 + $0x28] sm:$0xf]
      %v5109 = vld [vmem:[%s5097 + $0x2c] sm:$0xf]
      %v5110 = vld [vmem:[%s5097 + $0x30] sm:$0xf]
      %v5111 = vld [vmem:[%s5097 + $0x34] sm:$0xf]
      %v5112 = vld [vmem:[%s5097 + $0x38] sm:$0xf]
      %v5113 = vld [vmem:[%s5097 + $0x3c] sm:$0xf]
      %v5146 = vunpack.c.l.b16 %v4523
      %v5147 = vunpack.c.l.b16 %v4524
      %v5148 = vunpack.c.l.b16 %v4525
      %v5149 = vunpack.c.l.b16 %v4526
      %v5150 = vunpack.c.l.b16 %v4527
      %v5151 = vunpack.c.l.b16 %v4528
      %v5152 = vunpack.c.l.b16 %v4529
      %v5153 = vunpack.c.l.b16 %v4530
      %v5154 = vunpack.c.l.b16 %v4531
      %v5155 = vunpack.c.l.b16 %v4532
      %v5156 = vunpack.c.l.b16 %v4533
      %v5157 = vunpack.c.l.b16 %v4534
      %v5158 = vunpack.c.l.b16 %v4535
      %v5159 = vunpack.c.l.b16 %v4536
      %v5160 = vunpack.c.l.b16 %v4537
      %v5161 = vunpack.c.l.b16 %v4538
      %v5162 = vunpack.c.l.b16 %v4539
      %v5163 = vunpack.c.l.b16 %v4540
      %v5164 = vunpack.c.l.b16 %v4541
      %v5165 = vunpack.c.l.b16 %v4542
      %v5166 = vunpack.c.l.b16 %v4543
      %v5167 = vunpack.c.l.b16 %v4544
      %v5168 = vunpack.c.l.b16 %v4545
      %v5169 = vunpack.c.l.b16 %v4546
      %v5170 = vunpack.c.l.b16 %v4547
      %v5171 = vunpack.c.l.b16 %v4548
      %v5172 = vunpack.c.l.b16 %v4549
      %v5173 = vunpack.c.l.b16 %v4550
      %v5174 = vunpack.c.l.b16 %v4551
      %v5175 = vunpack.c.l.b16 %v4552
      %v5176 = vunpack.c.l.b16 %v4553
      %v5177 = vunpack.c.l.b16 %v4554
      %v5178 = vpack.c.b16 %v5147, %v5146
      %v5179 = vpack.c.b16 %v5149, %v5148
      %v5180 = vpack.c.b16 %v5151, %v5150
      %v5181 = vpack.c.b16 %v5153, %v5152
      %v5182 = vpack.c.b16 %v5155, %v5154
      %v5183 = vpack.c.b16 %v5157, %v5156
      %v5184 = vpack.c.b16 %v5159, %v5158
      %v5185 = vpack.c.b16 %v5161, %v5160
      %v5186 = vpack.c.b16 %v5163, %v5162
      %v5187 = vpack.c.b16 %v5165, %v5164
      %v5188 = vpack.c.b16 %v5167, %v5166
      %v5189 = vpack.c.b16 %v5169, %v5168
      %v5190 = vpack.c.b16 %v5171, %v5170
      %v5191 = vpack.c.b16 %v5173, %v5172
      %v5192 = vpack.c.b16 %v5175, %v5174
      %v5193 = vpack.c.b16 %v5177, %v5176
      %v5226 = vunpack.c.l.b16 %v5098
      %v5227 = vunpack.c.l.b16 %v5099
      %v5228 = vunpack.c.l.b16 %v5100
      %v5229 = vunpack.c.l.b16 %v5101
      %v5230 = vunpack.c.l.b16 %v5102
      %v5231 = vunpack.c.l.b16 %v5103
      %v5232 = vunpack.c.l.b16 %v5104
      %v5233 = vunpack.c.l.b16 %v5105
      %v5234 = vunpack.c.l.b16 %v5106
      %v5235 = vunpack.c.l.b16 %v5107
      %v5236 = vunpack.c.l.b16 %v5108
      %v5237 = vunpack.c.l.b16 %v5109
      %v5238 = vunpack.c.l.b16 %v5110
      %v5239 = vunpack.c.l.b16 %v5111
      %v5240 = vunpack.c.l.b16 %v5112
      %v5241 = vunpack.c.l.b16 %v5113
      %v5242 = vpack.c.b16 %v5227, %v5226
      %v5243 = vpack.c.b16 %v5229, %v5228
      %v5244 = vpack.c.b16 %v5231, %v5230
      %v5245 = vpack.c.b16 %v5233, %v5232
      %v5246 = vpack.c.b16 %v5235, %v5234
      %v5247 = vpack.c.b16 %v5237, %v5236
      %v5248 = vpack.c.b16 %v5239, %v5238
      %v5249 = vpack.c.b16 %v5241, %v5240
      %5258 = vmatprep.subr.bf16.mxu0 0
      %5259 = vmatpush1.bf16.msra.mxu0 %v5242
      %5260 = vmatprep.subr.bf16.mxu0 0
      %5261 = vmatpush1.bf16.msra.mxu0 %v5243
      %5262 = vmatprep.subr.bf16.mxu0 0
      %5263 = vmatpush1.bf16.msra.mxu0 %v5244
      %5264 = vmatprep.subr.bf16.mxu0 0
      %5265 = vmatpush1.bf16.msra.mxu0 %v5245
      %5266 = vmatprep.subr.bf16.mxu0 0
      %5267 = vmatpush1.bf16.msra.mxu0 %v5246
      %5268 = vmatprep.subr.bf16.mxu0 0
      %5269 = vmatpush1.bf16.msra.mxu0 %v5247
      %5270 = vmatprep.subr.bf16.mxu0 0
      %5271 = vmatpush1.bf16.msra.mxu0 %v5248
      %5272 = vmatprep.subr.bf16.mxu0 0
      %5273 = vmatpush1.bf16.msra.mxu0 %v5249
      %5274 = vmatprep.subr.bf16.mxu0 0
      %5275 = vmatpush1.bf16.msra.mxu0 0
      %5276 = vmatprep.subr.bf16.mxu0 0
      %5277 = vmatpush1.bf16.msra.mxu0 0
      %5278 = vmatprep.subr.bf16.mxu0 0
      %5279 = vmatpush1.bf16.msra.mxu0 0
      %5280 = vmatprep.subr.bf16.mxu0 0
      %5281 = vmatpush1.bf16.msra.mxu0 0
      %5282 = vmatprep.subr.bf16.mxu0 0
      %5283 = vmatpush1.bf16.msra.mxu0 0
      %5284 = vmatprep.subr.bf16.mxu0 0
      %5285 = vmatpush1.bf16.msra.mxu0 0
      %5286 = vmatprep.subr.bf16.mxu0 0
      %5287 = vmatpush1.bf16.msra.mxu0 0
      %5288 = vmatprep.subr.bf16.mxu0 0
      %5289 = vmatpush1.bf16.msra.mxu0 0
      %5290 = vmatprep.mubr.bf16.mxu0 0
      %5291 = vmatmul.mubr.bf16.gmra.mrb[0].mxu0 %v5178
      %v5292 = vpop.f32.mrb[0].mxu0
      %v5293 = vadd.f32 0.0, %v5292
      %v5294 = vpop.f32.mrb[0].mxu0
      %v5295 = vpop.f32.mrb[0].mxu0
      %v5296 = vadd.f32 0.0, %v5295
      %v5297 = vpop.f32.mrb[0].mxu0
      %5298 = vmatprep.mubr.bf16.mxu0 0
      %5299 = vmatmul.mubr.bf16.gmra.mrb[0].mxu0 %v5179
      %v5300 = vpop.f32.mrb[0].mxu0
      %v5301 = vadd.f32 0.0, %v5300
      %v5302 = vpop.f32.mrb[0].mxu0
      %v5303 = vpop.f32.mrb[0].mxu0
      %v5304 = vadd.f32 0.0, %v5303
      %v5305 = vpop.f32.mrb[0].mxu0
      %5306 = vmatprep.mubr.bf16.mxu0 0
      %5307 = vmatmul.mubr.bf16.gmra.mrb[0].mxu0 %v5180
      %v5308 = vpop.f32.mrb[0].mxu0
      %v5309 = vadd.f32 0.0, %v5308
      %v5310 = vpop.f32.mrb[0].mxu0
      %v5311 = vpop.f32.mrb[0].mxu0
      %v5312 = vadd.f32 0.0, %v5311
      %v5313 = vpop.f32.mrb[0].mxu0
      %5314 = vmatprep.mubr.bf16.mxu0 0
      %5315 = vmatmul.mubr.bf16.gmra.mrb[0].mxu0 %v5181
      %v5316 = vpop.f32.mrb[0].mxu0
      %v5317 = vadd.f32 0.0, %v5316
      %v5318 = vpop.f32.mrb[0].mxu0
      %v5319 = vpop.f32.mrb[0].mxu0
      %v5320 = vadd.f32 0.0, %v5319
      %v5321 = vpop.f32.mrb[0].mxu0
      %5322 = vmatprep.mubr.bf16.mxu0 0
      %5323 = vmatmul.mubr.bf16.gmra.mrb[0].mxu0 %v5182
      %v5324 = vpop.f32.mrb[0].mxu0
      %v5325 = vadd.f32 0.0, %v5324
      %v5326 = vpop.f32.mrb[0].mxu0
      %v5327 = vpop.f32.mrb[0].mxu0
      %v5328 = vadd.f32 0.0, %v5327
      %v5329 = vpop.f32.mrb[0].mxu0
      %5330 = vmatprep.mubr.bf16.mxu0 0
      %5331 = vmatmul.mubr.bf16.gmra.mrb[0].mxu0 %v5183
      %v5332 = vpop.f32.mrb[0].mxu0
      %v5333 = vadd.f32 0.0, %v5332
      %v5334 = vpop.f32.mrb[0].mxu0
      %v5335 = vpop.f32.mrb[0].mxu0
      %v5336 = vadd.f32 0.0, %v5335
      %v5337 = vpop.f32.mrb[0].mxu0
      %5338 = vmatprep.mubr.bf16.mxu0 0
      %5339 = vmatmul.mubr.bf16.gmra.mrb[0].mxu0 %v5184
      %v5340 = vpop.f32.mrb[0].mxu0
      %v5341 = vadd.f32 0.0, %v5340
      %v5342 = vpop.f32.mrb[0].mxu0
      %v5343 = vpop.f32.mrb[0].mxu0
      %v5344 = vadd.f32 0.0, %v5343
      %v5345 = vpop.f32.mrb[0].mxu0
      %5346 = vmatprep.mubr.bf16.mxu0 0
      %5347 = vmatmul.mubr.bf16.gmra.mrb[0].mxu0 %v5185
      %v5348 = vpop.f32.mrb[0].mxu0
      %v5349 = vadd.f32 0.0, %v5348
      %v5350 = vpop.f32.mrb[0].mxu0
      %v5351 = vpop.f32.mrb[0].mxu0
      %v5352 = vadd.f32 0.0, %v5351
      %v5353 = vpop.f32.mrb[0].mxu0
      %5354 = vmatprep.mubr.bf16.mxu0 0
      %5355 = vmatmul.mubr.bf16.gmra.mrb[0].mxu0 %v5186
      %v5356 = vpop.f32.mrb[0].mxu0
      %v5357 = vadd.f32 0.0, %v5356
      %v5358 = vpop.f32.mrb[0].mxu0
      %v5359 = vpop.f32.mrb[0].mxu0
      %v5360 = vadd.f32 0.0, %v5359
      %v5361 = vpop.f32.mrb[0].mxu0
      %5362 = vmatprep.mubr.bf16.mxu0 0
      %5363 = vmatmul.mubr.bf16.gmra.mrb[0].mxu0 %v5187
      %v5364 = vpop.f32.mrb[0].mxu0
      %v5365 = vadd.f32 0.0, %v5364
      %v5366 = vpop.f32.mrb[0].mxu0
      %v5367 = vpop.f32.mrb[0].mxu0
      %v5368 = vadd.f32 0.0, %v5367
      %v5369 = vpop.f32.mrb[0].mxu0
      %5370 = vmatprep.mubr.bf16.mxu0 0
      %5371 = vmatmul.mubr.bf16.gmra.mrb[0].mxu0 %v5188
      %v5372 = vpop.f32.mrb[0].mxu0
      %v5373 = vadd.f32 0.0, %v5372
      %v5374 = vpop.f32.mrb[0].mxu0
      %v5375 = vpop.f32.mrb[0].mxu0
      %v5376 = vadd.f32 0.0, %v5375
      %v5377 = vpop.f32.mrb[0].mxu0
      %5378 = vmatprep.mubr.bf16.mxu0 0
      %5379 = vmatmul.mubr.bf16.gmra.mrb[0].mxu0 %v5189
      %v5380 = vpop.f32.mrb[0].mxu0
      %v5381 = vadd.f32 0.0, %v5380
      %v5382 = vpop.f32.mrb[0].mxu0
      %v5383 = vpop.f32.mrb[0].mxu0
      %v5384 = vadd.f32 0.0, %v5383
      %v5385 = vpop.f32.mrb[0].mxu0
      %5386 = vmatprep.mubr.bf16.mxu0 0
      %5387 = vmatmul.mubr.bf16.gmra.mrb[0].mxu0 %v5190
      %v5388 = vpop.f32.mrb[0].mxu0
      %v5389 = vadd.f32 0.0, %v5388
      %v5390 = vpop.f32.mrb[0].mxu0
      %v5391 = vpop.f32.mrb[0].mxu0
      %v5392 = vadd.f32 0.0, %v5391
      %v5393 = vpop.f32.mrb[0].mxu0
      %5394 = vmatprep.mubr.bf16.mxu0 0
      %5395 = vmatmul.mubr.bf16.gmra.mrb[0].mxu0 %v5191
      %v5396 = vpop.f32.mrb[0].mxu0
      %v5397 = vadd.f32 0.0, %v5396
      %v5398 = vpop.f32.mrb[0].mxu0
      %v5399 = vpop.f32.mrb[0].mxu0
      %v5400 = vadd.f32 0.0, %v5399
      %v5401 = vpop.f32.mrb[0].mxu0
      %5402 = vmatprep.mubr.bf16.mxu0 0
      %5403 = vmatmul.mubr.bf16.gmra.mrb[0].mxu0 %v5192
      %v5404 = vpop.f32.mrb[0].mxu0
      %v5405 = vadd.f32 0.0, %v5404
      %v5406 = vpop.f32.mrb[0].mxu0
      %v5407 = vpop.f32.mrb[0].mxu0
      %v5408 = vadd.f32 0.0, %v5407
      %v5409 = vpop.f32.mrb[0].mxu0
      %5410 = vmatprep.mubr.bf16.mxu0 0
      %5411 = vmatmul.mubr.bf16.gmra.mrb[0].mxu0 %v5193
      %v5412 = vpop.f32.mrb[0].mxu0
      %v5413 = vadd.f32 0.0, %v5412
      %v5414 = vpop.f32.mrb[0].mxu0
      %v5415 = vpop.f32.mrb[0].mxu0
      %v5416 = vadd.f32 0.0, %v5415
      %v5417 = vpop.f32.mrb[0].mxu0
      %5418 = vdwg.mxu0
      %v5419 = vadd.f32 %v5065, %v5293
      %v5420 = vadd.f32 %v5066, %v5296
      %v5421 = vadd.f32 %v5067, %v5301
      %v5422 = vadd.f32 %v5068, %v5304
      %v5423 = vadd.f32 %v5069, %v5309
      %v5424 = vadd.f32 %v5070, %v5312
      %v5425 = vadd.f32 %v5071, %v5317
      %v5426 = vadd.f32 %v5072, %v5320
      %v5427 = vadd.f32 %v5073, %v5325
      %v5428 = vadd.f32 %v5074, %v5328
      %v5429 = vadd.f32 %v5075, %v5333
      %v5430 = vadd.f32 %v5076, %v5336
      %v5431 = vadd.f32 %v5077, %v5341
      %v5432 = vadd.f32 %v5078, %v5344
      %v5433 = vadd.f32 %v5079, %v5349
      %v5434 = vadd.f32 %v5080, %v5352
      %v5435 = vadd.f32 %v5081, %v5357
      %v5436 = vadd.f32 %v5082, %v5360
      %v5437 = vadd.f32 %v5083, %v5365
      %v5438 = vadd.f32 %v5084, %v5368
      %v5439 = vadd.f32 %v5085, %v5373
      %v5440 = vadd.f32 %v5086, %v5376
      %v5441 = vadd.f32 %v5087, %v5381
      %v5442 = vadd.f32 %v5088, %v5384
      %v5443 = vadd.f32 %v5089, %v5389
      %v5444 = vadd.f32 %v5090, %v5392
      %v5445 = vadd.f32 %v5091, %v5397
      %v5446 = vadd.f32 %v5092, %v5400
      %v5447 = vadd.f32 %v5093, %v5405
      %v5448 = vadd.f32 %v5094, %v5408
      %v5449 = vadd.f32 %v5095, %v5413
      %v5450 = vadd.f32 %v5096, %v5416
      %v5451 = vld [vmem:[%s187 + $0x14] sm:$0xf]
      %v5452 = vld [vmem:[%s187 + $0x18] sm:$0xf]
      %v5453 = vld [vmem:[%s187 + $0x1c] sm:$0xf]
      %v5454 = vld [vmem:[%s187 + $0x20] sm:$0xf]
      %v5455 = vld [vmem:[%s187 + $0x24] sm:$0xf]
      %v5456 = vld [vmem:[%s187 + $0x28] sm:$0xf]
      %v5457 = vld [vmem:[%s187 + $0x2c] sm:$0xf]
      %v5458 = vld [vmem:[%s187 + $0x30] sm:$0xf]
      %v5459 = vld [vmem:[%s187 + $0x34] sm:$0xf]
      %v5460 = vld [vmem:[%s187 + $0x38] sm:$0xf]
      %v5461 = vld [vmem:[%s187 + $0x3c] sm:$0xf]
      %v5462 = vld [vmem:[%s187 + $0x40] sm:$0xf]
      %v5463 = vld [vmem:[%s187 + $0x44] sm:$0xf]
      %v5464 = vld [vmem:[%s187 + $0x48] sm:$0xf]
      %v5465 = vld [vmem:[%s187 + $0x4c] sm:$0xf]
      %v5466 = vld [vmem:[%s187 + $0x50] sm:$0xf]
      %v5467 = vld [vmem:[%s187 + $0x54] sm:$0xf]
      %v5468 = vld [vmem:[%s187 + $0x58] sm:$0xf]
      %v5469 = vld [vmem:[%s187 + $0x5c] sm:$0xf]
      %v5470 = vld [vmem:[%s187 + $0x60] sm:$0xf]
      %v5471 = vld [vmem:[%s187 + $0x64] sm:$0xf]
      %v5472 = vld [vmem:[%s187 + $0x68] sm:$0xf]
      %v5473 = vld [vmem:[%s187 + $0x6c] sm:$0xf]
      %v5474 = vld [vmem:[%s187 + $0x70] sm:$0xf]
      %v5475 = vld [vmem:[%s187 + $0x74] sm:$0xf]
      %v5476 = vld [vmem:[%s187 + $0x78] sm:$0xf]
      %v5477 = vld [vmem:[%s187 + $0x7c] sm:$0xf]
      %v5478 = vld [vmem:[%s187 + $0x80] sm:$0xf]
      %v5479 = vld [vmem:[%s187 + $0x84] sm:$0xf]
      %v5480 = vld [vmem:[%s187 + $0x88] sm:$0xf]
      %v5481 = vld [vmem:[%s187 + $0x8c] sm:$0xf]
      %v5482 = vld [vmem:[%s187 + $0x90] sm:$0xf]
      %v5483 = vld [vmem:[%s187 + $0x94] sm:$0x1]
      %v5484 = vsel %vm2482, 0, %v5451
      %v5485 = vsel %vm2483, 0, %v5452
      %v5486 = vsel %vm2484, 0, %v5453
      %v5487 = vsel %vm2485, 0, %v5454
      %v5488 = vsel %vm2486, 0, %v5455
      %v5489 = vsel %vm2487, 0, %v5456
      %v5490 = vsel %vm2488, 0, %v5457
      %v5491 = vsel %vm2489, 0, %v5458
      %v5492 = vsel %vm2490, 0, %v5459
      %v5493 = vsel %vm2491, 0, %v5460
      %v5494 = vsel %vm2492, 0, %v5461
      %v5495 = vsel %vm2493, 0, %v5462
      %v5496 = vsel %vm2494, 0, %v5463
      %v5497 = vsel %vm2495, 0, %v5464
      %v5498 = vsel %vm2496, 0, %v5465
      %v5499 = vsel %vm2497, 0, %v5466
      %v5500 = vsel %vm2498, 0, %v5467
      %v5501 = vsel %vm2499, 0, %v5468
      %v5502 = vsel %vm2500, 0, %v5469
      %v5503 = vsel %vm2501, 0, %v5470
      %v5504 = vsel %vm2502, 0, %v5471
      %v5505 = vsel %vm2503, 0, %v5472
      %v5506 = vsel %vm2504, 0, %v5473
      %v5507 = vsel %vm2505, 0, %v5474
      %v5508 = vsel %vm2506, 0, %v5475
      %v5509 = vsel %vm2507, 0, %v5476
      %v5510 = vsel %vm2508, 0, %v5477
      %v5511 = vsel %vm2509, 0, %v5478
      %v5512 = vsel %vm2510, 0, %v5479
      %v5513 = vsel %vm2511, 0, %v5480
      %v5514 = vsel %vm2512, 0, %v5481
      %v5515 = vsel %vm2513, 0, %v5482
      %v5516 = vsel %vm2514, 0, %v5483
      %s5517 = scalar_lea.vmem %s1, 512
      %v5518 = vld [vmem:[%s5517] sm:$0xf]
      %v5519 = vld [vmem:[%s5517 + $0x4] sm:$0xf]
      %v5520 = vld [vmem:[%s5517 + $0x8] sm:$0xf]
      %v5521 = vld [vmem:[%s5517 + $0xc] sm:$0xf]
      %v5522 = vld [vmem:[%s5517 + $0x10] sm:$0xf]
      %v5523 = vld [vmem:[%s5517 + $0x14] sm:$0xf]
      %v5524 = vld [vmem:[%s5517 + $0x18] sm:$0xf]
      %v5525 = vld [vmem:[%s5517 + $0x1c] sm:$0xf]
      %v5526 = vld [vmem:[%s5517 + $0x20] sm:$0xf]
      %v5527 = vld [vmem:[%s5517 + $0x24] sm:$0xf]
      %v5528 = vld [vmem:[%s5517 + $0x28] sm:$0xf]
      %v5529 = vld [vmem:[%s5517 + $0x2c] sm:$0xf]
      %v5530 = vld [vmem:[%s5517 + $0x30] sm:$0xf]
      %v5531 = vld [vmem:[%s5517 + $0x34] sm:$0xf]
      %v5532 = vld [vmem:[%s5517 + $0x38] sm:$0xf]
      %v5533 = vld [vmem:[%s5517 + $0x3c] sm:$0xf]
      %v5567 = vunpack.c.l.b16 %v5484
      %v5568 = vunpack.c.l.b16 %v5485
      %v5569 = vunpack.c.l.b16 %v5486
      %v5570 = vunpack.c.l.b16 %v5487
      %v5571 = vunpack.c.l.b16 %v5488
      %v5572 = vunpack.c.l.b16 %v5489
      %v5573 = vunpack.c.l.b16 %v5490
      %v5574 = vunpack.c.l.b16 %v5491
      %v5575 = vunpack.c.l.b16 %v5492
      %v5576 = vunpack.c.l.b16 %v5493
      %v5577 = vunpack.c.l.b16 %v5494
      %v5578 = vunpack.c.l.b16 %v5495
      %v5579 = vunpack.c.l.b16 %v5496
      %v5580 = vunpack.c.l.b16 %v5497
      %v5581 = vunpack.c.l.b16 %v5498
      %v5582 = vunpack.c.l.b16 %v5499
      %v5583 = vunpack.c.l.b16 %v5500
      %v5584 = vunpack.c.l.b16 %v5501
      %v5585 = vunpack.c.l.b16 %v5502
      %v5586 = vunpack.c.l.b16 %v5503
      %v5587 = vunpack.c.l.b16 %v5504
      %v5588 = vunpack.c.l.b16 %v5505
      %v5589 = vunpack.c.l.b16 %v5506
      %v5590 = vunpack.c.l.b16 %v5507
      %v5591 = vunpack.c.l.b16 %v5508
      %v5592 = vunpack.c.l.b16 %v5509
      %v5593 = vunpack.c.l.b16 %v5510
      %v5594 = vunpack.c.l.b16 %v5511
      %v5595 = vunpack.c.l.b16 %v5512
      %v5596 = vunpack.c.l.b16 %v5513
      %v5597 = vunpack.c.l.b16 %v5514
      %v5598 = vunpack.c.l.b16 %v5515
      %v5599 = vunpack.c.l.b16 %v5516
      %v5600 = vpack.c.b16 %v5568, %v5567
      %v5601 = vpack.c.b16 %v5570, %v5569
      %v5602 = vpack.c.b16 %v5572, %v5571
      %v5603 = vpack.c.b16 %v5574, %v5573
      %v5604 = vpack.c.b16 %v5576, %v5575
      %v5605 = vpack.c.b16 %v5578, %v5577
      %v5606 = vpack.c.b16 %v5580, %v5579
      %v5607 = vpack.c.b16 %v5582, %v5581
      %v5608 = vpack.c.b16 %v5584, %v5583
      %v5609 = vpack.c.b16 %v5586, %v5585
      %v5610 = vpack.c.b16 %v5588, %v5587
      %v5611 = vpack.c.b16 %v5590, %v5589
      %v5612 = vpack.c.b16 %v5592, %v5591
      %v5613 = vpack.c.b16 %v5594, %v5593
      %v5614 = vpack.c.b16 %v5596, %v5595
      %v5615 = vpack.c.b16 %v5598, %v5597
      %v5616 = vpack.c.b16 %v5599, %v5599
      %v5618 = vshrl.u32 %v5600, 16
      %v5620 = vshll.u32 %v5600, 16
      %v5622 = vrot.slane %v5620, 1
      %v5623 = vor.u32 %v5618, %v5622
      %v5625 = vshll.u32 %v5601, 16
      %v5627 = vrot.slane %v5625, 1
      %v5628 = vsel %vm2648, %v5623, %v5627
      %v5629 = vshrl.u32 %v5601, 16
      %v5631 = vor.u32 %v5629, %v5627
      %v5633 = vshll.u32 %v5602, 16
      %v5635 = vrot.slane %v5633, 1
      %v5636 = vsel %vm2648, %v5631, %v5635
      %v5637 = vshrl.u32 %v5602, 16
      %v5639 = vor.u32 %v5637, %v5635
      %v5641 = vshll.u32 %v5603, 16
      %v5643 = vrot.slane %v5641, 1
      %v5644 = vsel %vm2648, %v5639, %v5643
      %v5645 = vshrl.u32 %v5603, 16
      %v5647 = vor.u32 %v5645, %v5643
      %v5649 = vshll.u32 %v5604, 16
      %v5651 = vrot.slane %v5649, 1
      %v5652 = vsel %vm2648, %v5647, %v5651
      %v5653 = vshrl.u32 %v5604, 16
      %v5655 = vor.u32 %v5653, %v5651
      %v5657 = vshll.u32 %v5605, 16
      %v5659 = vrot.slane %v5657, 1
      %v5660 = vsel %vm2648, %v5655, %v5659
      %v5661 = vshrl.u32 %v5605, 16
      %v5663 = vor.u32 %v5661, %v5659
      %v5665 = vshll.u32 %v5606, 16
      %v5667 = vrot.slane %v5665, 1
      %v5668 = vsel %vm2648, %v5663, %v5667
      %v5669 = vshrl.u32 %v5606, 16
      %v5671 = vor.u32 %v5669, %v5667
      %v5673 = vshll.u32 %v5607, 16
      %v5675 = vrot.slane %v5673, 1
      %v5676 = vsel %vm2648, %v5671, %v5675
      %v5677 = vshrl.u32 %v5607, 16
      %v5679 = vor.u32 %v5677, %v5675
      %v5681 = vshll.u32 %v5608, 16
      %v5683 = vrot.slane %v5681, 1
      %v5684 = vsel %vm2648, %v5679, %v5683
      %v5685 = vshrl.u32 %v5608, 16
      %v5687 = vor.u32 %v5685, %v5683
      %v5689 = vshll.u32 %v5609, 16
      %v5691 = vrot.slane %v5689, 1
      %v5692 = vsel %vm2648, %v5687, %v5691
      %v5693 = vshrl.u32 %v5609, 16
      %v5695 = vor.u32 %v5693, %v5691
      %v5697 = vshll.u32 %v5610, 16
      %v5699 = vrot.slane %v5697, 1
      %v5700 = vsel %vm2648, %v5695, %v5699
      %v5701 = vshrl.u32 %v5610, 16
      %v5703 = vor.u32 %v5701, %v5699
      %v5705 = vshll.u32 %v5611, 16
      %v5707 = vrot.slane %v5705, 1
      %v5708 = vsel %vm2648, %v5703, %v5707
      %v5709 = vshrl.u32 %v5611, 16
      %v5711 = vor.u32 %v5709, %v5707
      %v5713 = vshll.u32 %v5612, 16
      %v5715 = vrot.slane %v5713, 1
      %v5716 = vsel %vm2648, %v5711, %v5715
      %v5717 = vshrl.u32 %v5612, 16
      %v5719 = vor.u32 %v5717, %v5715
      %v5721 = vshll.u32 %v5613, 16
      %v5723 = vrot.slane %v5721, 1
      %v5724 = vsel %vm2648, %v5719, %v5723
      %v5725 = vshrl.u32 %v5613, 16
      %v5727 = vor.u32 %v5725, %v5723
      %v5729 = vshll.u32 %v5614, 16
      %v5731 = vrot.slane %v5729, 1
      %v5732 = vsel %vm2648, %v5727, %v5731
      %v5733 = vshrl.u32 %v5614, 16
      %v5735 = vor.u32 %v5733, %v5731
      %v5737 = vshll.u32 %v5615, 16
      %v5739 = vrot.slane %v5737, 1
      %v5740 = vsel %vm2648, %v5735, %v5739
      %v5741 = vshrl.u32 %v5615, 16
      %v5743 = vor.u32 %v5741, %v5739
      %v5745 = vshll.u32 %v5616, 16
      %v5747 = vrot.slane %v5745, 1
      %v5748 = vsel %vm2648, %v5743, %v5747
      %v5781 = vunpack.c.l.b16 %v5518
      %v5782 = vunpack.c.l.b16 %v5519
      %v5783 = vunpack.c.l.b16 %v5520
      %v5784 = vunpack.c.l.b16 %v5521
      %v5785 = vunpack.c.l.b16 %v5522
      %v5786 = vunpack.c.l.b16 %v5523
      %v5787 = vunpack.c.l.b16 %v5524
      %v5788 = vunpack.c.l.b16 %v5525
      %v5789 = vunpack.c.l.b16 %v5526
      %v5790 = vunpack.c.l.b16 %v5527
      %v5791 = vunpack.c.l.b16 %v5528
      %v5792 = vunpack.c.l.b16 %v5529
      %v5793 = vunpack.c.l.b16 %v5530
      %v5794 = vunpack.c.l.b16 %v5531
      %v5795 = vunpack.c.l.b16 %v5532
      %v5796 = vunpack.c.l.b16 %v5533
      %v5797 = vpack.c.b16 %v5782, %v5781
      %v5798 = vpack.c.b16 %v5784, %v5783
      %v5799 = vpack.c.b16 %v5786, %v5785
      %v5800 = vpack.c.b16 %v5788, %v5787
      %v5801 = vpack.c.b16 %v5790, %v5789
      %v5802 = vpack.c.b16 %v5792, %v5791
      %v5803 = vpack.c.b16 %v5794, %v5793
      %v5804 = vpack.c.b16 %v5796, %v5795
      %5813 = vmatprep.subr.bf16.mxu0 0
      %5814 = vmatpush1.bf16.msra.mxu0 %v5797
      %5815 = vmatprep.subr.bf16.mxu0 0
      %5816 = vmatpush1.bf16.msra.mxu0 %v5798
      %5817 = vmatprep.subr.bf16.mxu0 0
      %5818 = vmatpush1.bf16.msra.mxu0 %v5799
      %5819 = vmatprep.subr.bf16.mxu0 0
      %5820 = vmatpush1.bf16.msra.mxu0 %v5800
      %5821 = vmatprep.subr.bf16.mxu0 0
      %5822 = vmatpush1.bf16.msra.mxu0 %v5801
      %5823 = vmatprep.subr.bf16.mxu0 0
      %5824 = vmatpush1.bf16.msra.mxu0 %v5802
      %5825 = vmatprep.subr.bf16.mxu0 0
      %5826 = vmatpush1.bf16.msra.mxu0 %v5803
      %5827 = vmatprep.subr.bf16.mxu0 0
      %5828 = vmatpush1.bf16.msra.mxu0 %v5804
      %5829 = vmatprep.subr.bf16.mxu0 0
      %5830 = vmatpush1.bf16.msra.mxu0 0
      %5831 = vmatprep.subr.bf16.mxu0 0
      %5832 = vmatpush1.bf16.msra.mxu0 0
      %5833 = vmatprep.subr.bf16.mxu0 0
      %5834 = vmatpush1.bf16.msra.mxu0 0
      %5835 = vmatprep.subr.bf16.mxu0 0
      %5836 = vmatpush1.bf16.msra.mxu0 0
      %5837 = vmatprep.subr.bf16.mxu0 0
      %5838 = vmatpush1.bf16.msra.mxu0 0
      %5839 = vmatprep.subr.bf16.mxu0 0
      %5840 = vmatpush1.bf16.msra.mxu0 0
      %5841 = vmatprep.subr.bf16.mxu0 0
      %5842 = vmatpush1.bf16.msra.mxu0 0
      %5843 = vmatprep.subr.bf16.mxu0 0
      %5844 = vmatpush1.bf16.msra.mxu0 0
      %5845 = vmatprep.mubr.bf16.mxu0 0
      %5846 = vmatmul.mubr.bf16.gmra.mrb[0].mxu0 %v5628
      %v5847 = vpop.f32.mrb[0].mxu0
      %v5848 = vadd.f32 0.0, %v5847
      %v5849 = vpop.f32.mrb[0].mxu0
      %v5850 = vpop.f32.mrb[0].mxu0
      %v5851 = vadd.f32 0.0, %v5850
      %v5852 = vpop.f32.mrb[0].mxu0
      %5853 = vmatprep.mubr.bf16.mxu0 0
      %5854 = vmatmul.mubr.bf16.gmra.mrb[0].mxu0 %v5636
      %v5855 = vpop.f32.mrb[0].mxu0
      %v5856 = vadd.f32 0.0, %v5855
      %v5857 = vpop.f32.mrb[0].mxu0
      %v5858 = vpop.f32.mrb[0].mxu0
      %v5859 = vadd.f32 0.0, %v5858
      %v5860 = vpop.f32.mrb[0].mxu0
      %5861 = vmatprep.mubr.bf16.mxu0 0
      %5862 = vmatmul.mubr.bf16.gmra.mrb[0].mxu0 %v5644
      %v5863 = vpop.f32.mrb[0].mxu0
      %v5864 = vadd.f32 0.0, %v5863
      %v5865 = vpop.f32.mrb[0].mxu0
      %v5866 = vpop.f32.mrb[0].mxu0
      %v5867 = vadd.f32 0.0, %v5866
      %v5868 = vpop.f32.mrb[0].mxu0
      %5869 = vmatprep.mubr.bf16.mxu0 0
      %5870 = vmatmul.mubr.bf16.gmra.mrb[0].mxu0 %v5652
      %v5871 = vpop.f32.mrb[0].mxu0
      %v5872 = vadd.f32 0.0, %v5871
      %v5873 = vpop.f32.mrb[0].mxu0
      %v5874 = vpop.f32.mrb[0].mxu0
      %v5875 = vadd.f32 0.0, %v5874
      %v5876 = vpop.f32.mrb[0].mxu0
      %5877 = vmatprep.mubr.bf16.mxu0 0
      %5878 = vmatmul.mubr.bf16.gmra.mrb[0].mxu0 %v5660
      %v5879 = vpop.f32.mrb[0].mxu0
      %v5880 = vadd.f32 0.0, %v5879
      %v5881 = vpop.f32.mrb[0].mxu0
      %v5882 = vpop.f32.mrb[0].mxu0
      %v5883 = vadd.f32 0.0, %v5882
      %v5884 = vpop.f32.mrb[0].mxu0
      %5885 = vmatprep.mubr.bf16.mxu0 0
      %5886 = vmatmul.mubr.bf16.gmra.mrb[0].mxu0 %v5668
      %v5887 = vpop.f32.mrb[0].mxu0
      %v5888 = vadd.f32 0.0, %v5887
      %v5889 = vpop.f32.mrb[0].mxu0
      %v5890 = vpop.f32.mrb[0].mxu0
      %v5891 = vadd.f32 0.0, %v5890
      %v5892 = vpop.f32.mrb[0].mxu0
      %5893 = vmatprep.mubr.bf16.mxu0 0
      %5894 = vmatmul.mubr.bf16.gmra.mrb[0].mxu0 %v5676
      %v5895 = vpop.f32.mrb[0].mxu0
      %v5896 = vadd.f32 0.0, %v5895
      %v5897 = vpop.f32.mrb[0].mxu0
      %v5898 = vpop.f32.mrb[0].mxu0
      %v5899 = vadd.f32 0.0, %v5898
      %v5900 = vpop.f32.mrb[0].mxu0
      %5901 = vmatprep.mubr.bf16.mxu0 0
      %5902 = vmatmul.mubr.bf16.gmra.mrb[0].mxu0 %v5684
      %v5903 = vpop.f32.mrb[0].mxu0
      %v5904 = vadd.f32 0.0, %v5903
      %v5905 = vpop.f32.mrb[0].mxu0
      %v5906 = vpop.f32.mrb[0].mxu0
      %v5907 = vadd.f32 0.0, %v5906
      %v5908 = vpop.f32.mrb[0].mxu0
      %5909 = vmatprep.mubr.bf16.mxu0 0
      %5910 = vmatmul.mubr.bf16.gmra.mrb[0].mxu0 %v5692
      %v5911 = vpop.f32.mrb[0].mxu0
      %v5912 = vadd.f32 0.0, %v5911
      %v5913 = vpop.f32.mrb[0].mxu0
      %v5914 = vpop.f32.mrb[0].mxu0
      %v5915 = vadd.f32 0.0, %v5914
      %v5916 = vpop.f32.mrb[0].mxu0
      %5917 = vmatprep.mubr.bf16.mxu0 0
      %5918 = vmatmul.mubr.bf16.gmra.mrb[0].mxu0 %v5700
      %v5919 = vpop.f32.mrb[0].mxu0
      %v5920 = vadd.f32 0.0, %v5919
      %v5921 = vpop.f32.mrb[0].mxu0
      %v5922 = vpop.f32.mrb[0].mxu0
      %v5923 = vadd.f32 0.0, %v5922
      %v5924 = vpop.f32.mrb[0].mxu0
      %5925 = vmatprep.mubr.bf16.mxu0 0
      %5926 = vmatmul.mubr.bf16.gmra.mrb[0].mxu0 %v5708
      %v5927 = vpop.f32.mrb[0].mxu0
      %v5928 = vadd.f32 0.0, %v5927
      %v5929 = vpop.f32.mrb[0].mxu0
      %v5930 = vpop.f32.mrb[0].mxu0
      %v5931 = vadd.f32 0.0, %v5930
      %v5932 = vpop.f32.mrb[0].mxu0
      %5933 = vmatprep.mubr.bf16.mxu0 0
      %5934 = vmatmul.mubr.bf16.gmra.mrb[0].mxu0 %v5716
      %v5935 = vpop.f32.mrb[0].mxu0
      %v5936 = vadd.f32 0.0, %v5935
      %v5937 = vpop.f32.mrb[0].mxu0
      %v5938 = vpop.f32.mrb[0].mxu0
      %v5939 = vadd.f32 0.0, %v5938
      %v5940 = vpop.f32.mrb[0].mxu0
      %5941 = vmatprep.mubr.bf16.mxu0 0
      %5942 = vmatmul.mubr.bf16.gmra.mrb[0].mxu0 %v5724
      %v5943 = vpop.f32.mrb[0].mxu0
      %v5944 = vadd.f32 0.0, %v5943
      %v5945 = vpop.f32.mrb[0].mxu0
      %v5946 = vpop.f32.mrb[0].mxu0
      %v5947 = vadd.f32 0.0, %v5946
      %v5948 = vpop.f32.mrb[0].mxu0
      %5949 = vmatprep.mubr.bf16.mxu0 0
      %5950 = vmatmul.mubr.bf16.gmra.mrb[0].mxu0 %v5732
      %v5951 = vpop.f32.mrb[0].mxu0
      %v5952 = vadd.f32 0.0, %v5951
      %v5953 = vpop.f32.mrb[0].mxu0
      %v5954 = vpop.f32.mrb[0].mxu0
      %v5955 = vadd.f32 0.0, %v5954
      %v5956 = vpop.f32.mrb[0].mxu0
      %5957 = vmatprep.mubr.bf16.mxu0 0
      %5958 = vmatmul.mubr.bf16.gmra.mrb[0].mxu0 %v5740
      %v5959 = vpop.f32.mrb[0].mxu0
      %v5960 = vadd.f32 0.0, %v5959
      %v5961 = vpop.f32.mrb[0].mxu0
      %v5962 = vpop.f32.mrb[0].mxu0
      %v5963 = vadd.f32 0.0, %v5962
      %v5964 = vpop.f32.mrb[0].mxu0
      %5965 = vmatprep.mubr.bf16.mxu0 0
      %5966 = vmatmul.mubr.bf16.gmra.mrb[0].mxu0 %v5748
      %v5967 = vpop.f32.mrb[0].mxu0
      %v5968 = vadd.f32 0.0, %v5967
      %v5969 = vpop.f32.mrb[0].mxu0
      %v5970 = vpop.f32.mrb[0].mxu0
      %v5971 = vadd.f32 0.0, %v5970
      %v5972 = vpop.f32.mrb[0].mxu0
      %5973 = vdwg.mxu0
      %v5974 = vadd.f32 %v5419, %v5848
      %v5975 = vadd.f32 %v5420, %v5851
      %v5976 = vadd.f32 %v5421, %v5856
      %v5977 = vadd.f32 %v5422, %v5859
      %v5978 = vadd.f32 %v5423, %v5864
      %v5979 = vadd.f32 %v5424, %v5867
      %v5980 = vadd.f32 %v5425, %v5872
      %v5981 = vadd.f32 %v5426, %v5875
      %v5982 = vadd.f32 %v5427, %v5880
      %v5983 = vadd.f32 %v5428, %v5883
      %v5984 = vadd.f32 %v5429, %v5888
      %v5985 = vadd.f32 %v5430, %v5891
      %v5986 = vadd.f32 %v5431, %v5896
      %v5987 = vadd.f32 %v5432, %v5899
      %v5988 = vadd.f32 %v5433, %v5904
      %v5989 = vadd.f32 %v5434, %v5907
      %v5990 = vadd.f32 %v5435, %v5912
      %v5991 = vadd.f32 %v5436, %v5915
      %v5992 = vadd.f32 %v5437, %v5920
      %v5993 = vadd.f32 %v5438, %v5923
      %v5994 = vadd.f32 %v5439, %v5928
      %v5995 = vadd.f32 %v5440, %v5931
      %v5996 = vadd.f32 %v5441, %v5936
      %v5997 = vadd.f32 %v5442, %v5939
      %v5998 = vadd.f32 %v5443, %v5944
      %v5999 = vadd.f32 %v5444, %v5947
      %v6000 = vadd.f32 %v5445, %v5952
      %v6001 = vadd.f32 %v5446, %v5955
      %v6002 = vadd.f32 %v5447, %v5960
      %v6003 = vadd.f32 %v5448, %v5963
      %v6004 = vadd.f32 %v5449, %v5968
      %v6005 = vadd.f32 %v5450, %v5971
      %6006 = vst [vmem:[%s192] sm:$0xff] %v5974
      %6007 = vst [vmem:[%s192 + $0x8] sm:$0xff] %v5975
      %6008 = vst [vmem:[%s192 + $0x10] sm:$0xff] %v5976
      %6009 = vst [vmem:[%s192 + $0x18] sm:$0xff] %v5977
      %6010 = vst [vmem:[%s192 + $0x20] sm:$0xff] %v5978
      %6011 = vst [vmem:[%s192 + $0x28] sm:$0xff] %v5979
      %6012 = vst [vmem:[%s192 + $0x30] sm:$0xff] %v5980
      %6013 = vst [vmem:[%s192 + $0x38] sm:$0xff] %v5981
      %6014 = vst [vmem:[%s192 + $0x40] sm:$0xff] %v5982
      %6015 = vst [vmem:[%s192 + $0x48] sm:$0xff] %v5983
      %6016 = vst [vmem:[%s192 + $0x50] sm:$0xff] %v5984
      %6017 = vst [vmem:[%s192 + $0x58] sm:$0xff] %v5985
      %6018 = vst [vmem:[%s192 + $0x60] sm:$0xff] %v5986
      %6019 = vst [vmem:[%s192 + $0x68] sm:$0xff] %v5987
      %6020 = vst [vmem:[%s192 + $0x70] sm:$0xff] %v5988
      %6021 = vst [vmem:[%s192 + $0x78] sm:$0xff] %v5989
      %6022 = vst [vmem:[%s192 + $0x80] sm:$0xff] %v5990
      %6023 = vst [vmem:[%s192 + $0x88] sm:$0xff] %v5991
      %6024 = vst [vmem:[%s192 + $0x90] sm:$0xff] %v5992
      %6025 = vst [vmem:[%s192 + $0x98] sm:$0xff] %v5993
      %6026 = vst [vmem:[%s192 + $0xa0] sm:$0xff] %v5994
      %6027 = vst [vmem:[%s192 + $0xa8] sm:$0xff] %v5995
      %6028 = vst [vmem:[%s192 + $0xb0] sm:$0xff] %v5996
      %6029 = vst [vmem:[%s192 + $0xb8] sm:$0xff] %v5997
      %6030 = vst [vmem:[%s192 + $0xc0] sm:$0xff] %v5998
      %6031 = vst [vmem:[%s192 + $0xc8] sm:$0xff] %v5999
      %6032 = vst [vmem:[%s192 + $0xd0] sm:$0xff] %v6000
      %6033 = vst [vmem:[%s192 + $0xd8] sm:$0xff] %v6001
      %6034 = vst [vmem:[%s192 + $0xe0] sm:$0xff] %v6002
      %6035 = vst [vmem:[%s192 + $0xe8] sm:$0xff] %v6003
      %6036 = vst [vmem:[%s192 + $0xf0] sm:$0xff] %v6004
      %6037 = vst [vmem:[%s192 + $0xf8] sm:$0xff] %v6005
      %v6038 = vld [vmem:[%s3] sm:$0x1]
      %v6039 = vadd.f32 %v5974, %v5975
      %v6040 = vadd.f32 %v6039, %v5976
      %v6041 = vadd.f32 %v6040, %v5977
      %v6042 = vadd.f32 %v6041, %v5978
      %v6043 = vadd.f32 %v6042, %v5979
      %v6044 = vadd.f32 %v6043, %v5980
      %v6045 = vadd.f32 %v6044, %v5981
      %v6046 = vadd.f32 %v6045, %v5982
      %v6047 = vadd.f32 %v6046, %v5983
      %v6048 = vadd.f32 %v6047, %v5984
      %v6049 = vadd.f32 %v6048, %v5985
      %v6050 = vadd.f32 %v6049, %v5986
      %v6051 = vadd.f32 %v6050, %v5987
      %v6052 = vadd.f32 %v6051, %v5988
      %v6053 = vadd.f32 %v6052, %v5989
      %v6054 = vadd.f32 %v6053, %v5990
      %v6055 = vadd.f32 %v6054, %v5991
      %v6056 = vadd.f32 %v6055, %v5992
      %v6057 = vadd.f32 %v6056, %v5993
      %v6058 = vadd.f32 %v6057, %v5994
      %v6059 = vadd.f32 %v6058, %v5995
      %v6060 = vadd.f32 %v6059, %v5996
      %v6061 = vadd.f32 %v6060, %v5997
      %v6062 = vadd.f32 %v6061, %v5998
      %v6063 = vadd.f32 %v6062, %v5999
      %v6064 = vadd.f32 %v6063, %v6000
      %v6065 = vadd.f32 %v6064, %v6001
      %v6066 = vadd.f32 %v6065, %v6002
      %v6067 = vadd.f32 %v6066, %v6003
      %v6068 = vadd.f32 %v6067, %v6004
      %v6069 = vadd.f32 %v6068, %v6005
      %v6070 = vrot.slane %v6069, 4
      %v6071 = vadd.f32 %v6069, %v6070
      %v6072 = vrot.slane %v6071, 2
      %v6073 = vadd.f32 %v6071, %v6072
      %v6074 = vrot.slane %v6073, 1
      %v6075 = vadd.f32 %v6073, %v6074
      %v6076 = vadd.f32 %v6038, %v6075
      %6077 = vst [vmem:[%s3] sm:$0x1] %v6076
      %v6078 = vld [vmem:[%s4] sm:$0x1]
      %v6079 = vmul.f32 %v5974, %v5974
      %v6080 = vmul.f32 %v5975, %v5975
      %v6081 = vmul.f32 %v5976, %v5976
      %v6082 = vmul.f32 %v5977, %v5977
      %v6083 = vmul.f32 %v5978, %v5978
      %v6084 = vmul.f32 %v5979, %v5979
      %v6085 = vmul.f32 %v5980, %v5980
      %v6086 = vmul.f32 %v5981, %v5981
      %v6087 = vmul.f32 %v5982, %v5982
      %v6088 = vmul.f32 %v5983, %v5983
      %v6089 = vmul.f32 %v5984, %v5984
      %v6090 = vmul.f32 %v5985, %v5985
      %v6091 = vmul.f32 %v5986, %v5986
      %v6092 = vmul.f32 %v5987, %v5987
      %v6093 = vmul.f32 %v5988, %v5988
      %v6094 = vmul.f32 %v5989, %v5989
      %v6095 = vmul.f32 %v5990, %v5990
      %v6096 = vmul.f32 %v5991, %v5991
      %v6097 = vmul.f32 %v5992, %v5992
      %v6098 = vmul.f32 %v5993, %v5993
      %v6099 = vmul.f32 %v5994, %v5994
      %v6100 = vmul.f32 %v5995, %v5995
      %v6101 = vmul.f32 %v5996, %v5996
      %v6102 = vmul.f32 %v5997, %v5997
      %v6103 = vmul.f32 %v5998, %v5998
      %v6104 = vmul.f32 %v5999, %v5999
      %v6105 = vmul.f32 %v6000, %v6000
      %v6106 = vmul.f32 %v6001, %v6001
      %v6107 = vmul.f32 %v6002, %v6002
      %v6108 = vmul.f32 %v6003, %v6003
      %v6109 = vmul.f32 %v6004, %v6004
      %v6110 = vmul.f32 %v6005, %v6005
      %v6111 = vadd.f32 %v6079, %v6080
      %v6112 = vadd.f32 %v6111, %v6081
      %v6113 = vadd.f32 %v6112, %v6082
      %v6114 = vadd.f32 %v6113, %v6083
      %v6115 = vadd.f32 %v6114, %v6084
      %v6116 = vadd.f32 %v6115, %v6085
      %v6117 = vadd.f32 %v6116, %v6086
      %v6118 = vadd.f32 %v6117, %v6087
      %v6119 = vadd.f32 %v6118, %v6088
      %v6120 = vadd.f32 %v6119, %v6089
      %v6121 = vadd.f32 %v6120, %v6090
      %v6122 = vadd.f32 %v6121, %v6091
      %v6123 = vadd.f32 %v6122, %v6092
      %v6124 = vadd.f32 %v6123, %v6093
      %v6125 = vadd.f32 %v6124, %v6094
      %v6126 = vadd.f32 %v6125, %v6095
      %v6127 = vadd.f32 %v6126, %v6096
      %v6128 = vadd.f32 %v6127, %v6097
      %v6129 = vadd.f32 %v6128, %v6098
      %v6130 = vadd.f32 %v6129, %v6099
      %v6131 = vadd.f32 %v6130, %v6100
      %v6132 = vadd.f32 %v6131, %v6101
      %v6133 = vadd.f32 %v6132, %v6102
      %v6134 = vadd.f32 %v6133, %v6103
      %v6135 = vadd.f32 %v6134, %v6104
      %v6136 = vadd.f32 %v6135, %v6105
      %v6137 = vadd.f32 %v6136, %v6106
      %v6138 = vadd.f32 %v6137, %v6107
      %v6139 = vadd.f32 %v6138, %v6108
      %v6140 = vadd.f32 %v6139, %v6109
      %v6141 = vadd.f32 %v6140, %v6110
      %v6142 = vrot.slane %v6141, 4
      %v6143 = vadd.f32 %v6141, %v6142
      %v6144 = vrot.slane %v6143, 2
      %v6145 = vadd.f32 %v6143, %v6144
      %v6146 = vrot.slane %v6145, 1
      %v6147 = vadd.f32 %v6145, %v6146
      %v6148 = vadd.f32 %v6078, %v6147
      %6149 = vst [vmem:[%s4] sm:$0x1] %v6148
      %p6150 = scmp.lt.s32.totalorder %s16, 1
      %s6151 = scalar_select %p6150, %s16, 1
      %s6152 = smul.addr %s6151, 32
      %s6153 = smul.addr %s6152, 8
      %s6154 = scalar_lea.vmem %s2, %s6153
      // Predicated region
      $region33: #{bottleneck_forward.7} parent=27 // pred_check
        %p6155 = pneg %p81
      $region34: #{bottleneck_forward.7} parent=27 // pred_check_branch
        %6157 = sbr.rel (%p6155) target = $region36
      $region35: #{bottleneck_forward.7} parent=27 // pred_region
        _
      $region36: #{bottleneck_forward.7} parent=27 // pred_fallthru
        _
      // Predicated region
      $region37: #{bottleneck_forward.7} parent=27 // pred_check
        %p6158 = pneg %p102
      $region38: #{bottleneck_forward.7} parent=27 // pred_check_branch
        %6160 = sbr.rel (%p6158) target = $region40
      $region39: #{bottleneck_forward.7} parent=27 // pred_region
        _
      $region40: #{bottleneck_forward.7} parent=27 // pred_fallthru
        _
      // Predicated region
      $region41: #{bottleneck_forward.7} parent=27 // pred_check
        %p6161 = pneg %p123
      $region42: #{bottleneck_forward.7} parent=27 // pred_check_branch
        %6163 = sbr.rel (%p6161) target = $region44
      $region43: #{bottleneck_forward.7} parent=27 // pred_region
        _
      $region44: #{bottleneck_forward.7} parent=27 // pred_fallthru
        _
      // Predicated region
      $region45: #{bottleneck_forward.7} parent=27 // pred_check
        %p6164 = pneg %p102
      $region46: #{bottleneck_forward.7} parent=27 // pred_check_branch
        %6166 = sbr.rel (%p6164) target = $region48
      $region47: #{bottleneck_forward.7} parent=27 // pred_region
        _
      $region48: #{bottleneck_forward.7} parent=27 // pred_fallthru
        _
      // Predicated region
      $region49: #{bottleneck_forward.7} parent=27 // pred_check
        %p6167 = pneg %p123
      $region50: #{bottleneck_forward.7} parent=27 // pred_check_branch
        %6169 = sbr.rel (%p6167) target = $region52
      $region51: #{bottleneck_forward.7} parent=27 // pred_region
        _
      $region52: #{bottleneck_forward.7} parent=27 // pred_fallthru
        _
    $region28: #{bottleneck_forward.7} parent=5 // pred_fallthru
      _
    %p6170 = scmp.le.s32.totalorder 2, %s11
    // Predicated region
    $region53: #{bottleneck_forward.7} parent=5 // pred_check
      %p6171 = pneg %p6170
    $region54: #{bottleneck_forward.7} parent=5 // pred_check_branch
      %6173 = sbr.rel (%p6171) target = $region56
    $region55: #{bottleneck_forward.7} parent=5 // pred_region
      %s6174 = ssub.s32 %s11, 2
      // Predicated region
      $region57: #{bottleneck_forward.7} parent=55 // pred_check
        %p6175 = pneg %p87
      $region58: #{bottleneck_forward.7} parent=55 // pred_check_branch
        %6177 = sbr.rel (%p6175) target = $region60
      $region59: #{bottleneck_forward.7} parent=55 // pred_region
        %p6178 = scmp.lt.s32.totalorder %s17, 1
        %s6179 = scalar_select %p6178, %s17, 1
        %s6180 = smul.addr %s6179, 32
        %s6181 = smul.addr %s6180, 8
        %s6182 = scalar_lea.vmem %s2, %s6181
      $region60: #{bottleneck_forward.7} parent=55 // pred_fallthru
        _
    $region56: #{bottleneck_forward.7} parent=5 // pred_fallthru
      _
  $region6: #{bottleneck_forward.7} parent=0 // loop_footer
    %s15 = sadd.s32 1, %s11
  $region7: #{bottleneck_forward.7} parent=0 // loop_footer_branch
    %10 = sbr.rel target = $region3
  $region8: #{bottleneck_forward.7} parent=0 // loop_exit
    _

</llo_original>
